<compile_context>
chip_gen: v7x
topology: tpu7x:2x2x1
jax: 0.10.0
libtpu: 0.0.40
codegen_flags: <defaults>
</compile_context>

<pallas_src>
import jax
import jax.numpy as jnp
from jax.experimental import pallas as pl
from jax.experimental.pallas import tpu as pltpu

_SLIM_POSENC = 4  # [dist, xyz_j]; xyz_i and (xyz_i - xyz_j) are folded into a per-point bias


# ----------------------------------------------------------------------------- kernel
def lse_ap_kernel(fused_ref, pbias_ref, wbig_ref, w2f_ref, b2_ref, w3_ref, b3_ref, out_ref):
    TN, K, CF = fused_ref.shape          # (tn, K, inc + 4)
    INC = w2f_ref.shape[0]

    f32 = jnp.float32
    bf16 = jnp.bfloat16
    dot = lambda a, b: jnp.dot(a, b, preferred_element_type=f32)

    fused = fused_ref[...].reshape(TN * K, CF)   # bf16 (TN*K, inc+4); K%8==0 -> free reshape

    # Single fused-LHS dot (RHS width 3*inc):
    #   cols [0:INC)      : slim posmlp  (dist row of W1 + xyz_j rows (W_j - W_delta))
    #   cols [INC:3*INC)  : ff rows of the attmlp weight W2[inc:, :]
    big = dot(fused, wbig_ref[...])                                        # f32 (TN*K, 3*inc)

    # posmlp: Linear(10 -> inc) + folded BN + ReLU; xyz_i contribution + b1 arrive as the
    # precomputed per-point bias (broadcast over K).
    fxyz = jnp.maximum(big[:, :INC].reshape(TN, K, INC)
                       + pbias_ref[...][:, None, :], 0.0)                  # f32 (TN, K, inc)

    # attmlp: Linear(2inc -> 2inc) + folded BN + ReLU, full 2*inc width in one dot:
    #   scores = relu(fxyz @ W2[:inc, :] + ff @ W2[inc:, :] + b2)
    scores = jnp.maximum(dot(fxyz.reshape(TN * K, INC).astype(bf16), w2f_ref[...])
                         + big[:, INC:] + b2_ref[...], 0.0)
    scores = scores.reshape(TN, K, 2 * INC)

    # softmax over the neighbor axis K (f32 on VPU/EUP; v5e-safe), denominator on the EUP.
    e = jnp.exp(scores - jnp.max(scores, axis=1, keepdims=True))
    soft = e * pl.reciprocal(jnp.sum(e, axis=1, keepdims=True), approx=True)

    # attentive pooling over K on the full-width stack [fxyz | ff] (single lane-concat).
    ff = fused[:, :INC].reshape(TN, K, INC).astype(f32)
    stack = jnp.concatenate([fxyz, ff], axis=-1)                           # (TN, K, 2*inc)
    pooled = jnp.sum(soft * stack, axis=1)                                 # (TN, 2*inc)

    # mlpout: Linear(2inc -> outc) + folded BN + ReLU.
    out = dot(pooled.astype(bf16), w3_ref[...]) + b3_ref[...]
    out_ref[...] = jnp.maximum(out, 0.0).astype(out_ref.dtype)


# --------------------------------------------------------------------------- wrappers
def _fold_linear_bn(w, b, gamma, beta, mean, var, eps=1e-5):
    """Fold an eval-mode BatchNorm into the preceding Linear (y = x @ Wf + bf)."""
    scale = gamma / jnp.sqrt(var + eps)
    wf = w * scale[None, :]
    bf = (b - mean) * scale + beta
    return wf.astype(jnp.float32), bf.reshape(1, -1).astype(jnp.float32)


def _prepare_kernel_weights(params, inc, wdtype=jnp.bfloat16):
    """Fold BN, column-merge / zero-pad the weights for the 2-big-dot kernel, cast to bf16."""
    w1f, b1f = _fold_linear_bn(*params["posmlp"])   # (10, inc)   rows: [dist, W_delta, W_i, W_j]
    w2f, b2f = _fold_linear_bn(*params["attmlp"])   # (2inc, 2inc)
    w3f, b3f = _fold_linear_bn(*params["mlpout"])   # (2inc, outc)
    cf = inc + _SLIM_POSENC

    # Merged fused-LHS RHS: (cf, 3*inc) = [ posmlp (slim) | ff-rows of attmlp ].
    wbig = jnp.zeros((cf, 3 * inc), jnp.float32)
    wbig = wbig.at[:inc, inc:].set(w2f[inc:, :])                 # ff rows   -> scores
    wbig = wbig.at[inc, :inc].set(w1f[0, :])                     # dist row  -> posmlp
    wbig = wbig.at[inc + 1:, :inc].set(w1f[7:10] - w1f[1:4])     # xyz_j rows: W_j - W_delta

    c = lambda w: w.astype(wdtype)
    return dict(
        wbig=c(wbig),
        w2f=c(w2f[:inc, :]),        # fxyz rows of attmlp, full 2*inc width
        b2=b2f,
        w3=c(w3f),                  # full (2*inc, outc)
        b3=b3f,
        w1f=w1f, b1f=b1f,           # kept f32 for the per-point bias build
    )


def _build_inputs(x, pos, idx, dist, w1f, b1f, dtype=jnp.bfloat16):
    """Gather neighbors, build slim fused input (N, K, inc+4) = [ff | dist | xyz_j] and the
    per-point f32 bias pbias = xyz_i @ (W_delta + W_i) + b1  (N, inc)."""
    pos3 = pos[:, :3].astype(jnp.float32)
    posj = pos3[idx]                                              # (N, K, 3) neighbor coords
    ff = x[idx].astype(jnp.float32)                               # (N, K, inc)
    fused = jnp.concatenate(
        [ff, dist[:, :, None].astype(jnp.float32), posj], axis=-1).astype(dtype)
    pbias = pos3 @ (w1f[1:4] + w1f[4:7]) + b1f                    # f32 (N, inc)
    return fused, pbias


def lse_ap_forward(params, x, pos, idx, dist, *, tn=64):
    """Pallas forward. tn: points per grid step (multiple of 8; sweep 32-128)."""
    assert tn % 8 == 0, "tn must be a multiple of 8 (sublane tiling)"
    N, K = idx.shape
    inc = x.shape[-1]
    cf = inc + _SLIM_POSENC

    w = _prepare_kernel_weights(params, inc)
    outc = w["w3"].shape[-1]
    fused, pbias = _build_inputs(x, pos, idx, dist, w["w1f"], w["b1f"])

    # Tail handling: pad the point axis to a multiple of tn (padded rows are sliced off).
    num_tiles = pl.cdiv(N, tn)
    n_pad = num_tiles * tn
    if n_pad != N:
        fused = jnp.pad(fused, ((0, n_pad - N), (0, 0), (0, 0)))
        pbias = jnp.pad(pbias, ((0, n_pad - N), (0, 0)))

    rep = lambda i: (0, 0)   # weights: constant block index -> DMA'd once, stays VMEM-resident

    out = pl.pallas_call(
        lse_ap_kernel,
        out_shape=jax.ShapeDtypeStruct((n_pad, outc), jnp.float32),
        grid=(num_tiles,),
        in_specs=[
            pl.BlockSpec((tn, K, cf), lambda i: (i, 0, 0)),     # fused gathered input (bf16)
            pl.BlockSpec((tn, inc), lambda i: (i, 0)),          # per-point posmlp bias (f32)
            pl.BlockSpec((cf, 3 * inc), rep),                   # merged [W1_slim | W2 ff-rows]
            pl.BlockSpec((inc, 2 * inc), rep),                  # W2 fxyz-rows (full width)
            pl.BlockSpec((1, 2 * inc), rep),                    # b2
            pl.BlockSpec((2 * inc, outc), rep),                 # W3 (full)
            pl.BlockSpec((1, outc), rep),                       # b3
        ],
        # outc=64 < 128 lanes -> half-masked stores; padding to 128 would add output HBM
        # traffic to this kernel, so we keep the natural width.
        out_specs=pl.BlockSpec((tn, outc), lambda i: (i, 0)),
        compiler_params=pltpu.CompilerParams(dimension_semantics=("parallel",)),
    )(fused, pbias, w["wbig"], w["w2f"], w["b2"], w["w3"], w["b3"])
    return out[:N]


# ------------------------------------------------------------------------- references
def lse_ap_ref(params, x, pos, idx, dist):
    """Pure f32 JAX reference mirroring the PyTorch forward (eval-mode BN)."""
    N, K = idx.shape
    pos3 = pos[:, :3].astype(jnp.float32)
    xyzk = jnp.broadcast_to(pos3[:, None, :], (N, K, 3))
    posj = pos3[idx]
    posenc = jnp.concatenate(
        [dist[:, :, None].astype(jnp.float32), xyzk - posj, xyzk, posj], axis=-1)
    w1f, b1f = _fold_linear_bn(*params["posmlp"])
    w2f, b2f = _fold_linear_bn(*params["attmlp"])
    w3f, b3f = _fold_linear_bn(*params["mlpout"])

    fxyz = jnp.maximum(posenc @ w1f + b1f, 0.0)
    ffeats = x[idx].astype(jnp.float32)
    stack = jnp.concatenate([fxyz, ffeats], axis=-1)
    scores = jnp.maximum(stack @ w2f + b2f, 0.0)
    soft = jax.nn.softmax(scores, axis=1)
    pooled = jnp.sum(stack * soft, axis=1)
    return jnp.maximum(pooled @ w3f + b3f, 0.0)


def lse_ap_matched_ref(params, x, pos, idx, dist):
    """JAX reference using the same folded-weight / bf16-MXU / f32-accumulate numerics as the
    kernel (exact softmax vs. in-kernel approx reciprocal -> ~1e-3 drift, intentional)."""
    N, K = idx.shape
    inc = x.shape[-1]
    w = _prepare_kernel_weights(params, inc)
    fused, pbias = _build_inputs(x, pos, idx, dist, w["w1f"], w["b1f"])
    cf = inc + _SLIM_POSENC
    f32 = jnp.float32
    dot = lambda a, b: jnp.dot(a, b, preferred_element_type=f32)

    fused2 = fused.reshape(N * K, cf)
    big = dot(fused2, w["wbig"])
    fxyz = jnp.maximum(big[:, :inc].reshape(N, K, inc) + pbias[:, None, :], 0.0)
    scores = jnp.maximum(dot(fxyz.reshape(N * K, inc).astype(jnp.bfloat16), w["w2f"])
                         + big[:, inc:] + w["b2"], 0.0).reshape(N, K, 2 * inc)
    soft = jax.nn.softmax(scores, axis=1)
    ff = fused2[:, :inc].reshape(N, K, inc).astype(f32)
    stack = jnp.concatenate([fxyz, ff], axis=-1)
    pooled = jnp.sum(soft * stack, axis=1)
    out = dot(pooled.astype(jnp.bfloat16), w["w3"]) + w["b3"]
    return jnp.maximum(out, 0.0)


# ------------------------------------------------------------------------------ init
def init_params(key, inc, outc):
    def linear(kw, kb, fan_in, fan_out):
        bound = 1.0 / jnp.sqrt(fan_in)
        w = jax.random.uniform(kw, (fan_in, fan_out), minval=-bound, maxval=bound,
                               dtype=jnp.float32)
        b = jax.random.uniform(kb, (fan_out,), minval=-bound, maxval=bound,
                               dtype=jnp.float32)
        return w, b

    def bn(kg, kb, c):
        gamma = jax.random.uniform(kg, (c,), minval=0.5, maxval=1.5, dtype=jnp.float32)
        beta = 0.1 * jax.random.normal(kb, (c,), dtype=jnp.float32)
        mean = jnp.zeros((c,), jnp.float32)
        var = jnp.ones((c,), jnp.float32)
        return gamma, beta, mean, var

    ks = jax.random.split(key, 12)
    c2 = 2 * inc
    return {
        "posmlp": (*linear(ks[0], ks[1], 10, inc), *bn(ks[2], ks[3], inc)),
        "attmlp": (*linear(ks[4], ks[5], c2, c2), *bn(ks[6], ks[7], c2)),
        "mlpout": (*linear(ks[8], ks[9], c2, outc), *bn(ks[10], ks[11], outc)),
    }


# ------------------------------------------------------------------------------ main
if __name__ == "__main__":
    key = jax.random.PRNGKey(0)
    # Small but non-trivial: 256 points -> grid of 4 tiles at tn=64 (keeps both v7x TCs busy).
    N, K, INC, OUTC = 256, 16, 32, 64

    kx, kp, ki, kd, kparam = jax.random.split(key, 5)
    x = jax.random.normal(kx, (N, INC), dtype=jnp.float32)
    pos = jax.random.normal(kp, (N, 4), dtype=jnp.float32)
    idx = jax.random.randint(ki, (N, K), 0, N, dtype=jnp.int32)
    dist = jnp.abs(jax.random.normal(kd, (N, K), dtype=jnp.float32))

    params = init_params(kparam, INC, OUTC)

    out = lse_ap_forward(params, x, pos, idx, dist, tn=64)
    out = jax.block_until_ready(out)
    assert out.shape == (N, OUTC), out.shape

    # Tight check against a reference with matching (bf16 MXU / f32 accumulate) numerics.
    ref_matched = lse_ap_matched_ref(params, x, pos, idx, dist)
    err_matched = float(jnp.max(jnp.abs(out - ref_matched)))
    assert err_matched < 2e-2, f"kernel vs matched-precision reference: {err_matched}"

    # Looser sanity check against the full-f32 reference (bf16 operand rounding expected).
    ref32 = lse_ap_ref(params, x, pos, idx, dist)
    err32 = float(jnp.max(jnp.abs(out - ref32)))
    tol32 = 1e-1 * (1.0 + float(jnp.max(jnp.abs(ref32))))
    assert err32 < tol32, f"kernel vs f32 reference: {err32} (tol {tol32})"

    print("KERNEL_OK")
</pallas_src>

<mosaic_0001>
module attributes {stable_mosaic.version = 11 : i64} {
  func.func @lse_ap_kernel(%arg0: i32, %arg1: memref<64x16x36xbf16, #tpu.memory_space<vmem>>, %arg2: memref<64x32xf32, #tpu.memory_space<vmem>>, %arg3: memref<36x96xbf16, #tpu.memory_space<vmem>>, %arg4: memref<32x64xbf16, #tpu.memory_space<vmem>>, %arg5: memref<1x64xf32, #tpu.memory_space<vmem>>, %arg6: memref<64x64xbf16, #tpu.memory_space<vmem>>, %arg7: memref<1x64xf32, #tpu.memory_space<vmem>>, %arg8: memref<64x64xf32, #tpu.memory_space<vmem>>) attributes {dimension_semantics = [#tpu.dimension_semantics<parallel>], iteration_bounds = array<i64: 4>, scalar_prefetch = 0 : i64, scratch_operands = 0 : i64, tpu.core_type = #tpu.core_type<tc>, window_params = [{transform_indices = @transform_0, window_bounds = array<i64: 64, 16, 36>}, {transform_indices = @transform_1, window_bounds = array<i64: 64, 32>}, {pipeline_mode = #tpu.pipeline_mode<synchronous>, transform_indices = @transform_2, window_bounds = array<i64: 36, 96>}, {pipeline_mode = #tpu.pipeline_mode<synchronous>, transform_indices = @transform_3, window_bounds = array<i64: 32, 64>}, {pipeline_mode = #tpu.pipeline_mode<synchronous>, transform_indices = @transform_4, window_bounds = array<i64: 1, 64>}, {pipeline_mode = #tpu.pipeline_mode<synchronous>, transform_indices = @transform_5, window_bounds = array<i64: 64, 64>}, {pipeline_mode = #tpu.pipeline_mode<synchronous>, transform_indices = @transform_6, window_bounds = array<i64: 1, 64>}, {transform_indices = @transform_7, window_bounds = array<i64: 64, 64>}]} {
    %c0 = arith.constant 0 : index
    %c0_0 = arith.constant 0 : index
    %c0_1 = arith.constant 0 : index
    %0 = vector.load %arg1[%c0, %c0_0, %c0_1] : memref<64x16x36xbf16, #tpu.memory_space<vmem>>, vector<64x16x36xbf16>
    %1 = vector.shape_cast %0 : vector<64x16x36xbf16> to vector<1024x36xbf16>
    %c0_2 = arith.constant 0 : index
    %c0_3 = arith.constant 0 : index
    %2 = vector.load %arg3[%c0_2, %c0_3] : memref<36x96xbf16, #tpu.memory_space<vmem>>, vector<36x96xbf16>
    %cst = arith.constant dense<0.000000e+00> : vector<1024x96xf32>
    %3 = tpu.matmul %1, %2, %cst {dimension_numbers = #tpu.dot_dimension_numbers<[1], [0], [0], [1], [0, 0, 1, 1], [], []>} : vector<1024x36xbf16>, vector<36x96xbf16>, vector<1024x96xf32> -> vector<1024x96xf32>
    %4 = vector.extract_strided_slice %3 {offsets = [0, 0], sizes = [1024, 32], strides = [1, 1]} : vector<1024x96xf32> to vector<1024x32xf32>
    %5 = vector.shape_cast %4 : vector<1024x32xf32> to vector<64x16x32xf32>
    %c0_4 = arith.constant 0 : index
    %c0_5 = arith.constant 0 : index
    %6 = vector.load %arg2[%c0_4, %c0_5] : memref<64x32xf32, #tpu.memory_space<vmem>>, vector<64x32xf32>
    %7 = vector.shape_cast %6 : vector<64x32xf32> to vector<64x1x32xf32>
    %8 = vector.broadcast %7 : vector<64x1x32xf32> to vector<64x16x32xf32>
    %9 = arith.addf %5, %8 : vector<64x16x32xf32>
    %cst_6 = arith.constant 0.000000e+00 : f32
    %10 = vector.broadcast %cst_6 : f32 to vector<64x16x32xf32>
    %11 = arith.maximumf %9, %10 : vector<64x16x32xf32>
    %12 = vector.shape_cast %11 : vector<64x16x32xf32> to vector<1024x32xf32>
    %13 = arith.truncf %12 : vector<1024x32xf32> to vector<1024x32xbf16>
    %c0_7 = arith.constant 0 : index
    %c0_8 = arith.constant 0 : index
    %14 = vector.load %arg4[%c0_7, %c0_8] : memref<32x64xbf16, #tpu.memory_space<vmem>>, vector<32x64xbf16>
    %cst_9 = arith.constant dense<0.000000e+00> : vector<1024x64xf32>
    %15 = tpu.matmul %13, %14, %cst_9 {dimension_numbers = #tpu.dot_dimension_numbers<[1], [0], [0], [1], [0, 0, 1, 1], [], []>} : vector<1024x32xbf16>, vector<32x64xbf16>, vector<1024x64xf32> -> vector<1024x64xf32>
    %16 = vector.extract_strided_slice %3 {offsets = [0, 32], sizes = [1024, 64], strides = [1, 1]} : vector<1024x96xf32> to vector<1024x64xf32>
    %17 = arith.addf %15, %16 : vector<1024x64xf32>
    %c0_10 = arith.constant 0 : index
    %c0_11 = arith.constant 0 : index
    %18 = vector.load %arg5[%c0_10, %c0_11] : memref<1x64xf32, #tpu.memory_space<vmem>>, vector<1x64xf32>
    %19 = vector.broadcast %18 : vector<1x64xf32> to vector<1024x64xf32>
    %20 = arith.addf %17, %19 : vector<1024x64xf32>
    %cst_12 = arith.constant 0.000000e+00 : f32
    %21 = vector.broadcast %cst_12 : f32 to vector<1024x64xf32>
    %22 = arith.maximumf %20, %21 : vector<1024x64xf32>
    %23 = vector.shape_cast %22 : vector<1024x64xf32> to vector<64x16x64xf32>
    %cst_13 = arith.constant dense<0xFF800000> : vector<64x64xf32>
    %24 = vector.multi_reduction <maximumf>, %23, %cst_13 [1] : vector<64x16x64xf32> to vector<64x64xf32>
    %25 = vector.shape_cast %24 : vector<64x64xf32> to vector<64x1x64xf32>
    %26 = vector.broadcast %25 : vector<64x1x64xf32> to vector<64x16x64xf32>
    %27 = arith.subf %23, %26 : vector<64x16x64xf32>
    %28 = math.exp %27 : vector<64x16x64xf32>
    %cst_14 = arith.constant dense<0.000000e+00> : vector<64x64xf32>
    %29 = vector.multi_reduction <add>, %28, %cst_14 [1] : vector<64x16x64xf32> to vector<64x64xf32>
    %30 = vector.shape_cast %29 : vector<64x64xf32> to vector<64x1x64xf32>
    %31 = tpu.reciprocal %30 {approx = true} : vector<64x1x64xf32> -> vector<64x1x64xf32>
    %32 = vector.broadcast %31 : vector<64x1x64xf32> to vector<64x16x64xf32>
    %33 = arith.mulf %28, %32 : vector<64x16x64xf32>
    %34 = vector.extract_strided_slice %1 {offsets = [0, 0], sizes = [1024, 32], strides = [1, 1]} : vector<1024x36xbf16> to vector<1024x32xbf16>
    %35 = vector.shape_cast %34 : vector<1024x32xbf16> to vector<64x16x32xbf16>
    %36 = arith.extf %35 : vector<64x16x32xbf16> to vector<64x16x32xf32>
    %37 = tpu.concatenate %11, %36 in 2 : vector<64x16x32xf32>, vector<64x16x32xf32> -> vector<64x16x64xf32>
    %38 = arith.mulf %33, %37 : vector<64x16x64xf32>
    %cst_15 = arith.constant dense<0.000000e+00> : vector<64x64xf32>
    %39 = vector.multi_reduction <add>, %38, %cst_15 [1] : vector<64x16x64xf32> to vector<64x64xf32>
    %40 = arith.truncf %39 : vector<64x64xf32> to vector<64x64xbf16>
    %c0_16 = arith.constant 0 : index
    %c0_17 = arith.constant 0 : index
    %41 = vector.load %arg6[%c0_16, %c0_17] : memref<64x64xbf16, #tpu.memory_space<vmem>>, vector<64x64xbf16>
    %cst_18 = arith.constant dense<0.000000e+00> : vector<64x64xf32>
    %42 = tpu.matmul %40, %41, %cst_18 {dimension_numbers = #tpu.dot_dimension_numbers<[1], [0], [0], [1], [0, 0, 1, 1], [], []>} : vector<64x64xbf16>, vector<64x64xbf16>, vector<64x64xf32> -> vector<64x64xf32>
    %c0_19 = arith.constant 0 : index
    %c0_20 = arith.constant 0 : index
    %43 = vector.load %arg7[%c0_19, %c0_20] : memref<1x64xf32, #tpu.memory_space<vmem>>, vector<1x64xf32>
    %44 = vector.broadcast %43 : vector<1x64xf32> to vector<64x64xf32>
    %45 = arith.addf %42, %44 : vector<64x64xf32>
    %cst_21 = arith.constant 0.000000e+00 : f32
    %46 = vector.broadcast %cst_21 : f32 to vector<64x64xf32>
    %47 = arith.maximumf %45, %46 : vector<64x64xf32>
    %c0_22 = arith.constant 0 : index
    %c0_23 = arith.constant 0 : index
    %48 = vector.load %arg8[%c0_22, %c0_23] : memref<64x64xf32, #tpu.memory_space<vmem>>, vector<64x64xf32>
    tpu.vector_store %arg8[%c0_22, %c0_23], %47 {strides = array<i32>} : memref<64x64xf32, #tpu.memory_space<vmem>>, vector<64x64xf32>,
    return
  }
  func.func @transform_0(%arg0: i32) -> (i32, i32, i32) {
    %c0_i32 = arith.constant 0 : i32
    %c0_i32_0 = arith.constant 0 : i32
    %c0_i32_1 = arith.constant 0 : i32
    return %arg0, %c0_i32, %c0_i32_0 : i32, i32, i32
  }
  func.func @transform_1(%arg0: i32) -> (i32, i32) {
    %c0_i32 = arith.constant 0 : i32
    %c0_i32_0 = arith.constant 0 : i32
    return %arg0, %c0_i32 : i32, i32
  }
  func.func @transform_2(%arg0: i32) -> (i32, i32) {
    %c0_i32 = arith.constant 0 : i32
    %c0_i32_0 = arith.constant 0 : i32
    %c0_i32_1 = arith.constant 0 : i32
    return %c0_i32, %c0_i32_0 : i32, i32
  }
  func.func @transform_3(%arg0: i32) -> (i32, i32) {
    %c0_i32 = arith.constant 0 : i32
    %c0_i32_0 = arith.constant 0 : i32
    %c0_i32_1 = arith.constant 0 : i32
    return %c0_i32, %c0_i32_0 : i32, i32
  }
  func.func @transform_4(%arg0: i32) -> (i32, i32) {
    %c0_i32 = arith.constant 0 : i32
    %c0_i32_0 = arith.constant 0 : i32
    %c0_i32_1 = arith.constant 0 : i32
    return %c0_i32, %c0_i32_0 : i32, i32
  }
  func.func @transform_5(%arg0: i32) -> (i32, i32) {
    %c0_i32 = arith.constant 0 : i32
    %c0_i32_0 = arith.constant 0 : i32
    %c0_i32_1 = arith.constant 0 : i32
    return %c0_i32, %c0_i32_0 : i32, i32
  }
  func.func @transform_6(%arg0: i32) -> (i32, i32) {
    %c0_i32 = arith.constant 0 : i32
    %c0_i32_0 = arith.constant 0 : i32
    %c0_i32_1 = arith.constant 0 : i32
    return %c0_i32, %c0_i32_0 : i32, i32
  }
  func.func @transform_7(%arg0: i32) -> (i32, i32) {
    %c0_i32 = arith.constant 0 : i32
    %c0_i32_0 = arith.constant 0 : i32
    return %arg0, %c0_i32 : i32, i32
  }
}

</mosaic_0001>

<llo_original>
// kernel: tpu_custom_call.1
$region0: #{tpu_custom_call.1}
  #allocation0 [shape = 'u32[]', space=smem, size = 0x4, offset = 0x4, fixed_abs, tag = 'smem constant byte address 0x4 - core index']
  #allocation1 [shape = 'u32[144,128]{1,0:T(1,128)}', space=vmem, size = 0x12000, scoped, tag = 'internal scratch']
  %s0 = inlined_call_operand.vmem [shape: bf16[256,16,36], index: 0, kind: input, shape index: {}]
  %s1 = inlined_call_operand.vmem [shape: f32[256,32], index: 1, kind: input, shape index: {}]
  %s2 = inlined_call_operand.vmem [shape: bf16[36,96], index: 2, kind: input, shape index: {}]
  %s3 = inlined_call_operand.vmem [shape: bf16[32,64], index: 3, kind: input, shape index: {}]
  %s4 = inlined_call_operand.vmem [shape: f32[1,64], index: 4, kind: input, shape index: {}]
  %s5 = inlined_call_operand.vmem [shape: bf16[64,64], index: 5, kind: input, shape index: {}]
  %s6 = inlined_call_operand.vmem [shape: f32[1,64], index: 6, kind: input, shape index: {}]
  %s7 = inlined_call_operand.vmem [shape: f32[256,64], index: 7, kind: output, shape index: {}]
  %s8 = sld [smem:[#allocation0]]
  $region61: #{tpu_custom_call.1} parent=0
    _
  %s10 = ssub.s32 1, %s8
  %s11 = scalar_select 0, %s10, %s8
  loop: start=0, step=1, limit=6
  $region2: #{tpu_custom_call.1} parent=0 // loop_pre_header
    _
  $region3: #{tpu_custom_call.1} parent=0 // loop_header
    %s13 = sphi 0, %s17
    %p14 = scmp.ge.s32.totalorder %s13, 6
    %s23 = sphi 0, %s25
    %s26 = sphi 0, %s23
    %s27 = sphi 0, %s26
    %s43 = sphi 0, %s27
    %s49 = sphi 0, %s51
    %s52 = sphi 0, %s49
    %s53 = sphi 0, %s52
    %s69 = sphi 0, %s53
    %s73 = sphi 0, %s73
    %s75 = sphi 0, %s73
    %s76 = sphi 0, %s75
    %s90 = sphi 0, %s76
    %s94 = sphi 0, %s94
    %s96 = sphi 0, %s94
    %s97 = sphi 0, %s96
    %s111 = sphi 0, %s97
    %s115 = sphi 0, %s115
    %s117 = sphi 0, %s115
    %s118 = sphi 0, %s117
    %s132 = sphi 0, %s118
    %s136 = sphi 0, %s136
    %s138 = sphi 0, %s136
    %s139 = sphi 0, %s138
    %s153 = sphi 0, %s139
    %s157 = sphi 0, %s157
    %s159 = sphi 0, %s157
    %s160 = sphi 0, %s159
    %s174 = sphi 0, %s160
    %s180 = sphi 0, %s182
    %s183 = sphi 0, %s180
    %s184 = sphi 0, %s183
    %s200 = sphi 0, %s184
  $region4: #{tpu_custom_call.1} parent=0 // loop_header_branch
    %16 = sbr.rel (%p14) target = $region8
  $region5: #{tpu_custom_call.1} parent=0 // loop_body
    %s18 = ssub.s32 %s13, 1
    %s19 = ssub.s32 %s13, 2
    %s20 = sadd.s32 %s13, 1
    %s21 = ssub.s32 %s13, %s20
    %p22 = scmp.eq.s32.totalorder %s21, 0
    %s24 = sadd.s32 %s23, 1
    %s25 = scalar_select %p22, %s23, %s24
    %p28 = pneg %p22
    %p29 = scmp.eq.s32.totalorder %s13, 3
    %p30 = por %p28, %p29
    %p31 = scmp.ne.s32.totalorder %s23, %s26
    %p32 = scmp.eq.s32.totalorder %s13, 0
    %p33 = por %p31, %p32
    %p34 = scmp.ne.s32.totalorder %s23, %s26
    %p35 = scmp.eq.s32.totalorder %s18, 3
    %p36 = por %p34, %p35
    %p37 = scmp.ne.s32.totalorder %s26, %s27
    %p38 = scmp.eq.s32.totalorder %s18, 0
    %p39 = por %p37, %p38
    %p40 = scmp.ne.s32.totalorder %s26, %s27
    %p41 = scmp.eq.s32.totalorder %s19, 3
    %p42 = por %p40, %p41
    %p44 = scmp.ne.s32.totalorder %s27, %s43
    %p45 = scmp.eq.s32.totalorder %s19, 0
    %p46 = por %p44, %p45
    %s47 = ssub.s32 %s13, %s20
    %p48 = scmp.eq.s32.totalorder %s47, 0
    %s50 = sadd.s32 %s49, 1
    %s51 = scalar_select %p48, %s49, %s50
    %p54 = pneg %p48
    %p55 = scmp.eq.s32.totalorder %s13, 3
    %p56 = por %p54, %p55
    %p57 = scmp.ne.s32.totalorder %s49, %s52
    %p58 = scmp.eq.s32.totalorder %s13, 0
    %p59 = por %p57, %p58
    %p60 = scmp.ne.s32.totalorder %s49, %s52
    %p61 = scmp.eq.s32.totalorder %s18, 3
    %p62 = por %p60, %p61
    %p63 = scmp.ne.s32.totalorder %s52, %s53
    %p64 = scmp.eq.s32.totalorder %s18, 0
    %p65 = por %p63, %p64
    %p66 = scmp.ne.s32.totalorder %s52, %s53
    %p67 = scmp.eq.s32.totalorder %s19, 3
    %p68 = por %p66, %p67
    %p70 = scmp.ne.s32.totalorder %s53, %s69
    %p71 = scmp.eq.s32.totalorder %s19, 0
    %p72 = por %p70, %p71
    %s74 = sadd.s32 %s73, 1
    %p77 = scmp.eq.s32.totalorder %s13, 3
    %p78 = scmp.ne.s32.totalorder %s73, %s75
    %p79 = scmp.eq.s32.totalorder %s13, 0
    %p80 = por %p78, %p79
    %p81 = scmp.ne.s32.totalorder %s73, %s75
    %p82 = scmp.eq.s32.totalorder %s18, 3
    %p83 = por %p81, %p82
    %p84 = scmp.ne.s32.totalorder %s75, %s76
    %p85 = scmp.eq.s32.totalorder %s18, 0
    %p86 = por %p84, %p85
    %p87 = scmp.ne.s32.totalorder %s75, %s76
    %p88 = scmp.eq.s32.totalorder %s19, 3
    %p89 = por %p87, %p88
    %p91 = scmp.ne.s32.totalorder %s76, %s90
    %p92 = scmp.eq.s32.totalorder %s19, 0
    %p93 = por %p91, %p92
    %s95 = sadd.s32 %s94, 1
    %p98 = scmp.eq.s32.totalorder %s13, 3
    %p99 = scmp.ne.s32.totalorder %s94, %s96
    %p100 = scmp.eq.s32.totalorder %s13, 0
    %p101 = por %p99, %p100
    %p102 = scmp.ne.s32.totalorder %s94, %s96
    %p103 = scmp.eq.s32.totalorder %s18, 3
    %p104 = por %p102, %p103
    %p105 = scmp.ne.s32.totalorder %s96, %s97
    %p106 = scmp.eq.s32.totalorder %s18, 0
    %p107 = por %p105, %p106
    %p108 = scmp.ne.s32.totalorder %s96, %s97
    %p109 = scmp.eq.s32.totalorder %s19, 3
    %p110 = por %p108, %p109
    %p112 = scmp.ne.s32.totalorder %s97, %s111
    %p113 = scmp.eq.s32.totalorder %s19, 0
    %p114 = por %p112, %p113
    %s116 = sadd.s32 %s115, 1
    %p119 = scmp.eq.s32.totalorder %s13, 3
    %p120 = scmp.ne.s32.totalorder %s115, %s117
    %p121 = scmp.eq.s32.totalorder %s13, 0
    %p122 = por %p120, %p121
    %p123 = scmp.ne.s32.totalorder %s115, %s117
    %p124 = scmp.eq.s32.totalorder %s18, 3
    %p125 = por %p123, %p124
    %p126 = scmp.ne.s32.totalorder %s117, %s118
    %p127 = scmp.eq.s32.totalorder %s18, 0
    %p128 = por %p126, %p127
    %p129 = scmp.ne.s32.totalorder %s117, %s118
    %p130 = scmp.eq.s32.totalorder %s19, 3
    %p131 = por %p129, %p130
    %p133 = scmp.ne.s32.totalorder %s118, %s132
    %p134 = scmp.eq.s32.totalorder %s19, 0
    %p135 = por %p133, %p134
    %s137 = sadd.s32 %s136, 1
    %p140 = scmp.eq.s32.totalorder %s13, 3
    %p141 = scmp.ne.s32.totalorder %s136, %s138
    %p142 = scmp.eq.s32.totalorder %s13, 0
    %p143 = por %p141, %p142
    %p144 = scmp.ne.s32.totalorder %s136, %s138
    %p145 = scmp.eq.s32.totalorder %s18, 3
    %p146 = por %p144, %p145
    %p147 = scmp.ne.s32.totalorder %s138, %s139
    %p148 = scmp.eq.s32.totalorder %s18, 0
    %p149 = por %p147, %p148
    %p150 = scmp.ne.s32.totalorder %s138, %s139
    %p151 = scmp.eq.s32.totalorder %s19, 3
    %p152 = por %p150, %p151
    %p154 = scmp.ne.s32.totalorder %s139, %s153
    %p155 = scmp.eq.s32.totalorder %s19, 0
    %p156 = por %p154, %p155
    %s158 = sadd.s32 %s157, 1
    %p161 = scmp.eq.s32.totalorder %s13, 3
    %p162 = scmp.ne.s32.totalorder %s157, %s159
    %p163 = scmp.eq.s32.totalorder %s13, 0
    %p164 = por %p162, %p163
    %p165 = scmp.ne.s32.totalorder %s157, %s159
    %p166 = scmp.eq.s32.totalorder %s18, 3
    %p167 = por %p165, %p166
    %p168 = scmp.ne.s32.totalorder %s159, %s160
    %p169 = scmp.eq.s32.totalorder %s18, 0
    %p170 = por %p168, %p169
    %p171 = scmp.ne.s32.totalorder %s159, %s160
    %p172 = scmp.eq.s32.totalorder %s19, 3
    %p173 = por %p171, %p172
    %p175 = scmp.ne.s32.totalorder %s160, %s174
    %p176 = scmp.eq.s32.totalorder %s19, 0
    %p177 = por %p175, %p176
    %s178 = ssub.s32 %s13, %s20
    %p179 = scmp.eq.s32.totalorder %s178, 0
    %s181 = sadd.s32 %s180, 1
    %s182 = scalar_select %p179, %s180, %s181
    %p185 = pneg %p179
    %p186 = scmp.eq.s32.totalorder %s13, 3
    %p187 = por %p185, %p186
    %p188 = scmp.ne.s32.totalorder %s180, %s183
    %p189 = scmp.eq.s32.totalorder %s13, 0
    %p190 = por %p188, %p189
    %p191 = scmp.ne.s32.totalorder %s180, %s183
    %p192 = scmp.eq.s32.totalorder %s18, 3
    %p193 = por %p191, %p192
    %p194 = scmp.ne.s32.totalorder %s183, %s184
    %p195 = scmp.eq.s32.totalorder %s18, 0
    %p196 = por %p194, %p195
    %p197 = scmp.ne.s32.totalorder %s183, %s184
    %p198 = scmp.eq.s32.totalorder %s19, 3
    %p199 = por %p197, %p198
    %p201 = scmp.ne.s32.totalorder %s184, %s200
    %p202 = scmp.eq.s32.totalorder %s19, 0
    %p203 = por %p201, %p202
    %p204 = scmp.le.s32.totalorder 1, %s13
    %p205 = scmp.lt.s32.totalorder %s13, 5
    %p206 = pnand %p204, %p205
    %p207 = pneg %p206
    // Predicated region
    $region9: #{tpu_custom_call.1} parent=5 // pred_check
      _
    $region10: #{tpu_custom_call.1} parent=5 // pred_check_branch
      %209 = sbr.rel (%p206) target = $region12
    $region11: #{tpu_custom_call.1} parent=5 // pred_region
      %s210 = ssub.s32 %s13, 1
      // Predicated region
      $region13: #{tpu_custom_call.1} parent=11 // pred_check
        %p211 = pneg %p86
      $region14: #{tpu_custom_call.1} parent=11 // pred_check_branch
        %213 = sbr.rel (%p211) target = $region16
      $region15: #{tpu_custom_call.1} parent=11 // pred_region
        _
      $region16: #{tpu_custom_call.1} parent=11 // pred_fallthru
        _
      // Predicated region
      $region17: #{tpu_custom_call.1} parent=11 // pred_check
        %p214 = pneg %p107
      $region18: #{tpu_custom_call.1} parent=11 // pred_check_branch
        %216 = sbr.rel (%p214) target = $region20
      $region19: #{tpu_custom_call.1} parent=11 // pred_region
        _
      $region20: #{tpu_custom_call.1} parent=11 // pred_fallthru
        _
      // Predicated region
      $region21: #{tpu_custom_call.1} parent=11 // pred_check
        %p217 = pneg %p128
      $region22: #{tpu_custom_call.1} parent=11 // pred_check_branch
        %219 = sbr.rel (%p217) target = $region24
      $region23: #{tpu_custom_call.1} parent=11 // pred_region
        _
      $region24: #{tpu_custom_call.1} parent=11 // pred_fallthru
        _
      // Predicated region
      $region25: #{tpu_custom_call.1} parent=11 // pred_check
        %p220 = pneg %p149
      $region26: #{tpu_custom_call.1} parent=11 // pred_check_branch
        %222 = sbr.rel (%p220) target = $region28
      $region27: #{tpu_custom_call.1} parent=11 // pred_region
        _
      $region28: #{tpu_custom_call.1} parent=11 // pred_fallthru
        _
      // Predicated region
      $region29: #{tpu_custom_call.1} parent=11 // pred_check
        %p223 = pneg %p170
      $region30: #{tpu_custom_call.1} parent=11 // pred_check_branch
        %225 = sbr.rel (%p223) target = $region32
      $region31: #{tpu_custom_call.1} parent=11 // pred_region
        _
      $region32: #{tpu_custom_call.1} parent=11 // pred_fallthru
        _
    $region12: #{tpu_custom_call.1} parent=5 // pred_fallthru
      _
    %p226 = scmp.lt.s32.totalorder %s13, 4
    // Predicated region
    $region33: #{tpu_custom_call.1} parent=5 // pred_check
      %p227 = pneg %p226
    $region34: #{tpu_custom_call.1} parent=5 // pred_check_branch
      %229 = sbr.rel (%p227) target = $region36
    $region35: #{tpu_custom_call.1} parent=5 // pred_region
      // Predicated region
      $region37: #{tpu_custom_call.1} parent=35 // pred_check
        %p230 = pneg %p33
      $region38: #{tpu_custom_call.1} parent=35 // pred_check_branch
        %232 = sbr.rel (%p230) target = $region40
      $region39: #{tpu_custom_call.1} parent=35 // pred_region
        %s233 = smul.u32 64, %s13
        %p234 = scmp.lt.s32.totalorder %s233, 255
        %s235 = scalar_select %p234, %s233, 255
        %s236 = smul.addr %s235, 2
        %s237 = smul.addr %s236, 4
        %s238 = scalar_lea.vmem %s0, %s237
        %s239 = smul.u32 64, %s13
      $region40: #{tpu_custom_call.1} parent=35 // pred_fallthru
        _
      // Predicated region
      $region41: #{tpu_custom_call.1} parent=35 // pred_check
        %p240 = pneg %p59
      $region42: #{tpu_custom_call.1} parent=35 // pred_check_branch
        %242 = sbr.rel (%p240) target = $region44
      $region43: #{tpu_custom_call.1} parent=35 // pred_region
        %s243 = smul.u32 8, %s13
        %p244 = scmp.lt.s32.totalorder %s243, 31
        %s245 = scalar_select %p244, %s243, 31
        %s246 = smul.addr %s245, 8
        %s247 = scalar_lea.vmem %s1, %s246
        %s248 = smul.u32 8, %s13
      $region44: #{tpu_custom_call.1} parent=35 // pred_fallthru
        _
    $region36: #{tpu_custom_call.1} parent=5 // pred_fallthru
      _
    %p249 = scmp.le.s32.totalorder 1, %s13
    %p250 = scmp.lt.s32.totalorder %s13, 5
    %p251 = pnand %p249, %p250
    %p252 = pneg %p251
    // Predicated region
    $region45: #{tpu_custom_call.1} parent=5 // pred_check
      _
    $region46: #{tpu_custom_call.1} parent=5 // pred_check_branch
      %254 = sbr.rel (%p251) target = $region48
    $region47: #{tpu_custom_call.1} parent=5 // pred_region
      %s255 = ssub.s32 %s13, 1
      %s256 = smul.u32 64, %s18
      %p257 = scmp.lt.s32.totalorder %s256, 255
      %s258 = scalar_select %p257, %s256, 255
      %s259 = smul.addr %s258, 2
      %s260 = smul.addr %s259, 4
      %s261 = scalar_lea.vmem %s0, %s260
      %p262 = pneg %p39
      %p263 = pneg %p36
      %s264 = smul.u32 8, %s18
      %p265 = scmp.lt.s32.totalorder %s264, 31
      %s266 = scalar_select %p265, %s264, 31
      %s267 = smul.addr %s266, 8
      %s268 = scalar_lea.vmem %s1, %s267
      %p269 = pneg %p65
      %p270 = pneg %p62
      %p271 = pneg %p86
      %p272 = pneg %p83
      %p273 = pneg %p107
      %p274 = pneg %p104
      %p275 = pneg %p128
      %p276 = pneg %p125
      %p277 = pneg %p149
      %p278 = pneg %p146
      %p279 = pneg %p170
      %p280 = pneg %p167
      %p281 = pneg %p196
      %p282 = pneg %p193
      %s283 = smul.u32 8, %s18
      %p284 = scmp.lt.s32.totalorder %s283, 31
      %s285 = scalar_select %p284, %s283, 31
      %s286 = smul.addr %s285, 8
      %s287 = scalar_lea.vmem %s7, %s286
      %s288 = smul.u32 64, %s18
      %p289 = scmp.lt.s32.totalorder %s288, 255
      %s290 = scalar_select %p289, %s288, 255
      %s291 = smul.addr %s290, 2
      %s292 = smul.addr %s291, 4
      %s293 = scalar_lea.vmem %s0, %s292
      %s294 = smul.u32 64, %s18
      %s295 = smul.u32 8, %s18
      %p296 = scmp.lt.s32.totalorder %s295, 31
      %s297 = scalar_select %p296, %s295, 31
      %s298 = smul.addr %s297, 8
      %s299 = scalar_lea.vmem %s1, %s298
      %s300 = smul.u32 8, %s18
      %s301 = smul.u32 8, %s18
      %p302 = scmp.lt.s32.totalorder %s301, 31
      %s303 = scalar_select %p302, %s301, 31
      %s304 = smul.addr %s303, 8
      %s305 = scalar_lea.vmem %s7, %s304
      %s306 = smul.u32 8, %s18
      %v308 = vld [vmem:[%s293] sm:$0xf]
      %v309 = vld [vmem:[%s293 + $0x4] sm:$0xf]
      %v310 = vld [vmem:[%s293 + $0x8] sm:$0xf]
      %v311 = vld [vmem:[%s293 + $0xc] sm:$0xf]
      %v312 = vld [vmem:[%s293 + $0x10] sm:$0xf]
      %v313 = vld [vmem:[%s293 + $0x14] sm:$0xf]
      %v314 = vld [vmem:[%s293 + $0x18] sm:$0xf]
      %v315 = vld [vmem:[%s293 + $0x1c] sm:$0xf]
      %v316 = vld [vmem:[%s293 + $0x20] sm:$0xf]
      %v317 = vld [vmem:[%s293 + $0x24] sm:$0xf]
      %v318 = vld [vmem:[%s293 + $0x28] sm:$0xf]
      %v319 = vld [vmem:[%s293 + $0x2c] sm:$0xf]
      %v320 = vld [vmem:[%s293 + $0x30] sm:$0xf]
      %v321 = vld [vmem:[%s293 + $0x34] sm:$0xf]
      %v322 = vld [vmem:[%s293 + $0x38] sm:$0xf]
      %v323 = vld [vmem:[%s293 + $0x3c] sm:$0xf]
      %v324 = vld [vmem:[%s293 + $0x40] sm:$0xf]
      %v325 = vld [vmem:[%s293 + $0x44] sm:$0xf]
      %v326 = vld [vmem:[%s293 + $0x48] sm:$0xf]
      %v327 = vld [vmem:[%s293 + $0x4c] sm:$0xf]
      %v328 = vld [vmem:[%s293 + $0x50] sm:$0xf]
      %v329 = vld [vmem:[%s293 + $0x54] sm:$0xf]
      %v330 = vld [vmem:[%s293 + $0x58] sm:$0xf]
      %v331 = vld [vmem:[%s293 + $0x5c] sm:$0xf]
      %v332 = vld [vmem:[%s293 + $0x60] sm:$0xf]
      %v333 = vld [vmem:[%s293 + $0x64] sm:$0xf]
      %v334 = vld [vmem:[%s293 + $0x68] sm:$0xf]
      %v335 = vld [vmem:[%s293 + $0x6c] sm:$0xf]
      %v336 = vld [vmem:[%s293 + $0x70] sm:$0xf]
      %v337 = vld [vmem:[%s293 + $0x74] sm:$0xf]
      %v338 = vld [vmem:[%s293 + $0x78] sm:$0xf]
      %v339 = vld [vmem:[%s293 + $0x7c] sm:$0xf]
      %v340 = vld [vmem:[%s293 + $0x80] sm:$0xf]
      %v341 = vld [vmem:[%s293 + $0x84] sm:$0xf]
      %v342 = vld [vmem:[%s293 + $0x88] sm:$0xf]
      %v343 = vld [vmem:[%s293 + $0x8c] sm:$0xf]
      %v344 = vld [vmem:[%s293 + $0x90] sm:$0xf]
      %v345 = vld [vmem:[%s293 + $0x94] sm:$0xf]
      %v346 = vld [vmem:[%s293 + $0x98] sm:$0xf]
      %v347 = vld [vmem:[%s293 + $0x9c] sm:$0xf]
      %v348 = vld [vmem:[%s293 + $0xa0] sm:$0xf]
      %v349 = vld [vmem:[%s293 + $0xa4] sm:$0xf]
      %v350 = vld [vmem:[%s293 + $0xa8] sm:$0xf]
      %v351 = vld [vmem:[%s293 + $0xac] sm:$0xf]
      %v352 = vld [vmem:[%s293 + $0xb0] sm:$0xf]
      %v353 = vld [vmem:[%s293 + $0xb4] sm:$0xf]
      %v354 = vld [vmem:[%s293 + $0xb8] sm:$0xf]
      %v355 = vld [vmem:[%s293 + $0xbc] sm:$0xf]
      %v356 = vld [vmem:[%s293 + $0xc0] sm:$0xf]
      %v357 = vld [vmem:[%s293 + $0xc4] sm:$0xf]
      %v358 = vld [vmem:[%s293 + $0xc8] sm:$0xf]
      %v359 = vld [vmem:[%s293 + $0xcc] sm:$0xf]
      %v360 = vld [vmem:[%s293 + $0xd0] sm:$0xf]
      %v361 = vld [vmem:[%s293 + $0xd4] sm:$0xf]
      %v362 = vld [vmem:[%s293 + $0xd8] sm:$0xf]
      %v363 = vld [vmem:[%s293 + $0xdc] sm:$0xf]
      %v364 = vld [vmem:[%s293 + $0xe0] sm:$0xf]
      %v365 = vld [vmem:[%s293 + $0xe4] sm:$0xf]
      %v366 = vld [vmem:[%s293 + $0xe8] sm:$0xf]
      %v367 = vld [vmem:[%s293 + $0xec] sm:$0xf]
      %v368 = vld [vmem:[%s293 + $0xf0] sm:$0xf]
      %v369 = vld [vmem:[%s293 + $0xf4] sm:$0xf]
      %v370 = vld [vmem:[%s293 + $0xf8] sm:$0xf]
      %v371 = vld [vmem:[%s293 + $0xfc] sm:$0xf]
      %v372 = vld [vmem:[%s293 + $0x100] sm:$0xf]
      %v373 = vld [vmem:[%s293 + $0x104] sm:$0xf]
      %v374 = vld [vmem:[%s293 + $0x108] sm:$0xf]
      %v375 = vld [vmem:[%s293 + $0x10c] sm:$0xf]
      %v376 = vld [vmem:[%s293 + $0x110] sm:$0xf]
      %v377 = vld [vmem:[%s293 + $0x114] sm:$0xf]
      %v378 = vld [vmem:[%s293 + $0x118] sm:$0xf]
      %v379 = vld [vmem:[%s293 + $0x11c] sm:$0xf]
      %v380 = vld [vmem:[%s293 + $0x120] sm:$0xf]
      %v381 = vld [vmem:[%s293 + $0x124] sm:$0xf]
      %v382 = vld [vmem:[%s293 + $0x128] sm:$0xf]
      %v383 = vld [vmem:[%s293 + $0x12c] sm:$0xf]
      %v384 = vld [vmem:[%s293 + $0x130] sm:$0xf]
      %v385 = vld [vmem:[%s293 + $0x134] sm:$0xf]
      %v386 = vld [vmem:[%s293 + $0x138] sm:$0xf]
      %v387 = vld [vmem:[%s293 + $0x13c] sm:$0xf]
      %v388 = vld [vmem:[%s293 + $0x140] sm:$0xf]
      %v389 = vld [vmem:[%s293 + $0x144] sm:$0xf]
      %v390 = vld [vmem:[%s293 + $0x148] sm:$0xf]
      %v391 = vld [vmem:[%s293 + $0x14c] sm:$0xf]
      %v392 = vld [vmem:[%s293 + $0x150] sm:$0xf]
      %v393 = vld [vmem:[%s293 + $0x154] sm:$0xf]
      %v394 = vld [vmem:[%s293 + $0x158] sm:$0xf]
      %v395 = vld [vmem:[%s293 + $0x15c] sm:$0xf]
      %v396 = vld [vmem:[%s293 + $0x160] sm:$0xf]
      %v397 = vld [vmem:[%s293 + $0x164] sm:$0xf]
      %v398 = vld [vmem:[%s293 + $0x168] sm:$0xf]
      %v399 = vld [vmem:[%s293 + $0x16c] sm:$0xf]
      %v400 = vld [vmem:[%s293 + $0x170] sm:$0xf]
      %v401 = vld [vmem:[%s293 + $0x174] sm:$0xf]
      %v402 = vld [vmem:[%s293 + $0x178] sm:$0xf]
      %v403 = vld [vmem:[%s293 + $0x17c] sm:$0xf]
      %v404 = vld [vmem:[%s293 + $0x180] sm:$0xf]
      %v405 = vld [vmem:[%s293 + $0x184] sm:$0xf]
      %v406 = vld [vmem:[%s293 + $0x188] sm:$0xf]
      %v407 = vld [vmem:[%s293 + $0x18c] sm:$0xf]
      %v408 = vld [vmem:[%s293 + $0x190] sm:$0xf]
      %v409 = vld [vmem:[%s293 + $0x194] sm:$0xf]
      %v410 = vld [vmem:[%s293 + $0x198] sm:$0xf]
      %v411 = vld [vmem:[%s293 + $0x19c] sm:$0xf]
      %v412 = vld [vmem:[%s293 + $0x1a0] sm:$0xf]
      %v413 = vld [vmem:[%s293 + $0x1a4] sm:$0xf]
      %v414 = vld [vmem:[%s293 + $0x1a8] sm:$0xf]
      %v415 = vld [vmem:[%s293 + $0x1ac] sm:$0xf]
      %v416 = vld [vmem:[%s293 + $0x1b0] sm:$0xf]
      %v417 = vld [vmem:[%s293 + $0x1b4] sm:$0xf]
      %v418 = vld [vmem:[%s293 + $0x1b8] sm:$0xf]
      %v419 = vld [vmem:[%s293 + $0x1bc] sm:$0xf]
      %v420 = vld [vmem:[%s293 + $0x1c0] sm:$0xf]
      %v421 = vld [vmem:[%s293 + $0x1c4] sm:$0xf]
      %v422 = vld [vmem:[%s293 + $0x1c8] sm:$0xf]
      %v423 = vld [vmem:[%s293 + $0x1cc] sm:$0xf]
      %v424 = vld [vmem:[%s293 + $0x1d0] sm:$0xf]
      %v425 = vld [vmem:[%s293 + $0x1d4] sm:$0xf]
      %v426 = vld [vmem:[%s293 + $0x1d8] sm:$0xf]
      %v427 = vld [vmem:[%s293 + $0x1dc] sm:$0xf]
      %v428 = vld [vmem:[%s293 + $0x1e0] sm:$0xf]
      %v429 = vld [vmem:[%s293 + $0x1e4] sm:$0xf]
      %v430 = vld [vmem:[%s293 + $0x1e8] sm:$0xf]
      %v431 = vld [vmem:[%s293 + $0x1ec] sm:$0xf]
      %v432 = vld [vmem:[%s293 + $0x1f0] sm:$0xf]
      %v433 = vld [vmem:[%s293 + $0x1f4] sm:$0xf]
      %v434 = vld [vmem:[%s293 + $0x1f8] sm:$0xf]
      %v435 = vld [vmem:[%s293 + $0x1fc] sm:$0xf]
      %v436 = vld [vmem:[%s2] sm:$0xf]
      %v437 = vld [vmem:[%s2 + $0x4] sm:$0xf]
      %v438 = vld [vmem:[%s2 + $0x8] sm:$0xf]
      %v439 = vld [vmem:[%s2 + $0xc] sm:$0xf]
      %v440 = vld [vmem:[%s2 + $0x10] sm:$0x3]
      %v569 = vunpack.c.l.b16 %v308
      %v570 = vunpack.c.l.b16 %v309
      %v571 = vunpack.c.l.b16 %v310
      %v572 = vunpack.c.l.b16 %v311
      %v573 = vunpack.c.l.b16 %v312
      %v574 = vunpack.c.l.b16 %v313
      %v575 = vunpack.c.l.b16 %v314
      %v576 = vunpack.c.l.b16 %v315
      %v577 = vunpack.c.l.b16 %v316
      %v578 = vunpack.c.l.b16 %v317
      %v579 = vunpack.c.l.b16 %v318
      %v580 = vunpack.c.l.b16 %v319
      %v581 = vunpack.c.l.b16 %v320
      %v582 = vunpack.c.l.b16 %v321
      %v583 = vunpack.c.l.b16 %v322
      %v584 = vunpack.c.l.b16 %v323
      %v585 = vunpack.c.l.b16 %v324
      %v586 = vunpack.c.l.b16 %v325
      %v587 = vunpack.c.l.b16 %v326
      %v588 = vunpack.c.l.b16 %v327
      %v589 = vunpack.c.l.b16 %v328
      %v590 = vunpack.c.l.b16 %v329
      %v591 = vunpack.c.l.b16 %v330
      %v592 = vunpack.c.l.b16 %v331
      %v593 = vunpack.c.l.b16 %v332
      %v594 = vunpack.c.l.b16 %v333
      %v595 = vunpack.c.l.b16 %v334
      %v596 = vunpack.c.l.b16 %v335
      %v597 = vunpack.c.l.b16 %v336
      %v598 = vunpack.c.l.b16 %v337
      %v599 = vunpack.c.l.b16 %v338
      %v600 = vunpack.c.l.b16 %v339
      %v601 = vunpack.c.l.b16 %v340
      %v602 = vunpack.c.l.b16 %v341
      %v603 = vunpack.c.l.b16 %v342
      %v604 = vunpack.c.l.b16 %v343
      %v605 = vunpack.c.l.b16 %v344
      %v606 = vunpack.c.l.b16 %v345
      %v607 = vunpack.c.l.b16 %v346
      %v608 = vunpack.c.l.b16 %v347
      %v609 = vunpack.c.l.b16 %v348
      %v610 = vunpack.c.l.b16 %v349
      %v611 = vunpack.c.l.b16 %v350
      %v612 = vunpack.c.l.b16 %v351
      %v613 = vunpack.c.l.b16 %v352
      %v614 = vunpack.c.l.b16 %v353
      %v615 = vunpack.c.l.b16 %v354
      %v616 = vunpack.c.l.b16 %v355
      %v617 = vunpack.c.l.b16 %v356
      %v618 = vunpack.c.l.b16 %v357
      %v619 = vunpack.c.l.b16 %v358
      %v620 = vunpack.c.l.b16 %v359
      %v621 = vunpack.c.l.b16 %v360
      %v622 = vunpack.c.l.b16 %v361
      %v623 = vunpack.c.l.b16 %v362
      %v624 = vunpack.c.l.b16 %v363
      %v625 = vunpack.c.l.b16 %v364
      %v626 = vunpack.c.l.b16 %v365
      %v627 = vunpack.c.l.b16 %v366
      %v628 = vunpack.c.l.b16 %v367
      %v629 = vunpack.c.l.b16 %v368
      %v630 = vunpack.c.l.b16 %v369
      %v631 = vunpack.c.l.b16 %v370
      %v632 = vunpack.c.l.b16 %v371
      %v633 = vunpack.c.l.b16 %v372
      %v634 = vunpack.c.l.b16 %v373
      %v635 = vunpack.c.l.b16 %v374
      %v636 = vunpack.c.l.b16 %v375
      %v637 = vunpack.c.l.b16 %v376
      %v638 = vunpack.c.l.b16 %v377
      %v639 = vunpack.c.l.b16 %v378
      %v640 = vunpack.c.l.b16 %v379
      %v641 = vunpack.c.l.b16 %v380
      %v642 = vunpack.c.l.b16 %v381
      %v643 = vunpack.c.l.b16 %v382
      %v644 = vunpack.c.l.b16 %v383
      %v645 = vunpack.c.l.b16 %v384
      %v646 = vunpack.c.l.b16 %v385
      %v647 = vunpack.c.l.b16 %v386
      %v648 = vunpack.c.l.b16 %v387
      %v649 = vunpack.c.l.b16 %v388
      %v650 = vunpack.c.l.b16 %v389
      %v651 = vunpack.c.l.b16 %v390
      %v652 = vunpack.c.l.b16 %v391
      %v653 = vunpack.c.l.b16 %v392
      %v654 = vunpack.c.l.b16 %v393
      %v655 = vunpack.c.l.b16 %v394
      %v656 = vunpack.c.l.b16 %v395
      %v657 = vunpack.c.l.b16 %v396
      %v658 = vunpack.c.l.b16 %v397
      %v659 = vunpack.c.l.b16 %v398
      %v660 = vunpack.c.l.b16 %v399
      %v661 = vunpack.c.l.b16 %v400
      %v662 = vunpack.c.l.b16 %v401
      %v663 = vunpack.c.l.b16 %v402
      %v664 = vunpack.c.l.b16 %v403
      %v665 = vunpack.c.l.b16 %v404
      %v666 = vunpack.c.l.b16 %v405
      %v667 = vunpack.c.l.b16 %v406
      %v668 = vunpack.c.l.b16 %v407
      %v669 = vunpack.c.l.b16 %v408
      %v670 = vunpack.c.l.b16 %v409
      %v671 = vunpack.c.l.b16 %v410
      %v672 = vunpack.c.l.b16 %v411
      %v673 = vunpack.c.l.b16 %v412
      %v674 = vunpack.c.l.b16 %v413
      %v675 = vunpack.c.l.b16 %v414
      %v676 = vunpack.c.l.b16 %v415
      %v677 = vunpack.c.l.b16 %v416
      %v678 = vunpack.c.l.b16 %v417
      %v679 = vunpack.c.l.b16 %v418
      %v680 = vunpack.c.l.b16 %v419
      %v681 = vunpack.c.l.b16 %v420
      %v682 = vunpack.c.l.b16 %v421
      %v683 = vunpack.c.l.b16 %v422
      %v684 = vunpack.c.l.b16 %v423
      %v685 = vunpack.c.l.b16 %v424
      %v686 = vunpack.c.l.b16 %v425
      %v687 = vunpack.c.l.b16 %v426
      %v688 = vunpack.c.l.b16 %v427
      %v689 = vunpack.c.l.b16 %v428
      %v690 = vunpack.c.l.b16 %v429
      %v691 = vunpack.c.l.b16 %v430
      %v692 = vunpack.c.l.b16 %v431
      %v693 = vunpack.c.l.b16 %v432
      %v694 = vunpack.c.l.b16 %v433
      %v695 = vunpack.c.l.b16 %v434
      %v696 = vunpack.c.l.b16 %v435
      %v697 = vpack.c.b16 %v570, %v569
      %v698 = vpack.c.b16 %v572, %v571
      %v699 = vpack.c.b16 %v574, %v573
      %v700 = vpack.c.b16 %v576, %v575
      %v701 = vpack.c.b16 %v578, %v577
      %v702 = vpack.c.b16 %v580, %v579
      %v703 = vpack.c.b16 %v582, %v581
      %v704 = vpack.c.b16 %v584, %v583
      %v705 = vpack.c.b16 %v586, %v585
      %v706 = vpack.c.b16 %v588, %v587
      %v707 = vpack.c.b16 %v590, %v589
      %v708 = vpack.c.b16 %v592, %v591
      %v709 = vpack.c.b16 %v594, %v593
      %v710 = vpack.c.b16 %v596, %v595
      %v711 = vpack.c.b16 %v598, %v597
      %v712 = vpack.c.b16 %v600, %v599
      %v713 = vpack.c.b16 %v602, %v601
      %v714 = vpack.c.b16 %v604, %v603
      %v715 = vpack.c.b16 %v606, %v605
      %v716 = vpack.c.b16 %v608, %v607
      %v717 = vpack.c.b16 %v610, %v609
      %v718 = vpack.c.b16 %v612, %v611
      %v719 = vpack.c.b16 %v614, %v613
      %v720 = vpack.c.b16 %v616, %v615
      %v721 = vpack.c.b16 %v618, %v617
      %v722 = vpack.c.b16 %v620, %v619
      %v723 = vpack.c.b16 %v622, %v621
      %v724 = vpack.c.b16 %v624, %v623
      %v725 = vpack.c.b16 %v626, %v625
      %v726 = vpack.c.b16 %v628, %v627
      %v727 = vpack.c.b16 %v630, %v629
      %v728 = vpack.c.b16 %v632, %v631
      %v729 = vpack.c.b16 %v634, %v633
      %v730 = vpack.c.b16 %v636, %v635
      %v731 = vpack.c.b16 %v638, %v637
      %v732 = vpack.c.b16 %v640, %v639
      %v733 = vpack.c.b16 %v642, %v641
      %v734 = vpack.c.b16 %v644, %v643
      %v735 = vpack.c.b16 %v646, %v645
      %v736 = vpack.c.b16 %v648, %v647
      %v737 = vpack.c.b16 %v650, %v649
      %v738 = vpack.c.b16 %v652, %v651
      %v739 = vpack.c.b16 %v654, %v653
      %v740 = vpack.c.b16 %v656, %v655
      %v741 = vpack.c.b16 %v658, %v657
      %v742 = vpack.c.b16 %v660, %v659
      %v743 = vpack.c.b16 %v662, %v661
      %v744 = vpack.c.b16 %v664, %v663
      %v745 = vpack.c.b16 %v666, %v665
      %v746 = vpack.c.b16 %v668, %v667
      %v747 = vpack.c.b16 %v670, %v669
      %v748 = vpack.c.b16 %v672, %v671
      %v749 = vpack.c.b16 %v674, %v673
      %v750 = vpack.c.b16 %v676, %v675
      %v751 = vpack.c.b16 %v678, %v677
      %v752 = vpack.c.b16 %v680, %v679
      %v753 = vpack.c.b16 %v682, %v681
      %v754 = vpack.c.b16 %v684, %v683
      %v755 = vpack.c.b16 %v686, %v685
      %v756 = vpack.c.b16 %v688, %v687
      %v757 = vpack.c.b16 %v690, %v689
      %v758 = vpack.c.b16 %v692, %v691
      %v759 = vpack.c.b16 %v694, %v693
      %v760 = vpack.c.b16 %v696, %v695
      %v766 = vunpack.c.l.b16 %v436
      %v767 = vunpack.c.l.b16 %v437
      %v768 = vunpack.c.l.b16 %v438
      %v769 = vunpack.c.l.b16 %v439
      %v770 = vunpack.c.l.b16 %v440
      %v771 = vpack.c.b16 %v767, %v766
      %v772 = vpack.c.b16 %v769, %v768
      %v773 = vpack.c.b16 %v770, %v770
      %vm776 = vcmask 293888
      %v778 = vsel %vm776, %v697, 0
      %v781 = vsel %vm776, %v698, 0
      %v784 = vsel %vm776, %v699, 0
      %v787 = vsel %vm776, %v700, 0
      %v790 = vsel %vm776, %v701, 0
      %v793 = vsel %vm776, %v702, 0
      %v796 = vsel %vm776, %v703, 0
      %v799 = vsel %vm776, %v704, 0
      %v802 = vsel %vm776, %v705, 0
      %v805 = vsel %vm776, %v706, 0
      %v808 = vsel %vm776, %v707, 0
      %v811 = vsel %vm776, %v708, 0
      %v814 = vsel %vm776, %v709, 0
      %v817 = vsel %vm776, %v710, 0
      %v820 = vsel %vm776, %v711, 0
      %v823 = vsel %vm776, %v712, 0
      %v826 = vsel %vm776, %v713, 0
      %v829 = vsel %vm776, %v714, 0
      %v832 = vsel %vm776, %v715, 0
      %v835 = vsel %vm776, %v716, 0
      %v838 = vsel %vm776, %v717, 0
      %v841 = vsel %vm776, %v718, 0
      %v844 = vsel %vm776, %v719, 0
      %v847 = vsel %vm776, %v720, 0
      %v850 = vsel %vm776, %v721, 0
      %v853 = vsel %vm776, %v722, 0
      %v856 = vsel %vm776, %v723, 0
      %v859 = vsel %vm776, %v724, 0
      %v862 = vsel %vm776, %v725, 0
      %v865 = vsel %vm776, %v726, 0
      %v868 = vsel %vm776, %v727, 0
      %v871 = vsel %vm776, %v728, 0
      %v874 = vsel %vm776, %v729, 0
      %v877 = vsel %vm776, %v730, 0
      %v880 = vsel %vm776, %v731, 0
      %v883 = vsel %vm776, %v732, 0
      %v886 = vsel %vm776, %v733, 0
      %v889 = vsel %vm776, %v734, 0
      %v892 = vsel %vm776, %v735, 0
      %v895 = vsel %vm776, %v736, 0
      %v898 = vsel %vm776, %v737, 0
      %v901 = vsel %vm776, %v738, 0
      %v904 = vsel %vm776, %v739, 0
      %v907 = vsel %vm776, %v740, 0
      %v910 = vsel %vm776, %v741, 0
      %v913 = vsel %vm776, %v742, 0
      %v916 = vsel %vm776, %v743, 0
      %v919 = vsel %vm776, %v744, 0
      %v922 = vsel %vm776, %v745, 0
      %v925 = vsel %vm776, %v746, 0
      %v928 = vsel %vm776, %v747, 0
      %v931 = vsel %vm776, %v748, 0
      %v934 = vsel %vm776, %v749, 0
      %v937 = vsel %vm776, %v750, 0
      %v940 = vsel %vm776, %v751, 0
      %v943 = vsel %vm776, %v752, 0
      %v946 = vsel %vm776, %v753, 0
      %v949 = vsel %vm776, %v754, 0
      %v952 = vsel %vm776, %v755, 0
      %v955 = vsel %vm776, %v756, 0
      %v958 = vsel %vm776, %v757, 0
      %v961 = vsel %vm776, %v758, 0
      %v964 = vsel %vm776, %v759, 0
      %v967 = vsel %vm776, %v760, 0
      %vm969 = vcmask 1041408
      %v971 = vsel %vm969, %v773, 0
      %973 = vmatprep.subr.bf16.mxu0 0
      %974 = vmatpush1.bf16.msra.mxu0 %v771
      %975 = vmatprep.subr.bf16.mxu0 0
      %976 = vmatpush1.bf16.msra.mxu0 %v772
      %977 = vmatprep.subr.bf16.mxu0 0
      %978 = vmatpush1.bf16.msra.mxu0 %v971
      %979 = vmatprep.subr.bf16.mxu0 0
      %980 = vmatpush1.bf16.msra.mxu0 0
      %981 = vmatprep.subr.bf16.mxu0 0
      %982 = vmatpush1.bf16.msra.mxu0 0
      %983 = vmatprep.subr.bf16.mxu0 0
      %984 = vmatpush1.bf16.msra.mxu0 0
      %985 = vmatprep.subr.bf16.mxu0 0
      %986 = vmatpush1.bf16.msra.mxu0 0
      %987 = vmatprep.subr.bf16.mxu0 0
      %988 = vmatpush1.bf16.msra.mxu0 0
      %989 = vmatprep.subr.bf16.mxu0 0
      %990 = vmatpush1.bf16.msra.mxu0 0
      %991 = vmatprep.subr.bf16.mxu0 0
      %992 = vmatpush1.bf16.msra.mxu0 0
      %993 = vmatprep.subr.bf16.mxu0 0
      %994 = vmatpush1.bf16.msra.mxu0 0
      %995 = vmatprep.subr.bf16.mxu0 0
      %996 = vmatpush1.bf16.msra.mxu0 0
      %997 = vmatprep.subr.bf16.mxu0 0
      %998 = vmatpush1.bf16.msra.mxu0 0
      %999 = vmatprep.subr.bf16.mxu0 0
      %1000 = vmatpush1.bf16.msra.mxu0 0
      %1001 = vmatprep.subr.bf16.mxu0 0
      %1002 = vmatpush1.bf16.msra.mxu0 0
      %1003 = vmatprep.subr.bf16.mxu0 0
      %1004 = vmatpush1.bf16.msra.mxu0 0
      %1005 = vmatprep.mubr.bf16.mxu0 0
      %1006 = vmatmul.mubr.bf16.gmra.mrb[0].mxu0 %v778
      %v1007 = vpop.f32.mrb[0].mxu0
      %v1008 = vadd.f32 0.0, %v1007
      %v1009 = vpop.f32.mrb[0].mxu0
      %v1010 = vpop.f32.mrb[0].mxu0
      %v1011 = vadd.f32 0.0, %v1010
      %v1012 = vpop.f32.mrb[0].mxu0
      %1013 = vmatprep.mubr.bf16.mxu0 0
      %1014 = vmatmul.mubr.bf16.gmra.mrb[0].mxu0 %v781
      %v1015 = vpop.f32.mrb[0].mxu0
      %v1016 = vadd.f32 0.0, %v1015
      %v1017 = vpop.f32.mrb[0].mxu0
      %v1018 = vpop.f32.mrb[0].mxu0
      %v1019 = vadd.f32 0.0, %v1018
      %v1020 = vpop.f32.mrb[0].mxu0
      %1021 = vmatprep.mubr.bf16.mxu0 0
      %1022 = vmatmul.mubr.bf16.gmra.mrb[0].mxu0 %v784
      %v1023 = vpop.f32.mrb[0].mxu0
      %v1024 = vadd.f32 0.0, %v1023
      %v1025 = vpop.f32.mrb[0].mxu0
      %v1026 = vpop.f32.mrb[0].mxu0
      %v1027 = vadd.f32 0.0, %v1026
      %v1028 = vpop.f32.mrb[0].mxu0
      %1029 = vmatprep.mubr.bf16.mxu0 0
      %1030 = vmatmul.mubr.bf16.gmra.mrb[0].mxu0 %v787
      %v1031 = vpop.f32.mrb[0].mxu0
      %v1032 = vadd.f32 0.0, %v1031
      %v1033 = vpop.f32.mrb[0].mxu0
      %v1034 = vpop.f32.mrb[0].mxu0
      %v1035 = vadd.f32 0.0, %v1034
      %v1036 = vpop.f32.mrb[0].mxu0
      %1037 = vmatprep.mubr.bf16.mxu0 0
      %1038 = vmatmul.mubr.bf16.gmra.mrb[0].mxu0 %v790
      %v1039 = vpop.f32.mrb[0].mxu0
      %v1040 = vadd.f32 0.0, %v1039
      %v1041 = vpop.f32.mrb[0].mxu0
      %v1042 = vpop.f32.mrb[0].mxu0
      %v1043 = vadd.f32 0.0, %v1042
      %v1044 = vpop.f32.mrb[0].mxu0
      %1045 = vmatprep.mubr.bf16.mxu0 0
      %1046 = vmatmul.mubr.bf16.gmra.mrb[0].mxu0 %v793
      %v1047 = vpop.f32.mrb[0].mxu0
      %v1048 = vadd.f32 0.0, %v1047
      %v1049 = vpop.f32.mrb[0].mxu0
      %v1050 = vpop.f32.mrb[0].mxu0
      %v1051 = vadd.f32 0.0, %v1050
      %v1052 = vpop.f32.mrb[0].mxu0
      %1053 = vmatprep.mubr.bf16.mxu0 0
      %1054 = vmatmul.mubr.bf16.gmra.mrb[0].mxu0 %v796
      %v1055 = vpop.f32.mrb[0].mxu0
      %v1056 = vadd.f32 0.0, %v1055
      %v1057 = vpop.f32.mrb[0].mxu0
      %v1058 = vpop.f32.mrb[0].mxu0
      %v1059 = vadd.f32 0.0, %v1058
      %v1060 = vpop.f32.mrb[0].mxu0
      %1061 = vmatprep.mubr.bf16.mxu0 0
      %1062 = vmatmul.mubr.bf16.gmra.mrb[0].mxu0 %v799
      %v1063 = vpop.f32.mrb[0].mxu0
      %v1064 = vadd.f32 0.0, %v1063
      %v1065 = vpop.f32.mrb[0].mxu0
      %v1066 = vpop.f32.mrb[0].mxu0
      %v1067 = vadd.f32 0.0, %v1066
      %v1068 = vpop.f32.mrb[0].mxu0
      %1069 = vmatprep.mubr.bf16.mxu0 0
      %1070 = vmatmul.mubr.bf16.gmra.mrb[0].mxu0 %v802
      %v1071 = vpop.f32.mrb[0].mxu0
      %v1072 = vadd.f32 0.0, %v1071
      %v1073 = vpop.f32.mrb[0].mxu0
      %v1074 = vpop.f32.mrb[0].mxu0
      %v1075 = vadd.f32 0.0, %v1074
      %v1076 = vpop.f32.mrb[0].mxu0
      %1077 = vmatprep.mubr.bf16.mxu0 0
      %1078 = vmatmul.mubr.bf16.gmra.mrb[0].mxu0 %v805
      %v1079 = vpop.f32.mrb[0].mxu0
      %v1080 = vadd.f32 0.0, %v1079
      %v1081 = vpop.f32.mrb[0].mxu0
      %v1082 = vpop.f32.mrb[0].mxu0
      %v1083 = vadd.f32 0.0, %v1082
      %v1084 = vpop.f32.mrb[0].mxu0
      %1085 = vmatprep.mubr.bf16.mxu0 0
      %1086 = vmatmul.mubr.bf16.gmra.mrb[0].mxu0 %v808
      %v1087 = vpop.f32.mrb[0].mxu0
      %v1088 = vadd.f32 0.0, %v1087
      %v1089 = vpop.f32.mrb[0].mxu0
      %v1090 = vpop.f32.mrb[0].mxu0
      %v1091 = vadd.f32 0.0, %v1090
      %v1092 = vpop.f32.mrb[0].mxu0
      %1093 = vmatprep.mubr.bf16.mxu0 0
      %1094 = vmatmul.mubr.bf16.gmra.mrb[0].mxu0 %v811
      %v1095 = vpop.f32.mrb[0].mxu0
      %v1096 = vadd.f32 0.0, %v1095
      %v1097 = vpop.f32.mrb[0].mxu0
      %v1098 = vpop.f32.mrb[0].mxu0
      %v1099 = vadd.f32 0.0, %v1098
      %v1100 = vpop.f32.mrb[0].mxu0
      %1101 = vmatprep.mubr.bf16.mxu0 0
      %1102 = vmatmul.mubr.bf16.gmra.mrb[0].mxu0 %v814
      %v1103 = vpop.f32.mrb[0].mxu0
      %v1104 = vadd.f32 0.0, %v1103
      %v1105 = vpop.f32.mrb[0].mxu0
      %v1106 = vpop.f32.mrb[0].mxu0
      %v1107 = vadd.f32 0.0, %v1106
      %v1108 = vpop.f32.mrb[0].mxu0
      %1109 = vmatprep.mubr.bf16.mxu0 0
      %1110 = vmatmul.mubr.bf16.gmra.mrb[0].mxu0 %v817
      %v1111 = vpop.f32.mrb[0].mxu0
      %v1112 = vadd.f32 0.0, %v1111
      %v1113 = vpop.f32.mrb[0].mxu0
      %v1114 = vpop.f32.mrb[0].mxu0
      %v1115 = vadd.f32 0.0, %v1114
      %v1116 = vpop.f32.mrb[0].mxu0
      %1117 = vmatprep.mubr.bf16.mxu0 0
      %1118 = vmatmul.mubr.bf16.gmra.mrb[0].mxu0 %v820
      %v1119 = vpop.f32.mrb[0].mxu0
      %v1120 = vadd.f32 0.0, %v1119
      %v1121 = vpop.f32.mrb[0].mxu0
      %v1122 = vpop.f32.mrb[0].mxu0
      %v1123 = vadd.f32 0.0, %v1122
      %v1124 = vpop.f32.mrb[0].mxu0
      %1125 = vmatprep.mubr.bf16.mxu0 0
      %1126 = vmatmul.mubr.bf16.gmra.mrb[0].mxu0 %v823
      %v1127 = vpop.f32.mrb[0].mxu0
      %v1128 = vadd.f32 0.0, %v1127
      %v1129 = vpop.f32.mrb[0].mxu0
      %v1130 = vpop.f32.mrb[0].mxu0
      %v1131 = vadd.f32 0.0, %v1130
      %v1132 = vpop.f32.mrb[0].mxu0
      %1133 = vmatprep.mubr.bf16.mxu0 0
      %1134 = vmatmul.mubr.bf16.gmra.mrb[0].mxu0 %v826
      %v1135 = vpop.f32.mrb[0].mxu0
      %v1136 = vadd.f32 0.0, %v1135
      %v1137 = vpop.f32.mrb[0].mxu0
      %v1138 = vpop.f32.mrb[0].mxu0
      %v1139 = vadd.f32 0.0, %v1138
      %v1140 = vpop.f32.mrb[0].mxu0
      %1141 = vmatprep.mubr.bf16.mxu0 0
      %1142 = vmatmul.mubr.bf16.gmra.mrb[0].mxu0 %v829
      %v1143 = vpop.f32.mrb[0].mxu0
      %v1144 = vadd.f32 0.0, %v1143
      %v1145 = vpop.f32.mrb[0].mxu0
      %v1146 = vpop.f32.mrb[0].mxu0
      %v1147 = vadd.f32 0.0, %v1146
      %v1148 = vpop.f32.mrb[0].mxu0
      %1149 = vmatprep.mubr.bf16.mxu0 0
      %1150 = vmatmul.mubr.bf16.gmra.mrb[0].mxu0 %v832
      %v1151 = vpop.f32.mrb[0].mxu0
      %v1152 = vadd.f32 0.0, %v1151
      %v1153 = vpop.f32.mrb[0].mxu0
      %v1154 = vpop.f32.mrb[0].mxu0
      %v1155 = vadd.f32 0.0, %v1154
      %v1156 = vpop.f32.mrb[0].mxu0
      %1157 = vmatprep.mubr.bf16.mxu0 0
      %1158 = vmatmul.mubr.bf16.gmra.mrb[0].mxu0 %v835
      %v1159 = vpop.f32.mrb[0].mxu0
      %v1160 = vadd.f32 0.0, %v1159
      %v1161 = vpop.f32.mrb[0].mxu0
      %v1162 = vpop.f32.mrb[0].mxu0
      %v1163 = vadd.f32 0.0, %v1162
      %v1164 = vpop.f32.mrb[0].mxu0
      %1165 = vmatprep.mubr.bf16.mxu0 0
      %1166 = vmatmul.mubr.bf16.gmra.mrb[0].mxu0 %v838
      %v1167 = vpop.f32.mrb[0].mxu0
      %v1168 = vadd.f32 0.0, %v1167
      %v1169 = vpop.f32.mrb[0].mxu0
      %v1170 = vpop.f32.mrb[0].mxu0
      %v1171 = vadd.f32 0.0, %v1170
      %v1172 = vpop.f32.mrb[0].mxu0
      %1173 = vmatprep.mubr.bf16.mxu0 0
      %1174 = vmatmul.mubr.bf16.gmra.mrb[0].mxu0 %v841
      %v1175 = vpop.f32.mrb[0].mxu0
      %v1176 = vadd.f32 0.0, %v1175
      %v1177 = vpop.f32.mrb[0].mxu0
      %v1178 = vpop.f32.mrb[0].mxu0
      %v1179 = vadd.f32 0.0, %v1178
      %v1180 = vpop.f32.mrb[0].mxu0
      %1181 = vmatprep.mubr.bf16.mxu0 0
      %1182 = vmatmul.mubr.bf16.gmra.mrb[0].mxu0 %v844
      %v1183 = vpop.f32.mrb[0].mxu0
      %v1184 = vadd.f32 0.0, %v1183
      %v1185 = vpop.f32.mrb[0].mxu0
      %v1186 = vpop.f32.mrb[0].mxu0
      %v1187 = vadd.f32 0.0, %v1186
      %v1188 = vpop.f32.mrb[0].mxu0
      %1189 = vmatprep.mubr.bf16.mxu0 0
      %1190 = vmatmul.mubr.bf16.gmra.mrb[0].mxu0 %v847
      %v1191 = vpop.f32.mrb[0].mxu0
      %v1192 = vadd.f32 0.0, %v1191
      %v1193 = vpop.f32.mrb[0].mxu0
      %v1194 = vpop.f32.mrb[0].mxu0
      %v1195 = vadd.f32 0.0, %v1194
      %v1196 = vpop.f32.mrb[0].mxu0
      %1197 = vmatprep.mubr.bf16.mxu0 0
      %1198 = vmatmul.mubr.bf16.gmra.mrb[0].mxu0 %v850
      %v1199 = vpop.f32.mrb[0].mxu0
      %v1200 = vadd.f32 0.0, %v1199
      %v1201 = vpop.f32.mrb[0].mxu0
      %v1202 = vpop.f32.mrb[0].mxu0
      %v1203 = vadd.f32 0.0, %v1202
      %v1204 = vpop.f32.mrb[0].mxu0
      %1205 = vmatprep.mubr.bf16.mxu0 0
      %1206 = vmatmul.mubr.bf16.gmra.mrb[0].mxu0 %v853
      %v1207 = vpop.f32.mrb[0].mxu0
      %v1208 = vadd.f32 0.0, %v1207
      %v1209 = vpop.f32.mrb[0].mxu0
      %v1210 = vpop.f32.mrb[0].mxu0
      %v1211 = vadd.f32 0.0, %v1210
      %v1212 = vpop.f32.mrb[0].mxu0
      %1213 = vmatprep.mubr.bf16.mxu0 0
      %1214 = vmatmul.mubr.bf16.gmra.mrb[0].mxu0 %v856
      %v1215 = vpop.f32.mrb[0].mxu0
      %v1216 = vadd.f32 0.0, %v1215
      %v1217 = vpop.f32.mrb[0].mxu0
      %v1218 = vpop.f32.mrb[0].mxu0
      %v1219 = vadd.f32 0.0, %v1218
      %v1220 = vpop.f32.mrb[0].mxu0
      %1221 = vmatprep.mubr.bf16.mxu0 0
      %1222 = vmatmul.mubr.bf16.gmra.mrb[0].mxu0 %v859
      %v1223 = vpop.f32.mrb[0].mxu0
      %v1224 = vadd.f32 0.0, %v1223
      %v1225 = vpop.f32.mrb[0].mxu0
      %v1226 = vpop.f32.mrb[0].mxu0
      %v1227 = vadd.f32 0.0, %v1226
      %v1228 = vpop.f32.mrb[0].mxu0
      %1229 = vmatprep.mubr.bf16.mxu0 0
      %1230 = vmatmul.mubr.bf16.gmra.mrb[0].mxu0 %v862
      %v1231 = vpop.f32.mrb[0].mxu0
      %v1232 = vadd.f32 0.0, %v1231
      %v1233 = vpop.f32.mrb[0].mxu0
      %v1234 = vpop.f32.mrb[0].mxu0
      %v1235 = vadd.f32 0.0, %v1234
      %v1236 = vpop.f32.mrb[0].mxu0
      %1237 = vmatprep.mubr.bf16.mxu0 0
      %1238 = vmatmul.mubr.bf16.gmra.mrb[0].mxu0 %v865
      %v1239 = vpop.f32.mrb[0].mxu0
      %v1240 = vadd.f32 0.0, %v1239
      %v1241 = vpop.f32.mrb[0].mxu0
      %v1242 = vpop.f32.mrb[0].mxu0
      %v1243 = vadd.f32 0.0, %v1242
      %v1244 = vpop.f32.mrb[0].mxu0
      %1245 = vmatprep.mubr.bf16.mxu0 0
      %1246 = vmatmul.mubr.bf16.gmra.mrb[0].mxu0 %v868
      %v1247 = vpop.f32.mrb[0].mxu0
      %v1248 = vadd.f32 0.0, %v1247
      %v1249 = vpop.f32.mrb[0].mxu0
      %v1250 = vpop.f32.mrb[0].mxu0
      %v1251 = vadd.f32 0.0, %v1250
      %v1252 = vpop.f32.mrb[0].mxu0
      %1253 = vmatprep.mubr.bf16.mxu0 0
      %1254 = vmatmul.mubr.bf16.gmra.mrb[0].mxu0 %v871
      %v1255 = vpop.f32.mrb[0].mxu0
      %v1256 = vadd.f32 0.0, %v1255
      %v1257 = vpop.f32.mrb[0].mxu0
      %v1258 = vpop.f32.mrb[0].mxu0
      %v1259 = vadd.f32 0.0, %v1258
      %v1260 = vpop.f32.mrb[0].mxu0
      %1261 = vmatprep.mubr.bf16.mxu0 0
      %1262 = vmatmul.mubr.bf16.gmra.mrb[0].mxu0 %v874
      %v1263 = vpop.f32.mrb[0].mxu0
      %v1264 = vadd.f32 0.0, %v1263
      %v1265 = vpop.f32.mrb[0].mxu0
      %v1266 = vpop.f32.mrb[0].mxu0
      %v1267 = vadd.f32 0.0, %v1266
      %v1268 = vpop.f32.mrb[0].mxu0
      %1269 = vmatprep.mubr.bf16.mxu0 0
      %1270 = vmatmul.mubr.bf16.gmra.mrb[0].mxu0 %v877
      %v1271 = vpop.f32.mrb[0].mxu0
      %v1272 = vadd.f32 0.0, %v1271
      %v1273 = vpop.f32.mrb[0].mxu0
      %v1274 = vpop.f32.mrb[0].mxu0
      %v1275 = vadd.f32 0.0, %v1274
      %v1276 = vpop.f32.mrb[0].mxu0
      %1277 = vmatprep.mubr.bf16.mxu0 0
      %1278 = vmatmul.mubr.bf16.gmra.mrb[0].mxu0 %v880
      %v1279 = vpop.f32.mrb[0].mxu0
      %v1280 = vadd.f32 0.0, %v1279
      %v1281 = vpop.f32.mrb[0].mxu0
      %v1282 = vpop.f32.mrb[0].mxu0
      %v1283 = vadd.f32 0.0, %v1282
      %v1284 = vpop.f32.mrb[0].mxu0
      %1285 = vmatprep.mubr.bf16.mxu0 0
      %1286 = vmatmul.mubr.bf16.gmra.mrb[0].mxu0 %v883
      %v1287 = vpop.f32.mrb[0].mxu0
      %v1288 = vadd.f32 0.0, %v1287
      %v1289 = vpop.f32.mrb[0].mxu0
      %v1290 = vpop.f32.mrb[0].mxu0
      %v1291 = vadd.f32 0.0, %v1290
      %v1292 = vpop.f32.mrb[0].mxu0
      %1293 = vmatprep.mubr.bf16.mxu0 0
      %1294 = vmatmul.mubr.bf16.gmra.mrb[0].mxu0 %v886
      %v1295 = vpop.f32.mrb[0].mxu0
      %v1296 = vadd.f32 0.0, %v1295
      %v1297 = vpop.f32.mrb[0].mxu0
      %v1298 = vpop.f32.mrb[0].mxu0
      %v1299 = vadd.f32 0.0, %v1298
      %v1300 = vpop.f32.mrb[0].mxu0
      %1301 = vmatprep.mubr.bf16.mxu0 0
      %1302 = vmatmul.mubr.bf16.gmra.mrb[0].mxu0 %v889
      %v1303 = vpop.f32.mrb[0].mxu0
      %v1304 = vadd.f32 0.0, %v1303
      %v1305 = vpop.f32.mrb[0].mxu0
      %v1306 = vpop.f32.mrb[0].mxu0
      %v1307 = vadd.f32 0.0, %v1306
      %v1308 = vpop.f32.mrb[0].mxu0
      %1309 = vmatprep.mubr.bf16.mxu0 0
      %1310 = vmatmul.mubr.bf16.gmra.mrb[0].mxu0 %v892
      %v1311 = vpop.f32.mrb[0].mxu0
      %v1312 = vadd.f32 0.0, %v1311
      %v1313 = vpop.f32.mrb[0].mxu0
      %v1314 = vpop.f32.mrb[0].mxu0
      %v1315 = vadd.f32 0.0, %v1314
      %v1316 = vpop.f32.mrb[0].mxu0
      %1317 = vmatprep.mubr.bf16.mxu0 0
      %1318 = vmatmul.mubr.bf16.gmra.mrb[0].mxu0 %v895
      %v1319 = vpop.f32.mrb[0].mxu0
      %v1320 = vadd.f32 0.0, %v1319
      %v1321 = vpop.f32.mrb[0].mxu0
      %v1322 = vpop.f32.mrb[0].mxu0
      %v1323 = vadd.f32 0.0, %v1322
      %v1324 = vpop.f32.mrb[0].mxu0
      %1325 = vmatprep.mubr.bf16.mxu0 0
      %1326 = vmatmul.mubr.bf16.gmra.mrb[0].mxu0 %v898
      %v1327 = vpop.f32.mrb[0].mxu0
      %v1328 = vadd.f32 0.0, %v1327
      %v1329 = vpop.f32.mrb[0].mxu0
      %v1330 = vpop.f32.mrb[0].mxu0
      %v1331 = vadd.f32 0.0, %v1330
      %v1332 = vpop.f32.mrb[0].mxu0
      %1333 = vmatprep.mubr.bf16.mxu0 0
      %1334 = vmatmul.mubr.bf16.gmra.mrb[0].mxu0 %v901
      %v1335 = vpop.f32.mrb[0].mxu0
      %v1336 = vadd.f32 0.0, %v1335
      %v1337 = vpop.f32.mrb[0].mxu0
      %v1338 = vpop.f32.mrb[0].mxu0
      %v1339 = vadd.f32 0.0, %v1338
      %v1340 = vpop.f32.mrb[0].mxu0
      %1341 = vmatprep.mubr.bf16.mxu0 0
      %1342 = vmatmul.mubr.bf16.gmra.mrb[0].mxu0 %v904
      %v1343 = vpop.f32.mrb[0].mxu0
      %v1344 = vadd.f32 0.0, %v1343
      %v1345 = vpop.f32.mrb[0].mxu0
      %v1346 = vpop.f32.mrb[0].mxu0
      %v1347 = vadd.f32 0.0, %v1346
      %v1348 = vpop.f32.mrb[0].mxu0
      %1349 = vmatprep.mubr.bf16.mxu0 0
      %1350 = vmatmul.mubr.bf16.gmra.mrb[0].mxu0 %v907
      %v1351 = vpop.f32.mrb[0].mxu0
      %v1352 = vadd.f32 0.0, %v1351
      %v1353 = vpop.f32.mrb[0].mxu0
      %v1354 = vpop.f32.mrb[0].mxu0
      %v1355 = vadd.f32 0.0, %v1354
      %v1356 = vpop.f32.mrb[0].mxu0
      %1357 = vmatprep.mubr.bf16.mxu0 0
      %1358 = vmatmul.mubr.bf16.gmra.mrb[0].mxu0 %v910
      %v1359 = vpop.f32.mrb[0].mxu0
      %v1360 = vadd.f32 0.0, %v1359
      %v1361 = vpop.f32.mrb[0].mxu0
      %v1362 = vpop.f32.mrb[0].mxu0
      %v1363 = vadd.f32 0.0, %v1362
      %v1364 = vpop.f32.mrb[0].mxu0
      %1365 = vmatprep.mubr.bf16.mxu0 0
      %1366 = vmatmul.mubr.bf16.gmra.mrb[0].mxu0 %v913
      %v1367 = vpop.f32.mrb[0].mxu0
      %v1368 = vadd.f32 0.0, %v1367
      %v1369 = vpop.f32.mrb[0].mxu0
      %v1370 = vpop.f32.mrb[0].mxu0
      %v1371 = vadd.f32 0.0, %v1370
      %v1372 = vpop.f32.mrb[0].mxu0
      %1373 = vmatprep.mubr.bf16.mxu0 0
      %1374 = vmatmul.mubr.bf16.gmra.mrb[0].mxu0 %v916
      %v1375 = vpop.f32.mrb[0].mxu0
      %v1376 = vadd.f32 0.0, %v1375
      %v1377 = vpop.f32.mrb[0].mxu0
      %v1378 = vpop.f32.mrb[0].mxu0
      %v1379 = vadd.f32 0.0, %v1378
      %v1380 = vpop.f32.mrb[0].mxu0
      %1381 = vmatprep.mubr.bf16.mxu0 0
      %1382 = vmatmul.mubr.bf16.gmra.mrb[0].mxu0 %v919
      %v1383 = vpop.f32.mrb[0].mxu0
      %v1384 = vadd.f32 0.0, %v1383
      %v1385 = vpop.f32.mrb[0].mxu0
      %v1386 = vpop.f32.mrb[0].mxu0
      %v1387 = vadd.f32 0.0, %v1386
      %v1388 = vpop.f32.mrb[0].mxu0
      %1389 = vmatprep.mubr.bf16.mxu0 0
      %1390 = vmatmul.mubr.bf16.gmra.mrb[0].mxu0 %v922
      %v1391 = vpop.f32.mrb[0].mxu0
      %v1392 = vadd.f32 0.0, %v1391
      %v1393 = vpop.f32.mrb[0].mxu0
      %v1394 = vpop.f32.mrb[0].mxu0
      %v1395 = vadd.f32 0.0, %v1394
      %v1396 = vpop.f32.mrb[0].mxu0
      %1397 = vmatprep.mubr.bf16.mxu0 0
      %1398 = vmatmul.mubr.bf16.gmra.mrb[0].mxu0 %v925
      %v1399 = vpop.f32.mrb[0].mxu0
      %v1400 = vadd.f32 0.0, %v1399
      %v1401 = vpop.f32.mrb[0].mxu0
      %v1402 = vpop.f32.mrb[0].mxu0
      %v1403 = vadd.f32 0.0, %v1402
      %v1404 = vpop.f32.mrb[0].mxu0
      %1405 = vmatprep.mubr.bf16.mxu0 0
      %1406 = vmatmul.mubr.bf16.gmra.mrb[0].mxu0 %v928
      %v1407 = vpop.f32.mrb[0].mxu0
      %v1408 = vadd.f32 0.0, %v1407
      %v1409 = vpop.f32.mrb[0].mxu0
      %v1410 = vpop.f32.mrb[0].mxu0
      %v1411 = vadd.f32 0.0, %v1410
      %v1412 = vpop.f32.mrb[0].mxu0
      %1413 = vmatprep.mubr.bf16.mxu0 0
      %1414 = vmatmul.mubr.bf16.gmra.mrb[0].mxu0 %v931
      %v1415 = vpop.f32.mrb[0].mxu0
      %v1416 = vadd.f32 0.0, %v1415
      %v1417 = vpop.f32.mrb[0].mxu0
      %v1418 = vpop.f32.mrb[0].mxu0
      %v1419 = vadd.f32 0.0, %v1418
      %v1420 = vpop.f32.mrb[0].mxu0
      %1421 = vmatprep.mubr.bf16.mxu0 0
      %1422 = vmatmul.mubr.bf16.gmra.mrb[0].mxu0 %v934
      %v1423 = vpop.f32.mrb[0].mxu0
      %v1424 = vadd.f32 0.0, %v1423
      %v1425 = vpop.f32.mrb[0].mxu0
      %v1426 = vpop.f32.mrb[0].mxu0
      %v1427 = vadd.f32 0.0, %v1426
      %v1428 = vpop.f32.mrb[0].mxu0
      %1429 = vmatprep.mubr.bf16.mxu0 0
      %1430 = vmatmul.mubr.bf16.gmra.mrb[0].mxu0 %v937
      %v1431 = vpop.f32.mrb[0].mxu0
      %v1432 = vadd.f32 0.0, %v1431
      %v1433 = vpop.f32.mrb[0].mxu0
      %v1434 = vpop.f32.mrb[0].mxu0
      %v1435 = vadd.f32 0.0, %v1434
      %v1436 = vpop.f32.mrb[0].mxu0
      %1437 = vmatprep.mubr.bf16.mxu0 0
      %1438 = vmatmul.mubr.bf16.gmra.mrb[0].mxu0 %v940
      %v1439 = vpop.f32.mrb[0].mxu0
      %v1440 = vadd.f32 0.0, %v1439
      %v1441 = vpop.f32.mrb[0].mxu0
      %v1442 = vpop.f32.mrb[0].mxu0
      %v1443 = vadd.f32 0.0, %v1442
      %v1444 = vpop.f32.mrb[0].mxu0
      %1445 = vmatprep.mubr.bf16.mxu0 0
      %1446 = vmatmul.mubr.bf16.gmra.mrb[0].mxu0 %v943
      %v1447 = vpop.f32.mrb[0].mxu0
      %v1448 = vadd.f32 0.0, %v1447
      %v1449 = vpop.f32.mrb[0].mxu0
      %v1450 = vpop.f32.mrb[0].mxu0
      %v1451 = vadd.f32 0.0, %v1450
      %v1452 = vpop.f32.mrb[0].mxu0
      %1453 = vmatprep.mubr.bf16.mxu0 0
      %1454 = vmatmul.mubr.bf16.gmra.mrb[0].mxu0 %v946
      %v1455 = vpop.f32.mrb[0].mxu0
      %v1456 = vadd.f32 0.0, %v1455
      %v1457 = vpop.f32.mrb[0].mxu0
      %v1458 = vpop.f32.mrb[0].mxu0
      %v1459 = vadd.f32 0.0, %v1458
      %v1460 = vpop.f32.mrb[0].mxu0
      %1461 = vmatprep.mubr.bf16.mxu0 0
      %1462 = vmatmul.mubr.bf16.gmra.mrb[0].mxu0 %v949
      %v1463 = vpop.f32.mrb[0].mxu0
      %v1464 = vadd.f32 0.0, %v1463
      %v1465 = vpop.f32.mrb[0].mxu0
      %v1466 = vpop.f32.mrb[0].mxu0
      %v1467 = vadd.f32 0.0, %v1466
      %v1468 = vpop.f32.mrb[0].mxu0
      %1469 = vmatprep.mubr.bf16.mxu0 0
      %1470 = vmatmul.mubr.bf16.gmra.mrb[0].mxu0 %v952
      %v1471 = vpop.f32.mrb[0].mxu0
      %v1472 = vadd.f32 0.0, %v1471
      %v1473 = vpop.f32.mrb[0].mxu0
      %v1474 = vpop.f32.mrb[0].mxu0
      %v1475 = vadd.f32 0.0, %v1474
      %v1476 = vpop.f32.mrb[0].mxu0
      %1477 = vmatprep.mubr.bf16.mxu0 0
      %1478 = vmatmul.mubr.bf16.gmra.mrb[0].mxu0 %v955
      %v1479 = vpop.f32.mrb[0].mxu0
      %v1480 = vadd.f32 0.0, %v1479
      %v1481 = vpop.f32.mrb[0].mxu0
      %v1482 = vpop.f32.mrb[0].mxu0
      %v1483 = vadd.f32 0.0, %v1482
      %v1484 = vpop.f32.mrb[0].mxu0
      %1485 = vmatprep.mubr.bf16.mxu0 0
      %1486 = vmatmul.mubr.bf16.gmra.mrb[0].mxu0 %v958
      %v1487 = vpop.f32.mrb[0].mxu0
      %v1488 = vadd.f32 0.0, %v1487
      %v1489 = vpop.f32.mrb[0].mxu0
      %v1490 = vpop.f32.mrb[0].mxu0
      %v1491 = vadd.f32 0.0, %v1490
      %v1492 = vpop.f32.mrb[0].mxu0
      %1493 = vmatprep.mubr.bf16.mxu0 0
      %1494 = vmatmul.mubr.bf16.gmra.mrb[0].mxu0 %v961
      %v1495 = vpop.f32.mrb[0].mxu0
      %v1496 = vadd.f32 0.0, %v1495
      %v1497 = vpop.f32.mrb[0].mxu0
      %v1498 = vpop.f32.mrb[0].mxu0
      %v1499 = vadd.f32 0.0, %v1498
      %v1500 = vpop.f32.mrb[0].mxu0
      %1501 = vmatprep.mubr.bf16.mxu0 0
      %1502 = vmatmul.mubr.bf16.gmra.mrb[0].mxu0 %v964
      %v1503 = vpop.f32.mrb[0].mxu0
      %v1504 = vadd.f32 0.0, %v1503
      %v1505 = vpop.f32.mrb[0].mxu0
      %v1506 = vpop.f32.mrb[0].mxu0
      %v1507 = vadd.f32 0.0, %v1506
      %v1508 = vpop.f32.mrb[0].mxu0
      %1509 = vmatprep.mubr.bf16.mxu0 0
      %1510 = vmatmul.mubr.bf16.gmra.mrb[0].mxu0 %v967
      %v1511 = vpop.f32.mrb[0].mxu0
      %v1512 = vadd.f32 0.0, %v1511
      %v1513 = vpop.f32.mrb[0].mxu0
      %v1514 = vpop.f32.mrb[0].mxu0
      %v1515 = vadd.f32 0.0, %v1514
      %v1516 = vpop.f32.mrb[0].mxu0
      %1517 = vdwg.mxu0
      %v1518 = vld [vmem:[%s299] sm:$0xff]
      %v1519 = vld [vmem:[%s299 + $0x8] sm:$0xff]
      %v1520 = vld [vmem:[%s299 + $0x10] sm:$0xff]
      %v1521 = vld [vmem:[%s299 + $0x18] sm:$0xff]
      %v1522 = vld [vmem:[%s299 + $0x20] sm:$0xff]
      %v1523 = vld [vmem:[%s299 + $0x28] sm:$0xff]
      %v1524 = vld [vmem:[%s299 + $0x30] sm:$0xff]
      %v1525 = vld [vmem:[%s299 + $0x38] sm:$0xff]
      %v1534 = vcombine.high %v1518, %v1518
      %v1536 = vunpack.c.l.s4 1966171168
      %v1537 = vunpack.c.0.s8 %v1536
      %v1538 = vlaneseq
      %v1539 = vshrl.u32 %v1538, 7
      %v1540 = vsub.s32 %v1537, %v1539
      %v1541 = vrot.slane %v1518, %v1540
      %v1543 = vunpack.c.l.s4 1966171168
      %v1544 = vunpack.c.0.s8 %v1543
      %v1545 = vlaneseq
      %v1546 = vshrl.u32 %v1545, 7
      %v1547 = vsub.s32 %v1544, %v1546
      %v1548 = vrot.slane %v1534, %v1547
      %v1549 = vcombine.high %v1541, %v1541
      %v1550 = vcombine.high %v1548, %v1548
      %v1552 = vunpack.c.l.s4 1966171168
      %v1553 = vunpack.c.0.s8 %v1552
      %v1554 = vlaneseq
      %v1555 = vshrl.u32 %v1554, 7
      %v1556 = vsub.s32 %v1553, %v1555
      %v1557 = vrot.slane %v1541, %v1556
      %v1559 = vunpack.c.l.s4 1966171168
      %v1560 = vunpack.c.0.s8 %v1559
      %v1561 = vlaneseq
      %v1562 = vshrl.u32 %v1561, 7
      %v1563 = vsub.s32 %v1560, %v1562
      %v1564 = vrot.slane %v1548, %v1563
      %v1566 = vunpack.c.l.s4 1966171168
      %v1567 = vunpack.c.0.s8 %v1566
      %v1568 = vlaneseq
      %v1569 = vshrl.u32 %v1568, 7
      %v1570 = vsub.s32 %v1567, %v1569
      %v1571 = vrot.slane %v1549, %v1570
      %v1573 = vunpack.c.l.s4 1966171168
      %v1574 = vunpack.c.0.s8 %v1573
      %v1575 = vlaneseq
      %v1576 = vshrl.u32 %v1575, 7
      %v1577 = vsub.s32 %v1574, %v1576
      %v1578 = vrot.slane %v1550, %v1577
      %v1579 = vcombine.high %v1557, %v1557
      %v1580 = vcombine.high %v1564, %v1564
      %v1581 = vcombine.high %v1571, %v1571
      %v1582 = vcombine.high %v1578, %v1578
      %v1583 = vcombine.high %v1519, %v1519
      %v1585 = vunpack.c.l.s4 1966171168
      %v1586 = vunpack.c.0.s8 %v1585
      %v1587 = vlaneseq
      %v1588 = vshrl.u32 %v1587, 7
      %v1589 = vsub.s32 %v1586, %v1588
      %v1590 = vrot.slane %v1519, %v1589
      %v1592 = vunpack.c.l.s4 1966171168
      %v1593 = vunpack.c.0.s8 %v1592
      %v1594 = vlaneseq
      %v1595 = vshrl.u32 %v1594, 7
      %v1596 = vsub.s32 %v1593, %v1595
      %v1597 = vrot.slane %v1583, %v1596
      %v1598 = vcombine.high %v1590, %v1590
      %v1599 = vcombine.high %v1597, %v1597
      %v1601 = vunpack.c.l.s4 1966171168
      %v1602 = vunpack.c.0.s8 %v1601
      %v1603 = vlaneseq
      %v1604 = vshrl.u32 %v1603, 7
      %v1605 = vsub.s32 %v1602, %v1604
      %v1606 = vrot.slane %v1590, %v1605
      %v1608 = vunpack.c.l.s4 1966171168
      %v1609 = vunpack.c.0.s8 %v1608
      %v1610 = vlaneseq
      %v1611 = vshrl.u32 %v1610, 7
      %v1612 = vsub.s32 %v1609, %v1611
      %v1613 = vrot.slane %v1597, %v1612
      %v1615 = vunpack.c.l.s4 1966171168
      %v1616 = vunpack.c.0.s8 %v1615
      %v1617 = vlaneseq
      %v1618 = vshrl.u32 %v1617, 7
      %v1619 = vsub.s32 %v1616, %v1618
      %v1620 = vrot.slane %v1598, %v1619
      %v1622 = vunpack.c.l.s4 1966171168
      %v1623 = vunpack.c.0.s8 %v1622
      %v1624 = vlaneseq
      %v1625 = vshrl.u32 %v1624, 7
      %v1626 = vsub.s32 %v1623, %v1625
      %v1627 = vrot.slane %v1599, %v1626
      %v1628 = vcombine.high %v1606, %v1606
      %v1629 = vcombine.high %v1613, %v1613
      %v1630 = vcombine.high %v1620, %v1620
      %v1631 = vcombine.high %v1627, %v1627
      %v1632 = vcombine.high %v1520, %v1520
      %v1634 = vunpack.c.l.s4 1966171168
      %v1635 = vunpack.c.0.s8 %v1634
      %v1636 = vlaneseq
      %v1637 = vshrl.u32 %v1636, 7
      %v1638 = vsub.s32 %v1635, %v1637
      %v1639 = vrot.slane %v1520, %v1638
      %v1641 = vunpack.c.l.s4 1966171168
      %v1642 = vunpack.c.0.s8 %v1641
      %v1643 = vlaneseq
      %v1644 = vshrl.u32 %v1643, 7
      %v1645 = vsub.s32 %v1642, %v1644
      %v1646 = vrot.slane %v1632, %v1645
      %v1647 = vcombine.high %v1639, %v1639
      %v1648 = vcombine.high %v1646, %v1646
      %v1650 = vunpack.c.l.s4 1966171168
      %v1651 = vunpack.c.0.s8 %v1650
      %v1652 = vlaneseq
      %v1653 = vshrl.u32 %v1652, 7
      %v1654 = vsub.s32 %v1651, %v1653
      %v1655 = vrot.slane %v1639, %v1654
      %v1657 = vunpack.c.l.s4 1966171168
      %v1658 = vunpack.c.0.s8 %v1657
      %v1659 = vlaneseq
      %v1660 = vshrl.u32 %v1659, 7
      %v1661 = vsub.s32 %v1658, %v1660
      %v1662 = vrot.slane %v1646, %v1661
      %v1664 = vunpack.c.l.s4 1966171168
      %v1665 = vunpack.c.0.s8 %v1664
      %v1666 = vlaneseq
      %v1667 = vshrl.u32 %v1666, 7
      %v1668 = vsub.s32 %v1665, %v1667
      %v1669 = vrot.slane %v1647, %v1668
      %v1671 = vunpack.c.l.s4 1966171168
      %v1672 = vunpack.c.0.s8 %v1671
      %v1673 = vlaneseq
      %v1674 = vshrl.u32 %v1673, 7
      %v1675 = vsub.s32 %v1672, %v1674
      %v1676 = vrot.slane %v1648, %v1675
      %v1677 = vcombine.high %v1655, %v1655
      %v1678 = vcombine.high %v1662, %v1662
      %v1679 = vcombine.high %v1669, %v1669
      %v1680 = vcombine.high %v1676, %v1676
      %v1681 = vcombine.high %v1521, %v1521
      %v1683 = vunpack.c.l.s4 1966171168
      %v1684 = vunpack.c.0.s8 %v1683
      %v1685 = vlaneseq
      %v1686 = vshrl.u32 %v1685, 7
      %v1687 = vsub.s32 %v1684, %v1686
      %v1688 = vrot.slane %v1521, %v1687
      %v1690 = vunpack.c.l.s4 1966171168
      %v1691 = vunpack.c.0.s8 %v1690
      %v1692 = vlaneseq
      %v1693 = vshrl.u32 %v1692, 7
      %v1694 = vsub.s32 %v1691, %v1693
      %v1695 = vrot.slane %v1681, %v1694
      %v1696 = vcombine.high %v1688, %v1688
      %v1697 = vcombine.high %v1695, %v1695
      %v1699 = vunpack.c.l.s4 1966171168
      %v1700 = vunpack.c.0.s8 %v1699
      %v1701 = vlaneseq
      %v1702 = vshrl.u32 %v1701, 7
      %v1703 = vsub.s32 %v1700, %v1702
      %v1704 = vrot.slane %v1688, %v1703
      %v1706 = vunpack.c.l.s4 1966171168
      %v1707 = vunpack.c.0.s8 %v1706
      %v1708 = vlaneseq
      %v1709 = vshrl.u32 %v1708, 7
      %v1710 = vsub.s32 %v1707, %v1709
      %v1711 = vrot.slane %v1695, %v1710
      %v1713 = vunpack.c.l.s4 1966171168
      %v1714 = vunpack.c.0.s8 %v1713
      %v1715 = vlaneseq
      %v1716 = vshrl.u32 %v1715, 7
      %v1717 = vsub.s32 %v1714, %v1716
      %v1718 = vrot.slane %v1696, %v1717
      %v1720 = vunpack.c.l.s4 1966171168
      %v1721 = vunpack.c.0.s8 %v1720
      %v1722 = vlaneseq
      %v1723 = vshrl.u32 %v1722, 7
      %v1724 = vsub.s32 %v1721, %v1723
      %v1725 = vrot.slane %v1697, %v1724
      %v1726 = vcombine.high %v1704, %v1704
      %v1727 = vcombine.high %v1711, %v1711
      %v1728 = vcombine.high %v1718, %v1718
      %v1729 = vcombine.high %v1725, %v1725
      %v1730 = vcombine.high %v1522, %v1522
      %v1732 = vunpack.c.l.s4 1966171168
      %v1733 = vunpack.c.0.s8 %v1732
      %v1734 = vlaneseq
      %v1735 = vshrl.u32 %v1734, 7
      %v1736 = vsub.s32 %v1733, %v1735
      %v1737 = vrot.slane %v1522, %v1736
      %v1739 = vunpack.c.l.s4 1966171168
      %v1740 = vunpack.c.0.s8 %v1739
      %v1741 = vlaneseq
      %v1742 = vshrl.u32 %v1741, 7
      %v1743 = vsub.s32 %v1740, %v1742
      %v1744 = vrot.slane %v1730, %v1743
      %v1745 = vcombine.high %v1737, %v1737
      %v1746 = vcombine.high %v1744, %v1744
      %v1748 = vunpack.c.l.s4 1966171168
      %v1749 = vunpack.c.0.s8 %v1748
      %v1750 = vlaneseq
      %v1751 = vshrl.u32 %v1750, 7
      %v1752 = vsub.s32 %v1749, %v1751
      %v1753 = vrot.slane %v1737, %v1752
      %v1755 = vunpack.c.l.s4 1966171168
      %v1756 = vunpack.c.0.s8 %v1755
      %v1757 = vlaneseq
      %v1758 = vshrl.u32 %v1757, 7
      %v1759 = vsub.s32 %v1756, %v1758
      %v1760 = vrot.slane %v1744, %v1759
      %v1762 = vunpack.c.l.s4 1966171168
      %v1763 = vunpack.c.0.s8 %v1762
      %v1764 = vlaneseq
      %v1765 = vshrl.u32 %v1764, 7
      %v1766 = vsub.s32 %v1763, %v1765
      %v1767 = vrot.slane %v1745, %v1766
      %v1769 = vunpack.c.l.s4 1966171168
      %v1770 = vunpack.c.0.s8 %v1769
      %v1771 = vlaneseq
      %v1772 = vshrl.u32 %v1771, 7
      %v1773 = vsub.s32 %v1770, %v1772
      %v1774 = vrot.slane %v1746, %v1773
      %v1775 = vcombine.high %v1753, %v1753
      %v1776 = vcombine.high %v1760, %v1760
      %v1777 = vcombine.high %v1767, %v1767
      %v1778 = vcombine.high %v1774, %v1774
      %v1779 = vcombine.high %v1523, %v1523
      %v1781 = vunpack.c.l.s4 1966171168
      %v1782 = vunpack.c.0.s8 %v1781
      %v1783 = vlaneseq
      %v1784 = vshrl.u32 %v1783, 7
      %v1785 = vsub.s32 %v1782, %v1784
      %v1786 = vrot.slane %v1523, %v1785
      %v1788 = vunpack.c.l.s4 1966171168
      %v1789 = vunpack.c.0.s8 %v1788
      %v1790 = vlaneseq
      %v1791 = vshrl.u32 %v1790, 7
      %v1792 = vsub.s32 %v1789, %v1791
      %v1793 = vrot.slane %v1779, %v1792
      %v1794 = vcombine.high %v1786, %v1786
      %v1795 = vcombine.high %v1793, %v1793
      %v1797 = vunpack.c.l.s4 1966171168
      %v1798 = vunpack.c.0.s8 %v1797
      %v1799 = vlaneseq
      %v1800 = vshrl.u32 %v1799, 7
      %v1801 = vsub.s32 %v1798, %v1800
      %v1802 = vrot.slane %v1786, %v1801
      %v1804 = vunpack.c.l.s4 1966171168
      %v1805 = vunpack.c.0.s8 %v1804
      %v1806 = vlaneseq
      %v1807 = vshrl.u32 %v1806, 7
      %v1808 = vsub.s32 %v1805, %v1807
      %v1809 = vrot.slane %v1793, %v1808
      %v1811 = vunpack.c.l.s4 1966171168
      %v1812 = vunpack.c.0.s8 %v1811
      %v1813 = vlaneseq
      %v1814 = vshrl.u32 %v1813, 7
      %v1815 = vsub.s32 %v1812, %v1814
      %v1816 = vrot.slane %v1794, %v1815
      %v1818 = vunpack.c.l.s4 1966171168
      %v1819 = vunpack.c.0.s8 %v1818
      %v1820 = vlaneseq
      %v1821 = vshrl.u32 %v1820, 7
      %v1822 = vsub.s32 %v1819, %v1821
      %v1823 = vrot.slane %v1795, %v1822
      %v1824 = vcombine.high %v1802, %v1802
      %v1825 = vcombine.high %v1809, %v1809
      %v1826 = vcombine.high %v1816, %v1816
      %v1827 = vcombine.high %v1823, %v1823
      %v1828 = vcombine.high %v1524, %v1524
      %v1830 = vunpack.c.l.s4 1966171168
      %v1831 = vunpack.c.0.s8 %v1830
      %v1832 = vlaneseq
      %v1833 = vshrl.u32 %v1832, 7
      %v1834 = vsub.s32 %v1831, %v1833
      %v1835 = vrot.slane %v1524, %v1834
      %v1837 = vunpack.c.l.s4 1966171168
      %v1838 = vunpack.c.0.s8 %v1837
      %v1839 = vlaneseq
      %v1840 = vshrl.u32 %v1839, 7
      %v1841 = vsub.s32 %v1838, %v1840
      %v1842 = vrot.slane %v1828, %v1841
      %v1843 = vcombine.high %v1835, %v1835
      %v1844 = vcombine.high %v1842, %v1842
      %v1846 = vunpack.c.l.s4 1966171168
      %v1847 = vunpack.c.0.s8 %v1846
      %v1848 = vlaneseq
      %v1849 = vshrl.u32 %v1848, 7
      %v1850 = vsub.s32 %v1847, %v1849
      %v1851 = vrot.slane %v1835, %v1850
      %v1853 = vunpack.c.l.s4 1966171168
      %v1854 = vunpack.c.0.s8 %v1853
      %v1855 = vlaneseq
      %v1856 = vshrl.u32 %v1855, 7
      %v1857 = vsub.s32 %v1854, %v1856
      %v1858 = vrot.slane %v1842, %v1857
      %v1860 = vunpack.c.l.s4 1966171168
      %v1861 = vunpack.c.0.s8 %v1860
      %v1862 = vlaneseq
      %v1863 = vshrl.u32 %v1862, 7
      %v1864 = vsub.s32 %v1861, %v1863
      %v1865 = vrot.slane %v1843, %v1864
      %v1867 = vunpack.c.l.s4 1966171168
      %v1868 = vunpack.c.0.s8 %v1867
      %v1869 = vlaneseq
      %v1870 = vshrl.u32 %v1869, 7
      %v1871 = vsub.s32 %v1868, %v1870
      %v1872 = vrot.slane %v1844, %v1871
      %v1873 = vcombine.high %v1851, %v1851
      %v1874 = vcombine.high %v1858, %v1858
      %v1875 = vcombine.high %v1865, %v1865
      %v1876 = vcombine.high %v1872, %v1872
      %v1877 = vcombine.high %v1525, %v1525
      %v1879 = vunpack.c.l.s4 1966171168
      %v1880 = vunpack.c.0.s8 %v1879
      %v1881 = vlaneseq
      %v1882 = vshrl.u32 %v1881, 7
      %v1883 = vsub.s32 %v1880, %v1882
      %v1884 = vrot.slane %v1525, %v1883
      %v1886 = vunpack.c.l.s4 1966171168
      %v1887 = vunpack.c.0.s8 %v1886
      %v1888 = vlaneseq
      %v1889 = vshrl.u32 %v1888, 7
      %v1890 = vsub.s32 %v1887, %v1889
      %v1891 = vrot.slane %v1877, %v1890
      %v1892 = vcombine.high %v1884, %v1884
      %v1893 = vcombine.high %v1891, %v1891
      %v1895 = vunpack.c.l.s4 1966171168
      %v1896 = vunpack.c.0.s8 %v1895
      %v1897 = vlaneseq
      %v1898 = vshrl.u32 %v1897, 7
      %v1899 = vsub.s32 %v1896, %v1898
      %v1900 = vrot.slane %v1884, %v1899
      %v1902 = vunpack.c.l.s4 1966171168
      %v1903 = vunpack.c.0.s8 %v1902
      %v1904 = vlaneseq
      %v1905 = vshrl.u32 %v1904, 7
      %v1906 = vsub.s32 %v1903, %v1905
      %v1907 = vrot.slane %v1891, %v1906
      %v1909 = vunpack.c.l.s4 1966171168
      %v1910 = vunpack.c.0.s8 %v1909
      %v1911 = vlaneseq
      %v1912 = vshrl.u32 %v1911, 7
      %v1913 = vsub.s32 %v1910, %v1912
      %v1914 = vrot.slane %v1892, %v1913
      %v1916 = vunpack.c.l.s4 1966171168
      %v1917 = vunpack.c.0.s8 %v1916
      %v1918 = vlaneseq
      %v1919 = vshrl.u32 %v1918, 7
      %v1920 = vsub.s32 %v1917, %v1919
      %v1921 = vrot.slane %v1893, %v1920
      %v1922 = vcombine.high %v1900, %v1900
      %v1923 = vcombine.high %v1907, %v1907
      %v1924 = vcombine.high %v1914, %v1914
      %v1925 = vcombine.high %v1921, %v1921
      %v1926 = vlaneseq
      %v1927 = vshrl.u32 %v1926, 7
      %v1928 = vsub.s32 0, %v1927
      %v1929 = vrot.slane %v1557, %v1928
      %v1930 = vlaneseq
      %v1931 = vshrl.u32 %v1930, 7
      %v1932 = vsub.s32 0, %v1931
      %v1933 = vrot.slane %v1571, %v1932
      %v1934 = vlaneseq
      %v1935 = vshrl.u32 %v1934, 7
      %v1936 = vsub.s32 0, %v1935
      %v1937 = vrot.slane %v1579, %v1936
      %v1938 = vlaneseq
      %v1939 = vshrl.u32 %v1938, 7
      %v1940 = vsub.s32 0, %v1939
      %v1941 = vrot.slane %v1581, %v1940
      %v1942 = vlaneseq
      %v1943 = vshrl.u32 %v1942, 7
      %v1944 = vsub.s32 0, %v1943
      %v1945 = vrot.slane %v1564, %v1944
      %v1946 = vlaneseq
      %v1947 = vshrl.u32 %v1946, 7
      %v1948 = vsub.s32 0, %v1947
      %v1949 = vrot.slane %v1578, %v1948
      %v1950 = vlaneseq
      %v1951 = vshrl.u32 %v1950, 7
      %v1952 = vsub.s32 0, %v1951
      %v1953 = vrot.slane %v1580, %v1952
      %v1954 = vlaneseq
      %v1955 = vshrl.u32 %v1954, 7
      %v1956 = vsub.s32 0, %v1955
      %v1957 = vrot.slane %v1582, %v1956
      %v1958 = vlaneseq
      %v1959 = vshrl.u32 %v1958, 7
      %v1960 = vsub.s32 0, %v1959
      %v1961 = vrot.slane %v1606, %v1960
      %v1962 = vlaneseq
      %v1963 = vshrl.u32 %v1962, 7
      %v1964 = vsub.s32 0, %v1963
      %v1965 = vrot.slane %v1620, %v1964
      %v1966 = vlaneseq
      %v1967 = vshrl.u32 %v1966, 7
      %v1968 = vsub.s32 0, %v1967
      %v1969 = vrot.slane %v1628, %v1968
      %v1970 = vlaneseq
      %v1971 = vshrl.u32 %v1970, 7
      %v1972 = vsub.s32 0, %v1971
      %v1973 = vrot.slane %v1630, %v1972
      %v1974 = vlaneseq
      %v1975 = vshrl.u32 %v1974, 7
      %v1976 = vsub.s32 0, %v1975
      %v1977 = vrot.slane %v1613, %v1976
      %v1978 = vlaneseq
      %v1979 = vshrl.u32 %v1978, 7
      %v1980 = vsub.s32 0, %v1979
      %v1981 = vrot.slane %v1627, %v1980
      %v1982 = vlaneseq
      %v1983 = vshrl.u32 %v1982, 7
      %v1984 = vsub.s32 0, %v1983
      %v1985 = vrot.slane %v1629, %v1984
      %v1986 = vlaneseq
      %v1987 = vshrl.u32 %v1986, 7
      %v1988 = vsub.s32 0, %v1987
      %v1989 = vrot.slane %v1631, %v1988
      %v1990 = vlaneseq
      %v1991 = vshrl.u32 %v1990, 7
      %v1992 = vsub.s32 0, %v1991
      %v1993 = vrot.slane %v1655, %v1992
      %v1994 = vlaneseq
      %v1995 = vshrl.u32 %v1994, 7
      %v1996 = vsub.s32 0, %v1995
      %v1997 = vrot.slane %v1669, %v1996
      %v1998 = vlaneseq
      %v1999 = vshrl.u32 %v1998, 7
      %v2000 = vsub.s32 0, %v1999
      %v2001 = vrot.slane %v1677, %v2000
      %v2002 = vlaneseq
      %v2003 = vshrl.u32 %v2002, 7
      %v2004 = vsub.s32 0, %v2003
      %v2005 = vrot.slane %v1679, %v2004
      %v2006 = vlaneseq
      %v2007 = vshrl.u32 %v2006, 7
      %v2008 = vsub.s32 0, %v2007
      %v2009 = vrot.slane %v1662, %v2008
      %v2010 = vlaneseq
      %v2011 = vshrl.u32 %v2010, 7
      %v2012 = vsub.s32 0, %v2011
      %v2013 = vrot.slane %v1676, %v2012
      %v2014 = vlaneseq
      %v2015 = vshrl.u32 %v2014, 7
      %v2016 = vsub.s32 0, %v2015
      %v2017 = vrot.slane %v1678, %v2016
      %v2018 = vlaneseq
      %v2019 = vshrl.u32 %v2018, 7
      %v2020 = vsub.s32 0, %v2019
      %v2021 = vrot.slane %v1680, %v2020
      %v2022 = vlaneseq
      %v2023 = vshrl.u32 %v2022, 7
      %v2024 = vsub.s32 0, %v2023
      %v2025 = vrot.slane %v1704, %v2024
      %v2026 = vlaneseq
      %v2027 = vshrl.u32 %v2026, 7
      %v2028 = vsub.s32 0, %v2027
      %v2029 = vrot.slane %v1718, %v2028
      %v2030 = vlaneseq
      %v2031 = vshrl.u32 %v2030, 7
      %v2032 = vsub.s32 0, %v2031
      %v2033 = vrot.slane %v1726, %v2032
      %v2034 = vlaneseq
      %v2035 = vshrl.u32 %v2034, 7
      %v2036 = vsub.s32 0, %v2035
      %v2037 = vrot.slane %v1728, %v2036
      %v2038 = vlaneseq
      %v2039 = vshrl.u32 %v2038, 7
      %v2040 = vsub.s32 0, %v2039
      %v2041 = vrot.slane %v1711, %v2040
      %v2042 = vlaneseq
      %v2043 = vshrl.u32 %v2042, 7
      %v2044 = vsub.s32 0, %v2043
      %v2045 = vrot.slane %v1725, %v2044
      %v2046 = vlaneseq
      %v2047 = vshrl.u32 %v2046, 7
      %v2048 = vsub.s32 0, %v2047
      %v2049 = vrot.slane %v1727, %v2048
      %v2050 = vlaneseq
      %v2051 = vshrl.u32 %v2050, 7
      %v2052 = vsub.s32 0, %v2051
      %v2053 = vrot.slane %v1729, %v2052
      %v2054 = vlaneseq
      %v2055 = vshrl.u32 %v2054, 7
      %v2056 = vsub.s32 0, %v2055
      %v2057 = vrot.slane %v1753, %v2056
      %v2058 = vlaneseq
      %v2059 = vshrl.u32 %v2058, 7
      %v2060 = vsub.s32 0, %v2059
      %v2061 = vrot.slane %v1767, %v2060
      %v2062 = vlaneseq
      %v2063 = vshrl.u32 %v2062, 7
      %v2064 = vsub.s32 0, %v2063
      %v2065 = vrot.slane %v1775, %v2064
      %v2066 = vlaneseq
      %v2067 = vshrl.u32 %v2066, 7
      %v2068 = vsub.s32 0, %v2067
      %v2069 = vrot.slane %v1777, %v2068
      %v2070 = vlaneseq
      %v2071 = vshrl.u32 %v2070, 7
      %v2072 = vsub.s32 0, %v2071
      %v2073 = vrot.slane %v1760, %v2072
      %v2074 = vlaneseq
      %v2075 = vshrl.u32 %v2074, 7
      %v2076 = vsub.s32 0, %v2075
      %v2077 = vrot.slane %v1774, %v2076
      %v2078 = vlaneseq
      %v2079 = vshrl.u32 %v2078, 7
      %v2080 = vsub.s32 0, %v2079
      %v2081 = vrot.slane %v1776, %v2080
      %v2082 = vlaneseq
      %v2083 = vshrl.u32 %v2082, 7
      %v2084 = vsub.s32 0, %v2083
      %v2085 = vrot.slane %v1778, %v2084
      %v2086 = vlaneseq
      %v2087 = vshrl.u32 %v2086, 7
      %v2088 = vsub.s32 0, %v2087
      %v2089 = vrot.slane %v1802, %v2088
      %v2090 = vlaneseq
      %v2091 = vshrl.u32 %v2090, 7
      %v2092 = vsub.s32 0, %v2091
      %v2093 = vrot.slane %v1816, %v2092
      %v2094 = vlaneseq
      %v2095 = vshrl.u32 %v2094, 7
      %v2096 = vsub.s32 0, %v2095
      %v2097 = vrot.slane %v1824, %v2096
      %v2098 = vlaneseq
      %v2099 = vshrl.u32 %v2098, 7
      %v2100 = vsub.s32 0, %v2099
      %v2101 = vrot.slane %v1826, %v2100
      %v2102 = vlaneseq
      %v2103 = vshrl.u32 %v2102, 7
      %v2104 = vsub.s32 0, %v2103
      %v2105 = vrot.slane %v1809, %v2104
      %v2106 = vlaneseq
      %v2107 = vshrl.u32 %v2106, 7
      %v2108 = vsub.s32 0, %v2107
      %v2109 = vrot.slane %v1823, %v2108
      %v2110 = vlaneseq
      %v2111 = vshrl.u32 %v2110, 7
      %v2112 = vsub.s32 0, %v2111
      %v2113 = vrot.slane %v1825, %v2112
      %v2114 = vlaneseq
      %v2115 = vshrl.u32 %v2114, 7
      %v2116 = vsub.s32 0, %v2115
      %v2117 = vrot.slane %v1827, %v2116
      %v2118 = vlaneseq
      %v2119 = vshrl.u32 %v2118, 7
      %v2120 = vsub.s32 0, %v2119
      %v2121 = vrot.slane %v1851, %v2120
      %v2122 = vlaneseq
      %v2123 = vshrl.u32 %v2122, 7
      %v2124 = vsub.s32 0, %v2123
      %v2125 = vrot.slane %v1865, %v2124
      %v2126 = vlaneseq
      %v2127 = vshrl.u32 %v2126, 7
      %v2128 = vsub.s32 0, %v2127
      %v2129 = vrot.slane %v1873, %v2128
      %v2130 = vlaneseq
      %v2131 = vshrl.u32 %v2130, 7
      %v2132 = vsub.s32 0, %v2131
      %v2133 = vrot.slane %v1875, %v2132
      %v2134 = vlaneseq
      %v2135 = vshrl.u32 %v2134, 7
      %v2136 = vsub.s32 0, %v2135
      %v2137 = vrot.slane %v1858, %v2136
      %v2138 = vlaneseq
      %v2139 = vshrl.u32 %v2138, 7
      %v2140 = vsub.s32 0, %v2139
      %v2141 = vrot.slane %v1872, %v2140
      %v2142 = vlaneseq
      %v2143 = vshrl.u32 %v2142, 7
      %v2144 = vsub.s32 0, %v2143
      %v2145 = vrot.slane %v1874, %v2144
      %v2146 = vlaneseq
      %v2147 = vshrl.u32 %v2146, 7
      %v2148 = vsub.s32 0, %v2147
      %v2149 = vrot.slane %v1876, %v2148
      %v2150 = vlaneseq
      %v2151 = vshrl.u32 %v2150, 7
      %v2152 = vsub.s32 0, %v2151
      %v2153 = vrot.slane %v1900, %v2152
      %v2154 = vlaneseq
      %v2155 = vshrl.u32 %v2154, 7
      %v2156 = vsub.s32 0, %v2155
      %v2157 = vrot.slane %v1914, %v2156
      %v2158 = vlaneseq
      %v2159 = vshrl.u32 %v2158, 7
      %v2160 = vsub.s32 0, %v2159
      %v2161 = vrot.slane %v1922, %v2160
      %v2162 = vlaneseq
      %v2163 = vshrl.u32 %v2162, 7
      %v2164 = vsub.s32 0, %v2163
      %v2165 = vrot.slane %v1924, %v2164
      %v2166 = vlaneseq
      %v2167 = vshrl.u32 %v2166, 7
      %v2168 = vsub.s32 0, %v2167
      %v2169 = vrot.slane %v1907, %v2168
      %v2170 = vlaneseq
      %v2171 = vshrl.u32 %v2170, 7
      %v2172 = vsub.s32 0, %v2171
      %v2173 = vrot.slane %v1921, %v2172
      %v2174 = vlaneseq
      %v2175 = vshrl.u32 %v2174, 7
      %v2176 = vsub.s32 0, %v2175
      %v2177 = vrot.slane %v1923, %v2176
      %v2178 = vlaneseq
      %v2179 = vshrl.u32 %v2178, 7
      %v2180 = vsub.s32 0, %v2179
      %v2181 = vrot.slane %v1925, %v2180
      %v2246 = vadd.f32 %v1008, %v1929
      %v2247 = vadd.f32 %v1011, %v1929
      %v2248 = vadd.f32 %v1016, %v1933
      %v2249 = vadd.f32 %v1019, %v1933
      %v2250 = vadd.f32 %v1024, %v1937
      %v2251 = vadd.f32 %v1027, %v1937
      %v2252 = vadd.f32 %v1032, %v1941
      %v2253 = vadd.f32 %v1035, %v1941
      %v2254 = vadd.f32 %v1040, %v1945
      %v2255 = vadd.f32 %v1043, %v1945
      %v2256 = vadd.f32 %v1048, %v1949
      %v2257 = vadd.f32 %v1051, %v1949
      %v2258 = vadd.f32 %v1056, %v1953
      %v2259 = vadd.f32 %v1059, %v1953
      %v2260 = vadd.f32 %v1064, %v1957
      %v2261 = vadd.f32 %v1067, %v1957
      %v2262 = vadd.f32 %v1072, %v1961
      %v2263 = vadd.f32 %v1075, %v1961
      %v2264 = vadd.f32 %v1080, %v1965
      %v2265 = vadd.f32 %v1083, %v1965
      %v2266 = vadd.f32 %v1088, %v1969
      %v2267 = vadd.f32 %v1091, %v1969
      %v2268 = vadd.f32 %v1096, %v1973
      %v2269 = vadd.f32 %v1099, %v1973
      %v2270 = vadd.f32 %v1104, %v1977
      %v2271 = vadd.f32 %v1107, %v1977
      %v2272 = vadd.f32 %v1112, %v1981
      %v2273 = vadd.f32 %v1115, %v1981
      %v2274 = vadd.f32 %v1120, %v1985
      %v2275 = vadd.f32 %v1123, %v1985
      %v2276 = vadd.f32 %v1128, %v1989
      %v2277 = vadd.f32 %v1131, %v1989
      %v2278 = vadd.f32 %v1136, %v1993
      %v2279 = vadd.f32 %v1139, %v1993
      %v2280 = vadd.f32 %v1144, %v1997
      %v2281 = vadd.f32 %v1147, %v1997
      %v2282 = vadd.f32 %v1152, %v2001
      %v2283 = vadd.f32 %v1155, %v2001
      %v2284 = vadd.f32 %v1160, %v2005
      %v2285 = vadd.f32 %v1163, %v2005
      %v2286 = vadd.f32 %v1168, %v2009
      %v2287 = vadd.f32 %v1171, %v2009
      %v2288 = vadd.f32 %v1176, %v2013
      %v2289 = vadd.f32 %v1179, %v2013
      %v2290 = vadd.f32 %v1184, %v2017
      %v2291 = vadd.f32 %v1187, %v2017
      %v2292 = vadd.f32 %v1192, %v2021
      %v2293 = vadd.f32 %v1195, %v2021
      %v2294 = vadd.f32 %v1200, %v2025
      %v2295 = vadd.f32 %v1203, %v2025
      %v2296 = vadd.f32 %v1208, %v2029
      %v2297 = vadd.f32 %v1211, %v2029
      %v2298 = vadd.f32 %v1216, %v2033
      %v2299 = vadd.f32 %v1219, %v2033
      %v2300 = vadd.f32 %v1224, %v2037
      %v2301 = vadd.f32 %v1227, %v2037
      %v2302 = vadd.f32 %v1232, %v2041
      %v2303 = vadd.f32 %v1235, %v2041
      %v2304 = vadd.f32 %v1240, %v2045
      %v2305 = vadd.f32 %v1243, %v2045
      %v2306 = vadd.f32 %v1248, %v2049
      %v2307 = vadd.f32 %v1251, %v2049
      %v2308 = vadd.f32 %v1256, %v2053
      %v2309 = vadd.f32 %v1259, %v2053
      %v2310 = vadd.f32 %v1264, %v2057
      %v2311 = vadd.f32 %v1267, %v2057
      %v2312 = vadd.f32 %v1272, %v2061
      %v2313 = vadd.f32 %v1275, %v2061
      %v2314 = vadd.f32 %v1280, %v2065
      %v2315 = vadd.f32 %v1283, %v2065
      %v2316 = vadd.f32 %v1288, %v2069
      %v2317 = vadd.f32 %v1291, %v2069
      %v2318 = vadd.f32 %v1296, %v2073
      %v2319 = vadd.f32 %v1299, %v2073
      %v2320 = vadd.f32 %v1304, %v2077
      %v2321 = vadd.f32 %v1307, %v2077
      %v2322 = vadd.f32 %v1312, %v2081
      %v2323 = vadd.f32 %v1315, %v2081
      %v2324 = vadd.f32 %v1320, %v2085
      %v2325 = vadd.f32 %v1323, %v2085
      %v2326 = vadd.f32 %v1328, %v2089
      %v2327 = vadd.f32 %v1331, %v2089
      %v2328 = vadd.f32 %v1336, %v2093
      %v2329 = vadd.f32 %v1339, %v2093
      %v2330 = vadd.f32 %v1344, %v2097
      %v2331 = vadd.f32 %v1347, %v2097
      %v2332 = vadd.f32 %v1352, %v2101
      %v2333 = vadd.f32 %v1355, %v2101
      %v2334 = vadd.f32 %v1360, %v2105
      %v2335 = vadd.f32 %v1363, %v2105
      %v2336 = vadd.f32 %v1368, %v2109
      %v2337 = vadd.f32 %v1371, %v2109
      %v2338 = vadd.f32 %v1376, %v2113
      %v2339 = vadd.f32 %v1379, %v2113
      %v2340 = vadd.f32 %v1384, %v2117
      %v2341 = vadd.f32 %v1387, %v2117
      %v2342 = vadd.f32 %v1392, %v2121
      %v2343 = vadd.f32 %v1395, %v2121
      %v2344 = vadd.f32 %v1400, %v2125
      %v2345 = vadd.f32 %v1403, %v2125
      %v2346 = vadd.f32 %v1408, %v2129
      %v2347 = vadd.f32 %v1411, %v2129
      %v2348 = vadd.f32 %v1416, %v2133
      %v2349 = vadd.f32 %v1419, %v2133
      %v2350 = vadd.f32 %v1424, %v2137
      %v2351 = vadd.f32 %v1427, %v2137
      %v2352 = vadd.f32 %v1432, %v2141
      %v2353 = vadd.f32 %v1435, %v2141
      %v2354 = vadd.f32 %v1440, %v2145
      %v2355 = vadd.f32 %v1443, %v2145
      %v2356 = vadd.f32 %v1448, %v2149
      %v2357 = vadd.f32 %v1451, %v2149
      %v2358 = vadd.f32 %v1456, %v2153
      %v2359 = vadd.f32 %v1459, %v2153
      %v2360 = vadd.f32 %v1464, %v2157
      %v2361 = vadd.f32 %v1467, %v2157
      %v2362 = vadd.f32 %v1472, %v2161
      %v2363 = vadd.f32 %v1475, %v2161
      %v2364 = vadd.f32 %v1480, %v2165
      %v2365 = vadd.f32 %v1483, %v2165
      %v2366 = vadd.f32 %v1488, %v2169
      %v2367 = vadd.f32 %v1491, %v2169
      %v2368 = vadd.f32 %v1496, %v2173
      %v2369 = vadd.f32 %v1499, %v2173
      %v2370 = vadd.f32 %v1504, %v2177
      %v2371 = vadd.f32 %v1507, %v2177
      %v2372 = vadd.f32 %v1512, %v2181
      %v2373 = vadd.f32 %v1515, %v2181
      %v2374 = vmax.f32 %v2246, 0.0
      %v2375 = vmax.f32 %v2247, 0.0
      %v2376 = vmax.f32 %v2248, 0.0
      %v2377 = vmax.f32 %v2249, 0.0
      %v2378 = vmax.f32 %v2250, 0.0
      %v2379 = vmax.f32 %v2251, 0.0
      %v2380 = vmax.f32 %v2252, 0.0
      %v2381 = vmax.f32 %v2253, 0.0
      %v2382 = vmax.f32 %v2254, 0.0
      %v2383 = vmax.f32 %v2255, 0.0
      %v2384 = vmax.f32 %v2256, 0.0
      %v2385 = vmax.f32 %v2257, 0.0
      %v2386 = vmax.f32 %v2258, 0.0
      %v2387 = vmax.f32 %v2259, 0.0
      %v2388 = vmax.f32 %v2260, 0.0
      %v2389 = vmax.f32 %v2261, 0.0
      %v2390 = vmax.f32 %v2262, 0.0
      %v2391 = vmax.f32 %v2263, 0.0
      %v2392 = vmax.f32 %v2264, 0.0
      %v2393 = vmax.f32 %v2265, 0.0
      %v2394 = vmax.f32 %v2266, 0.0
      %v2395 = vmax.f32 %v2267, 0.0
      %v2396 = vmax.f32 %v2268, 0.0
      %v2397 = vmax.f32 %v2269, 0.0
      %v2398 = vmax.f32 %v2270, 0.0
      %v2399 = vmax.f32 %v2271, 0.0
      %v2400 = vmax.f32 %v2272, 0.0
      %v2401 = vmax.f32 %v2273, 0.0
      %v2402 = vmax.f32 %v2274, 0.0
      %v2403 = vmax.f32 %v2275, 0.0
      %v2404 = vmax.f32 %v2276, 0.0
      %v2405 = vmax.f32 %v2277, 0.0
      %v2406 = vmax.f32 %v2278, 0.0
      %v2407 = vmax.f32 %v2279, 0.0
      %v2408 = vmax.f32 %v2280, 0.0
      %v2409 = vmax.f32 %v2281, 0.0
      %v2410 = vmax.f32 %v2282, 0.0
      %v2411 = vmax.f32 %v2283, 0.0
      %v2412 = vmax.f32 %v2284, 0.0
      %v2413 = vmax.f32 %v2285, 0.0
      %v2414 = vmax.f32 %v2286, 0.0
      %v2415 = vmax.f32 %v2287, 0.0
      %v2416 = vmax.f32 %v2288, 0.0
      %v2417 = vmax.f32 %v2289, 0.0
      %v2418 = vmax.f32 %v2290, 0.0
      %v2419 = vmax.f32 %v2291, 0.0
      %v2420 = vmax.f32 %v2292, 0.0
      %v2421 = vmax.f32 %v2293, 0.0
      %v2422 = vmax.f32 %v2294, 0.0
      %v2423 = vmax.f32 %v2295, 0.0
      %v2424 = vmax.f32 %v2296, 0.0
      %v2425 = vmax.f32 %v2297, 0.0
      %v2426 = vmax.f32 %v2298, 0.0
      %v2427 = vmax.f32 %v2299, 0.0
      %v2428 = vmax.f32 %v2300, 0.0
      %v2429 = vmax.f32 %v2301, 0.0
      %v2430 = vmax.f32 %v2302, 0.0
      %v2431 = vmax.f32 %v2303, 0.0
      %v2432 = vmax.f32 %v2304, 0.0
      %v2433 = vmax.f32 %v2305, 0.0
      %v2434 = vmax.f32 %v2306, 0.0
      %v2435 = vmax.f32 %v2307, 0.0
      %v2436 = vmax.f32 %v2308, 0.0
      %v2437 = vmax.f32 %v2309, 0.0
      %v2438 = vmax.f32 %v2310, 0.0
      %v2439 = vmax.f32 %v2311, 0.0
      %v2440 = vmax.f32 %v2312, 0.0
      %v2441 = vmax.f32 %v2313, 0.0
      %v2442 = vmax.f32 %v2314, 0.0
      %v2443 = vmax.f32 %v2315, 0.0
      %v2444 = vmax.f32 %v2316, 0.0
      %v2445 = vmax.f32 %v2317, 0.0
      %v2446 = vmax.f32 %v2318, 0.0
      %v2447 = vmax.f32 %v2319, 0.0
      %v2448 = vmax.f32 %v2320, 0.0
      %v2449 = vmax.f32 %v2321, 0.0
      %v2450 = vmax.f32 %v2322, 0.0
      %v2451 = vmax.f32 %v2323, 0.0
      %v2452 = vmax.f32 %v2324, 0.0
      %v2453 = vmax.f32 %v2325, 0.0
      %v2454 = vmax.f32 %v2326, 0.0
      %v2455 = vmax.f32 %v2327, 0.0
      %v2456 = vmax.f32 %v2328, 0.0
      %v2457 = vmax.f32 %v2329, 0.0
      %v2458 = vmax.f32 %v2330, 0.0
      %v2459 = vmax.f32 %v2331, 0.0
      %v2460 = vmax.f32 %v2332, 0.0
      %v2461 = vmax.f32 %v2333, 0.0
      %v2462 = vmax.f32 %v2334, 0.0
      %v2463 = vmax.f32 %v2335, 0.0
      %v2464 = vmax.f32 %v2336, 0.0
      %v2465 = vmax.f32 %v2337, 0.0
      %v2466 = vmax.f32 %v2338, 0.0
      %v2467 = vmax.f32 %v2339, 0.0
      %v2468 = vmax.f32 %v2340, 0.0
      %v2469 = vmax.f32 %v2341, 0.0
      %v2470 = vmax.f32 %v2342, 0.0
      %v2471 = vmax.f32 %v2343, 0.0
      %v2472 = vmax.f32 %v2344, 0.0
      %v2473 = vmax.f32 %v2345, 0.0
      %v2474 = vmax.f32 %v2346, 0.0
      %v2475 = vmax.f32 %v2347, 0.0
      %v2476 = vmax.f32 %v2348, 0.0
      %v2477 = vmax.f32 %v2349, 0.0
      %v2478 = vmax.f32 %v2350, 0.0
      %v2479 = vmax.f32 %v2351, 0.0
      %v2480 = vmax.f32 %v2352, 0.0
      %v2481 = vmax.f32 %v2353, 0.0
      %v2482 = vmax.f32 %v2354, 0.0
      %v2483 = vmax.f32 %v2355, 0.0
      %v2484 = vmax.f32 %v2356, 0.0
      %v2485 = vmax.f32 %v2357, 0.0
      %v2486 = vmax.f32 %v2358, 0.0
      %v2487 = vmax.f32 %v2359, 0.0
      %v2488 = vmax.f32 %v2360, 0.0
      %v2489 = vmax.f32 %v2361, 0.0
      %v2490 = vmax.f32 %v2362, 0.0
      %v2491 = vmax.f32 %v2363, 0.0
      %v2492 = vmax.f32 %v2364, 0.0
      %v2493 = vmax.f32 %v2365, 0.0
      %v2494 = vmax.f32 %v2366, 0.0
      %v2495 = vmax.f32 %v2367, 0.0
      %v2496 = vmax.f32 %v2368, 0.0
      %v2497 = vmax.f32 %v2369, 0.0
      %v2498 = vmax.f32 %v2370, 0.0
      %v2499 = vmax.f32 %v2371, 0.0
      %v2500 = vmax.f32 %v2372, 0.0
      %v2501 = vmax.f32 %v2373, 0.0
      %v2502 = vpack.c.bf16 %v2375, %v2374
      %v2503 = vpack.c.bf16 %v2377, %v2376
      %v2504 = vpack.c.bf16 %v2379, %v2378
      %v2505 = vpack.c.bf16 %v2381, %v2380
      %v2506 = vpack.c.bf16 %v2383, %v2382
      %v2507 = vpack.c.bf16 %v2385, %v2384
      %v2508 = vpack.c.bf16 %v2387, %v2386
      %v2509 = vpack.c.bf16 %v2389, %v2388
      %v2510 = vpack.c.bf16 %v2391, %v2390
      %v2511 = vpack.c.bf16 %v2393, %v2392
      %v2512 = vpack.c.bf16 %v2395, %v2394
      %v2513 = vpack.c.bf16 %v2397, %v2396
      %v2514 = vpack.c.bf16 %v2399, %v2398
      %v2515 = vpack.c.bf16 %v2401, %v2400
      %v2516 = vpack.c.bf16 %v2403, %v2402
      %v2517 = vpack.c.bf16 %v2405, %v2404
      %v2518 = vpack.c.bf16 %v2407, %v2406
      %v2519 = vpack.c.bf16 %v2409, %v2408
      %v2520 = vpack.c.bf16 %v2411, %v2410
      %v2521 = vpack.c.bf16 %v2413, %v2412
      %v2522 = vpack.c.bf16 %v2415, %v2414
      %v2523 = vpack.c.bf16 %v2417, %v2416
      %v2524 = vpack.c.bf16 %v2419, %v2418
      %v2525 = vpack.c.bf16 %v2421, %v2420
      %v2526 = vpack.c.bf16 %v2423, %v2422
      %v2527 = vpack.c.bf16 %v2425, %v2424
      %v2528 = vpack.c.bf16 %v2427, %v2426
      %v2529 = vpack.c.bf16 %v2429, %v2428
      %v2530 = vpack.c.bf16 %v2431, %v2430
      %v2531 = vpack.c.bf16 %v2433, %v2432
      %v2532 = vpack.c.bf16 %v2435, %v2434
      %v2533 = vpack.c.bf16 %v2437, %v2436
      %v2534 = vpack.c.bf16 %v2439, %v2438
      %v2535 = vpack.c.bf16 %v2441, %v2440
      %v2536 = vpack.c.bf16 %v2443, %v2442
      %v2537 = vpack.c.bf16 %v2445, %v2444
      %v2538 = vpack.c.bf16 %v2447, %v2446
      %v2539 = vpack.c.bf16 %v2449, %v2448
      %v2540 = vpack.c.bf16 %v2451, %v2450
      %v2541 = vpack.c.bf16 %v2453, %v2452
      %v2542 = vpack.c.bf16 %v2455, %v2454
      %v2543 = vpack.c.bf16 %v2457, %v2456
      %v2544 = vpack.c.bf16 %v2459, %v2458
      %v2545 = vpack.c.bf16 %v2461, %v2460
      %v2546 = vpack.c.bf16 %v2463, %v2462
      %v2547 = vpack.c.bf16 %v2465, %v2464
      %v2548 = vpack.c.bf16 %v2467, %v2466
      %v2549 = vpack.c.bf16 %v2469, %v2468
      %v2550 = vpack.c.bf16 %v2471, %v2470
      %v2551 = vpack.c.bf16 %v2473, %v2472
      %v2552 = vpack.c.bf16 %v2475, %v2474
      %v2553 = vpack.c.bf16 %v2477, %v2476
      %v2554 = vpack.c.bf16 %v2479, %v2478
      %v2555 = vpack.c.bf16 %v2481, %v2480
      %v2556 = vpack.c.bf16 %v2483, %v2482
      %v2557 = vpack.c.bf16 %v2485, %v2484
      %v2558 = vpack.c.bf16 %v2487, %v2486
      %v2559 = vpack.c.bf16 %v2489, %v2488
      %v2560 = vpack.c.bf16 %v2491, %v2490
      %v2561 = vpack.c.bf16 %v2493, %v2492
      %v2562 = vpack.c.bf16 %v2495, %v2494
      %v2563 = vpack.c.bf16 %v2497, %v2496
      %v2564 = vpack.c.bf16 %v2499, %v2498
      %v2565 = vpack.c.bf16 %v2501, %v2500
      %v2566 = vld [vmem:[%s3] sm:$0xf]
      %v2567 = vld [vmem:[%s3 + $0x4] sm:$0xf]
      %v2568 = vld [vmem:[%s3 + $0x8] sm:$0xf]
      %v2569 = vld [vmem:[%s3 + $0xc] sm:$0xf]
      %v2574 = vunpack.c.l.b16 %v2566
      %v2575 = vunpack.c.l.b16 %v2567
      %v2576 = vunpack.c.l.b16 %v2568
      %v2577 = vunpack.c.l.b16 %v2569
      %v2578 = vpack.c.b16 %v2575, %v2574
      %v2579 = vpack.c.b16 %v2577, %v2576
      %2710 = vrot.lane.b32.xlu0 %v1008, 96
      %v2711 = vpop.permute.xlu0 %2710
      %2712 = vrot.lane.b32.xlu0 %v1011, 96
      %v2713 = vpop.permute.xlu0 %2712
      %2714 = vrot.lane.b32.xlu0 %v1016, 96
      %v2715 = vpop.permute.xlu0 %2714
      %2716 = vrot.lane.b32.xlu0 %v1019, 96
      %v2717 = vpop.permute.xlu0 %2716
      %2718 = vrot.lane.b32.xlu0 %v1024, 96
      %v2719 = vpop.permute.xlu0 %2718
      %2720 = vrot.lane.b32.xlu0 %v1027, 96
      %v2721 = vpop.permute.xlu0 %2720
      %2722 = vrot.lane.b32.xlu0 %v1032, 96
      %v2723 = vpop.permute.xlu0 %2722
      %2724 = vrot.lane.b32.xlu0 %v1035, 96
      %v2725 = vpop.permute.xlu0 %2724
      %2726 = vrot.lane.b32.xlu0 %v1040, 96
      %v2727 = vpop.permute.xlu0 %2726
      %2728 = vrot.lane.b32.xlu0 %v1043, 96
      %v2729 = vpop.permute.xlu0 %2728
      %2730 = vrot.lane.b32.xlu0 %v1048, 96
      %v2731 = vpop.permute.xlu0 %2730
      %2732 = vrot.lane.b32.xlu0 %v1051, 96
      %v2733 = vpop.permute.xlu0 %2732
      %2734 = vrot.lane.b32.xlu0 %v1056, 96
      %v2735 = vpop.permute.xlu0 %2734
      %2736 = vrot.lane.b32.xlu0 %v1059, 96
      %v2737 = vpop.permute.xlu0 %2736
      %2738 = vrot.lane.b32.xlu0 %v1064, 96
      %v2739 = vpop.permute.xlu0 %2738
      %2740 = vrot.lane.b32.xlu0 %v1067, 96
      %v2741 = vpop.permute.xlu0 %2740
      %2742 = vrot.lane.b32.xlu0 %v1072, 96
      %v2743 = vpop.permute.xlu0 %2742
      %2744 = vrot.lane.b32.xlu0 %v1075, 96
      %v2745 = vpop.permute.xlu0 %2744
      %2746 = vrot.lane.b32.xlu0 %v1080, 96
      %v2747 = vpop.permute.xlu0 %2746
      %2748 = vrot.lane.b32.xlu0 %v1083, 96
      %v2749 = vpop.permute.xlu0 %2748
      %2750 = vrot.lane.b32.xlu0 %v1088, 96
      %v2751 = vpop.permute.xlu0 %2750
      %2752 = vrot.lane.b32.xlu0 %v1091, 96
      %v2753 = vpop.permute.xlu0 %2752
      %2754 = vrot.lane.b32.xlu0 %v1096, 96
      %v2755 = vpop.permute.xlu0 %2754
      %2756 = vrot.lane.b32.xlu0 %v1099, 96
      %v2757 = vpop.permute.xlu0 %2756
      %2758 = vrot.lane.b32.xlu0 %v1104, 96
      %v2759 = vpop.permute.xlu0 %2758
      %2760 = vrot.lane.b32.xlu0 %v1107, 96
      %v2761 = vpop.permute.xlu0 %2760
      %2762 = vrot.lane.b32.xlu0 %v1112, 96
      %v2763 = vpop.permute.xlu0 %2762
      %2764 = vrot.lane.b32.xlu0 %v1115, 96
      %v2765 = vpop.permute.xlu0 %2764
      %2766 = vrot.lane.b32.xlu0 %v1120, 96
      %v2767 = vpop.permute.xlu0 %2766
      %2768 = vrot.lane.b32.xlu0 %v1123, 96
      %v2769 = vpop.permute.xlu0 %2768
      %2770 = vrot.lane.b32.xlu0 %v1128, 96
      %v2771 = vpop.permute.xlu0 %2770
      %2772 = vrot.lane.b32.xlu0 %v1131, 96
      %v2773 = vpop.permute.xlu0 %2772
      %2774 = vrot.lane.b32.xlu0 %v1136, 96
      %v2775 = vpop.permute.xlu0 %2774
      %2776 = vrot.lane.b32.xlu0 %v1139, 96
      %v2777 = vpop.permute.xlu0 %2776
      %2778 = vrot.lane.b32.xlu0 %v1144, 96
      %v2779 = vpop.permute.xlu0 %2778
      %2780 = vrot.lane.b32.xlu0 %v1147, 96
      %v2781 = vpop.permute.xlu0 %2780
      %2782 = vrot.lane.b32.xlu0 %v1152, 96
      %v2783 = vpop.permute.xlu0 %2782
      %2784 = vrot.lane.b32.xlu0 %v1155, 96
      %v2785 = vpop.permute.xlu0 %2784
      %2786 = vrot.lane.b32.xlu0 %v1160, 96
      %v2787 = vpop.permute.xlu0 %2786
      %2788 = vrot.lane.b32.xlu0 %v1163, 96
      %v2789 = vpop.permute.xlu0 %2788
      %2790 = vrot.lane.b32.xlu0 %v1168, 96
      %v2791 = vpop.permute.xlu0 %2790
      %2792 = vrot.lane.b32.xlu0 %v1171, 96
      %v2793 = vpop.permute.xlu0 %2792
      %2794 = vrot.lane.b32.xlu0 %v1176, 96
      %v2795 = vpop.permute.xlu0 %2794
      %2796 = vrot.lane.b32.xlu0 %v1179, 96
      %v2797 = vpop.permute.xlu0 %2796
      %2798 = vrot.lane.b32.xlu0 %v1184, 96
      %v2799 = vpop.permute.xlu0 %2798
      %2800 = vrot.lane.b32.xlu0 %v1187, 96
      %v2801 = vpop.permute.xlu0 %2800
      %2802 = vrot.lane.b32.xlu0 %v1192, 96
      %v2803 = vpop.permute.xlu0 %2802
      %2804 = vrot.lane.b32.xlu0 %v1195, 96
      %v2805 = vpop.permute.xlu0 %2804
      %2806 = vrot.lane.b32.xlu0 %v1200, 96
      %v2807 = vpop.permute.xlu0 %2806
      %2808 = vrot.lane.b32.xlu0 %v1203, 96
      %v2809 = vpop.permute.xlu0 %2808
      %2810 = vrot.lane.b32.xlu0 %v1208, 96
      %v2811 = vpop.permute.xlu0 %2810
      %2812 = vrot.lane.b32.xlu0 %v1211, 96
      %v2813 = vpop.permute.xlu0 %2812
      %2814 = vrot.lane.b32.xlu0 %v1216, 96
      %v2815 = vpop.permute.xlu0 %2814
      %2816 = vrot.lane.b32.xlu0 %v1219, 96
      %v2817 = vpop.permute.xlu0 %2816
      %2818 = vrot.lane.b32.xlu0 %v1224, 96
      %v2819 = vpop.permute.xlu0 %2818
      %2820 = vrot.lane.b32.xlu0 %v1227, 96
      %v2821 = vpop.permute.xlu0 %2820
      %2822 = vrot.lane.b32.xlu0 %v1232, 96
      %v2823 = vpop.permute.xlu0 %2822
      %2824 = vrot.lane.b32.xlu0 %v1235, 96
      %v2825 = vpop.permute.xlu0 %2824
      %2826 = vrot.lane.b32.xlu0 %v1240, 96
      %v2827 = vpop.permute.xlu0 %2826
      %2828 = vrot.lane.b32.xlu0 %v1243, 96
      %v2829 = vpop.permute.xlu0 %2828
      %2830 = vrot.lane.b32.xlu0 %v1248, 96
      %v2831 = vpop.permute.xlu0 %2830
      %2832 = vrot.lane.b32.xlu0 %v1251, 96
      %v2833 = vpop.permute.xlu0 %2832
      %2834 = vrot.lane.b32.xlu0 %v1256, 96
      %v2835 = vpop.permute.xlu0 %2834
      %2836 = vrot.lane.b32.xlu0 %v1259, 96
      %v2837 = vpop.permute.xlu0 %2836
      %2838 = vrot.lane.b32.xlu0 %v1264, 96
      %v2839 = vpop.permute.xlu0 %2838
      %2840 = vrot.lane.b32.xlu0 %v1267, 96
      %v2841 = vpop.permute.xlu0 %2840
      %2842 = vrot.lane.b32.xlu0 %v1272, 96
      %v2843 = vpop.permute.xlu0 %2842
      %2844 = vrot.lane.b32.xlu0 %v1275, 96
      %v2845 = vpop.permute.xlu0 %2844
      %2846 = vrot.lane.b32.xlu0 %v1280, 96
      %v2847 = vpop.permute.xlu0 %2846
      %2848 = vrot.lane.b32.xlu0 %v1283, 96
      %v2849 = vpop.permute.xlu0 %2848
      %2850 = vrot.lane.b32.xlu0 %v1288, 96
      %v2851 = vpop.permute.xlu0 %2850
      %2852 = vrot.lane.b32.xlu0 %v1291, 96
      %v2853 = vpop.permute.xlu0 %2852
      %2854 = vrot.lane.b32.xlu0 %v1296, 96
      %v2855 = vpop.permute.xlu0 %2854
      %2856 = vrot.lane.b32.xlu0 %v1299, 96
      %v2857 = vpop.permute.xlu0 %2856
      %2858 = vrot.lane.b32.xlu0 %v1304, 96
      %v2859 = vpop.permute.xlu0 %2858
      %2860 = vrot.lane.b32.xlu0 %v1307, 96
      %v2861 = vpop.permute.xlu0 %2860
      %2862 = vrot.lane.b32.xlu0 %v1312, 96
      %v2863 = vpop.permute.xlu0 %2862
      %2864 = vrot.lane.b32.xlu0 %v1315, 96
      %v2865 = vpop.permute.xlu0 %2864
      %2866 = vrot.lane.b32.xlu0 %v1320, 96
      %v2867 = vpop.permute.xlu0 %2866
      %2868 = vrot.lane.b32.xlu0 %v1323, 96
      %v2869 = vpop.permute.xlu0 %2868
      %2870 = vrot.lane.b32.xlu0 %v1328, 96
      %v2871 = vpop.permute.xlu0 %2870
      %2872 = vrot.lane.b32.xlu0 %v1331, 96
      %v2873 = vpop.permute.xlu0 %2872
      %2874 = vrot.lane.b32.xlu0 %v1336, 96
      %v2875 = vpop.permute.xlu0 %2874
      %2876 = vrot.lane.b32.xlu0 %v1339, 96
      %v2877 = vpop.permute.xlu0 %2876
      %2878 = vrot.lane.b32.xlu0 %v1344, 96
      %v2879 = vpop.permute.xlu0 %2878
      %2880 = vrot.lane.b32.xlu0 %v1347, 96
      %v2881 = vpop.permute.xlu0 %2880
      %2882 = vrot.lane.b32.xlu0 %v1352, 96
      %v2883 = vpop.permute.xlu0 %2882
      %2884 = vrot.lane.b32.xlu0 %v1355, 96
      %v2885 = vpop.permute.xlu0 %2884
      %2886 = vrot.lane.b32.xlu0 %v1360, 96
      %v2887 = vpop.permute.xlu0 %2886
      %2888 = vrot.lane.b32.xlu0 %v1363, 96
      %v2889 = vpop.permute.xlu0 %2888
      %2890 = vrot.lane.b32.xlu0 %v1368, 96
      %v2891 = vpop.permute.xlu0 %2890
      %2892 = vrot.lane.b32.xlu0 %v1371, 96
      %v2893 = vpop.permute.xlu0 %2892
      %2894 = vrot.lane.b32.xlu0 %v1376, 96
      %v2895 = vpop.permute.xlu0 %2894
      %2896 = vrot.lane.b32.xlu0 %v1379, 96
      %v2897 = vpop.permute.xlu0 %2896
      %2898 = vrot.lane.b32.xlu0 %v1384, 96
      %v2899 = vpop.permute.xlu0 %2898
      %2900 = vrot.lane.b32.xlu0 %v1387, 96
      %v2901 = vpop.permute.xlu0 %2900
      %2902 = vrot.lane.b32.xlu0 %v1392, 96
      %v2903 = vpop.permute.xlu0 %2902
      %2904 = vrot.lane.b32.xlu0 %v1395, 96
      %v2905 = vpop.permute.xlu0 %2904
      %2906 = vrot.lane.b32.xlu0 %v1400, 96
      %v2907 = vpop.permute.xlu0 %2906
      %2908 = vrot.lane.b32.xlu0 %v1403, 96
      %v2909 = vpop.permute.xlu0 %2908
      %2910 = vrot.lane.b32.xlu0 %v1408, 96
      %v2911 = vpop.permute.xlu0 %2910
      %2912 = vrot.lane.b32.xlu0 %v1411, 96
      %v2913 = vpop.permute.xlu0 %2912
      %2914 = vrot.lane.b32.xlu0 %v1416, 96
      %v2915 = vpop.permute.xlu0 %2914
      %2916 = vrot.lane.b32.xlu0 %v1419, 96
      %v2917 = vpop.permute.xlu0 %2916
      %2918 = vrot.lane.b32.xlu0 %v1424, 96
      %v2919 = vpop.permute.xlu0 %2918
      %2920 = vrot.lane.b32.xlu0 %v1427, 96
      %v2921 = vpop.permute.xlu0 %2920
      %2922 = vrot.lane.b32.xlu0 %v1432, 96
      %v2923 = vpop.permute.xlu0 %2922
      %2924 = vrot.lane.b32.xlu0 %v1435, 96
      %v2925 = vpop.permute.xlu0 %2924
      %2926 = vrot.lane.b32.xlu0 %v1440, 96
      %v2927 = vpop.permute.xlu0 %2926
      %2928 = vrot.lane.b32.xlu0 %v1443, 96
      %v2929 = vpop.permute.xlu0 %2928
      %2930 = vrot.lane.b32.xlu0 %v1448, 96
      %v2931 = vpop.permute.xlu0 %2930
      %2932 = vrot.lane.b32.xlu0 %v1451, 96
      %v2933 = vpop.permute.xlu0 %2932
      %2934 = vrot.lane.b32.xlu0 %v1456, 96
      %v2935 = vpop.permute.xlu0 %2934
      %2936 = vrot.lane.b32.xlu0 %v1459, 96
      %v2937 = vpop.permute.xlu0 %2936
      %2938 = vrot.lane.b32.xlu0 %v1464, 96
      %v2939 = vpop.permute.xlu0 %2938
      %2940 = vrot.lane.b32.xlu0 %v1467, 96
      %v2941 = vpop.permute.xlu0 %2940
      %2942 = vrot.lane.b32.xlu0 %v1472, 96
      %v2943 = vpop.permute.xlu0 %2942
      %2944 = vrot.lane.b32.xlu0 %v1475, 96
      %v2945 = vpop.permute.xlu0 %2944
      %2946 = vrot.lane.b32.xlu0 %v1480, 96
      %v2947 = vpop.permute.xlu0 %2946
      %2948 = vrot.lane.b32.xlu0 %v1483, 96
      %v2949 = vpop.permute.xlu0 %2948
      %2950 = vrot.lane.b32.xlu0 %v1488, 96
      %v2951 = vpop.permute.xlu0 %2950
      %2952 = vrot.lane.b32.xlu0 %v1491, 96
      %v2953 = vpop.permute.xlu0 %2952
      %2954 = vrot.lane.b32.xlu0 %v1496, 96
      %v2955 = vpop.permute.xlu0 %2954
      %2956 = vrot.lane.b32.xlu0 %v1499, 96
      %v2957 = vpop.permute.xlu0 %2956
      %2958 = vrot.lane.b32.xlu0 %v1504, 96
      %v2959 = vpop.permute.xlu0 %2958
      %2960 = vrot.lane.b32.xlu0 %v1507, 96
      %v2961 = vpop.permute.xlu0 %2960
      %2962 = vrot.lane.b32.xlu0 %v1512, 96
      %v2963 = vpop.permute.xlu0 %2962
      %2964 = vrot.lane.b32.xlu0 %v1515, 96
      %v2965 = vpop.permute.xlu0 %2964
      %vm3094 = vcmask 261120
      %v3096 = vsel %vm3094, %v2502, 0
      %v3099 = vsel %vm3094, %v2503, 0
      %v3102 = vsel %vm3094, %v2504, 0
      %v3105 = vsel %vm3094, %v2505, 0
      %v3108 = vsel %vm3094, %v2506, 0
      %v3111 = vsel %vm3094, %v2507, 0
      %v3114 = vsel %vm3094, %v2508, 0
      %v3117 = vsel %vm3094, %v2509, 0
      %v3120 = vsel %vm3094, %v2510, 0
      %v3123 = vsel %vm3094, %v2511, 0
      %v3126 = vsel %vm3094, %v2512, 0
      %v3129 = vsel %vm3094, %v2513, 0
      %v3132 = vsel %vm3094, %v2514, 0
      %v3135 = vsel %vm3094, %v2515, 0
      %v3138 = vsel %vm3094, %v2516, 0
      %v3141 = vsel %vm3094, %v2517, 0
      %v3144 = vsel %vm3094, %v2518, 0
      %v3147 = vsel %vm3094, %v2519, 0
      %v3150 = vsel %vm3094, %v2520, 0
      %v3153 = vsel %vm3094, %v2521, 0
      %v3156 = vsel %vm3094, %v2522, 0
      %v3159 = vsel %vm3094, %v2523, 0
      %v3162 = vsel %vm3094, %v2524, 0
      %v3165 = vsel %vm3094, %v2525, 0
      %v3168 = vsel %vm3094, %v2526, 0
      %v3171 = vsel %vm3094, %v2527, 0
      %v3174 = vsel %vm3094, %v2528, 0
      %v3177 = vsel %vm3094, %v2529, 0
      %v3180 = vsel %vm3094, %v2530, 0
      %v3183 = vsel %vm3094, %v2531, 0
      %v3186 = vsel %vm3094, %v2532, 0
      %v3189 = vsel %vm3094, %v2533, 0
      %v3192 = vsel %vm3094, %v2534, 0
      %v3195 = vsel %vm3094, %v2535, 0
      %v3198 = vsel %vm3094, %v2536, 0
      %v3201 = vsel %vm3094, %v2537, 0
      %v3204 = vsel %vm3094, %v2538, 0
      %v3207 = vsel %vm3094, %v2539, 0
      %v3210 = vsel %vm3094, %v2540, 0
      %v3213 = vsel %vm3094, %v2541, 0
      %v3216 = vsel %vm3094, %v2542, 0
      %v3219 = vsel %vm3094, %v2543, 0
      %v3222 = vsel %vm3094, %v2544, 0
      %v3225 = vsel %vm3094, %v2545, 0
      %v3228 = vsel %vm3094, %v2546, 0
      %v3231 = vsel %vm3094, %v2547, 0
      %v3234 = vsel %vm3094, %v2548, 0
      %v3237 = vsel %vm3094, %v2549, 0
      %v3240 = vsel %vm3094, %v2550, 0
      %v3243 = vsel %vm3094, %v2551, 0
      %v3246 = vsel %vm3094, %v2552, 0
      %v3249 = vsel %vm3094, %v2553, 0
      %v3252 = vsel %vm3094, %v2554, 0
      %v3255 = vsel %vm3094, %v2555, 0
      %v3258 = vsel %vm3094, %v2556, 0
      %v3261 = vsel %vm3094, %v2557, 0
      %v3264 = vsel %vm3094, %v2558, 0
      %v3267 = vsel %vm3094, %v2559, 0
      %v3270 = vsel %vm3094, %v2560, 0
      %v3273 = vsel %vm3094, %v2561, 0
      %v3276 = vsel %vm3094, %v2562, 0
      %v3279 = vsel %vm3094, %v2563, 0
      %v3282 = vsel %vm3094, %v2564, 0
      %v3285 = vsel %vm3094, %v2565, 0
      %3287 = vmatprep.subr.bf16.mxu0 0
      %3288 = vmatpush1.bf16.msra.mxu0 %v2578
      %3289 = vmatprep.subr.bf16.mxu0 0
      %3290 = vmatpush1.bf16.msra.mxu0 %v2579
      %3291 = vmatprep.subr.bf16.mxu0 0
      %3292 = vmatpush1.bf16.msra.mxu0 0
      %3293 = vmatprep.subr.bf16.mxu0 0
      %3294 = vmatpush1.bf16.msra.mxu0 0
      %3295 = vmatprep.subr.bf16.mxu0 0
      %3296 = vmatpush1.bf16.msra.mxu0 0
      %3297 = vmatprep.subr.bf16.mxu0 0
      %3298 = vmatpush1.bf16.msra.mxu0 0
      %3299 = vmatprep.subr.bf16.mxu0 0
      %3300 = vmatpush1.bf16.msra.mxu0 0
      %3301 = vmatprep.subr.bf16.mxu0 0
      %3302 = vmatpush1.bf16.msra.mxu0 0
      %3303 = vmatprep.subr.bf16.mxu0 0
      %3304 = vmatpush1.bf16.msra.mxu0 0
      %3305 = vmatprep.subr.bf16.mxu0 0
      %3306 = vmatpush1.bf16.msra.mxu0 0
      %3307 = vmatprep.subr.bf16.mxu0 0
      %3308 = vmatpush1.bf16.msra.mxu0 0
      %3309 = vmatprep.subr.bf16.mxu0 0
      %3310 = vmatpush1.bf16.msra.mxu0 0
      %3311 = vmatprep.subr.bf16.mxu0 0
      %3312 = vmatpush1.bf16.msra.mxu0 0
      %3313 = vmatprep.subr.bf16.mxu0 0
      %3314 = vmatpush1.bf16.msra.mxu0 0
      %3315 = vmatprep.subr.bf16.mxu0 0
      %3316 = vmatpush1.bf16.msra.mxu0 0
      %3317 = vmatprep.subr.bf16.mxu0 0
      %3318 = vmatpush1.bf16.msra.mxu0 0
      %3319 = vmatprep.mubr.bf16.mxu0 0
      %3320 = vmatmul.mubr.bf16.gmra.mrb[0].mxu0 %v3096
      %v3321 = vpop.f32.mrb[0].mxu0
      %v3322 = vadd.f32 %v2711, %v3321
      %v3323 = vpop.f32.mrb[0].mxu0
      %v3324 = vpop.f32.mrb[0].mxu0
      %v3325 = vadd.f32 %v2713, %v3324
      %v3326 = vpop.f32.mrb[0].mxu0
      %3327 = vmatprep.mubr.bf16.mxu0 0
      %3328 = vmatmul.mubr.bf16.gmra.mrb[0].mxu0 %v3099
      %v3329 = vpop.f32.mrb[0].mxu0
      %v3330 = vadd.f32 %v2715, %v3329
      %v3331 = vpop.f32.mrb[0].mxu0
      %v3332 = vpop.f32.mrb[0].mxu0
      %v3333 = vadd.f32 %v2717, %v3332
      %v3334 = vpop.f32.mrb[0].mxu0
      %3335 = vmatprep.mubr.bf16.mxu0 0
      %3336 = vmatmul.mubr.bf16.gmra.mrb[0].mxu0 %v3102
      %v3337 = vpop.f32.mrb[0].mxu0
      %v3338 = vadd.f32 %v2719, %v3337
      %v3339 = vpop.f32.mrb[0].mxu0
      %v3340 = vpop.f32.mrb[0].mxu0
      %v3341 = vadd.f32 %v2721, %v3340
      %v3342 = vpop.f32.mrb[0].mxu0
      %3343 = vmatprep.mubr.bf16.mxu0 0
      %3344 = vmatmul.mubr.bf16.gmra.mrb[0].mxu0 %v3105
      %v3345 = vpop.f32.mrb[0].mxu0
      %v3346 = vadd.f32 %v2723, %v3345
      %v3347 = vpop.f32.mrb[0].mxu0
      %v3348 = vpop.f32.mrb[0].mxu0
      %v3349 = vadd.f32 %v2725, %v3348
      %v3350 = vpop.f32.mrb[0].mxu0
      %3351 = vmatprep.mubr.bf16.mxu0 0
      %3352 = vmatmul.mubr.bf16.gmra.mrb[0].mxu0 %v3108
      %v3353 = vpop.f32.mrb[0].mxu0
      %v3354 = vadd.f32 %v2727, %v3353
      %v3355 = vpop.f32.mrb[0].mxu0
      %v3356 = vpop.f32.mrb[0].mxu0
      %v3357 = vadd.f32 %v2729, %v3356
      %v3358 = vpop.f32.mrb[0].mxu0
      %3359 = vmatprep.mubr.bf16.mxu0 0
      %3360 = vmatmul.mubr.bf16.gmra.mrb[0].mxu0 %v3111
      %v3361 = vpop.f32.mrb[0].mxu0
      %v3362 = vadd.f32 %v2731, %v3361
      %v3363 = vpop.f32.mrb[0].mxu0
      %v3364 = vpop.f32.mrb[0].mxu0
      %v3365 = vadd.f32 %v2733, %v3364
      %v3366 = vpop.f32.mrb[0].mxu0
      %3367 = vmatprep.mubr.bf16.mxu0 0
      %3368 = vmatmul.mubr.bf16.gmra.mrb[0].mxu0 %v3114
      %v3369 = vpop.f32.mrb[0].mxu0
      %v3370 = vadd.f32 %v2735, %v3369
      %v3371 = vpop.f32.mrb[0].mxu0
      %v3372 = vpop.f32.mrb[0].mxu0
      %v3373 = vadd.f32 %v2737, %v3372
      %v3374 = vpop.f32.mrb[0].mxu0
      %3375 = vmatprep.mubr.bf16.mxu0 0
      %3376 = vmatmul.mubr.bf16.gmra.mrb[0].mxu0 %v3117
      %v3377 = vpop.f32.mrb[0].mxu0
      %v3378 = vadd.f32 %v2739, %v3377
      %v3379 = vpop.f32.mrb[0].mxu0
      %v3380 = vpop.f32.mrb[0].mxu0
      %v3381 = vadd.f32 %v2741, %v3380
      %v3382 = vpop.f32.mrb[0].mxu0
      %3383 = vmatprep.mubr.bf16.mxu0 0
      %3384 = vmatmul.mubr.bf16.gmra.mrb[0].mxu0 %v3120
      %v3385 = vpop.f32.mrb[0].mxu0
      %v3386 = vadd.f32 %v2743, %v3385
      %v3387 = vpop.f32.mrb[0].mxu0
      %v3388 = vpop.f32.mrb[0].mxu0
      %v3389 = vadd.f32 %v2745, %v3388
      %v3390 = vpop.f32.mrb[0].mxu0
      %3391 = vmatprep.mubr.bf16.mxu0 0
      %3392 = vmatmul.mubr.bf16.gmra.mrb[0].mxu0 %v3123
      %v3393 = vpop.f32.mrb[0].mxu0
      %v3394 = vadd.f32 %v2747, %v3393
      %v3395 = vpop.f32.mrb[0].mxu0
      %v3396 = vpop.f32.mrb[0].mxu0
      %v3397 = vadd.f32 %v2749, %v3396
      %v3398 = vpop.f32.mrb[0].mxu0
      %3399 = vmatprep.mubr.bf16.mxu0 0
      %3400 = vmatmul.mubr.bf16.gmra.mrb[0].mxu0 %v3126
      %v3401 = vpop.f32.mrb[0].mxu0
      %v3402 = vadd.f32 %v2751, %v3401
      %v3403 = vpop.f32.mrb[0].mxu0
      %v3404 = vpop.f32.mrb[0].mxu0
      %v3405 = vadd.f32 %v2753, %v3404
      %v3406 = vpop.f32.mrb[0].mxu0
      %3407 = vmatprep.mubr.bf16.mxu0 0
      %3408 = vmatmul.mubr.bf16.gmra.mrb[0].mxu0 %v3129
      %v3409 = vpop.f32.mrb[0].mxu0
      %v3410 = vadd.f32 %v2755, %v3409
      %v3411 = vpop.f32.mrb[0].mxu0
      %v3412 = vpop.f32.mrb[0].mxu0
      %v3413 = vadd.f32 %v2757, %v3412
      %v3414 = vpop.f32.mrb[0].mxu0
      %3415 = vmatprep.mubr.bf16.mxu0 0
      %3416 = vmatmul.mubr.bf16.gmra.mrb[0].mxu0 %v3132
      %v3417 = vpop.f32.mrb[0].mxu0
      %v3418 = vadd.f32 %v2759, %v3417
      %v3419 = vpop.f32.mrb[0].mxu0
      %v3420 = vpop.f32.mrb[0].mxu0
      %v3421 = vadd.f32 %v2761, %v3420
      %v3422 = vpop.f32.mrb[0].mxu0
      %3423 = vmatprep.mubr.bf16.mxu0 0
      %3424 = vmatmul.mubr.bf16.gmra.mrb[0].mxu0 %v3135
      %v3425 = vpop.f32.mrb[0].mxu0
      %v3426 = vadd.f32 %v2763, %v3425
      %v3427 = vpop.f32.mrb[0].mxu0
      %v3428 = vpop.f32.mrb[0].mxu0
      %v3429 = vadd.f32 %v2765, %v3428
      %v3430 = vpop.f32.mrb[0].mxu0
      %3431 = vmatprep.mubr.bf16.mxu0 0
      %3432 = vmatmul.mubr.bf16.gmra.mrb[0].mxu0 %v3138
      %v3433 = vpop.f32.mrb[0].mxu0
      %v3434 = vadd.f32 %v2767, %v3433
      %v3435 = vpop.f32.mrb[0].mxu0
      %v3436 = vpop.f32.mrb[0].mxu0
      %v3437 = vadd.f32 %v2769, %v3436
      %v3438 = vpop.f32.mrb[0].mxu0
      %3439 = vmatprep.mubr.bf16.mxu0 0
      %3440 = vmatmul.mubr.bf16.gmra.mrb[0].mxu0 %v3141
      %v3441 = vpop.f32.mrb[0].mxu0
      %v3442 = vadd.f32 %v2771, %v3441
      %v3443 = vpop.f32.mrb[0].mxu0
      %v3444 = vpop.f32.mrb[0].mxu0
      %v3445 = vadd.f32 %v2773, %v3444
      %v3446 = vpop.f32.mrb[0].mxu0
      %3447 = vmatprep.mubr.bf16.mxu0 0
      %3448 = vmatmul.mubr.bf16.gmra.mrb[0].mxu0 %v3144
      %v3449 = vpop.f32.mrb[0].mxu0
      %v3450 = vadd.f32 %v2775, %v3449
      %v3451 = vpop.f32.mrb[0].mxu0
      %v3452 = vpop.f32.mrb[0].mxu0
      %v3453 = vadd.f32 %v2777, %v3452
      %v3454 = vpop.f32.mrb[0].mxu0
      %3455 = vmatprep.mubr.bf16.mxu0 0
      %3456 = vmatmul.mubr.bf16.gmra.mrb[0].mxu0 %v3147
      %v3457 = vpop.f32.mrb[0].mxu0
      %v3458 = vadd.f32 %v2779, %v3457
      %v3459 = vpop.f32.mrb[0].mxu0
      %v3460 = vpop.f32.mrb[0].mxu0
      %v3461 = vadd.f32 %v2781, %v3460
      %v3462 = vpop.f32.mrb[0].mxu0
      %3463 = vmatprep.mubr.bf16.mxu0 0
      %3464 = vmatmul.mubr.bf16.gmra.mrb[0].mxu0 %v3150
      %v3465 = vpop.f32.mrb[0].mxu0
      %v3466 = vadd.f32 %v2783, %v3465
      %v3467 = vpop.f32.mrb[0].mxu0
      %v3468 = vpop.f32.mrb[0].mxu0
      %v3469 = vadd.f32 %v2785, %v3468
      %v3470 = vpop.f32.mrb[0].mxu0
      %3471 = vmatprep.mubr.bf16.mxu0 0
      %3472 = vmatmul.mubr.bf16.gmra.mrb[0].mxu0 %v3153
      %v3473 = vpop.f32.mrb[0].mxu0
      %v3474 = vadd.f32 %v2787, %v3473
      %v3475 = vpop.f32.mrb[0].mxu0
      %v3476 = vpop.f32.mrb[0].mxu0
      %v3477 = vadd.f32 %v2789, %v3476
      %v3478 = vpop.f32.mrb[0].mxu0
      %3479 = vmatprep.mubr.bf16.mxu0 0
      %3480 = vmatmul.mubr.bf16.gmra.mrb[0].mxu0 %v3156
      %v3481 = vpop.f32.mrb[0].mxu0
      %v3482 = vadd.f32 %v2791, %v3481
      %v3483 = vpop.f32.mrb[0].mxu0
      %v3484 = vpop.f32.mrb[0].mxu0
      %v3485 = vadd.f32 %v2793, %v3484
      %v3486 = vpop.f32.mrb[0].mxu0
      %3487 = vmatprep.mubr.bf16.mxu0 0
      %3488 = vmatmul.mubr.bf16.gmra.mrb[0].mxu0 %v3159
      %v3489 = vpop.f32.mrb[0].mxu0
      %v3490 = vadd.f32 %v2795, %v3489
      %v3491 = vpop.f32.mrb[0].mxu0
      %v3492 = vpop.f32.mrb[0].mxu0
      %v3493 = vadd.f32 %v2797, %v3492
      %v3494 = vpop.f32.mrb[0].mxu0
      %3495 = vmatprep.mubr.bf16.mxu0 0
      %3496 = vmatmul.mubr.bf16.gmra.mrb[0].mxu0 %v3162
      %v3497 = vpop.f32.mrb[0].mxu0
      %v3498 = vadd.f32 %v2799, %v3497
      %v3499 = vpop.f32.mrb[0].mxu0
      %v3500 = vpop.f32.mrb[0].mxu0
      %v3501 = vadd.f32 %v2801, %v3500
      %v3502 = vpop.f32.mrb[0].mxu0
      %3503 = vmatprep.mubr.bf16.mxu0 0
      %3504 = vmatmul.mubr.bf16.gmra.mrb[0].mxu0 %v3165
      %v3505 = vpop.f32.mrb[0].mxu0
      %v3506 = vadd.f32 %v2803, %v3505
      %v3507 = vpop.f32.mrb[0].mxu0
      %v3508 = vpop.f32.mrb[0].mxu0
      %v3509 = vadd.f32 %v2805, %v3508
      %v3510 = vpop.f32.mrb[0].mxu0
      %3511 = vmatprep.mubr.bf16.mxu0 0
      %3512 = vmatmul.mubr.bf16.gmra.mrb[0].mxu0 %v3168
      %v3513 = vpop.f32.mrb[0].mxu0
      %v3514 = vadd.f32 %v2807, %v3513
      %v3515 = vpop.f32.mrb[0].mxu0
      %v3516 = vpop.f32.mrb[0].mxu0
      %v3517 = vadd.f32 %v2809, %v3516
      %v3518 = vpop.f32.mrb[0].mxu0
      %3519 = vmatprep.mubr.bf16.mxu0 0
      %3520 = vmatmul.mubr.bf16.gmra.mrb[0].mxu0 %v3171
      %v3521 = vpop.f32.mrb[0].mxu0
      %v3522 = vadd.f32 %v2811, %v3521
      %v3523 = vpop.f32.mrb[0].mxu0
      %v3524 = vpop.f32.mrb[0].mxu0
      %v3525 = vadd.f32 %v2813, %v3524
      %v3526 = vpop.f32.mrb[0].mxu0
      %3527 = vmatprep.mubr.bf16.mxu0 0
      %3528 = vmatmul.mubr.bf16.gmra.mrb[0].mxu0 %v3174
      %v3529 = vpop.f32.mrb[0].mxu0
      %v3530 = vadd.f32 %v2815, %v3529
      %v3531 = vpop.f32.mrb[0].mxu0
      %v3532 = vpop.f32.mrb[0].mxu0
      %v3533 = vadd.f32 %v2817, %v3532
      %v3534 = vpop.f32.mrb[0].mxu0
      %3535 = vmatprep.mubr.bf16.mxu0 0
      %3536 = vmatmul.mubr.bf16.gmra.mrb[0].mxu0 %v3177
      %v3537 = vpop.f32.mrb[0].mxu0
      %v3538 = vadd.f32 %v2819, %v3537
      %v3539 = vpop.f32.mrb[0].mxu0
      %v3540 = vpop.f32.mrb[0].mxu0
      %v3541 = vadd.f32 %v2821, %v3540
      %v3542 = vpop.f32.mrb[0].mxu0
      %3543 = vmatprep.mubr.bf16.mxu0 0
      %3544 = vmatmul.mubr.bf16.gmra.mrb[0].mxu0 %v3180
      %v3545 = vpop.f32.mrb[0].mxu0
      %v3546 = vadd.f32 %v2823, %v3545
      %v3547 = vpop.f32.mrb[0].mxu0
      %v3548 = vpop.f32.mrb[0].mxu0
      %v3549 = vadd.f32 %v2825, %v3548
      %v3550 = vpop.f32.mrb[0].mxu0
      %3551 = vmatprep.mubr.bf16.mxu0 0
      %3552 = vmatmul.mubr.bf16.gmra.mrb[0].mxu0 %v3183
      %v3553 = vpop.f32.mrb[0].mxu0
      %v3554 = vadd.f32 %v2827, %v3553
      %v3555 = vpop.f32.mrb[0].mxu0
      %v3556 = vpop.f32.mrb[0].mxu0
      %v3557 = vadd.f32 %v2829, %v3556
      %v3558 = vpop.f32.mrb[0].mxu0
      %3559 = vmatprep.mubr.bf16.mxu0 0
      %3560 = vmatmul.mubr.bf16.gmra.mrb[0].mxu0 %v3186
      %v3561 = vpop.f32.mrb[0].mxu0
      %v3562 = vadd.f32 %v2831, %v3561
      %v3563 = vpop.f32.mrb[0].mxu0
      %v3564 = vpop.f32.mrb[0].mxu0
      %v3565 = vadd.f32 %v2833, %v3564
      %v3566 = vpop.f32.mrb[0].mxu0
      %3567 = vmatprep.mubr.bf16.mxu0 0
      %3568 = vmatmul.mubr.bf16.gmra.mrb[0].mxu0 %v3189
      %v3569 = vpop.f32.mrb[0].mxu0
      %v3570 = vadd.f32 %v2835, %v3569
      %v3571 = vpop.f32.mrb[0].mxu0
      %v3572 = vpop.f32.mrb[0].mxu0
      %v3573 = vadd.f32 %v2837, %v3572
      %v3574 = vpop.f32.mrb[0].mxu0
      %3575 = vmatprep.mubr.bf16.mxu0 0
      %3576 = vmatmul.mubr.bf16.gmra.mrb[0].mxu0 %v3192
      %v3577 = vpop.f32.mrb[0].mxu0
      %v3578 = vadd.f32 %v2839, %v3577
      %v3579 = vpop.f32.mrb[0].mxu0
      %v3580 = vpop.f32.mrb[0].mxu0
      %v3581 = vadd.f32 %v2841, %v3580
      %v3582 = vpop.f32.mrb[0].mxu0
      %3583 = vmatprep.mubr.bf16.mxu0 0
      %3584 = vmatmul.mubr.bf16.gmra.mrb[0].mxu0 %v3195
      %v3585 = vpop.f32.mrb[0].mxu0
      %v3586 = vadd.f32 %v2843, %v3585
      %v3587 = vpop.f32.mrb[0].mxu0
      %v3588 = vpop.f32.mrb[0].mxu0
      %v3589 = vadd.f32 %v2845, %v3588
      %v3590 = vpop.f32.mrb[0].mxu0
      %3591 = vmatprep.mubr.bf16.mxu0 0
      %3592 = vmatmul.mubr.bf16.gmra.mrb[0].mxu0 %v3198
      %v3593 = vpop.f32.mrb[0].mxu0
      %v3594 = vadd.f32 %v2847, %v3593
      %v3595 = vpop.f32.mrb[0].mxu0
      %v3596 = vpop.f32.mrb[0].mxu0
      %v3597 = vadd.f32 %v2849, %v3596
      %v3598 = vpop.f32.mrb[0].mxu0
      %3599 = vmatprep.mubr.bf16.mxu0 0
      %3600 = vmatmul.mubr.bf16.gmra.mrb[0].mxu0 %v3201
      %v3601 = vpop.f32.mrb[0].mxu0
      %v3602 = vadd.f32 %v2851, %v3601
      %v3603 = vpop.f32.mrb[0].mxu0
      %v3604 = vpop.f32.mrb[0].mxu0
      %v3605 = vadd.f32 %v2853, %v3604
      %v3606 = vpop.f32.mrb[0].mxu0
      %3607 = vmatprep.mubr.bf16.mxu0 0
      %3608 = vmatmul.mubr.bf16.gmra.mrb[0].mxu0 %v3204
      %v3609 = vpop.f32.mrb[0].mxu0
      %v3610 = vadd.f32 %v2855, %v3609
      %v3611 = vpop.f32.mrb[0].mxu0
      %v3612 = vpop.f32.mrb[0].mxu0
      %v3613 = vadd.f32 %v2857, %v3612
      %v3614 = vpop.f32.mrb[0].mxu0
      %3615 = vmatprep.mubr.bf16.mxu0 0
      %3616 = vmatmul.mubr.bf16.gmra.mrb[0].mxu0 %v3207
      %v3617 = vpop.f32.mrb[0].mxu0
      %v3618 = vadd.f32 %v2859, %v3617
      %v3619 = vpop.f32.mrb[0].mxu0
      %v3620 = vpop.f32.mrb[0].mxu0
      %v3621 = vadd.f32 %v2861, %v3620
      %v3622 = vpop.f32.mrb[0].mxu0
      %3623 = vmatprep.mubr.bf16.mxu0 0
      %3624 = vmatmul.mubr.bf16.gmra.mrb[0].mxu0 %v3210
      %v3625 = vpop.f32.mrb[0].mxu0
      %v3626 = vadd.f32 %v2863, %v3625
      %v3627 = vpop.f32.mrb[0].mxu0
      %v3628 = vpop.f32.mrb[0].mxu0
      %v3629 = vadd.f32 %v2865, %v3628
      %v3630 = vpop.f32.mrb[0].mxu0
      %3631 = vmatprep.mubr.bf16.mxu0 0
      %3632 = vmatmul.mubr.bf16.gmra.mrb[0].mxu0 %v3213
      %v3633 = vpop.f32.mrb[0].mxu0
      %v3634 = vadd.f32 %v2867, %v3633
      %v3635 = vpop.f32.mrb[0].mxu0
      %v3636 = vpop.f32.mrb[0].mxu0
      %v3637 = vadd.f32 %v2869, %v3636
      %v3638 = vpop.f32.mrb[0].mxu0
      %3639 = vmatprep.mubr.bf16.mxu0 0
      %3640 = vmatmul.mubr.bf16.gmra.mrb[0].mxu0 %v3216
      %v3641 = vpop.f32.mrb[0].mxu0
      %v3642 = vadd.f32 %v2871, %v3641
      %v3643 = vpop.f32.mrb[0].mxu0
      %v3644 = vpop.f32.mrb[0].mxu0
      %v3645 = vadd.f32 %v2873, %v3644
      %v3646 = vpop.f32.mrb[0].mxu0
      %3647 = vmatprep.mubr.bf16.mxu0 0
      %3648 = vmatmul.mubr.bf16.gmra.mrb[0].mxu0 %v3219
      %v3649 = vpop.f32.mrb[0].mxu0
      %v3650 = vadd.f32 %v2875, %v3649
      %v3651 = vpop.f32.mrb[0].mxu0
      %v3652 = vpop.f32.mrb[0].mxu0
      %v3653 = vadd.f32 %v2877, %v3652
      %v3654 = vpop.f32.mrb[0].mxu0
      %3655 = vmatprep.mubr.bf16.mxu0 0
      %3656 = vmatmul.mubr.bf16.gmra.mrb[0].mxu0 %v3222
      %v3657 = vpop.f32.mrb[0].mxu0
      %v3658 = vadd.f32 %v2879, %v3657
      %v3659 = vpop.f32.mrb[0].mxu0
      %v3660 = vpop.f32.mrb[0].mxu0
      %v3661 = vadd.f32 %v2881, %v3660
      %v3662 = vpop.f32.mrb[0].mxu0
      %3663 = vmatprep.mubr.bf16.mxu0 0
      %3664 = vmatmul.mubr.bf16.gmra.mrb[0].mxu0 %v3225
      %v3665 = vpop.f32.mrb[0].mxu0
      %v3666 = vadd.f32 %v2883, %v3665
      %v3667 = vpop.f32.mrb[0].mxu0
      %v3668 = vpop.f32.mrb[0].mxu0
      %v3669 = vadd.f32 %v2885, %v3668
      %v3670 = vpop.f32.mrb[0].mxu0
      %3671 = vmatprep.mubr.bf16.mxu0 0
      %3672 = vmatmul.mubr.bf16.gmra.mrb[0].mxu0 %v3228
      %v3673 = vpop.f32.mrb[0].mxu0
      %v3674 = vadd.f32 %v2887, %v3673
      %v3675 = vpop.f32.mrb[0].mxu0
      %v3676 = vpop.f32.mrb[0].mxu0
      %v3677 = vadd.f32 %v2889, %v3676
      %v3678 = vpop.f32.mrb[0].mxu0
      %3679 = vmatprep.mubr.bf16.mxu0 0
      %3680 = vmatmul.mubr.bf16.gmra.mrb[0].mxu0 %v3231
      %v3681 = vpop.f32.mrb[0].mxu0
      %v3682 = vadd.f32 %v2891, %v3681
      %v3683 = vpop.f32.mrb[0].mxu0
      %v3684 = vpop.f32.mrb[0].mxu0
      %v3685 = vadd.f32 %v2893, %v3684
      %v3686 = vpop.f32.mrb[0].mxu0
      %3687 = vmatprep.mubr.bf16.mxu0 0
      %3688 = vmatmul.mubr.bf16.gmra.mrb[0].mxu0 %v3234
      %v3689 = vpop.f32.mrb[0].mxu0
      %v3690 = vadd.f32 %v2895, %v3689
      %v3691 = vpop.f32.mrb[0].mxu0
      %v3692 = vpop.f32.mrb[0].mxu0
      %v3693 = vadd.f32 %v2897, %v3692
      %v3694 = vpop.f32.mrb[0].mxu0
      %3695 = vmatprep.mubr.bf16.mxu0 0
      %3696 = vmatmul.mubr.bf16.gmra.mrb[0].mxu0 %v3237
      %v3697 = vpop.f32.mrb[0].mxu0
      %v3698 = vadd.f32 %v2899, %v3697
      %v3699 = vpop.f32.mrb[0].mxu0
      %v3700 = vpop.f32.mrb[0].mxu0
      %v3701 = vadd.f32 %v2901, %v3700
      %v3702 = vpop.f32.mrb[0].mxu0
      %3703 = vmatprep.mubr.bf16.mxu0 0
      %3704 = vmatmul.mubr.bf16.gmra.mrb[0].mxu0 %v3240
      %v3705 = vpop.f32.mrb[0].mxu0
      %v3706 = vadd.f32 %v2903, %v3705
      %v3707 = vpop.f32.mrb[0].mxu0
      %v3708 = vpop.f32.mrb[0].mxu0
      %v3709 = vadd.f32 %v2905, %v3708
      %v3710 = vpop.f32.mrb[0].mxu0
      %3711 = vmatprep.mubr.bf16.mxu0 0
      %3712 = vmatmul.mubr.bf16.gmra.mrb[0].mxu0 %v3243
      %v3713 = vpop.f32.mrb[0].mxu0
      %v3714 = vadd.f32 %v2907, %v3713
      %v3715 = vpop.f32.mrb[0].mxu0
      %v3716 = vpop.f32.mrb[0].mxu0
      %v3717 = vadd.f32 %v2909, %v3716
      %v3718 = vpop.f32.mrb[0].mxu0
      %3719 = vmatprep.mubr.bf16.mxu0 0
      %3720 = vmatmul.mubr.bf16.gmra.mrb[0].mxu0 %v3246
      %v3721 = vpop.f32.mrb[0].mxu0
      %v3722 = vadd.f32 %v2911, %v3721
      %v3723 = vpop.f32.mrb[0].mxu0
      %v3724 = vpop.f32.mrb[0].mxu0
      %v3725 = vadd.f32 %v2913, %v3724
      %v3726 = vpop.f32.mrb[0].mxu0
      %3727 = vmatprep.mubr.bf16.mxu0 0
      %3728 = vmatmul.mubr.bf16.gmra.mrb[0].mxu0 %v3249
      %v3729 = vpop.f32.mrb[0].mxu0
      %v3730 = vadd.f32 %v2915, %v3729
      %v3731 = vpop.f32.mrb[0].mxu0
      %v3732 = vpop.f32.mrb[0].mxu0
      %v3733 = vadd.f32 %v2917, %v3732
      %v3734 = vpop.f32.mrb[0].mxu0
      %3735 = vmatprep.mubr.bf16.mxu0 0
      %3736 = vmatmul.mubr.bf16.gmra.mrb[0].mxu0 %v3252
      %v3737 = vpop.f32.mrb[0].mxu0
      %v3738 = vadd.f32 %v2919, %v3737
      %v3739 = vpop.f32.mrb[0].mxu0
      %v3740 = vpop.f32.mrb[0].mxu0
      %v3741 = vadd.f32 %v2921, %v3740
      %v3742 = vpop.f32.mrb[0].mxu0
      %3743 = vmatprep.mubr.bf16.mxu0 0
      %3744 = vmatmul.mubr.bf16.gmra.mrb[0].mxu0 %v3255
      %v3745 = vpop.f32.mrb[0].mxu0
      %v3746 = vadd.f32 %v2923, %v3745
      %v3747 = vpop.f32.mrb[0].mxu0
      %v3748 = vpop.f32.mrb[0].mxu0
      %v3749 = vadd.f32 %v2925, %v3748
      %v3750 = vpop.f32.mrb[0].mxu0
      %3751 = vmatprep.mubr.bf16.mxu0 0
      %3752 = vmatmul.mubr.bf16.gmra.mrb[0].mxu0 %v3258
      %v3753 = vpop.f32.mrb[0].mxu0
      %v3754 = vadd.f32 %v2927, %v3753
      %v3755 = vpop.f32.mrb[0].mxu0
      %v3756 = vpop.f32.mrb[0].mxu0
      %v3757 = vadd.f32 %v2929, %v3756
      %v3758 = vpop.f32.mrb[0].mxu0
      %3759 = vmatprep.mubr.bf16.mxu0 0
      %3760 = vmatmul.mubr.bf16.gmra.mrb[0].mxu0 %v3261
      %v3761 = vpop.f32.mrb[0].mxu0
      %v3762 = vadd.f32 %v2931, %v3761
      %v3763 = vpop.f32.mrb[0].mxu0
      %v3764 = vpop.f32.mrb[0].mxu0
      %v3765 = vadd.f32 %v2933, %v3764
      %v3766 = vpop.f32.mrb[0].mxu0
      %3767 = vmatprep.mubr.bf16.mxu0 0
      %3768 = vmatmul.mubr.bf16.gmra.mrb[0].mxu0 %v3264
      %v3769 = vpop.f32.mrb[0].mxu0
      %v3770 = vadd.f32 %v2935, %v3769
      %v3771 = vpop.f32.mrb[0].mxu0
      %v3772 = vpop.f32.mrb[0].mxu0
      %v3773 = vadd.f32 %v2937, %v3772
      %v3774 = vpop.f32.mrb[0].mxu0
      %3775 = vmatprep.mubr.bf16.mxu0 0
      %3776 = vmatmul.mubr.bf16.gmra.mrb[0].mxu0 %v3267
      %v3777 = vpop.f32.mrb[0].mxu0
      %v3778 = vadd.f32 %v2939, %v3777
      %v3779 = vpop.f32.mrb[0].mxu0
      %v3780 = vpop.f32.mrb[0].mxu0
      %v3781 = vadd.f32 %v2941, %v3780
      %v3782 = vpop.f32.mrb[0].mxu0
      %3783 = vmatprep.mubr.bf16.mxu0 0
      %3784 = vmatmul.mubr.bf16.gmra.mrb[0].mxu0 %v3270
      %v3785 = vpop.f32.mrb[0].mxu0
      %v3786 = vadd.f32 %v2943, %v3785
      %v3787 = vpop.f32.mrb[0].mxu0
      %v3788 = vpop.f32.mrb[0].mxu0
      %v3789 = vadd.f32 %v2945, %v3788
      %v3790 = vpop.f32.mrb[0].mxu0
      %3791 = vmatprep.mubr.bf16.mxu0 0
      %3792 = vmatmul.mubr.bf16.gmra.mrb[0].mxu0 %v3273
      %v3793 = vpop.f32.mrb[0].mxu0
      %v3794 = vadd.f32 %v2947, %v3793
      %v3795 = vpop.f32.mrb[0].mxu0
      %v3796 = vpop.f32.mrb[0].mxu0
      %v3797 = vadd.f32 %v2949, %v3796
      %v3798 = vpop.f32.mrb[0].mxu0
      %3799 = vmatprep.mubr.bf16.mxu0 0
      %3800 = vmatmul.mubr.bf16.gmra.mrb[0].mxu0 %v3276
      %v3801 = vpop.f32.mrb[0].mxu0
      %v3802 = vadd.f32 %v2951, %v3801
      %v3803 = vpop.f32.mrb[0].mxu0
      %v3804 = vpop.f32.mrb[0].mxu0
      %v3805 = vadd.f32 %v2953, %v3804
      %v3806 = vpop.f32.mrb[0].mxu0
      %3807 = vmatprep.mubr.bf16.mxu0 0
      %3808 = vmatmul.mubr.bf16.gmra.mrb[0].mxu0 %v3279
      %v3809 = vpop.f32.mrb[0].mxu0
      %v3810 = vadd.f32 %v2955, %v3809
      %v3811 = vpop.f32.mrb[0].mxu0
      %v3812 = vpop.f32.mrb[0].mxu0
      %v3813 = vadd.f32 %v2957, %v3812
      %v3814 = vpop.f32.mrb[0].mxu0
      %3815 = vmatprep.mubr.bf16.mxu0 0
      %3816 = vmatmul.mubr.bf16.gmra.mrb[0].mxu0 %v3282
      %v3817 = vpop.f32.mrb[0].mxu0
      %v3818 = vadd.f32 %v2959, %v3817
      %v3819 = vpop.f32.mrb[0].mxu0
      %v3820 = vpop.f32.mrb[0].mxu0
      %v3821 = vadd.f32 %v2961, %v3820
      %v3822 = vpop.f32.mrb[0].mxu0
      %3823 = vmatprep.mubr.bf16.mxu0 0
      %3824 = vmatmul.mubr.bf16.gmra.mrb[0].mxu0 %v3285
      %v3825 = vpop.f32.mrb[0].mxu0
      %v3826 = vadd.f32 %v2963, %v3825
      %v3827 = vpop.f32.mrb[0].mxu0
      %v3828 = vpop.f32.mrb[0].mxu0
      %v3829 = vadd.f32 %v2965, %v3828
      %v3830 = vpop.f32.mrb[0].mxu0
      %3831 = vdwg.mxu0
      %v3832 = vld [vmem:[%s4] sm:$0x1]
      %v3834 = vlaneseq
      %v3835 = vshrl.u32 %v3834, 7
      %v3836 = vsub.s32 0, %v3835
      %v3837 = vrot.slane %v3832, %v3836
      %v3839 = vadd.f32 %v3322, %v3837
      %v3840 = vadd.f32 %v3325, %v3837
      %v3841 = vadd.f32 %v3330, %v3837
      %v3842 = vadd.f32 %v3333, %v3837
      %v3843 = vadd.f32 %v3338, %v3837
      %v3844 = vadd.f32 %v3341, %v3837
      %v3845 = vadd.f32 %v3346, %v3837
      %v3846 = vadd.f32 %v3349, %v3837
      %v3847 = vadd.f32 %v3354, %v3837
      %v3848 = vadd.f32 %v3357, %v3837
      %v3849 = vadd.f32 %v3362, %v3837
      %v3850 = vadd.f32 %v3365, %v3837
      %v3851 = vadd.f32 %v3370, %v3837
      %v3852 = vadd.f32 %v3373, %v3837
      %v3853 = vadd.f32 %v3378, %v3837
      %v3854 = vadd.f32 %v3381, %v3837
      %v3855 = vadd.f32 %v3386, %v3837
      %v3856 = vadd.f32 %v3389, %v3837
      %v3857 = vadd.f32 %v3394, %v3837
      %v3858 = vadd.f32 %v3397, %v3837
      %v3859 = vadd.f32 %v3402, %v3837
      %v3860 = vadd.f32 %v3405, %v3837
      %v3861 = vadd.f32 %v3410, %v3837
      %v3862 = vadd.f32 %v3413, %v3837
      %v3863 = vadd.f32 %v3418, %v3837
      %v3864 = vadd.f32 %v3421, %v3837
      %v3865 = vadd.f32 %v3426, %v3837
      %v3866 = vadd.f32 %v3429, %v3837
      %v3867 = vadd.f32 %v3434, %v3837
      %v3868 = vadd.f32 %v3437, %v3837
      %v3869 = vadd.f32 %v3442, %v3837
      %v3870 = vadd.f32 %v3445, %v3837
      %v3871 = vadd.f32 %v3450, %v3837
      %v3872 = vadd.f32 %v3453, %v3837
      %v3873 = vadd.f32 %v3458, %v3837
      %v3874 = vadd.f32 %v3461, %v3837
      %v3875 = vadd.f32 %v3466, %v3837
      %v3876 = vadd.f32 %v3469, %v3837
      %v3877 = vadd.f32 %v3474, %v3837
      %v3878 = vadd.f32 %v3477, %v3837
      %v3879 = vadd.f32 %v3482, %v3837
      %v3880 = vadd.f32 %v3485, %v3837
      %v3881 = vadd.f32 %v3490, %v3837
      %v3882 = vadd.f32 %v3493, %v3837
      %v3883 = vadd.f32 %v3498, %v3837
      %v3884 = vadd.f32 %v3501, %v3837
      %v3885 = vadd.f32 %v3506, %v3837
      %v3886 = vadd.f32 %v3509, %v3837
      %v3887 = vadd.f32 %v3514, %v3837
      %v3888 = vadd.f32 %v3517, %v3837
      %v3889 = vadd.f32 %v3522, %v3837
      %v3890 = vadd.f32 %v3525, %v3837
      %v3891 = vadd.f32 %v3530, %v3837
      %v3892 = vadd.f32 %v3533, %v3837
      %v3893 = vadd.f32 %v3538, %v3837
      %v3894 = vadd.f32 %v3541, %v3837
      %v3895 = vadd.f32 %v3546, %v3837
      %v3896 = vadd.f32 %v3549, %v3837
      %v3897 = vadd.f32 %v3554, %v3837
      %v3898 = vadd.f32 %v3557, %v3837
      %v3899 = vadd.f32 %v3562, %v3837
      %v3900 = vadd.f32 %v3565, %v3837
      %v3901 = vadd.f32 %v3570, %v3837
      %v3902 = vadd.f32 %v3573, %v3837
      %v3903 = vadd.f32 %v3578, %v3837
      %v3904 = vadd.f32 %v3581, %v3837
      %v3905 = vadd.f32 %v3586, %v3837
      %v3906 = vadd.f32 %v3589, %v3837
      %v3907 = vadd.f32 %v3594, %v3837
      %v3908 = vadd.f32 %v3597, %v3837
      %v3909 = vadd.f32 %v3602, %v3837
      %v3910 = vadd.f32 %v3605, %v3837
      %v3911 = vadd.f32 %v3610, %v3837
      %v3912 = vadd.f32 %v3613, %v3837
      %v3913 = vadd.f32 %v3618, %v3837
      %v3914 = vadd.f32 %v3621, %v3837
      %v3915 = vadd.f32 %v3626, %v3837
      %v3916 = vadd.f32 %v3629, %v3837
      %v3917 = vadd.f32 %v3634, %v3837
      %v3918 = vadd.f32 %v3637, %v3837
      %v3919 = vadd.f32 %v3642, %v3837
      %v3920 = vadd.f32 %v3645, %v3837
      %v3921 = vadd.f32 %v3650, %v3837
      %v3922 = vadd.f32 %v3653, %v3837
      %v3923 = vadd.f32 %v3658, %v3837
      %v3924 = vadd.f32 %v3661, %v3837
      %v3925 = vadd.f32 %v3666, %v3837
      %v3926 = vadd.f32 %v3669, %v3837
      %v3927 = vadd.f32 %v3674, %v3837
      %v3928 = vadd.f32 %v3677, %v3837
      %v3929 = vadd.f32 %v3682, %v3837
      %v3930 = vadd.f32 %v3685, %v3837
      %v3931 = vadd.f32 %v3690, %v3837
      %v3932 = vadd.f32 %v3693, %v3837
      %v3933 = vadd.f32 %v3698, %v3837
      %v3934 = vadd.f32 %v3701, %v3837
      %v3935 = vadd.f32 %v3706, %v3837
      %v3936 = vadd.f32 %v3709, %v3837
      %v3937 = vadd.f32 %v3714, %v3837
      %v3938 = vadd.f32 %v3717, %v3837
      %v3939 = vadd.f32 %v3722, %v3837
      %v3940 = vadd.f32 %v3725, %v3837
      %v3941 = vadd.f32 %v3730, %v3837
      %v3942 = vadd.f32 %v3733, %v3837
      %v3943 = vadd.f32 %v3738, %v3837
      %v3944 = vadd.f32 %v3741, %v3837
      %v3945 = vadd.f32 %v3746, %v3837
      %v3946 = vadd.f32 %v3749, %v3837
      %v3947 = vadd.f32 %v3754, %v3837
      %v3948 = vadd.f32 %v3757, %v3837
      %v3949 = vadd.f32 %v3762, %v3837
      %v3950 = vadd.f32 %v3765, %v3837
      %v3951 = vadd.f32 %v3770, %v3837
      %v3952 = vadd.f32 %v3773, %v3837
      %v3953 = vadd.f32 %v3778, %v3837
      %v3954 = vadd.f32 %v3781, %v3837
      %v3955 = vadd.f32 %v3786, %v3837
      %v3956 = vadd.f32 %v3789, %v3837
      %v3957 = vadd.f32 %v3794, %v3837
      %v3958 = vadd.f32 %v3797, %v3837
      %v3959 = vadd.f32 %v3802, %v3837
      %v3960 = vadd.f32 %v3805, %v3837
      %v3961 = vadd.f32 %v3810, %v3837
      %v3962 = vadd.f32 %v3813, %v3837
      %v3963 = vadd.f32 %v3818, %v3837
      %v3964 = vadd.f32 %v3821, %v3837
      %v3965 = vadd.f32 %v3826, %v3837
      %v3966 = vadd.f32 %v3829, %v3837
      %v3967 = vmax.f32 %v3839, 0.0
      %v3968 = vmax.f32 %v3840, 0.0
      %v3969 = vmax.f32 %v3841, 0.0
      %v3970 = vmax.f32 %v3842, 0.0
      %v3971 = vmax.f32 %v3843, 0.0
      %v3972 = vmax.f32 %v3844, 0.0
      %v3973 = vmax.f32 %v3845, 0.0
      %v3974 = vmax.f32 %v3846, 0.0
      %v3975 = vmax.f32 %v3847, 0.0
      %v3976 = vmax.f32 %v3848, 0.0
      %v3977 = vmax.f32 %v3849, 0.0
      %v3978 = vmax.f32 %v3850, 0.0
      %v3979 = vmax.f32 %v3851, 0.0
      %v3980 = vmax.f32 %v3852, 0.0
      %v3981 = vmax.f32 %v3853, 0.0
      %v3982 = vmax.f32 %v3854, 0.0
      %v3983 = vmax.f32 %v3855, 0.0
      %v3984 = vmax.f32 %v3856, 0.0
      %v3985 = vmax.f32 %v3857, 0.0
      %v3986 = vmax.f32 %v3858, 0.0
      %v3987 = vmax.f32 %v3859, 0.0
      %v3988 = vmax.f32 %v3860, 0.0
      %v3989 = vmax.f32 %v3861, 0.0
      %v3990 = vmax.f32 %v3862, 0.0
      %v3991 = vmax.f32 %v3863, 0.0
      %v3992 = vmax.f32 %v3864, 0.0
      %v3993 = vmax.f32 %v3865, 0.0
      %v3994 = vmax.f32 %v3866, 0.0
      %v3995 = vmax.f32 %v3867, 0.0
      %v3996 = vmax.f32 %v3868, 0.0
      %v3997 = vmax.f32 %v3869, 0.0
      %v3998 = vmax.f32 %v3870, 0.0
      %v3999 = vmax.f32 %v3871, 0.0
      %v4000 = vmax.f32 %v3872, 0.0
      %v4001 = vmax.f32 %v3873, 0.0
      %v4002 = vmax.f32 %v3874, 0.0
      %v4003 = vmax.f32 %v3875, 0.0
      %v4004 = vmax.f32 %v3876, 0.0
      %v4005 = vmax.f32 %v3877, 0.0
      %v4006 = vmax.f32 %v3878, 0.0
      %v4007 = vmax.f32 %v3879, 0.0
      %v4008 = vmax.f32 %v3880, 0.0
      %v4009 = vmax.f32 %v3881, 0.0
      %v4010 = vmax.f32 %v3882, 0.0
      %v4011 = vmax.f32 %v3883, 0.0
      %v4012 = vmax.f32 %v3884, 0.0
      %v4013 = vmax.f32 %v3885, 0.0
      %v4014 = vmax.f32 %v3886, 0.0
      %v4015 = vmax.f32 %v3887, 0.0
      %v4016 = vmax.f32 %v3888, 0.0
      %v4017 = vmax.f32 %v3889, 0.0
      %v4018 = vmax.f32 %v3890, 0.0
      %v4019 = vmax.f32 %v3891, 0.0
      %v4020 = vmax.f32 %v3892, 0.0
      %v4021 = vmax.f32 %v3893, 0.0
      %v4022 = vmax.f32 %v3894, 0.0
      %v4023 = vmax.f32 %v3895, 0.0
      %v4024 = vmax.f32 %v3896, 0.0
      %v4025 = vmax.f32 %v3897, 0.0
      %v4026 = vmax.f32 %v3898, 0.0
      %v4027 = vmax.f32 %v3899, 0.0
      %v4028 = vmax.f32 %v3900, 0.0
      %v4029 = vmax.f32 %v3901, 0.0
      %v4030 = vmax.f32 %v3902, 0.0
      %v4031 = vmax.f32 %v3903, 0.0
      %v4032 = vmax.f32 %v3904, 0.0
      %v4033 = vmax.f32 %v3905, 0.0
      %v4034 = vmax.f32 %v3906, 0.0
      %v4035 = vmax.f32 %v3907, 0.0
      %v4036 = vmax.f32 %v3908, 0.0
      %v4037 = vmax.f32 %v3909, 0.0
      %v4038 = vmax.f32 %v3910, 0.0
      %v4039 = vmax.f32 %v3911, 0.0
      %v4040 = vmax.f32 %v3912, 0.0
      %v4041 = vmax.f32 %v3913, 0.0
      %v4042 = vmax.f32 %v3914, 0.0
      %v4043 = vmax.f32 %v3915, 0.0
      %v4044 = vmax.f32 %v3916, 0.0
      %v4045 = vmax.f32 %v3917, 0.0
      %v4046 = vmax.f32 %v3918, 0.0
      %v4047 = vmax.f32 %v3919, 0.0
      %v4048 = vmax.f32 %v3920, 0.0
      %v4049 = vmax.f32 %v3921, 0.0
      %v4050 = vmax.f32 %v3922, 0.0
      %v4051 = vmax.f32 %v3923, 0.0
      %v4052 = vmax.f32 %v3924, 0.0
      %v4053 = vmax.f32 %v3925, 0.0
      %v4054 = vmax.f32 %v3926, 0.0
      %v4055 = vmax.f32 %v3927, 0.0
      %v4056 = vmax.f32 %v3928, 0.0
      %v4057 = vmax.f32 %v3929, 0.0
      %v4058 = vmax.f32 %v3930, 0.0
      %v4059 = vmax.f32 %v3931, 0.0
      %v4060 = vmax.f32 %v3932, 0.0
      %v4061 = vmax.f32 %v3933, 0.0
      %v4062 = vmax.f32 %v3934, 0.0
      %v4063 = vmax.f32 %v3935, 0.0
      %v4064 = vmax.f32 %v3936, 0.0
      %v4065 = vmax.f32 %v3937, 0.0
      %v4066 = vmax.f32 %v3938, 0.0
      %v4067 = vmax.f32 %v3939, 0.0
      %v4068 = vmax.f32 %v3940, 0.0
      %v4069 = vmax.f32 %v3941, 0.0
      %v4070 = vmax.f32 %v3942, 0.0
      %v4071 = vmax.f32 %v3943, 0.0
      %v4072 = vmax.f32 %v3944, 0.0
      %v4073 = vmax.f32 %v3945, 0.0
      %v4074 = vmax.f32 %v3946, 0.0
      %v4075 = vmax.f32 %v3947, 0.0
      %v4076 = vmax.f32 %v3948, 0.0
      %v4077 = vmax.f32 %v3949, 0.0
      %v4078 = vmax.f32 %v3950, 0.0
      %v4079 = vmax.f32 %v3951, 0.0
      %v4080 = vmax.f32 %v3952, 0.0
      %v4081 = vmax.f32 %v3953, 0.0
      %v4082 = vmax.f32 %v3954, 0.0
      %v4083 = vmax.f32 %v3955, 0.0
      %v4084 = vmax.f32 %v3956, 0.0
      %v4085 = vmax.f32 %v3957, 0.0
      %v4086 = vmax.f32 %v3958, 0.0
      %v4087 = vmax.f32 %v3959, 0.0
      %v4088 = vmax.f32 %v3960, 0.0
      %v4089 = vmax.f32 %v3961, 0.0
      %v4090 = vmax.f32 %v3962, 0.0
      %v4091 = vmax.f32 %v3963, 0.0
      %v4092 = vmax.f32 %v3964, 0.0
      %v4093 = vmax.f32 %v3965, 0.0
      %v4094 = vmax.f32 %v3966, 0.0
      %vm4095 = vcmask 523264
      %v4096 = vsel %vm4095, %v3967, -inf
      %v4097 = vsel %vm4095, %v3968, -inf
      %v4098 = vmax.f32 %v4096, %v4097
      %v4099 = vrot.slane %v4098, 4
      %v4100 = vmax.f32 %v4098, %v4099
      %v4101 = vrot.slane %v4100, 2
      %v4102 = vmax.f32 %v4100, %v4101
      %v4103 = vrot.slane %v4102, 1
      %v4104 = vmax.f32 %v4102, %v4103
      %v4105 = vsel %vm4095, %v3969, -inf
      %v4106 = vsel %vm4095, %v3970, -inf
      %v4107 = vmax.f32 %v4105, %v4106
      %v4108 = vrot.slane %v4107, 4
      %v4109 = vmax.f32 %v4107, %v4108
      %v4110 = vrot.slane %v4109, 2
      %v4111 = vmax.f32 %v4109, %v4110
      %v4112 = vrot.slane %v4111, 1
      %v4113 = vmax.f32 %v4111, %v4112
      %v4114 = vsel %vm4095, %v3971, -inf
      %v4115 = vsel %vm4095, %v3972, -inf
      %v4116 = vmax.f32 %v4114, %v4115
      %v4117 = vrot.slane %v4116, 4
      %v4118 = vmax.f32 %v4116, %v4117
      %v4119 = vrot.slane %v4118, 2
      %v4120 = vmax.f32 %v4118, %v4119
      %v4121 = vrot.slane %v4120, 1
      %v4122 = vmax.f32 %v4120, %v4121
      %v4123 = vsel %vm4095, %v3973, -inf
      %v4124 = vsel %vm4095, %v3974, -inf
      %v4125 = vmax.f32 %v4123, %v4124
      %v4126 = vrot.slane %v4125, 4
      %v4127 = vmax.f32 %v4125, %v4126
      %v4128 = vrot.slane %v4127, 2
      %v4129 = vmax.f32 %v4127, %v4128
      %v4130 = vrot.slane %v4129, 1
      %v4131 = vmax.f32 %v4129, %v4130
      %v4132 = vsel %vm4095, %v3975, -inf
      %v4133 = vsel %vm4095, %v3976, -inf
      %v4134 = vmax.f32 %v4132, %v4133
      %v4135 = vrot.slane %v4134, 4
      %v4136 = vmax.f32 %v4134, %v4135
      %v4137 = vrot.slane %v4136, 2
      %v4138 = vmax.f32 %v4136, %v4137
      %v4139 = vrot.slane %v4138, 1
      %v4140 = vmax.f32 %v4138, %v4139
      %v4141 = vsel %vm4095, %v3977, -inf
      %v4142 = vsel %vm4095, %v3978, -inf
      %v4143 = vmax.f32 %v4141, %v4142
      %v4144 = vrot.slane %v4143, 4
      %v4145 = vmax.f32 %v4143, %v4144
      %v4146 = vrot.slane %v4145, 2
      %v4147 = vmax.f32 %v4145, %v4146
      %v4148 = vrot.slane %v4147, 1
      %v4149 = vmax.f32 %v4147, %v4148
      %v4150 = vsel %vm4095, %v3979, -inf
      %v4151 = vsel %vm4095, %v3980, -inf
      %v4152 = vmax.f32 %v4150, %v4151
      %v4153 = vrot.slane %v4152, 4
      %v4154 = vmax.f32 %v4152, %v4153
      %v4155 = vrot.slane %v4154, 2
      %v4156 = vmax.f32 %v4154, %v4155
      %v4157 = vrot.slane %v4156, 1
      %v4158 = vmax.f32 %v4156, %v4157
      %v4159 = vsel %vm4095, %v3981, -inf
      %v4160 = vsel %vm4095, %v3982, -inf
      %v4161 = vmax.f32 %v4159, %v4160
      %v4162 = vrot.slane %v4161, 4
      %v4163 = vmax.f32 %v4161, %v4162
      %v4164 = vrot.slane %v4163, 2
      %v4165 = vmax.f32 %v4163, %v4164
      %v4166 = vrot.slane %v4165, 1
      %v4167 = vmax.f32 %v4165, %v4166
      %v4168 = vsel %vm4095, %v3983, -inf
      %v4169 = vsel %vm4095, %v3984, -inf
      %v4170 = vmax.f32 %v4168, %v4169
      %v4171 = vrot.slane %v4170, 4
      %v4172 = vmax.f32 %v4170, %v4171
      %v4173 = vrot.slane %v4172, 2
      %v4174 = vmax.f32 %v4172, %v4173
      %v4175 = vrot.slane %v4174, 1
      %v4176 = vmax.f32 %v4174, %v4175
      %v4177 = vsel %vm4095, %v3985, -inf
      %v4178 = vsel %vm4095, %v3986, -inf
      %v4179 = vmax.f32 %v4177, %v4178
      %v4180 = vrot.slane %v4179, 4
      %v4181 = vmax.f32 %v4179, %v4180
      %v4182 = vrot.slane %v4181, 2
      %v4183 = vmax.f32 %v4181, %v4182
      %v4184 = vrot.slane %v4183, 1
      %v4185 = vmax.f32 %v4183, %v4184
      %v4186 = vsel %vm4095, %v3987, -inf
      %v4187 = vsel %vm4095, %v3988, -inf
      %v4188 = vmax.f32 %v4186, %v4187
      %v4189 = vrot.slane %v4188, 4
      %v4190 = vmax.f32 %v4188, %v4189
      %v4191 = vrot.slane %v4190, 2
      %v4192 = vmax.f32 %v4190, %v4191
      %v4193 = vrot.slane %v4192, 1
      %v4194 = vmax.f32 %v4192, %v4193
      %v4195 = vsel %vm4095, %v3989, -inf
      %v4196 = vsel %vm4095, %v3990, -inf
      %v4197 = vmax.f32 %v4195, %v4196
      %v4198 = vrot.slane %v4197, 4
      %v4199 = vmax.f32 %v4197, %v4198
      %v4200 = vrot.slane %v4199, 2
      %v4201 = vmax.f32 %v4199, %v4200
      %v4202 = vrot.slane %v4201, 1
      %v4203 = vmax.f32 %v4201, %v4202
      %v4204 = vsel %vm4095, %v3991, -inf
      %v4205 = vsel %vm4095, %v3992, -inf
      %v4206 = vmax.f32 %v4204, %v4205
      %v4207 = vrot.slane %v4206, 4
      %v4208 = vmax.f32 %v4206, %v4207
      %v4209 = vrot.slane %v4208, 2
      %v4210 = vmax.f32 %v4208, %v4209
      %v4211 = vrot.slane %v4210, 1
      %v4212 = vmax.f32 %v4210, %v4211
      %v4213 = vsel %vm4095, %v3993, -inf
      %v4214 = vsel %vm4095, %v3994, -inf
      %v4215 = vmax.f32 %v4213, %v4214
      %v4216 = vrot.slane %v4215, 4
      %v4217 = vmax.f32 %v4215, %v4216
      %v4218 = vrot.slane %v4217, 2
      %v4219 = vmax.f32 %v4217, %v4218
      %v4220 = vrot.slane %v4219, 1
      %v4221 = vmax.f32 %v4219, %v4220
      %v4222 = vsel %vm4095, %v3995, -inf
      %v4223 = vsel %vm4095, %v3996, -inf
      %v4224 = vmax.f32 %v4222, %v4223
      %v4225 = vrot.slane %v4224, 4
      %v4226 = vmax.f32 %v4224, %v4225
      %v4227 = vrot.slane %v4226, 2
      %v4228 = vmax.f32 %v4226, %v4227
      %v4229 = vrot.slane %v4228, 1
      %v4230 = vmax.f32 %v4228, %v4229
      %v4231 = vsel %vm4095, %v3997, -inf
      %v4232 = vsel %vm4095, %v3998, -inf
      %v4233 = vmax.f32 %v4231, %v4232
      %v4234 = vrot.slane %v4233, 4
      %v4235 = vmax.f32 %v4233, %v4234
      %v4236 = vrot.slane %v4235, 2
      %v4237 = vmax.f32 %v4235, %v4236
      %v4238 = vrot.slane %v4237, 1
      %v4239 = vmax.f32 %v4237, %v4238
      %v4240 = vsel %vm4095, %v3999, -inf
      %v4241 = vsel %vm4095, %v4000, -inf
      %v4242 = vmax.f32 %v4240, %v4241
      %v4243 = vrot.slane %v4242, 4
      %v4244 = vmax.f32 %v4242, %v4243
      %v4245 = vrot.slane %v4244, 2
      %v4246 = vmax.f32 %v4244, %v4245
      %v4247 = vrot.slane %v4246, 1
      %v4248 = vmax.f32 %v4246, %v4247
      %v4249 = vsel %vm4095, %v4001, -inf
      %v4250 = vsel %vm4095, %v4002, -inf
      %v4251 = vmax.f32 %v4249, %v4250
      %v4252 = vrot.slane %v4251, 4
      %v4253 = vmax.f32 %v4251, %v4252
      %v4254 = vrot.slane %v4253, 2
      %v4255 = vmax.f32 %v4253, %v4254
      %v4256 = vrot.slane %v4255, 1
      %v4257 = vmax.f32 %v4255, %v4256
      %v4258 = vsel %vm4095, %v4003, -inf
      %v4259 = vsel %vm4095, %v4004, -inf
      %v4260 = vmax.f32 %v4258, %v4259
      %v4261 = vrot.slane %v4260, 4
      %v4262 = vmax.f32 %v4260, %v4261
      %v4263 = vrot.slane %v4262, 2
      %v4264 = vmax.f32 %v4262, %v4263
      %v4265 = vrot.slane %v4264, 1
      %v4266 = vmax.f32 %v4264, %v4265
      %v4267 = vsel %vm4095, %v4005, -inf
      %v4268 = vsel %vm4095, %v4006, -inf
      %v4269 = vmax.f32 %v4267, %v4268
      %v4270 = vrot.slane %v4269, 4
      %v4271 = vmax.f32 %v4269, %v4270
      %v4272 = vrot.slane %v4271, 2
      %v4273 = vmax.f32 %v4271, %v4272
      %v4274 = vrot.slane %v4273, 1
      %v4275 = vmax.f32 %v4273, %v4274
      %v4276 = vsel %vm4095, %v4007, -inf
      %v4277 = vsel %vm4095, %v4008, -inf
      %v4278 = vmax.f32 %v4276, %v4277
      %v4279 = vrot.slane %v4278, 4
      %v4280 = vmax.f32 %v4278, %v4279
      %v4281 = vrot.slane %v4280, 2
      %v4282 = vmax.f32 %v4280, %v4281
      %v4283 = vrot.slane %v4282, 1
      %v4284 = vmax.f32 %v4282, %v4283
      %v4285 = vsel %vm4095, %v4009, -inf
      %v4286 = vsel %vm4095, %v4010, -inf
      %v4287 = vmax.f32 %v4285, %v4286
      %v4288 = vrot.slane %v4287, 4
      %v4289 = vmax.f32 %v4287, %v4288
      %v4290 = vrot.slane %v4289, 2
      %v4291 = vmax.f32 %v4289, %v4290
      %v4292 = vrot.slane %v4291, 1
      %v4293 = vmax.f32 %v4291, %v4292
      %v4294 = vsel %vm4095, %v4011, -inf
      %v4295 = vsel %vm4095, %v4012, -inf
      %v4296 = vmax.f32 %v4294, %v4295
      %v4297 = vrot.slane %v4296, 4
      %v4298 = vmax.f32 %v4296, %v4297
      %v4299 = vrot.slane %v4298, 2
      %v4300 = vmax.f32 %v4298, %v4299
      %v4301 = vrot.slane %v4300, 1
      %v4302 = vmax.f32 %v4300, %v4301
      %v4303 = vsel %vm4095, %v4013, -inf
      %v4304 = vsel %vm4095, %v4014, -inf
      %v4305 = vmax.f32 %v4303, %v4304
      %v4306 = vrot.slane %v4305, 4
      %v4307 = vmax.f32 %v4305, %v4306
      %v4308 = vrot.slane %v4307, 2
      %v4309 = vmax.f32 %v4307, %v4308
      %v4310 = vrot.slane %v4309, 1
      %v4311 = vmax.f32 %v4309, %v4310
      %v4312 = vsel %vm4095, %v4015, -inf
      %v4313 = vsel %vm4095, %v4016, -inf
      %v4314 = vmax.f32 %v4312, %v4313
      %v4315 = vrot.slane %v4314, 4
      %v4316 = vmax.f32 %v4314, %v4315
      %v4317 = vrot.slane %v4316, 2
      %v4318 = vmax.f32 %v4316, %v4317
      %v4319 = vrot.slane %v4318, 1
      %v4320 = vmax.f32 %v4318, %v4319
      %v4321 = vsel %vm4095, %v4017, -inf
      %v4322 = vsel %vm4095, %v4018, -inf
      %v4323 = vmax.f32 %v4321, %v4322
      %v4324 = vrot.slane %v4323, 4
      %v4325 = vmax.f32 %v4323, %v4324
      %v4326 = vrot.slane %v4325, 2
      %v4327 = vmax.f32 %v4325, %v4326
      %v4328 = vrot.slane %v4327, 1
      %v4329 = vmax.f32 %v4327, %v4328
      %v4330 = vsel %vm4095, %v4019, -inf
      %v4331 = vsel %vm4095, %v4020, -inf
      %v4332 = vmax.f32 %v4330, %v4331
      %v4333 = vrot.slane %v4332, 4
      %v4334 = vmax.f32 %v4332, %v4333
      %v4335 = vrot.slane %v4334, 2
      %v4336 = vmax.f32 %v4334, %v4335
      %v4337 = vrot.slane %v4336, 1
      %v4338 = vmax.f32 %v4336, %v4337
      %v4339 = vsel %vm4095, %v4021, -inf
      %v4340 = vsel %vm4095, %v4022, -inf
      %v4341 = vmax.f32 %v4339, %v4340
      %v4342 = vrot.slane %v4341, 4
      %v4343 = vmax.f32 %v4341, %v4342
      %v4344 = vrot.slane %v4343, 2
      %v4345 = vmax.f32 %v4343, %v4344
      %v4346 = vrot.slane %v4345, 1
      %v4347 = vmax.f32 %v4345, %v4346
      %v4348 = vsel %vm4095, %v4023, -inf
      %v4349 = vsel %vm4095, %v4024, -inf
      %v4350 = vmax.f32 %v4348, %v4349
      %v4351 = vrot.slane %v4350, 4
      %v4352 = vmax.f32 %v4350, %v4351
      %v4353 = vrot.slane %v4352, 2
      %v4354 = vmax.f32 %v4352, %v4353
      %v4355 = vrot.slane %v4354, 1
      %v4356 = vmax.f32 %v4354, %v4355
      %v4357 = vsel %vm4095, %v4025, -inf
      %v4358 = vsel %vm4095, %v4026, -inf
      %v4359 = vmax.f32 %v4357, %v4358
      %v4360 = vrot.slane %v4359, 4
      %v4361 = vmax.f32 %v4359, %v4360
      %v4362 = vrot.slane %v4361, 2
      %v4363 = vmax.f32 %v4361, %v4362
      %v4364 = vrot.slane %v4363, 1
      %v4365 = vmax.f32 %v4363, %v4364
      %v4366 = vsel %vm4095, %v4027, -inf
      %v4367 = vsel %vm4095, %v4028, -inf
      %v4368 = vmax.f32 %v4366, %v4367
      %v4369 = vrot.slane %v4368, 4
      %v4370 = vmax.f32 %v4368, %v4369
      %v4371 = vrot.slane %v4370, 2
      %v4372 = vmax.f32 %v4370, %v4371
      %v4373 = vrot.slane %v4372, 1
      %v4374 = vmax.f32 %v4372, %v4373
      %v4375 = vsel %vm4095, %v4029, -inf
      %v4376 = vsel %vm4095, %v4030, -inf
      %v4377 = vmax.f32 %v4375, %v4376
      %v4378 = vrot.slane %v4377, 4
      %v4379 = vmax.f32 %v4377, %v4378
      %v4380 = vrot.slane %v4379, 2
      %v4381 = vmax.f32 %v4379, %v4380
      %v4382 = vrot.slane %v4381, 1
      %v4383 = vmax.f32 %v4381, %v4382
      %v4384 = vsel %vm4095, %v4031, -inf
      %v4385 = vsel %vm4095, %v4032, -inf
      %v4386 = vmax.f32 %v4384, %v4385
      %v4387 = vrot.slane %v4386, 4
      %v4388 = vmax.f32 %v4386, %v4387
      %v4389 = vrot.slane %v4388, 2
      %v4390 = vmax.f32 %v4388, %v4389
      %v4391 = vrot.slane %v4390, 1
      %v4392 = vmax.f32 %v4390, %v4391
      %v4393 = vsel %vm4095, %v4033, -inf
      %v4394 = vsel %vm4095, %v4034, -inf
      %v4395 = vmax.f32 %v4393, %v4394
      %v4396 = vrot.slane %v4395, 4
      %v4397 = vmax.f32 %v4395, %v4396
      %v4398 = vrot.slane %v4397, 2
      %v4399 = vmax.f32 %v4397, %v4398
      %v4400 = vrot.slane %v4399, 1
      %v4401 = vmax.f32 %v4399, %v4400
      %v4402 = vsel %vm4095, %v4035, -inf
      %v4403 = vsel %vm4095, %v4036, -inf
      %v4404 = vmax.f32 %v4402, %v4403
      %v4405 = vrot.slane %v4404, 4
      %v4406 = vmax.f32 %v4404, %v4405
      %v4407 = vrot.slane %v4406, 2
      %v4408 = vmax.f32 %v4406, %v4407
      %v4409 = vrot.slane %v4408, 1
      %v4410 = vmax.f32 %v4408, %v4409
      %v4411 = vsel %vm4095, %v4037, -inf
      %v4412 = vsel %vm4095, %v4038, -inf
      %v4413 = vmax.f32 %v4411, %v4412
      %v4414 = vrot.slane %v4413, 4
      %v4415 = vmax.f32 %v4413, %v4414
      %v4416 = vrot.slane %v4415, 2
      %v4417 = vmax.f32 %v4415, %v4416
      %v4418 = vrot.slane %v4417, 1
      %v4419 = vmax.f32 %v4417, %v4418
      %v4420 = vsel %vm4095, %v4039, -inf
      %v4421 = vsel %vm4095, %v4040, -inf
      %v4422 = vmax.f32 %v4420, %v4421
      %v4423 = vrot.slane %v4422, 4
      %v4424 = vmax.f32 %v4422, %v4423
      %v4425 = vrot.slane %v4424, 2
      %v4426 = vmax.f32 %v4424, %v4425
      %v4427 = vrot.slane %v4426, 1
      %v4428 = vmax.f32 %v4426, %v4427
      %v4429 = vsel %vm4095, %v4041, -inf
      %v4430 = vsel %vm4095, %v4042, -inf
      %v4431 = vmax.f32 %v4429, %v4430
      %v4432 = vrot.slane %v4431, 4
      %v4433 = vmax.f32 %v4431, %v4432
      %v4434 = vrot.slane %v4433, 2
      %v4435 = vmax.f32 %v4433, %v4434
      %v4436 = vrot.slane %v4435, 1
      %v4437 = vmax.f32 %v4435, %v4436
      %v4438 = vsel %vm4095, %v4043, -inf
      %v4439 = vsel %vm4095, %v4044, -inf
      %v4440 = vmax.f32 %v4438, %v4439
      %v4441 = vrot.slane %v4440, 4
      %v4442 = vmax.f32 %v4440, %v4441
      %v4443 = vrot.slane %v4442, 2
      %v4444 = vmax.f32 %v4442, %v4443
      %v4445 = vrot.slane %v4444, 1
      %v4446 = vmax.f32 %v4444, %v4445
      %v4447 = vsel %vm4095, %v4045, -inf
      %v4448 = vsel %vm4095, %v4046, -inf
      %v4449 = vmax.f32 %v4447, %v4448
      %v4450 = vrot.slane %v4449, 4
      %v4451 = vmax.f32 %v4449, %v4450
      %v4452 = vrot.slane %v4451, 2
      %v4453 = vmax.f32 %v4451, %v4452
      %v4454 = vrot.slane %v4453, 1
      %v4455 = vmax.f32 %v4453, %v4454
      %v4456 = vsel %vm4095, %v4047, -inf
      %v4457 = vsel %vm4095, %v4048, -inf
      %v4458 = vmax.f32 %v4456, %v4457
      %v4459 = vrot.slane %v4458, 4
      %v4460 = vmax.f32 %v4458, %v4459
      %v4461 = vrot.slane %v4460, 2
      %v4462 = vmax.f32 %v4460, %v4461
      %v4463 = vrot.slane %v4462, 1
      %v4464 = vmax.f32 %v4462, %v4463
      %v4465 = vsel %vm4095, %v4049, -inf
      %v4466 = vsel %vm4095, %v4050, -inf
      %v4467 = vmax.f32 %v4465, %v4466
      %v4468 = vrot.slane %v4467, 4
      %v4469 = vmax.f32 %v4467, %v4468
      %v4470 = vrot.slane %v4469, 2
      %v4471 = vmax.f32 %v4469, %v4470
      %v4472 = vrot.slane %v4471, 1
      %v4473 = vmax.f32 %v4471, %v4472
      %v4474 = vsel %vm4095, %v4051, -inf
      %v4475 = vsel %vm4095, %v4052, -inf
      %v4476 = vmax.f32 %v4474, %v4475
      %v4477 = vrot.slane %v4476, 4
      %v4478 = vmax.f32 %v4476, %v4477
      %v4479 = vrot.slane %v4478, 2
      %v4480 = vmax.f32 %v4478, %v4479
      %v4481 = vrot.slane %v4480, 1
      %v4482 = vmax.f32 %v4480, %v4481
      %v4483 = vsel %vm4095, %v4053, -inf
      %v4484 = vsel %vm4095, %v4054, -inf
      %v4485 = vmax.f32 %v4483, %v4484
      %v4486 = vrot.slane %v4485, 4
      %v4487 = vmax.f32 %v4485, %v4486
      %v4488 = vrot.slane %v4487, 2
      %v4489 = vmax.f32 %v4487, %v4488
      %v4490 = vrot.slane %v4489, 1
      %v4491 = vmax.f32 %v4489, %v4490
      %v4492 = vsel %vm4095, %v4055, -inf
      %v4493 = vsel %vm4095, %v4056, -inf
      %v4494 = vmax.f32 %v4492, %v4493
      %v4495 = vrot.slane %v4494, 4
      %v4496 = vmax.f32 %v4494, %v4495
      %v4497 = vrot.slane %v4496, 2
      %v4498 = vmax.f32 %v4496, %v4497
      %v4499 = vrot.slane %v4498, 1
      %v4500 = vmax.f32 %v4498, %v4499
      %v4501 = vsel %vm4095, %v4057, -inf
      %v4502 = vsel %vm4095, %v4058, -inf
      %v4503 = vmax.f32 %v4501, %v4502
      %v4504 = vrot.slane %v4503, 4
      %v4505 = vmax.f32 %v4503, %v4504
      %v4506 = vrot.slane %v4505, 2
      %v4507 = vmax.f32 %v4505, %v4506
      %v4508 = vrot.slane %v4507, 1
      %v4509 = vmax.f32 %v4507, %v4508
      %v4510 = vsel %vm4095, %v4059, -inf
      %v4511 = vsel %vm4095, %v4060, -inf
      %v4512 = vmax.f32 %v4510, %v4511
      %v4513 = vrot.slane %v4512, 4
      %v4514 = vmax.f32 %v4512, %v4513
      %v4515 = vrot.slane %v4514, 2
      %v4516 = vmax.f32 %v4514, %v4515
      %v4517 = vrot.slane %v4516, 1
      %v4518 = vmax.f32 %v4516, %v4517
      %v4519 = vsel %vm4095, %v4061, -inf
      %v4520 = vsel %vm4095, %v4062, -inf
      %v4521 = vmax.f32 %v4519, %v4520
      %v4522 = vrot.slane %v4521, 4
      %v4523 = vmax.f32 %v4521, %v4522
      %v4524 = vrot.slane %v4523, 2
      %v4525 = vmax.f32 %v4523, %v4524
      %v4526 = vrot.slane %v4525, 1
      %v4527 = vmax.f32 %v4525, %v4526
      %v4528 = vsel %vm4095, %v4063, -inf
      %v4529 = vsel %vm4095, %v4064, -inf
      %v4530 = vmax.f32 %v4528, %v4529
      %v4531 = vrot.slane %v4530, 4
      %v4532 = vmax.f32 %v4530, %v4531
      %v4533 = vrot.slane %v4532, 2
      %v4534 = vmax.f32 %v4532, %v4533
      %v4535 = vrot.slane %v4534, 1
      %v4536 = vmax.f32 %v4534, %v4535
      %v4537 = vsel %vm4095, %v4065, -inf
      %v4538 = vsel %vm4095, %v4066, -inf
      %v4539 = vmax.f32 %v4537, %v4538
      %v4540 = vrot.slane %v4539, 4
      %v4541 = vmax.f32 %v4539, %v4540
      %v4542 = vrot.slane %v4541, 2
      %v4543 = vmax.f32 %v4541, %v4542
      %v4544 = vrot.slane %v4543, 1
      %v4545 = vmax.f32 %v4543, %v4544
      %v4546 = vsel %vm4095, %v4067, -inf
      %v4547 = vsel %vm4095, %v4068, -inf
      %v4548 = vmax.f32 %v4546, %v4547
      %v4549 = vrot.slane %v4548, 4
      %v4550 = vmax.f32 %v4548, %v4549
      %v4551 = vrot.slane %v4550, 2
      %v4552 = vmax.f32 %v4550, %v4551
      %v4553 = vrot.slane %v4552, 1
      %v4554 = vmax.f32 %v4552, %v4553
      %v4555 = vsel %vm4095, %v4069, -inf
      %v4556 = vsel %vm4095, %v4070, -inf
      %v4557 = vmax.f32 %v4555, %v4556
      %v4558 = vrot.slane %v4557, 4
      %v4559 = vmax.f32 %v4557, %v4558
      %v4560 = vrot.slane %v4559, 2
      %v4561 = vmax.f32 %v4559, %v4560
      %v4562 = vrot.slane %v4561, 1
      %v4563 = vmax.f32 %v4561, %v4562
      %v4564 = vsel %vm4095, %v4071, -inf
      %v4565 = vsel %vm4095, %v4072, -inf
      %v4566 = vmax.f32 %v4564, %v4565
      %v4567 = vrot.slane %v4566, 4
      %v4568 = vmax.f32 %v4566, %v4567
      %v4569 = vrot.slane %v4568, 2
      %v4570 = vmax.f32 %v4568, %v4569
      %v4571 = vrot.slane %v4570, 1
      %v4572 = vmax.f32 %v4570, %v4571
      %v4573 = vsel %vm4095, %v4073, -inf
      %v4574 = vsel %vm4095, %v4074, -inf
      %v4575 = vmax.f32 %v4573, %v4574
      %v4576 = vrot.slane %v4575, 4
      %v4577 = vmax.f32 %v4575, %v4576
      %v4578 = vrot.slane %v4577, 2
      %v4579 = vmax.f32 %v4577, %v4578
      %v4580 = vrot.slane %v4579, 1
      %v4581 = vmax.f32 %v4579, %v4580
      %v4582 = vsel %vm4095, %v4075, -inf
      %v4583 = vsel %vm4095, %v4076, -inf
      %v4584 = vmax.f32 %v4582, %v4583
      %v4585 = vrot.slane %v4584, 4
      %v4586 = vmax.f32 %v4584, %v4585
      %v4587 = vrot.slane %v4586, 2
      %v4588 = vmax.f32 %v4586, %v4587
      %v4589 = vrot.slane %v4588, 1
      %v4590 = vmax.f32 %v4588, %v4589
      %v4591 = vsel %vm4095, %v4077, -inf
      %v4592 = vsel %vm4095, %v4078, -inf
      %v4593 = vmax.f32 %v4591, %v4592
      %v4594 = vrot.slane %v4593, 4
      %v4595 = vmax.f32 %v4593, %v4594
      %v4596 = vrot.slane %v4595, 2
      %v4597 = vmax.f32 %v4595, %v4596
      %v4598 = vrot.slane %v4597, 1
      %v4599 = vmax.f32 %v4597, %v4598
      %v4600 = vsel %vm4095, %v4079, -inf
      %v4601 = vsel %vm4095, %v4080, -inf
      %v4602 = vmax.f32 %v4600, %v4601
      %v4603 = vrot.slane %v4602, 4
      %v4604 = vmax.f32 %v4602, %v4603
      %v4605 = vrot.slane %v4604, 2
      %v4606 = vmax.f32 %v4604, %v4605
      %v4607 = vrot.slane %v4606, 1
      %v4608 = vmax.f32 %v4606, %v4607
      %v4609 = vsel %vm4095, %v4081, -inf
      %v4610 = vsel %vm4095, %v4082, -inf
      %v4611 = vmax.f32 %v4609, %v4610
      %v4612 = vrot.slane %v4611, 4
      %v4613 = vmax.f32 %v4611, %v4612
      %v4614 = vrot.slane %v4613, 2
      %v4615 = vmax.f32 %v4613, %v4614
      %v4616 = vrot.slane %v4615, 1
      %v4617 = vmax.f32 %v4615, %v4616
      %v4618 = vsel %vm4095, %v4083, -inf
      %v4619 = vsel %vm4095, %v4084, -inf
      %v4620 = vmax.f32 %v4618, %v4619
      %v4621 = vrot.slane %v4620, 4
      %v4622 = vmax.f32 %v4620, %v4621
      %v4623 = vrot.slane %v4622, 2
      %v4624 = vmax.f32 %v4622, %v4623
      %v4625 = vrot.slane %v4624, 1
      %v4626 = vmax.f32 %v4624, %v4625
      %v4627 = vsel %vm4095, %v4085, -inf
      %v4628 = vsel %vm4095, %v4086, -inf
      %v4629 = vmax.f32 %v4627, %v4628
      %v4630 = vrot.slane %v4629, 4
      %v4631 = vmax.f32 %v4629, %v4630
      %v4632 = vrot.slane %v4631, 2
      %v4633 = vmax.f32 %v4631, %v4632
      %v4634 = vrot.slane %v4633, 1
      %v4635 = vmax.f32 %v4633, %v4634
      %v4636 = vsel %vm4095, %v4087, -inf
      %v4637 = vsel %vm4095, %v4088, -inf
      %v4638 = vmax.f32 %v4636, %v4637
      %v4639 = vrot.slane %v4638, 4
      %v4640 = vmax.f32 %v4638, %v4639
      %v4641 = vrot.slane %v4640, 2
      %v4642 = vmax.f32 %v4640, %v4641
      %v4643 = vrot.slane %v4642, 1
      %v4644 = vmax.f32 %v4642, %v4643
      %v4645 = vsel %vm4095, %v4089, -inf
      %v4646 = vsel %vm4095, %v4090, -inf
      %v4647 = vmax.f32 %v4645, %v4646
      %v4648 = vrot.slane %v4647, 4
      %v4649 = vmax.f32 %v4647, %v4648
      %v4650 = vrot.slane %v4649, 2
      %v4651 = vmax.f32 %v4649, %v4650
      %v4652 = vrot.slane %v4651, 1
      %v4653 = vmax.f32 %v4651, %v4652
      %v4654 = vsel %vm4095, %v4091, -inf
      %v4655 = vsel %vm4095, %v4092, -inf
      %v4656 = vmax.f32 %v4654, %v4655
      %v4657 = vrot.slane %v4656, 4
      %v4658 = vmax.f32 %v4656, %v4657
      %v4659 = vrot.slane %v4658, 2
      %v4660 = vmax.f32 %v4658, %v4659
      %v4661 = vrot.slane %v4660, 1
      %v4662 = vmax.f32 %v4660, %v4661
      %v4663 = vsel %vm4095, %v4093, -inf
      %v4664 = vsel %vm4095, %v4094, -inf
      %v4665 = vmax.f32 %v4663, %v4664
      %v4666 = vrot.slane %v4665, 4
      %v4667 = vmax.f32 %v4665, %v4666
      %v4668 = vrot.slane %v4667, 2
      %v4669 = vmax.f32 %v4667, %v4668
      %v4670 = vrot.slane %v4669, 1
      %v4671 = vmax.f32 %v4669, %v4670
      %v4672 = vsub.f32 %v3967, %v4104
      %v4673 = vsub.f32 %v3968, %v4104
      %v4674 = vsub.f32 %v3969, %v4113
      %v4675 = vsub.f32 %v3970, %v4113
      %v4676 = vsub.f32 %v3971, %v4122
      %v4677 = vsub.f32 %v3972, %v4122
      %v4678 = vsub.f32 %v3973, %v4131
      %v4679 = vsub.f32 %v3974, %v4131
      %v4680 = vsub.f32 %v3975, %v4140
      %v4681 = vsub.f32 %v3976, %v4140
      %v4682 = vsub.f32 %v3977, %v4149
      %v4683 = vsub.f32 %v3978, %v4149
      %v4684 = vsub.f32 %v3979, %v4158
      %v4685 = vsub.f32 %v3980, %v4158
      %v4686 = vsub.f32 %v3981, %v4167
      %v4687 = vsub.f32 %v3982, %v4167
      %v4688 = vsub.f32 %v3983, %v4176
      %v4689 = vsub.f32 %v3984, %v4176
      %v4690 = vsub.f32 %v3985, %v4185
      %v4691 = vsub.f32 %v3986, %v4185
      %v4692 = vsub.f32 %v3987, %v4194
      %v4693 = vsub.f32 %v3988, %v4194
      %v4694 = vsub.f32 %v3989, %v4203
      %v4695 = vsub.f32 %v3990, %v4203
      %v4696 = vsub.f32 %v3991, %v4212
      %v4697 = vsub.f32 %v3992, %v4212
      %v4698 = vsub.f32 %v3993, %v4221
      %v4699 = vsub.f32 %v3994, %v4221
      %v4700 = vsub.f32 %v3995, %v4230
      %v4701 = vsub.f32 %v3996, %v4230
      %v4702 = vsub.f32 %v3997, %v4239
      %v4703 = vsub.f32 %v3998, %v4239
      %v4704 = vsub.f32 %v3999, %v4248
      %v4705 = vsub.f32 %v4000, %v4248
      %v4706 = vsub.f32 %v4001, %v4257
      %v4707 = vsub.f32 %v4002, %v4257
      %v4708 = vsub.f32 %v4003, %v4266
      %v4709 = vsub.f32 %v4004, %v4266
      %v4710 = vsub.f32 %v4005, %v4275
      %v4711 = vsub.f32 %v4006, %v4275
      %v4712 = vsub.f32 %v4007, %v4284
      %v4713 = vsub.f32 %v4008, %v4284
      %v4714 = vsub.f32 %v4009, %v4293
      %v4715 = vsub.f32 %v4010, %v4293
      %v4716 = vsub.f32 %v4011, %v4302
      %v4717 = vsub.f32 %v4012, %v4302
      %v4718 = vsub.f32 %v4013, %v4311
      %v4719 = vsub.f32 %v4014, %v4311
      %v4720 = vsub.f32 %v4015, %v4320
      %v4721 = vsub.f32 %v4016, %v4320
      %v4722 = vsub.f32 %v4017, %v4329
      %v4723 = vsub.f32 %v4018, %v4329
      %v4724 = vsub.f32 %v4019, %v4338
      %v4725 = vsub.f32 %v4020, %v4338
      %v4726 = vsub.f32 %v4021, %v4347
      %v4727 = vsub.f32 %v4022, %v4347
      %v4728 = vsub.f32 %v4023, %v4356
      %v4729 = vsub.f32 %v4024, %v4356
      %v4730 = vsub.f32 %v4025, %v4365
      %v4731 = vsub.f32 %v4026, %v4365
      %v4732 = vsub.f32 %v4027, %v4374
      %v4733 = vsub.f32 %v4028, %v4374
      %v4734 = vsub.f32 %v4029, %v4383
      %v4735 = vsub.f32 %v4030, %v4383
      %v4736 = vsub.f32 %v4031, %v4392
      %v4737 = vsub.f32 %v4032, %v4392
      %v4738 = vsub.f32 %v4033, %v4401
      %v4739 = vsub.f32 %v4034, %v4401
      %v4740 = vsub.f32 %v4035, %v4410
      %v4741 = vsub.f32 %v4036, %v4410
      %v4742 = vsub.f32 %v4037, %v4419
      %v4743 = vsub.f32 %v4038, %v4419
      %v4744 = vsub.f32 %v4039, %v4428
      %v4745 = vsub.f32 %v4040, %v4428
      %v4746 = vsub.f32 %v4041, %v4437
      %v4747 = vsub.f32 %v4042, %v4437
      %v4748 = vsub.f32 %v4043, %v4446
      %v4749 = vsub.f32 %v4044, %v4446
      %v4750 = vsub.f32 %v4045, %v4455
      %v4751 = vsub.f32 %v4046, %v4455
      %v4752 = vsub.f32 %v4047, %v4464
      %v4753 = vsub.f32 %v4048, %v4464
      %v4754 = vsub.f32 %v4049, %v4473
      %v4755 = vsub.f32 %v4050, %v4473
      %v4756 = vsub.f32 %v4051, %v4482
      %v4757 = vsub.f32 %v4052, %v4482
      %v4758 = vsub.f32 %v4053, %v4491
      %v4759 = vsub.f32 %v4054, %v4491
      %v4760 = vsub.f32 %v4055, %v4500
      %v4761 = vsub.f32 %v4056, %v4500
      %v4762 = vsub.f32 %v4057, %v4509
      %v4763 = vsub.f32 %v4058, %v4509
      %v4764 = vsub.f32 %v4059, %v4518
      %v4765 = vsub.f32 %v4060, %v4518
      %v4766 = vsub.f32 %v4061, %v4527
      %v4767 = vsub.f32 %v4062, %v4527
      %v4768 = vsub.f32 %v4063, %v4536
      %v4769 = vsub.f32 %v4064, %v4536
      %v4770 = vsub.f32 %v4065, %v4545
      %v4771 = vsub.f32 %v4066, %v4545
      %v4772 = vsub.f32 %v4067, %v4554
      %v4773 = vsub.f32 %v4068, %v4554
      %v4774 = vsub.f32 %v4069, %v4563
      %v4775 = vsub.f32 %v4070, %v4563
      %v4776 = vsub.f32 %v4071, %v4572
      %v4777 = vsub.f32 %v4072, %v4572
      %v4778 = vsub.f32 %v4073, %v4581
      %v4779 = vsub.f32 %v4074, %v4581
      %v4780 = vsub.f32 %v4075, %v4590
      %v4781 = vsub.f32 %v4076, %v4590
      %v4782 = vsub.f32 %v4077, %v4599
      %v4783 = vsub.f32 %v4078, %v4599
      %v4784 = vsub.f32 %v4079, %v4608
      %v4785 = vsub.f32 %v4080, %v4608
      %v4786 = vsub.f32 %v4081, %v4617
      %v4787 = vsub.f32 %v4082, %v4617
      %v4788 = vsub.f32 %v4083, %v4626
      %v4789 = vsub.f32 %v4084, %v4626
      %v4790 = vsub.f32 %v4085, %v4635
      %v4791 = vsub.f32 %v4086, %v4635
      %v4792 = vsub.f32 %v4087, %v4644
      %v4793 = vsub.f32 %v4088, %v4644
      %v4794 = vsub.f32 %v4089, %v4653
      %v4795 = vsub.f32 %v4090, %v4653
      %v4796 = vsub.f32 %v4091, %v4662
      %v4797 = vsub.f32 %v4092, %v4662
      %v4798 = vsub.f32 %v4093, %v4671
      %v4799 = vsub.f32 %v4094, %v4671
      %v4800 = vmul.f32 %v4672, 1.442695
      %v4801 = vpow.pop %v4800
      %v4802 = vmul.f32 %v4673, 1.442695
      %v4803 = vpow.pop %v4802
      %v4804 = vmul.f32 %v4674, 1.442695
      %v4805 = vpow.pop %v4804
      %v4806 = vmul.f32 %v4675, 1.442695
      %v4807 = vpow.pop %v4806
      %v4808 = vmul.f32 %v4676, 1.442695
      %v4809 = vpow.pop %v4808
      %v4810 = vmul.f32 %v4677, 1.442695
      %v4811 = vpow.pop %v4810
      %v4812 = vmul.f32 %v4678, 1.442695
      %v4813 = vpow.pop %v4812
      %v4814 = vmul.f32 %v4679, 1.442695
      %v4815 = vpow.pop %v4814
      %v4816 = vmul.f32 %v4680, 1.442695
      %v4817 = vpow.pop %v4816
      %v4818 = vmul.f32 %v4681, 1.442695
      %v4819 = vpow.pop %v4818
      %v4820 = vmul.f32 %v4682, 1.442695
      %v4821 = vpow.pop %v4820
      %v4822 = vmul.f32 %v4683, 1.442695
      %v4823 = vpow.pop %v4822
      %v4824 = vmul.f32 %v4684, 1.442695
      %v4825 = vpow.pop %v4824
      %v4826 = vmul.f32 %v4685, 1.442695
      %v4827 = vpow.pop %v4826
      %v4828 = vmul.f32 %v4686, 1.442695
      %v4829 = vpow.pop %v4828
      %v4830 = vmul.f32 %v4687, 1.442695
      %v4831 = vpow.pop %v4830
      %v4832 = vmul.f32 %v4688, 1.442695
      %v4833 = vpow.pop %v4832
      %v4834 = vmul.f32 %v4689, 1.442695
      %v4835 = vpow.pop %v4834
      %v4836 = vmul.f32 %v4690, 1.442695
      %v4837 = vpow.pop %v4836
      %v4838 = vmul.f32 %v4691, 1.442695
      %v4839 = vpow.pop %v4838
      %v4840 = vmul.f32 %v4692, 1.442695
      %v4841 = vpow.pop %v4840
      %v4842 = vmul.f32 %v4693, 1.442695
      %v4843 = vpow.pop %v4842
      %v4844 = vmul.f32 %v4694, 1.442695
      %v4845 = vpow.pop %v4844
      %v4846 = vmul.f32 %v4695, 1.442695
      %v4847 = vpow.pop %v4846
      %v4848 = vmul.f32 %v4696, 1.442695
      %v4849 = vpow.pop %v4848
      %v4850 = vmul.f32 %v4697, 1.442695
      %v4851 = vpow.pop %v4850
      %v4852 = vmul.f32 %v4698, 1.442695
      %v4853 = vpow.pop %v4852
      %v4854 = vmul.f32 %v4699, 1.442695
      %v4855 = vpow.pop %v4854
      %v4856 = vmul.f32 %v4700, 1.442695
      %v4857 = vpow.pop %v4856
      %v4858 = vmul.f32 %v4701, 1.442695
      %v4859 = vpow.pop %v4858
      %v4860 = vmul.f32 %v4702, 1.442695
      %v4861 = vpow.pop %v4860
      %v4862 = vmul.f32 %v4703, 1.442695
      %v4863 = vpow.pop %v4862
      %v4864 = vmul.f32 %v4704, 1.442695
      %v4865 = vpow.pop %v4864
      %v4866 = vmul.f32 %v4705, 1.442695
      %v4867 = vpow.pop %v4866
      %v4868 = vmul.f32 %v4706, 1.442695
      %v4869 = vpow.pop %v4868
      %v4870 = vmul.f32 %v4707, 1.442695
      %v4871 = vpow.pop %v4870
      %v4872 = vmul.f32 %v4708, 1.442695
      %v4873 = vpow.pop %v4872
      %v4874 = vmul.f32 %v4709, 1.442695
      %v4875 = vpow.pop %v4874
      %v4876 = vmul.f32 %v4710, 1.442695
      %v4877 = vpow.pop %v4876
      %v4878 = vmul.f32 %v4711, 1.442695
      %v4879 = vpow.pop %v4878
      %v4880 = vmul.f32 %v4712, 1.442695
      %v4881 = vpow.pop %v4880
      %v4882 = vmul.f32 %v4713, 1.442695
      %v4883 = vpow.pop %v4882
      %v4884 = vmul.f32 %v4714, 1.442695
      %v4885 = vpow.pop %v4884
      %v4886 = vmul.f32 %v4715, 1.442695
      %v4887 = vpow.pop %v4886
      %v4888 = vmul.f32 %v4716, 1.442695
      %v4889 = vpow.pop %v4888
      %v4890 = vmul.f32 %v4717, 1.442695
      %v4891 = vpow.pop %v4890
      %v4892 = vmul.f32 %v4718, 1.442695
      %v4893 = vpow.pop %v4892
      %v4894 = vmul.f32 %v4719, 1.442695
      %v4895 = vpow.pop %v4894
      %v4896 = vmul.f32 %v4720, 1.442695
      %v4897 = vpow.pop %v4896
      %v4898 = vmul.f32 %v4721, 1.442695
      %v4899 = vpow.pop %v4898
      %v4900 = vmul.f32 %v4722, 1.442695
      %v4901 = vpow.pop %v4900
      %v4902 = vmul.f32 %v4723, 1.442695
      %v4903 = vpow.pop %v4902
      %v4904 = vmul.f32 %v4724, 1.442695
      %v4905 = vpow.pop %v4904
      %v4906 = vmul.f32 %v4725, 1.442695
      %v4907 = vpow.pop %v4906
      %v4908 = vmul.f32 %v4726, 1.442695
      %v4909 = vpow.pop %v4908
      %v4910 = vmul.f32 %v4727, 1.442695
      %v4911 = vpow.pop %v4910
      %v4912 = vmul.f32 %v4728, 1.442695
      %v4913 = vpow.pop %v4912
      %v4914 = vmul.f32 %v4729, 1.442695
      %v4915 = vpow.pop %v4914
      %v4916 = vmul.f32 %v4730, 1.442695
      %v4917 = vpow.pop %v4916
      %v4918 = vmul.f32 %v4731, 1.442695
      %v4919 = vpow.pop %v4918
      %v4920 = vmul.f32 %v4732, 1.442695
      %v4921 = vpow.pop %v4920
      %v4922 = vmul.f32 %v4733, 1.442695
      %v4923 = vpow.pop %v4922
      %v4924 = vmul.f32 %v4734, 1.442695
      %v4925 = vpow.pop %v4924
      %v4926 = vmul.f32 %v4735, 1.442695
      %v4927 = vpow.pop %v4926
      %v4928 = vmul.f32 %v4736, 1.442695
      %v4929 = vpow.pop %v4928
      %v4930 = vmul.f32 %v4737, 1.442695
      %v4931 = vpow.pop %v4930
      %v4932 = vmul.f32 %v4738, 1.442695
      %v4933 = vpow.pop %v4932
      %v4934 = vmul.f32 %v4739, 1.442695
      %v4935 = vpow.pop %v4934
      %v4936 = vmul.f32 %v4740, 1.442695
      %v4937 = vpow.pop %v4936
      %v4938 = vmul.f32 %v4741, 1.442695
      %v4939 = vpow.pop %v4938
      %v4940 = vmul.f32 %v4742, 1.442695
      %v4941 = vpow.pop %v4940
      %v4942 = vmul.f32 %v4743, 1.442695
      %v4943 = vpow.pop %v4942
      %v4944 = vmul.f32 %v4744, 1.442695
      %v4945 = vpow.pop %v4944
      %v4946 = vmul.f32 %v4745, 1.442695
      %v4947 = vpow.pop %v4946
      %v4948 = vmul.f32 %v4746, 1.442695
      %v4949 = vpow.pop %v4948
      %v4950 = vmul.f32 %v4747, 1.442695
      %v4951 = vpow.pop %v4950
      %v4952 = vmul.f32 %v4748, 1.442695
      %v4953 = vpow.pop %v4952
      %v4954 = vmul.f32 %v4749, 1.442695
      %v4955 = vpow.pop %v4954
      %v4956 = vmul.f32 %v4750, 1.442695
      %v4957 = vpow.pop %v4956
      %v4958 = vmul.f32 %v4751, 1.442695
      %v4959 = vpow.pop %v4958
      %v4960 = vmul.f32 %v4752, 1.442695
      %v4961 = vpow.pop %v4960
      %v4962 = vmul.f32 %v4753, 1.442695
      %v4963 = vpow.pop %v4962
      %v4964 = vmul.f32 %v4754, 1.442695
      %v4965 = vpow.pop %v4964
      %v4966 = vmul.f32 %v4755, 1.442695
      %v4967 = vpow.pop %v4966
      %v4968 = vmul.f32 %v4756, 1.442695
      %v4969 = vpow.pop %v4968
      %v4970 = vmul.f32 %v4757, 1.442695
      %v4971 = vpow.pop %v4970
      %v4972 = vmul.f32 %v4758, 1.442695
      %v4973 = vpow.pop %v4972
      %v4974 = vmul.f32 %v4759, 1.442695
      %v4975 = vpow.pop %v4974
      %v4976 = vmul.f32 %v4760, 1.442695
      %v4977 = vpow.pop %v4976
      %v4978 = vmul.f32 %v4761, 1.442695
      %v4979 = vpow.pop %v4978
      %v4980 = vmul.f32 %v4762, 1.442695
      %v4981 = vpow.pop %v4980
      %v4982 = vmul.f32 %v4763, 1.442695
      %v4983 = vpow.pop %v4982
      %v4984 = vmul.f32 %v4764, 1.442695
      %v4985 = vpow.pop %v4984
      %v4986 = vmul.f32 %v4765, 1.442695
      %v4987 = vpow.pop %v4986
      %v4988 = vmul.f32 %v4766, 1.442695
      %v4989 = vpow.pop %v4988
      %v4990 = vmul.f32 %v4767, 1.442695
      %v4991 = vpow.pop %v4990
      %v4992 = vmul.f32 %v4768, 1.442695
      %v4993 = vpow.pop %v4992
      %v4994 = vmul.f32 %v4769, 1.442695
      %v4995 = vpow.pop %v4994
      %v4996 = vmul.f32 %v4770, 1.442695
      %v4997 = vpow.pop %v4996
      %v4998 = vmul.f32 %v4771, 1.442695
      %v4999 = vpow.pop %v4998
      %v5000 = vmul.f32 %v4772, 1.442695
      %v5001 = vpow.pop %v5000
      %v5002 = vmul.f32 %v4773, 1.442695
      %v5003 = vpow.pop %v5002
      %v5004 = vmul.f32 %v4774, 1.442695
      %v5005 = vpow.pop %v5004
      %v5006 = vmul.f32 %v4775, 1.442695
      %v5007 = vpow.pop %v5006
      %v5008 = vmul.f32 %v4776, 1.442695
      %v5009 = vpow.pop %v5008
      %v5010 = vmul.f32 %v4777, 1.442695
      %v5011 = vpow.pop %v5010
      %v5012 = vmul.f32 %v4778, 1.442695
      %v5013 = vpow.pop %v5012
      %v5014 = vmul.f32 %v4779, 1.442695
      %v5015 = vpow.pop %v5014
      %v5016 = vmul.f32 %v4780, 1.442695
      %v5017 = vpow.pop %v5016
      %v5018 = vmul.f32 %v4781, 1.442695
      %v5019 = vpow.pop %v5018
      %v5020 = vmul.f32 %v4782, 1.442695
      %v5021 = vpow.pop %v5020
      %v5022 = vmul.f32 %v4783, 1.442695
      %v5023 = vpow.pop %v5022
      %v5024 = vmul.f32 %v4784, 1.442695
      %v5025 = vpow.pop %v5024
      %v5026 = vmul.f32 %v4785, 1.442695
      %v5027 = vpow.pop %v5026
      %v5028 = vmul.f32 %v4786, 1.442695
      %v5029 = vpow.pop %v5028
      %v5030 = vmul.f32 %v4787, 1.442695
      %v5031 = vpow.pop %v5030
      %v5032 = vmul.f32 %v4788, 1.442695
      %v5033 = vpow.pop %v5032
      %v5034 = vmul.f32 %v4789, 1.442695
      %v5035 = vpow.pop %v5034
      %v5036 = vmul.f32 %v4790, 1.442695
      %v5037 = vpow.pop %v5036
      %v5038 = vmul.f32 %v4791, 1.442695
      %v5039 = vpow.pop %v5038
      %v5040 = vmul.f32 %v4792, 1.442695
      %v5041 = vpow.pop %v5040
      %v5042 = vmul.f32 %v4793, 1.442695
      %v5043 = vpow.pop %v5042
      %v5044 = vmul.f32 %v4794, 1.442695
      %v5045 = vpow.pop %v5044
      %v5046 = vmul.f32 %v4795, 1.442695
      %v5047 = vpow.pop %v5046
      %v5048 = vmul.f32 %v4796, 1.442695
      %v5049 = vpow.pop %v5048
      %v5050 = vmul.f32 %v4797, 1.442695
      %v5051 = vpow.pop %v5050
      %v5052 = vmul.f32 %v4798, 1.442695
      %v5053 = vpow.pop %v5052
      %v5054 = vmul.f32 %v4799, 1.442695
      %v5055 = vpow.pop %v5054
      %v5056 = vsel %vm4095, %v4801, 0.0
      %v5057 = vsel %vm4095, %v4803, 0.0
      %v5058 = vadd.f32 %v5056, %v5057
      %v5059 = vrot.slane %v5058, 4
      %v5060 = vadd.f32 %v5058, %v5059
      %v5061 = vrot.slane %v5060, 2
      %v5062 = vadd.f32 %v5060, %v5061
      %v5063 = vrot.slane %v5062, 1
      %v5064 = vadd.f32 %v5062, %v5063
      %v5065 = vsel %vm4095, %v4805, 0.0
      %v5066 = vsel %vm4095, %v4807, 0.0
      %v5067 = vadd.f32 %v5065, %v5066
      %v5068 = vrot.slane %v5067, 4
      %v5069 = vadd.f32 %v5067, %v5068
      %v5070 = vrot.slane %v5069, 2
      %v5071 = vadd.f32 %v5069, %v5070
      %v5072 = vrot.slane %v5071, 1
      %v5073 = vadd.f32 %v5071, %v5072
      %v5074 = vsel %vm4095, %v4809, 0.0
      %v5075 = vsel %vm4095, %v4811, 0.0
      %v5076 = vadd.f32 %v5074, %v5075
      %v5077 = vrot.slane %v5076, 4
      %v5078 = vadd.f32 %v5076, %v5077
      %v5079 = vrot.slane %v5078, 2
      %v5080 = vadd.f32 %v5078, %v5079
      %v5081 = vrot.slane %v5080, 1
      %v5082 = vadd.f32 %v5080, %v5081
      %v5083 = vsel %vm4095, %v4813, 0.0
      %v5084 = vsel %vm4095, %v4815, 0.0
      %v5085 = vadd.f32 %v5083, %v5084
      %v5086 = vrot.slane %v5085, 4
      %v5087 = vadd.f32 %v5085, %v5086
      %v5088 = vrot.slane %v5087, 2
      %v5089 = vadd.f32 %v5087, %v5088
      %v5090 = vrot.slane %v5089, 1
      %v5091 = vadd.f32 %v5089, %v5090
      %v5092 = vsel %vm4095, %v4817, 0.0
      %v5093 = vsel %vm4095, %v4819, 0.0
      %v5094 = vadd.f32 %v5092, %v5093
      %v5095 = vrot.slane %v5094, 4
      %v5096 = vadd.f32 %v5094, %v5095
      %v5097 = vrot.slane %v5096, 2
      %v5098 = vadd.f32 %v5096, %v5097
      %v5099 = vrot.slane %v5098, 1
      %v5100 = vadd.f32 %v5098, %v5099
      %v5101 = vsel %vm4095, %v4821, 0.0
      %v5102 = vsel %vm4095, %v4823, 0.0
      %v5103 = vadd.f32 %v5101, %v5102
      %v5104 = vrot.slane %v5103, 4
      %v5105 = vadd.f32 %v5103, %v5104
      %v5106 = vrot.slane %v5105, 2
      %v5107 = vadd.f32 %v5105, %v5106
      %v5108 = vrot.slane %v5107, 1
      %v5109 = vadd.f32 %v5107, %v5108
      %v5110 = vsel %vm4095, %v4825, 0.0
      %v5111 = vsel %vm4095, %v4827, 0.0
      %v5112 = vadd.f32 %v5110, %v5111
      %v5113 = vrot.slane %v5112, 4
      %v5114 = vadd.f32 %v5112, %v5113
      %v5115 = vrot.slane %v5114, 2
      %v5116 = vadd.f32 %v5114, %v5115
      %v5117 = vrot.slane %v5116, 1
      %v5118 = vadd.f32 %v5116, %v5117
      %v5119 = vsel %vm4095, %v4829, 0.0
      %v5120 = vsel %vm4095, %v4831, 0.0
      %v5121 = vadd.f32 %v5119, %v5120
      %v5122 = vrot.slane %v5121, 4
      %v5123 = vadd.f32 %v5121, %v5122
      %v5124 = vrot.slane %v5123, 2
      %v5125 = vadd.f32 %v5123, %v5124
      %v5126 = vrot.slane %v5125, 1
      %v5127 = vadd.f32 %v5125, %v5126
      %v5128 = vsel %vm4095, %v4833, 0.0
      %v5129 = vsel %vm4095, %v4835, 0.0
      %v5130 = vadd.f32 %v5128, %v5129
      %v5131 = vrot.slane %v5130, 4
      %v5132 = vadd.f32 %v5130, %v5131
      %v5133 = vrot.slane %v5132, 2
      %v5134 = vadd.f32 %v5132, %v5133
      %v5135 = vrot.slane %v5134, 1
      %v5136 = vadd.f32 %v5134, %v5135
      %v5137 = vsel %vm4095, %v4837, 0.0
      %v5138 = vsel %vm4095, %v4839, 0.0
      %v5139 = vadd.f32 %v5137, %v5138
      %v5140 = vrot.slane %v5139, 4
      %v5141 = vadd.f32 %v5139, %v5140
      %v5142 = vrot.slane %v5141, 2
      %v5143 = vadd.f32 %v5141, %v5142
      %v5144 = vrot.slane %v5143, 1
      %v5145 = vadd.f32 %v5143, %v5144
      %v5146 = vsel %vm4095, %v4841, 0.0
      %v5147 = vsel %vm4095, %v4843, 0.0
      %v5148 = vadd.f32 %v5146, %v5147
      %v5149 = vrot.slane %v5148, 4
      %v5150 = vadd.f32 %v5148, %v5149
      %v5151 = vrot.slane %v5150, 2
      %v5152 = vadd.f32 %v5150, %v5151
      %v5153 = vrot.slane %v5152, 1
      %v5154 = vadd.f32 %v5152, %v5153
      %v5155 = vsel %vm4095, %v4845, 0.0
      %v5156 = vsel %vm4095, %v4847, 0.0
      %v5157 = vadd.f32 %v5155, %v5156
      %v5158 = vrot.slane %v5157, 4
      %v5159 = vadd.f32 %v5157, %v5158
      %v5160 = vrot.slane %v5159, 2
      %v5161 = vadd.f32 %v5159, %v5160
      %v5162 = vrot.slane %v5161, 1
      %v5163 = vadd.f32 %v5161, %v5162
      %v5164 = vsel %vm4095, %v4849, 0.0
      %v5165 = vsel %vm4095, %v4851, 0.0
      %v5166 = vadd.f32 %v5164, %v5165
      %v5167 = vrot.slane %v5166, 4
      %v5168 = vadd.f32 %v5166, %v5167
      %v5169 = vrot.slane %v5168, 2
      %v5170 = vadd.f32 %v5168, %v5169
      %v5171 = vrot.slane %v5170, 1
      %v5172 = vadd.f32 %v5170, %v5171
      %v5173 = vsel %vm4095, %v4853, 0.0
      %v5174 = vsel %vm4095, %v4855, 0.0
      %v5175 = vadd.f32 %v5173, %v5174
      %v5176 = vrot.slane %v5175, 4
      %v5177 = vadd.f32 %v5175, %v5176
      %v5178 = vrot.slane %v5177, 2
      %v5179 = vadd.f32 %v5177, %v5178
      %v5180 = vrot.slane %v5179, 1
      %v5181 = vadd.f32 %v5179, %v5180
      %v5182 = vsel %vm4095, %v4857, 0.0
      %v5183 = vsel %vm4095, %v4859, 0.0
      %v5184 = vadd.f32 %v5182, %v5183
      %v5185 = vrot.slane %v5184, 4
      %v5186 = vadd.f32 %v5184, %v5185
      %v5187 = vrot.slane %v5186, 2
      %v5188 = vadd.f32 %v5186, %v5187
      %v5189 = vrot.slane %v5188, 1
      %v5190 = vadd.f32 %v5188, %v5189
      %v5191 = vsel %vm4095, %v4861, 0.0
      %v5192 = vsel %vm4095, %v4863, 0.0
      %v5193 = vadd.f32 %v5191, %v5192
      %v5194 = vrot.slane %v5193, 4
      %v5195 = vadd.f32 %v5193, %v5194
      %v5196 = vrot.slane %v5195, 2
      %v5197 = vadd.f32 %v5195, %v5196
      %v5198 = vrot.slane %v5197, 1
      %v5199 = vadd.f32 %v5197, %v5198
      %v5200 = vsel %vm4095, %v4865, 0.0
      %v5201 = vsel %vm4095, %v4867, 0.0
      %v5202 = vadd.f32 %v5200, %v5201
      %v5203 = vrot.slane %v5202, 4
      %v5204 = vadd.f32 %v5202, %v5203
      %v5205 = vrot.slane %v5204, 2
      %v5206 = vadd.f32 %v5204, %v5205
      %v5207 = vrot.slane %v5206, 1
      %v5208 = vadd.f32 %v5206, %v5207
      %v5209 = vsel %vm4095, %v4869, 0.0
      %v5210 = vsel %vm4095, %v4871, 0.0
      %v5211 = vadd.f32 %v5209, %v5210
      %v5212 = vrot.slane %v5211, 4
      %v5213 = vadd.f32 %v5211, %v5212
      %v5214 = vrot.slane %v5213, 2
      %v5215 = vadd.f32 %v5213, %v5214
      %v5216 = vrot.slane %v5215, 1
      %v5217 = vadd.f32 %v5215, %v5216
      %v5218 = vsel %vm4095, %v4873, 0.0
      %v5219 = vsel %vm4095, %v4875, 0.0
      %v5220 = vadd.f32 %v5218, %v5219
      %v5221 = vrot.slane %v5220, 4
      %v5222 = vadd.f32 %v5220, %v5221
      %v5223 = vrot.slane %v5222, 2
      %v5224 = vadd.f32 %v5222, %v5223
      %v5225 = vrot.slane %v5224, 1
      %v5226 = vadd.f32 %v5224, %v5225
      %v5227 = vsel %vm4095, %v4877, 0.0
      %v5228 = vsel %vm4095, %v4879, 0.0
      %v5229 = vadd.f32 %v5227, %v5228
      %v5230 = vrot.slane %v5229, 4
      %v5231 = vadd.f32 %v5229, %v5230
      %v5232 = vrot.slane %v5231, 2
      %v5233 = vadd.f32 %v5231, %v5232
      %v5234 = vrot.slane %v5233, 1
      %v5235 = vadd.f32 %v5233, %v5234
      %v5236 = vsel %vm4095, %v4881, 0.0
      %v5237 = vsel %vm4095, %v4883, 0.0
      %v5238 = vadd.f32 %v5236, %v5237
      %v5239 = vrot.slane %v5238, 4
      %v5240 = vadd.f32 %v5238, %v5239
      %v5241 = vrot.slane %v5240, 2
      %v5242 = vadd.f32 %v5240, %v5241
      %v5243 = vrot.slane %v5242, 1
      %v5244 = vadd.f32 %v5242, %v5243
      %v5245 = vsel %vm4095, %v4885, 0.0
      %v5246 = vsel %vm4095, %v4887, 0.0
      %v5247 = vadd.f32 %v5245, %v5246
      %v5248 = vrot.slane %v5247, 4
      %v5249 = vadd.f32 %v5247, %v5248
      %v5250 = vrot.slane %v5249, 2
      %v5251 = vadd.f32 %v5249, %v5250
      %v5252 = vrot.slane %v5251, 1
      %v5253 = vadd.f32 %v5251, %v5252
      %v5254 = vsel %vm4095, %v4889, 0.0
      %v5255 = vsel %vm4095, %v4891, 0.0
      %v5256 = vadd.f32 %v5254, %v5255
      %v5257 = vrot.slane %v5256, 4
      %v5258 = vadd.f32 %v5256, %v5257
      %v5259 = vrot.slane %v5258, 2
      %v5260 = vadd.f32 %v5258, %v5259
      %v5261 = vrot.slane %v5260, 1
      %v5262 = vadd.f32 %v5260, %v5261
      %v5263 = vsel %vm4095, %v4893, 0.0
      %v5264 = vsel %vm4095, %v4895, 0.0
      %v5265 = vadd.f32 %v5263, %v5264
      %v5266 = vrot.slane %v5265, 4
      %v5267 = vadd.f32 %v5265, %v5266
      %v5268 = vrot.slane %v5267, 2
      %v5269 = vadd.f32 %v5267, %v5268
      %v5270 = vrot.slane %v5269, 1
      %v5271 = vadd.f32 %v5269, %v5270
      %v5272 = vsel %vm4095, %v4897, 0.0
      %v5273 = vsel %vm4095, %v4899, 0.0
      %v5274 = vadd.f32 %v5272, %v5273
      %v5275 = vrot.slane %v5274, 4
      %v5276 = vadd.f32 %v5274, %v5275
      %v5277 = vrot.slane %v5276, 2
      %v5278 = vadd.f32 %v5276, %v5277
      %v5279 = vrot.slane %v5278, 1
      %v5280 = vadd.f32 %v5278, %v5279
      %v5281 = vsel %vm4095, %v4901, 0.0
      %v5282 = vsel %vm4095, %v4903, 0.0
      %v5283 = vadd.f32 %v5281, %v5282
      %v5284 = vrot.slane %v5283, 4
      %v5285 = vadd.f32 %v5283, %v5284
      %v5286 = vrot.slane %v5285, 2
      %v5287 = vadd.f32 %v5285, %v5286
      %v5288 = vrot.slane %v5287, 1
      %v5289 = vadd.f32 %v5287, %v5288
      %v5290 = vsel %vm4095, %v4905, 0.0
      %v5291 = vsel %vm4095, %v4907, 0.0
      %v5292 = vadd.f32 %v5290, %v5291
      %v5293 = vrot.slane %v5292, 4
      %v5294 = vadd.f32 %v5292, %v5293
      %v5295 = vrot.slane %v5294, 2
      %v5296 = vadd.f32 %v5294, %v5295
      %v5297 = vrot.slane %v5296, 1
      %v5298 = vadd.f32 %v5296, %v5297
      %v5299 = vsel %vm4095, %v4909, 0.0
      %v5300 = vsel %vm4095, %v4911, 0.0
      %v5301 = vadd.f32 %v5299, %v5300
      %v5302 = vrot.slane %v5301, 4
      %v5303 = vadd.f32 %v5301, %v5302
      %v5304 = vrot.slane %v5303, 2
      %v5305 = vadd.f32 %v5303, %v5304
      %v5306 = vrot.slane %v5305, 1
      %v5307 = vadd.f32 %v5305, %v5306
      %v5308 = vsel %vm4095, %v4913, 0.0
      %v5309 = vsel %vm4095, %v4915, 0.0
      %v5310 = vadd.f32 %v5308, %v5309
      %v5311 = vrot.slane %v5310, 4
      %v5312 = vadd.f32 %v5310, %v5311
      %v5313 = vrot.slane %v5312, 2
      %v5314 = vadd.f32 %v5312, %v5313
      %v5315 = vrot.slane %v5314, 1
      %v5316 = vadd.f32 %v5314, %v5315
      %v5317 = vsel %vm4095, %v4917, 0.0
      %v5318 = vsel %vm4095, %v4919, 0.0
      %v5319 = vadd.f32 %v5317, %v5318
      %v5320 = vrot.slane %v5319, 4
      %v5321 = vadd.f32 %v5319, %v5320
      %v5322 = vrot.slane %v5321, 2
      %v5323 = vadd.f32 %v5321, %v5322
      %v5324 = vrot.slane %v5323, 1
      %v5325 = vadd.f32 %v5323, %v5324
      %v5326 = vsel %vm4095, %v4921, 0.0
      %v5327 = vsel %vm4095, %v4923, 0.0
      %v5328 = vadd.f32 %v5326, %v5327
      %v5329 = vrot.slane %v5328, 4
      %v5330 = vadd.f32 %v5328, %v5329
      %v5331 = vrot.slane %v5330, 2
      %v5332 = vadd.f32 %v5330, %v5331
      %v5333 = vrot.slane %v5332, 1
      %v5334 = vadd.f32 %v5332, %v5333
      %v5335 = vsel %vm4095, %v4925, 0.0
      %v5336 = vsel %vm4095, %v4927, 0.0
      %v5337 = vadd.f32 %v5335, %v5336
      %v5338 = vrot.slane %v5337, 4
      %v5339 = vadd.f32 %v5337, %v5338
      %v5340 = vrot.slane %v5339, 2
      %v5341 = vadd.f32 %v5339, %v5340
      %v5342 = vrot.slane %v5341, 1
      %v5343 = vadd.f32 %v5341, %v5342
      %v5344 = vsel %vm4095, %v4929, 0.0
      %v5345 = vsel %vm4095, %v4931, 0.0
      %v5346 = vadd.f32 %v5344, %v5345
      %v5347 = vrot.slane %v5346, 4
      %v5348 = vadd.f32 %v5346, %v5347
      %v5349 = vrot.slane %v5348, 2
      %v5350 = vadd.f32 %v5348, %v5349
      %v5351 = vrot.slane %v5350, 1
      %v5352 = vadd.f32 %v5350, %v5351
      %v5353 = vsel %vm4095, %v4933, 0.0
      %v5354 = vsel %vm4095, %v4935, 0.0
      %v5355 = vadd.f32 %v5353, %v5354
      %v5356 = vrot.slane %v5355, 4
      %v5357 = vadd.f32 %v5355, %v5356
      %v5358 = vrot.slane %v5357, 2
      %v5359 = vadd.f32 %v5357, %v5358
      %v5360 = vrot.slane %v5359, 1
      %v5361 = vadd.f32 %v5359, %v5360
      %v5362 = vsel %vm4095, %v4937, 0.0
      %v5363 = vsel %vm4095, %v4939, 0.0
      %v5364 = vadd.f32 %v5362, %v5363
      %v5365 = vrot.slane %v5364, 4
      %v5366 = vadd.f32 %v5364, %v5365
      %v5367 = vrot.slane %v5366, 2
      %v5368 = vadd.f32 %v5366, %v5367
      %v5369 = vrot.slane %v5368, 1
      %v5370 = vadd.f32 %v5368, %v5369
      %v5371 = vsel %vm4095, %v4941, 0.0
      %v5372 = vsel %vm4095, %v4943, 0.0
      %v5373 = vadd.f32 %v5371, %v5372
      %v5374 = vrot.slane %v5373, 4
      %v5375 = vadd.f32 %v5373, %v5374
      %v5376 = vrot.slane %v5375, 2
      %v5377 = vadd.f32 %v5375, %v5376
      %v5378 = vrot.slane %v5377, 1
      %v5379 = vadd.f32 %v5377, %v5378
      %v5380 = vsel %vm4095, %v4945, 0.0
      %v5381 = vsel %vm4095, %v4947, 0.0
      %v5382 = vadd.f32 %v5380, %v5381
      %v5383 = vrot.slane %v5382, 4
      %v5384 = vadd.f32 %v5382, %v5383
      %v5385 = vrot.slane %v5384, 2
      %v5386 = vadd.f32 %v5384, %v5385
      %v5387 = vrot.slane %v5386, 1
      %v5388 = vadd.f32 %v5386, %v5387
      %v5389 = vsel %vm4095, %v4949, 0.0
      %v5390 = vsel %vm4095, %v4951, 0.0
      %v5391 = vadd.f32 %v5389, %v5390
      %v5392 = vrot.slane %v5391, 4
      %v5393 = vadd.f32 %v5391, %v5392
      %v5394 = vrot.slane %v5393, 2
      %v5395 = vadd.f32 %v5393, %v5394
      %v5396 = vrot.slane %v5395, 1
      %v5397 = vadd.f32 %v5395, %v5396
      %v5398 = vsel %vm4095, %v4953, 0.0
      %v5399 = vsel %vm4095, %v4955, 0.0
      %v5400 = vadd.f32 %v5398, %v5399
      %v5401 = vrot.slane %v5400, 4
      %v5402 = vadd.f32 %v5400, %v5401
      %v5403 = vrot.slane %v5402, 2
      %v5404 = vadd.f32 %v5402, %v5403
      %v5405 = vrot.slane %v5404, 1
      %v5406 = vadd.f32 %v5404, %v5405
      %v5407 = vsel %vm4095, %v4957, 0.0
      %v5408 = vsel %vm4095, %v4959, 0.0
      %v5409 = vadd.f32 %v5407, %v5408
      %v5410 = vrot.slane %v5409, 4
      %v5411 = vadd.f32 %v5409, %v5410
      %v5412 = vrot.slane %v5411, 2
      %v5413 = vadd.f32 %v5411, %v5412
      %v5414 = vrot.slane %v5413, 1
      %v5415 = vadd.f32 %v5413, %v5414
      %v5416 = vsel %vm4095, %v4961, 0.0
      %v5417 = vsel %vm4095, %v4963, 0.0
      %v5418 = vadd.f32 %v5416, %v5417
      %v5419 = vrot.slane %v5418, 4
      %v5420 = vadd.f32 %v5418, %v5419
      %v5421 = vrot.slane %v5420, 2
      %v5422 = vadd.f32 %v5420, %v5421
      %v5423 = vrot.slane %v5422, 1
      %v5424 = vadd.f32 %v5422, %v5423
      %v5425 = vsel %vm4095, %v4965, 0.0
      %v5426 = vsel %vm4095, %v4967, 0.0
      %v5427 = vadd.f32 %v5425, %v5426
      %v5428 = vrot.slane %v5427, 4
      %v5429 = vadd.f32 %v5427, %v5428
      %v5430 = vrot.slane %v5429, 2
      %v5431 = vadd.f32 %v5429, %v5430
      %v5432 = vrot.slane %v5431, 1
      %v5433 = vadd.f32 %v5431, %v5432
      %v5434 = vsel %vm4095, %v4969, 0.0
      %v5435 = vsel %vm4095, %v4971, 0.0
      %v5436 = vadd.f32 %v5434, %v5435
      %v5437 = vrot.slane %v5436, 4
      %v5438 = vadd.f32 %v5436, %v5437
      %v5439 = vrot.slane %v5438, 2
      %v5440 = vadd.f32 %v5438, %v5439
      %v5441 = vrot.slane %v5440, 1
      %v5442 = vadd.f32 %v5440, %v5441
      %v5443 = vsel %vm4095, %v4973, 0.0
      %v5444 = vsel %vm4095, %v4975, 0.0
      %v5445 = vadd.f32 %v5443, %v5444
      %v5446 = vrot.slane %v5445, 4
      %v5447 = vadd.f32 %v5445, %v5446
      %v5448 = vrot.slane %v5447, 2
      %v5449 = vadd.f32 %v5447, %v5448
      %v5450 = vrot.slane %v5449, 1
      %v5451 = vadd.f32 %v5449, %v5450
      %v5452 = vsel %vm4095, %v4977, 0.0
      %v5453 = vsel %vm4095, %v4979, 0.0
      %v5454 = vadd.f32 %v5452, %v5453
      %v5455 = vrot.slane %v5454, 4
      %v5456 = vadd.f32 %v5454, %v5455
      %v5457 = vrot.slane %v5456, 2
      %v5458 = vadd.f32 %v5456, %v5457
      %v5459 = vrot.slane %v5458, 1
      %v5460 = vadd.f32 %v5458, %v5459
      %v5461 = vsel %vm4095, %v4981, 0.0
      %v5462 = vsel %vm4095, %v4983, 0.0
      %v5463 = vadd.f32 %v5461, %v5462
      %v5464 = vrot.slane %v5463, 4
      %v5465 = vadd.f32 %v5463, %v5464
      %v5466 = vrot.slane %v5465, 2
      %v5467 = vadd.f32 %v5465, %v5466
      %v5468 = vrot.slane %v5467, 1
      %v5469 = vadd.f32 %v5467, %v5468
      %v5470 = vsel %vm4095, %v4985, 0.0
      %v5471 = vsel %vm4095, %v4987, 0.0
      %v5472 = vadd.f32 %v5470, %v5471
      %v5473 = vrot.slane %v5472, 4
      %v5474 = vadd.f32 %v5472, %v5473
      %v5475 = vrot.slane %v5474, 2
      %v5476 = vadd.f32 %v5474, %v5475
      %v5477 = vrot.slane %v5476, 1
      %v5478 = vadd.f32 %v5476, %v5477
      %v5479 = vsel %vm4095, %v4989, 0.0
      %v5480 = vsel %vm4095, %v4991, 0.0
      %v5481 = vadd.f32 %v5479, %v5480
      %v5482 = vrot.slane %v5481, 4
      %v5483 = vadd.f32 %v5481, %v5482
      %v5484 = vrot.slane %v5483, 2
      %v5485 = vadd.f32 %v5483, %v5484
      %v5486 = vrot.slane %v5485, 1
      %v5487 = vadd.f32 %v5485, %v5486
      %v5488 = vsel %vm4095, %v4993, 0.0
      %v5489 = vsel %vm4095, %v4995, 0.0
      %v5490 = vadd.f32 %v5488, %v5489
      %v5491 = vrot.slane %v5490, 4
      %v5492 = vadd.f32 %v5490, %v5491
      %v5493 = vrot.slane %v5492, 2
      %v5494 = vadd.f32 %v5492, %v5493
      %v5495 = vrot.slane %v5494, 1
      %v5496 = vadd.f32 %v5494, %v5495
      %v5497 = vsel %vm4095, %v4997, 0.0
      %v5498 = vsel %vm4095, %v4999, 0.0
      %v5499 = vadd.f32 %v5497, %v5498
      %v5500 = vrot.slane %v5499, 4
      %v5501 = vadd.f32 %v5499, %v5500
      %v5502 = vrot.slane %v5501, 2
      %v5503 = vadd.f32 %v5501, %v5502
      %v5504 = vrot.slane %v5503, 1
      %v5505 = vadd.f32 %v5503, %v5504
      %v5506 = vsel %vm4095, %v5001, 0.0
      %v5507 = vsel %vm4095, %v5003, 0.0
      %v5508 = vadd.f32 %v5506, %v5507
      %v5509 = vrot.slane %v5508, 4
      %v5510 = vadd.f32 %v5508, %v5509
      %v5511 = vrot.slane %v5510, 2
      %v5512 = vadd.f32 %v5510, %v5511
      %v5513 = vrot.slane %v5512, 1
      %v5514 = vadd.f32 %v5512, %v5513
      %v5515 = vsel %vm4095, %v5005, 0.0
      %v5516 = vsel %vm4095, %v5007, 0.0
      %v5517 = vadd.f32 %v5515, %v5516
      %v5518 = vrot.slane %v5517, 4
      %v5519 = vadd.f32 %v5517, %v5518
      %v5520 = vrot.slane %v5519, 2
      %v5521 = vadd.f32 %v5519, %v5520
      %v5522 = vrot.slane %v5521, 1
      %v5523 = vadd.f32 %v5521, %v5522
      %v5524 = vsel %vm4095, %v5009, 0.0
      %v5525 = vsel %vm4095, %v5011, 0.0
      %v5526 = vadd.f32 %v5524, %v5525
      %v5527 = vrot.slane %v5526, 4
      %v5528 = vadd.f32 %v5526, %v5527
      %v5529 = vrot.slane %v5528, 2
      %v5530 = vadd.f32 %v5528, %v5529
      %v5531 = vrot.slane %v5530, 1
      %v5532 = vadd.f32 %v5530, %v5531
      %v5533 = vsel %vm4095, %v5013, 0.0
      %v5534 = vsel %vm4095, %v5015, 0.0
      %v5535 = vadd.f32 %v5533, %v5534
      %v5536 = vrot.slane %v5535, 4
      %v5537 = vadd.f32 %v5535, %v5536
      %v5538 = vrot.slane %v5537, 2
      %v5539 = vadd.f32 %v5537, %v5538
      %v5540 = vrot.slane %v5539, 1
      %v5541 = vadd.f32 %v5539, %v5540
      %v5542 = vsel %vm4095, %v5017, 0.0
      %v5543 = vsel %vm4095, %v5019, 0.0
      %v5544 = vadd.f32 %v5542, %v5543
      %v5545 = vrot.slane %v5544, 4
      %v5546 = vadd.f32 %v5544, %v5545
      %v5547 = vrot.slane %v5546, 2
      %v5548 = vadd.f32 %v5546, %v5547
      %v5549 = vrot.slane %v5548, 1
      %v5550 = vadd.f32 %v5548, %v5549
      %v5551 = vsel %vm4095, %v5021, 0.0
      %v5552 = vsel %vm4095, %v5023, 0.0
      %v5553 = vadd.f32 %v5551, %v5552
      %v5554 = vrot.slane %v5553, 4
      %v5555 = vadd.f32 %v5553, %v5554
      %v5556 = vrot.slane %v5555, 2
      %v5557 = vadd.f32 %v5555, %v5556
      %v5558 = vrot.slane %v5557, 1
      %v5559 = vadd.f32 %v5557, %v5558
      %v5560 = vsel %vm4095, %v5025, 0.0
      %v5561 = vsel %vm4095, %v5027, 0.0
      %v5562 = vadd.f32 %v5560, %v5561
      %v5563 = vrot.slane %v5562, 4
      %v5564 = vadd.f32 %v5562, %v5563
      %v5565 = vrot.slane %v5564, 2
      %v5566 = vadd.f32 %v5564, %v5565
      %v5567 = vrot.slane %v5566, 1
      %v5568 = vadd.f32 %v5566, %v5567
      %v5569 = vsel %vm4095, %v5029, 0.0
      %v5570 = vsel %vm4095, %v5031, 0.0
      %v5571 = vadd.f32 %v5569, %v5570
      %v5572 = vrot.slane %v5571, 4
      %v5573 = vadd.f32 %v5571, %v5572
      %v5574 = vrot.slane %v5573, 2
      %v5575 = vadd.f32 %v5573, %v5574
      %v5576 = vrot.slane %v5575, 1
      %v5577 = vadd.f32 %v5575, %v5576
      %v5578 = vsel %vm4095, %v5033, 0.0
      %v5579 = vsel %vm4095, %v5035, 0.0
      %v5580 = vadd.f32 %v5578, %v5579
      %v5581 = vrot.slane %v5580, 4
      %v5582 = vadd.f32 %v5580, %v5581
      %v5583 = vrot.slane %v5582, 2
      %v5584 = vadd.f32 %v5582, %v5583
      %v5585 = vrot.slane %v5584, 1
      %v5586 = vadd.f32 %v5584, %v5585
      %v5587 = vsel %vm4095, %v5037, 0.0
      %v5588 = vsel %vm4095, %v5039, 0.0
      %v5589 = vadd.f32 %v5587, %v5588
      %v5590 = vrot.slane %v5589, 4
      %v5591 = vadd.f32 %v5589, %v5590
      %v5592 = vrot.slane %v5591, 2
      %v5593 = vadd.f32 %v5591, %v5592
      %v5594 = vrot.slane %v5593, 1
      %v5595 = vadd.f32 %v5593, %v5594
      %v5596 = vsel %vm4095, %v5041, 0.0
      %v5597 = vsel %vm4095, %v5043, 0.0
      %v5598 = vadd.f32 %v5596, %v5597
      %v5599 = vrot.slane %v5598, 4
      %v5600 = vadd.f32 %v5598, %v5599
      %v5601 = vrot.slane %v5600, 2
      %v5602 = vadd.f32 %v5600, %v5601
      %v5603 = vrot.slane %v5602, 1
      %v5604 = vadd.f32 %v5602, %v5603
      %v5605 = vsel %vm4095, %v5045, 0.0
      %v5606 = vsel %vm4095, %v5047, 0.0
      %v5607 = vadd.f32 %v5605, %v5606
      %v5608 = vrot.slane %v5607, 4
      %v5609 = vadd.f32 %v5607, %v5608
      %v5610 = vrot.slane %v5609, 2
      %v5611 = vadd.f32 %v5609, %v5610
      %v5612 = vrot.slane %v5611, 1
      %v5613 = vadd.f32 %v5611, %v5612
      %v5614 = vsel %vm4095, %v5049, 0.0
      %v5615 = vsel %vm4095, %v5051, 0.0
      %v5616 = vadd.f32 %v5614, %v5615
      %v5617 = vrot.slane %v5616, 4
      %v5618 = vadd.f32 %v5616, %v5617
      %v5619 = vrot.slane %v5618, 2
      %v5620 = vadd.f32 %v5618, %v5619
      %v5621 = vrot.slane %v5620, 1
      %v5622 = vadd.f32 %v5620, %v5621
      %v5623 = vsel %vm4095, %v5053, 0.0
      %v5624 = vsel %vm4095, %v5055, 0.0
      %v5625 = vadd.f32 %v5623, %v5624
      %v5626 = vrot.slane %v5625, 4
      %v5627 = vadd.f32 %v5625, %v5626
      %v5628 = vrot.slane %v5627, 2
      %v5629 = vadd.f32 %v5627, %v5628
      %v5630 = vrot.slane %v5629, 1
      %v5631 = vadd.f32 %v5629, %v5630
      %v5632 = vrcp.pop %v5064
      %v5633 = vrcp.pop %v5073
      %v5634 = vrcp.pop %v5082
      %v5635 = vrcp.pop %v5091
      %v5636 = vrcp.pop %v5100
      %v5637 = vrcp.pop %v5109
      %v5638 = vrcp.pop %v5118
      %v5639 = vrcp.pop %v5127
      %v5640 = vrcp.pop %v5136
      %v5641 = vrcp.pop %v5145
      %v5642 = vrcp.pop %v5154
      %v5643 = vrcp.pop %v5163
      %v5644 = vrcp.pop %v5172
      %v5645 = vrcp.pop %v5181
      %v5646 = vrcp.pop %v5190
      %v5647 = vrcp.pop %v5199
      %v5648 = vrcp.pop %v5208
      %v5649 = vrcp.pop %v5217
      %v5650 = vrcp.pop %v5226
      %v5651 = vrcp.pop %v5235
      %v5652 = vrcp.pop %v5244
      %v5653 = vrcp.pop %v5253
      %v5654 = vrcp.pop %v5262
      %v5655 = vrcp.pop %v5271
      %v5656 = vrcp.pop %v5280
      %v5657 = vrcp.pop %v5289
      %v5658 = vrcp.pop %v5298
      %v5659 = vrcp.pop %v5307
      %v5660 = vrcp.pop %v5316
      %v5661 = vrcp.pop %v5325
      %v5662 = vrcp.pop %v5334
      %v5663 = vrcp.pop %v5343
      %v5664 = vrcp.pop %v5352
      %v5665 = vrcp.pop %v5361
      %v5666 = vrcp.pop %v5370
      %v5667 = vrcp.pop %v5379
      %v5668 = vrcp.pop %v5388
      %v5669 = vrcp.pop %v5397
      %v5670 = vrcp.pop %v5406
      %v5671 = vrcp.pop %v5415
      %v5672 = vrcp.pop %v5424
      %v5673 = vrcp.pop %v5433
      %v5674 = vrcp.pop %v5442
      %v5675 = vrcp.pop %v5451
      %v5676 = vrcp.pop %v5460
      %v5677 = vrcp.pop %v5469
      %v5678 = vrcp.pop %v5478
      %v5679 = vrcp.pop %v5487
      %v5680 = vrcp.pop %v5496
      %v5681 = vrcp.pop %v5505
      %v5682 = vrcp.pop %v5514
      %v5683 = vrcp.pop %v5523
      %v5684 = vrcp.pop %v5532
      %v5685 = vrcp.pop %v5541
      %v5686 = vrcp.pop %v5550
      %v5687 = vrcp.pop %v5559
      %v5688 = vrcp.pop %v5568
      %v5689 = vrcp.pop %v5577
      %v5690 = vrcp.pop %v5586
      %v5691 = vrcp.pop %v5595
      %v5692 = vrcp.pop %v5604
      %v5693 = vrcp.pop %v5613
      %v5694 = vrcp.pop %v5622
      %v5695 = vrcp.pop %v5631
      %v5696 = vmul.f32 %v4801, %v5632
      %v5697 = vmul.f32 %v4803, %v5632
      %v5698 = vmul.f32 %v4805, %v5633
      %v5699 = vmul.f32 %v4807, %v5633
      %v5700 = vmul.f32 %v4809, %v5634
      %v5701 = vmul.f32 %v4811, %v5634
      %v5702 = vmul.f32 %v4813, %v5635
      %v5703 = vmul.f32 %v4815, %v5635
      %v5704 = vmul.f32 %v4817, %v5636
      %v5705 = vmul.f32 %v4819, %v5636
      %v5706 = vmul.f32 %v4821, %v5637
      %v5707 = vmul.f32 %v4823, %v5637
      %v5708 = vmul.f32 %v4825, %v5638
      %v5709 = vmul.f32 %v4827, %v5638
      %v5710 = vmul.f32 %v4829, %v5639
      %v5711 = vmul.f32 %v4831, %v5639
      %v5712 = vmul.f32 %v4833, %v5640
      %v5713 = vmul.f32 %v4835, %v5640
      %v5714 = vmul.f32 %v4837, %v5641
      %v5715 = vmul.f32 %v4839, %v5641
      %v5716 = vmul.f32 %v4841, %v5642
      %v5717 = vmul.f32 %v4843, %v5642
      %v5718 = vmul.f32 %v4845, %v5643
      %v5719 = vmul.f32 %v4847, %v5643
      %v5720 = vmul.f32 %v4849, %v5644
      %v5721 = vmul.f32 %v4851, %v5644
      %v5722 = vmul.f32 %v4853, %v5645
      %v5723 = vmul.f32 %v4855, %v5645
      %v5724 = vmul.f32 %v4857, %v5646
      %v5725 = vmul.f32 %v4859, %v5646
      %v5726 = vmul.f32 %v4861, %v5647
      %v5727 = vmul.f32 %v4863, %v5647
      %v5728 = vmul.f32 %v4865, %v5648
      %v5729 = vmul.f32 %v4867, %v5648
      %v5730 = vmul.f32 %v4869, %v5649
      %v5731 = vmul.f32 %v4871, %v5649
      %v5732 = vmul.f32 %v4873, %v5650
      %v5733 = vmul.f32 %v4875, %v5650
      %v5734 = vmul.f32 %v4877, %v5651
      %v5735 = vmul.f32 %v4879, %v5651
      %v5736 = vmul.f32 %v4881, %v5652
      %v5737 = vmul.f32 %v4883, %v5652
      %v5738 = vmul.f32 %v4885, %v5653
      %v5739 = vmul.f32 %v4887, %v5653
      %v5740 = vmul.f32 %v4889, %v5654
      %v5741 = vmul.f32 %v4891, %v5654
      %v5742 = vmul.f32 %v4893, %v5655
      %v5743 = vmul.f32 %v4895, %v5655
      %v5744 = vmul.f32 %v4897, %v5656
      %v5745 = vmul.f32 %v4899, %v5656
      %v5746 = vmul.f32 %v4901, %v5657
      %v5747 = vmul.f32 %v4903, %v5657
      %v5748 = vmul.f32 %v4905, %v5658
      %v5749 = vmul.f32 %v4907, %v5658
      %v5750 = vmul.f32 %v4909, %v5659
      %v5751 = vmul.f32 %v4911, %v5659
      %v5752 = vmul.f32 %v4913, %v5660
      %v5753 = vmul.f32 %v4915, %v5660
      %v5754 = vmul.f32 %v4917, %v5661
      %v5755 = vmul.f32 %v4919, %v5661
      %v5756 = vmul.f32 %v4921, %v5662
      %v5757 = vmul.f32 %v4923, %v5662
      %v5758 = vmul.f32 %v4925, %v5663
      %v5759 = vmul.f32 %v4927, %v5663
      %v5760 = vmul.f32 %v4929, %v5664
      %v5761 = vmul.f32 %v4931, %v5664
      %v5762 = vmul.f32 %v4933, %v5665
      %v5763 = vmul.f32 %v4935, %v5665
      %v5764 = vmul.f32 %v4937, %v5666
      %v5765 = vmul.f32 %v4939, %v5666
      %v5766 = vmul.f32 %v4941, %v5667
      %v5767 = vmul.f32 %v4943, %v5667
      %v5768 = vmul.f32 %v4945, %v5668
      %v5769 = vmul.f32 %v4947, %v5668
      %v5770 = vmul.f32 %v4949, %v5669
      %v5771 = vmul.f32 %v4951, %v5669
      %v5772 = vmul.f32 %v4953, %v5670
      %v5773 = vmul.f32 %v4955, %v5670
      %v5774 = vmul.f32 %v4957, %v5671
      %v5775 = vmul.f32 %v4959, %v5671
      %v5776 = vmul.f32 %v4961, %v5672
      %v5777 = vmul.f32 %v4963, %v5672
      %v5778 = vmul.f32 %v4965, %v5673
      %v5779 = vmul.f32 %v4967, %v5673
      %v5780 = vmul.f32 %v4969, %v5674
      %v5781 = vmul.f32 %v4971, %v5674
      %v5782 = vmul.f32 %v4973, %v5675
      %v5783 = vmul.f32 %v4975, %v5675
      %v5784 = vmul.f32 %v4977, %v5676
      %v5785 = vmul.f32 %v4979, %v5676
      %v5786 = vmul.f32 %v4981, %v5677
      %v5787 = vmul.f32 %v4983, %v5677
      %v5788 = vmul.f32 %v4985, %v5678
      %v5789 = vmul.f32 %v4987, %v5678
      %v5790 = vmul.f32 %v4989, %v5679
      %v5791 = vmul.f32 %v4991, %v5679
      %v5792 = vmul.f32 %v4993, %v5680
      %v5793 = vmul.f32 %v4995, %v5680
      %v5794 = vmul.f32 %v4997, %v5681
      %v5795 = vmul.f32 %v4999, %v5681
      %v5796 = vmul.f32 %v5001, %v5682
      %v5797 = vmul.f32 %v5003, %v5682
      %v5798 = vmul.f32 %v5005, %v5683
      %v5799 = vmul.f32 %v5007, %v5683
      %v5800 = vmul.f32 %v5009, %v5684
      %v5801 = vmul.f32 %v5011, %v5684
      %v5802 = vmul.f32 %v5013, %v5685
      %v5803 = vmul.f32 %v5015, %v5685
      %v5804 = vmul.f32 %v5017, %v5686
      %v5805 = vmul.f32 %v5019, %v5686
      %v5806 = vmul.f32 %v5021, %v5687
      %v5807 = vmul.f32 %v5023, %v5687
      %v5808 = vmul.f32 %v5025, %v5688
      %v5809 = vmul.f32 %v5027, %v5688
      %v5810 = vmul.f32 %v5029, %v5689
      %v5811 = vmul.f32 %v5031, %v5689
      %v5812 = vmul.f32 %v5033, %v5690
      %v5813 = vmul.f32 %v5035, %v5690
      %v5814 = vmul.f32 %v5037, %v5691
      %v5815 = vmul.f32 %v5039, %v5691
      %v5816 = vmul.f32 %v5041, %v5692
      %v5817 = vmul.f32 %v5043, %v5692
      %v5818 = vmul.f32 %v5045, %v5693
      %v5819 = vmul.f32 %v5047, %v5693
      %v5820 = vmul.f32 %v5049, %v5694
      %v5821 = vmul.f32 %v5051, %v5694
      %v5822 = vmul.f32 %v5053, %v5695
      %v5823 = vmul.f32 %v5055, %v5695
      %v5824 = vunpack.c.l.bf16 %v308
      %v5825 = vunpack.c.l.bf16 %v309
      %v5826 = vunpack.c.l.bf16 %v310
      %v5827 = vunpack.c.l.bf16 %v311
      %v5828 = vunpack.c.l.bf16 %v312
      %v5829 = vunpack.c.l.bf16 %v313
      %v5830 = vunpack.c.l.bf16 %v314
      %v5831 = vunpack.c.l.bf16 %v315
      %v5832 = vunpack.c.l.bf16 %v316
      %v5833 = vunpack.c.l.bf16 %v317
      %v5834 = vunpack.c.l.bf16 %v318
      %v5835 = vunpack.c.l.bf16 %v319
      %v5836 = vunpack.c.l.bf16 %v320
      %v5837 = vunpack.c.l.bf16 %v321
      %v5838 = vunpack.c.l.bf16 %v322
      %v5839 = vunpack.c.l.bf16 %v323
      %v5840 = vunpack.c.l.bf16 %v324
      %v5841 = vunpack.c.l.bf16 %v325
      %v5842 = vunpack.c.l.bf16 %v326
      %v5843 = vunpack.c.l.bf16 %v327
      %v5844 = vunpack.c.l.bf16 %v328
      %v5845 = vunpack.c.l.bf16 %v329
      %v5846 = vunpack.c.l.bf16 %v330
      %v5847 = vunpack.c.l.bf16 %v331
      %v5848 = vunpack.c.l.bf16 %v332
      %v5849 = vunpack.c.l.bf16 %v333
      %v5850 = vunpack.c.l.bf16 %v334
      %v5851 = vunpack.c.l.bf16 %v335
      %v5852 = vunpack.c.l.bf16 %v336
      %v5853 = vunpack.c.l.bf16 %v337
      %v5854 = vunpack.c.l.bf16 %v338
      %v5855 = vunpack.c.l.bf16 %v339
      %v5856 = vunpack.c.l.bf16 %v340
      %v5857 = vunpack.c.l.bf16 %v341
      %v5858 = vunpack.c.l.bf16 %v342
      %v5859 = vunpack.c.l.bf16 %v343
      %v5860 = vunpack.c.l.bf16 %v344
      %v5861 = vunpack.c.l.bf16 %v345
      %v5862 = vunpack.c.l.bf16 %v346
      %v5863 = vunpack.c.l.bf16 %v347
      %v5864 = vunpack.c.l.bf16 %v348
      %v5865 = vunpack.c.l.bf16 %v349
      %v5866 = vunpack.c.l.bf16 %v350
      %v5867 = vunpack.c.l.bf16 %v351
      %v5868 = vunpack.c.l.bf16 %v352
      %v5869 = vunpack.c.l.bf16 %v353
      %v5870 = vunpack.c.l.bf16 %v354
      %v5871 = vunpack.c.l.bf16 %v355
      %v5872 = vunpack.c.l.bf16 %v356
      %v5873 = vunpack.c.l.bf16 %v357
      %v5874 = vunpack.c.l.bf16 %v358
      %v5875 = vunpack.c.l.bf16 %v359
      %v5876 = vunpack.c.l.bf16 %v360
      %v5877 = vunpack.c.l.bf16 %v361
      %v5878 = vunpack.c.l.bf16 %v362
      %v5879 = vunpack.c.l.bf16 %v363
      %v5880 = vunpack.c.l.bf16 %v364
      %v5881 = vunpack.c.l.bf16 %v365
      %v5882 = vunpack.c.l.bf16 %v366
      %v5883 = vunpack.c.l.bf16 %v367
      %v5884 = vunpack.c.l.bf16 %v368
      %v5885 = vunpack.c.l.bf16 %v369
      %v5886 = vunpack.c.l.bf16 %v370
      %v5887 = vunpack.c.l.bf16 %v371
      %v5888 = vunpack.c.l.bf16 %v372
      %v5889 = vunpack.c.l.bf16 %v373
      %v5890 = vunpack.c.l.bf16 %v374
      %v5891 = vunpack.c.l.bf16 %v375
      %v5892 = vunpack.c.l.bf16 %v376
      %v5893 = vunpack.c.l.bf16 %v377
      %v5894 = vunpack.c.l.bf16 %v378
      %v5895 = vunpack.c.l.bf16 %v379
      %v5896 = vunpack.c.l.bf16 %v380
      %v5897 = vunpack.c.l.bf16 %v381
      %v5898 = vunpack.c.l.bf16 %v382
      %v5899 = vunpack.c.l.bf16 %v383
      %v5900 = vunpack.c.l.bf16 %v384
      %v5901 = vunpack.c.l.bf16 %v385
      %v5902 = vunpack.c.l.bf16 %v386
      %v5903 = vunpack.c.l.bf16 %v387
      %v5904 = vunpack.c.l.bf16 %v388
      %v5905 = vunpack.c.l.bf16 %v389
      %v5906 = vunpack.c.l.bf16 %v390
      %v5907 = vunpack.c.l.bf16 %v391
      %v5908 = vunpack.c.l.bf16 %v392
      %v5909 = vunpack.c.l.bf16 %v393
      %v5910 = vunpack.c.l.bf16 %v394
      %v5911 = vunpack.c.l.bf16 %v395
      %v5912 = vunpack.c.l.bf16 %v396
      %v5913 = vunpack.c.l.bf16 %v397
      %v5914 = vunpack.c.l.bf16 %v398
      %v5915 = vunpack.c.l.bf16 %v399
      %v5916 = vunpack.c.l.bf16 %v400
      %v5917 = vunpack.c.l.bf16 %v401
      %v5918 = vunpack.c.l.bf16 %v402
      %v5919 = vunpack.c.l.bf16 %v403
      %v5920 = vunpack.c.l.bf16 %v404
      %v5921 = vunpack.c.l.bf16 %v405
      %v5922 = vunpack.c.l.bf16 %v406
      %v5923 = vunpack.c.l.bf16 %v407
      %v5924 = vunpack.c.l.bf16 %v408
      %v5925 = vunpack.c.l.bf16 %v409
      %v5926 = vunpack.c.l.bf16 %v410
      %v5927 = vunpack.c.l.bf16 %v411
      %v5928 = vunpack.c.l.bf16 %v412
      %v5929 = vunpack.c.l.bf16 %v413
      %v5930 = vunpack.c.l.bf16 %v414
      %v5931 = vunpack.c.l.bf16 %v415
      %v5932 = vunpack.c.l.bf16 %v416
      %v5933 = vunpack.c.l.bf16 %v417
      %v5934 = vunpack.c.l.bf16 %v418
      %v5935 = vunpack.c.l.bf16 %v419
      %v5936 = vunpack.c.l.bf16 %v420
      %v5937 = vunpack.c.l.bf16 %v421
      %v5938 = vunpack.c.l.bf16 %v422
      %v5939 = vunpack.c.l.bf16 %v423
      %v5940 = vunpack.c.l.bf16 %v424
      %v5941 = vunpack.c.l.bf16 %v425
      %v5942 = vunpack.c.l.bf16 %v426
      %v5943 = vunpack.c.l.bf16 %v427
      %v5944 = vunpack.c.l.bf16 %v428
      %v5945 = vunpack.c.l.bf16 %v429
      %v5946 = vunpack.c.l.bf16 %v430
      %v5947 = vunpack.c.l.bf16 %v431
      %v5948 = vunpack.c.l.bf16 %v432
      %v5949 = vunpack.c.l.bf16 %v433
      %v5950 = vunpack.c.l.bf16 %v434
      %v5951 = vunpack.c.l.bf16 %v435
      %6080 = vrot.lane.b32.xlu0 %v5824, 32
      %v6081 = vpop.permute.xlu0 %6080
      %6082 = vrot.lane.b32.xlu0 %v5825, 32
      %v6083 = vpop.permute.xlu0 %6082
      %6084 = vrot.lane.b32.xlu0 %v5826, 32
      %v6085 = vpop.permute.xlu0 %6084
      %6086 = vrot.lane.b32.xlu0 %v5827, 32
      %v6087 = vpop.permute.xlu0 %6086
      %6088 = vrot.lane.b32.xlu0 %v5828, 32
      %v6089 = vpop.permute.xlu0 %6088
      %6090 = vrot.lane.b32.xlu0 %v5829, 32
      %v6091 = vpop.permute.xlu0 %6090
      %6092 = vrot.lane.b32.xlu0 %v5830, 32
      %v6093 = vpop.permute.xlu0 %6092
      %6094 = vrot.lane.b32.xlu0 %v5831, 32
      %v6095 = vpop.permute.xlu0 %6094
      %6096 = vrot.lane.b32.xlu0 %v5832, 32
      %v6097 = vpop.permute.xlu0 %6096
      %6098 = vrot.lane.b32.xlu0 %v5833, 32
      %v6099 = vpop.permute.xlu0 %6098
      %6100 = vrot.lane.b32.xlu0 %v5834, 32
      %v6101 = vpop.permute.xlu0 %6100
      %6102 = vrot.lane.b32.xlu0 %v5835, 32
      %v6103 = vpop.permute.xlu0 %6102
      %6104 = vrot.lane.b32.xlu0 %v5836, 32
      %v6105 = vpop.permute.xlu0 %6104
      %6106 = vrot.lane.b32.xlu0 %v5837, 32
      %v6107 = vpop.permute.xlu0 %6106
      %6108 = vrot.lane.b32.xlu0 %v5838, 32
      %v6109 = vpop.permute.xlu0 %6108
      %6110 = vrot.lane.b32.xlu0 %v5839, 32
      %v6111 = vpop.permute.xlu0 %6110
      %6112 = vrot.lane.b32.xlu0 %v5840, 32
      %v6113 = vpop.permute.xlu0 %6112
      %6114 = vrot.lane.b32.xlu0 %v5841, 32
      %v6115 = vpop.permute.xlu0 %6114
      %6116 = vrot.lane.b32.xlu0 %v5842, 32
      %v6117 = vpop.permute.xlu0 %6116
      %6118 = vrot.lane.b32.xlu0 %v5843, 32
      %v6119 = vpop.permute.xlu0 %6118
      %6120 = vrot.lane.b32.xlu0 %v5844, 32
      %v6121 = vpop.permute.xlu0 %6120
      %6122 = vrot.lane.b32.xlu0 %v5845, 32
      %v6123 = vpop.permute.xlu0 %6122
      %6124 = vrot.lane.b32.xlu0 %v5846, 32
      %v6125 = vpop.permute.xlu0 %6124
      %6126 = vrot.lane.b32.xlu0 %v5847, 32
      %v6127 = vpop.permute.xlu0 %6126
      %6128 = vrot.lane.b32.xlu0 %v5848, 32
      %v6129 = vpop.permute.xlu0 %6128
      %6130 = vrot.lane.b32.xlu0 %v5849, 32
      %v6131 = vpop.permute.xlu0 %6130
      %6132 = vrot.lane.b32.xlu0 %v5850, 32
      %v6133 = vpop.permute.xlu0 %6132
      %6134 = vrot.lane.b32.xlu0 %v5851, 32
      %v6135 = vpop.permute.xlu0 %6134
      %6136 = vrot.lane.b32.xlu0 %v5852, 32
      %v6137 = vpop.permute.xlu0 %6136
      %6138 = vrot.lane.b32.xlu0 %v5853, 32
      %v6139 = vpop.permute.xlu0 %6138
      %6140 = vrot.lane.b32.xlu0 %v5854, 32
      %v6141 = vpop.permute.xlu0 %6140
      %6142 = vrot.lane.b32.xlu0 %v5855, 32
      %v6143 = vpop.permute.xlu0 %6142
      %6144 = vrot.lane.b32.xlu0 %v5856, 32
      %v6145 = vpop.permute.xlu0 %6144
      %6146 = vrot.lane.b32.xlu0 %v5857, 32
      %v6147 = vpop.permute.xlu0 %6146
      %6148 = vrot.lane.b32.xlu0 %v5858, 32
      %v6149 = vpop.permute.xlu0 %6148
      %6150 = vrot.lane.b32.xlu0 %v5859, 32
      %v6151 = vpop.permute.xlu0 %6150
      %6152 = vrot.lane.b32.xlu0 %v5860, 32
      %v6153 = vpop.permute.xlu0 %6152
      %6154 = vrot.lane.b32.xlu0 %v5861, 32
      %v6155 = vpop.permute.xlu0 %6154
      %6156 = vrot.lane.b32.xlu0 %v5862, 32
      %v6157 = vpop.permute.xlu0 %6156
      %6158 = vrot.lane.b32.xlu0 %v5863, 32
      %v6159 = vpop.permute.xlu0 %6158
      %6160 = vrot.lane.b32.xlu0 %v5864, 32
      %v6161 = vpop.permute.xlu0 %6160
      %6162 = vrot.lane.b32.xlu0 %v5865, 32
      %v6163 = vpop.permute.xlu0 %6162
      %6164 = vrot.lane.b32.xlu0 %v5866, 32
      %v6165 = vpop.permute.xlu0 %6164
      %6166 = vrot.lane.b32.xlu0 %v5867, 32
      %v6167 = vpop.permute.xlu0 %6166
      %6168 = vrot.lane.b32.xlu0 %v5868, 32
      %v6169 = vpop.permute.xlu0 %6168
      %6170 = vrot.lane.b32.xlu0 %v5869, 32
      %v6171 = vpop.permute.xlu0 %6170
      %6172 = vrot.lane.b32.xlu0 %v5870, 32
      %v6173 = vpop.permute.xlu0 %6172
      %6174 = vrot.lane.b32.xlu0 %v5871, 32
      %v6175 = vpop.permute.xlu0 %6174
      %6176 = vrot.lane.b32.xlu0 %v5872, 32
      %v6177 = vpop.permute.xlu0 %6176
      %6178 = vrot.lane.b32.xlu0 %v5873, 32
      %v6179 = vpop.permute.xlu0 %6178
      %6180 = vrot.lane.b32.xlu0 %v5874, 32
      %v6181 = vpop.permute.xlu0 %6180
      %6182 = vrot.lane.b32.xlu0 %v5875, 32
      %v6183 = vpop.permute.xlu0 %6182
      %6184 = vrot.lane.b32.xlu0 %v5876, 32
      %v6185 = vpop.permute.xlu0 %6184
      %6186 = vrot.lane.b32.xlu0 %v5877, 32
      %v6187 = vpop.permute.xlu0 %6186
      %6188 = vrot.lane.b32.xlu0 %v5878, 32
      %v6189 = vpop.permute.xlu0 %6188
      %6190 = vrot.lane.b32.xlu0 %v5879, 32
      %v6191 = vpop.permute.xlu0 %6190
      %6192 = vrot.lane.b32.xlu0 %v5880, 32
      %v6193 = vpop.permute.xlu0 %6192
      %6194 = vrot.lane.b32.xlu0 %v5881, 32
      %v6195 = vpop.permute.xlu0 %6194
      %6196 = vrot.lane.b32.xlu0 %v5882, 32
      %v6197 = vpop.permute.xlu0 %6196
      %6198 = vrot.lane.b32.xlu0 %v5883, 32
      %v6199 = vpop.permute.xlu0 %6198
      %6200 = vrot.lane.b32.xlu0 %v5884, 32
      %v6201 = vpop.permute.xlu0 %6200
      %6202 = vrot.lane.b32.xlu0 %v5885, 32
      %v6203 = vpop.permute.xlu0 %6202
      %6204 = vrot.lane.b32.xlu0 %v5886, 32
      %v6205 = vpop.permute.xlu0 %6204
      %6206 = vrot.lane.b32.xlu0 %v5887, 32
      %v6207 = vpop.permute.xlu0 %6206
      %6208 = vrot.lane.b32.xlu0 %v5888, 32
      %v6209 = vpop.permute.xlu0 %6208
      %6210 = vrot.lane.b32.xlu0 %v5889, 32
      %v6211 = vpop.permute.xlu0 %6210
      %6212 = vrot.lane.b32.xlu0 %v5890, 32
      %v6213 = vpop.permute.xlu0 %6212
      %6214 = vrot.lane.b32.xlu0 %v5891, 32
      %v6215 = vpop.permute.xlu0 %6214
      %6216 = vrot.lane.b32.xlu0 %v5892, 32
      %v6217 = vpop.permute.xlu0 %6216
      %6218 = vrot.lane.b32.xlu0 %v5893, 32
      %v6219 = vpop.permute.xlu0 %6218
      %6220 = vrot.lane.b32.xlu0 %v5894, 32
      %v6221 = vpop.permute.xlu0 %6220
      %6222 = vrot.lane.b32.xlu0 %v5895, 32
      %v6223 = vpop.permute.xlu0 %6222
      %6224 = vrot.lane.b32.xlu0 %v5896, 32
      %v6225 = vpop.permute.xlu0 %6224
      %6226 = vrot.lane.b32.xlu0 %v5897, 32
      %v6227 = vpop.permute.xlu0 %6226
      %6228 = vrot.lane.b32.xlu0 %v5898, 32
      %v6229 = vpop.permute.xlu0 %6228
      %6230 = vrot.lane.b32.xlu0 %v5899, 32
      %v6231 = vpop.permute.xlu0 %6230
      %6232 = vrot.lane.b32.xlu0 %v5900, 32
      %v6233 = vpop.permute.xlu0 %6232
      %6234 = vrot.lane.b32.xlu0 %v5901, 32
      %v6235 = vpop.permute.xlu0 %6234
      %6236 = vrot.lane.b32.xlu0 %v5902, 32
      %v6237 = vpop.permute.xlu0 %6236
      %6238 = vrot.lane.b32.xlu0 %v5903, 32
      %v6239 = vpop.permute.xlu0 %6238
      %6240 = vrot.lane.b32.xlu0 %v5904, 32
      %v6241 = vpop.permute.xlu0 %6240
      %6242 = vrot.lane.b32.xlu0 %v5905, 32
      %v6243 = vpop.permute.xlu0 %6242
      %6244 = vrot.lane.b32.xlu0 %v5906, 32
      %v6245 = vpop.permute.xlu0 %6244
      %6246 = vrot.lane.b32.xlu0 %v5907, 32
      %v6247 = vpop.permute.xlu0 %6246
      %6248 = vrot.lane.b32.xlu0 %v5908, 32
      %v6249 = vpop.permute.xlu0 %6248
      %6250 = vrot.lane.b32.xlu0 %v5909, 32
      %v6251 = vpop.permute.xlu0 %6250
      %6252 = vrot.lane.b32.xlu0 %v5910, 32
      %v6253 = vpop.permute.xlu0 %6252
      %6254 = vrot.lane.b32.xlu0 %v5911, 32
      %v6255 = vpop.permute.xlu0 %6254
      %6256 = vrot.lane.b32.xlu0 %v5912, 32
      %v6257 = vpop.permute.xlu0 %6256
      %6258 = vrot.lane.b32.xlu0 %v5913, 32
      %v6259 = vpop.permute.xlu0 %6258
      %6260 = vrot.lane.b32.xlu0 %v5914, 32
      %v6261 = vpop.permute.xlu0 %6260
      %6262 = vrot.lane.b32.xlu0 %v5915, 32
      %v6263 = vpop.permute.xlu0 %6262
      %6264 = vrot.lane.b32.xlu0 %v5916, 32
      %v6265 = vpop.permute.xlu0 %6264
      %6266 = vrot.lane.b32.xlu0 %v5917, 32
      %v6267 = vpop.permute.xlu0 %6266
      %6268 = vrot.lane.b32.xlu0 %v5918, 32
      %v6269 = vpop.permute.xlu0 %6268
      %6270 = vrot.lane.b32.xlu0 %v5919, 32
      %v6271 = vpop.permute.xlu0 %6270
      %6272 = vrot.lane.b32.xlu0 %v5920, 32
      %v6273 = vpop.permute.xlu0 %6272
      %6274 = vrot.lane.b32.xlu0 %v5921, 32
      %v6275 = vpop.permute.xlu0 %6274
      %6276 = vrot.lane.b32.xlu0 %v5922, 32
      %v6277 = vpop.permute.xlu0 %6276
      %6278 = vrot.lane.b32.xlu0 %v5923, 32
      %v6279 = vpop.permute.xlu0 %6278
      %6280 = vrot.lane.b32.xlu0 %v5924, 32
      %v6281 = vpop.permute.xlu0 %6280
      %6282 = vrot.lane.b32.xlu0 %v5925, 32
      %v6283 = vpop.permute.xlu0 %6282
      %6284 = vrot.lane.b32.xlu0 %v5926, 32
      %v6285 = vpop.permute.xlu0 %6284
      %6286 = vrot.lane.b32.xlu0 %v5927, 32
      %v6287 = vpop.permute.xlu0 %6286
      %6288 = vrot.lane.b32.xlu0 %v5928, 32
      %v6289 = vpop.permute.xlu0 %6288
      %6290 = vrot.lane.b32.xlu0 %v5929, 32
      %v6291 = vpop.permute.xlu0 %6290
      %6292 = vrot.lane.b32.xlu0 %v5930, 32
      %v6293 = vpop.permute.xlu0 %6292
      %6294 = vrot.lane.b32.xlu0 %v5931, 32
      %v6295 = vpop.permute.xlu0 %6294
      %6296 = vrot.lane.b32.xlu0 %v5932, 32
      %v6297 = vpop.permute.xlu0 %6296
      %6298 = vrot.lane.b32.xlu0 %v5933, 32
      %v6299 = vpop.permute.xlu0 %6298
      %6300 = vrot.lane.b32.xlu0 %v5934, 32
      %v6301 = vpop.permute.xlu0 %6300
      %6302 = vrot.lane.b32.xlu0 %v5935, 32
      %v6303 = vpop.permute.xlu0 %6302
      %6304 = vrot.lane.b32.xlu0 %v5936, 32
      %v6305 = vpop.permute.xlu0 %6304
      %6306 = vrot.lane.b32.xlu0 %v5937, 32
      %v6307 = vpop.permute.xlu0 %6306
      %6308 = vrot.lane.b32.xlu0 %v5938, 32
      %v6309 = vpop.permute.xlu0 %6308
      %6310 = vrot.lane.b32.xlu0 %v5939, 32
      %v6311 = vpop.permute.xlu0 %6310
      %6312 = vrot.lane.b32.xlu0 %v5940, 32
      %v6313 = vpop.permute.xlu0 %6312
      %6314 = vrot.lane.b32.xlu0 %v5941, 32
      %v6315 = vpop.permute.xlu0 %6314
      %6316 = vrot.lane.b32.xlu0 %v5942, 32
      %v6317 = vpop.permute.xlu0 %6316
      %6318 = vrot.lane.b32.xlu0 %v5943, 32
      %v6319 = vpop.permute.xlu0 %6318
      %6320 = vrot.lane.b32.xlu0 %v5944, 32
      %v6321 = vpop.permute.xlu0 %6320
      %6322 = vrot.lane.b32.xlu0 %v5945, 32
      %v6323 = vpop.permute.xlu0 %6322
      %6324 = vrot.lane.b32.xlu0 %v5946, 32
      %v6325 = vpop.permute.xlu0 %6324
      %6326 = vrot.lane.b32.xlu0 %v5947, 32
      %v6327 = vpop.permute.xlu0 %6326
      %6328 = vrot.lane.b32.xlu0 %v5948, 32
      %v6329 = vpop.permute.xlu0 %6328
      %6330 = vrot.lane.b32.xlu0 %v5949, 32
      %v6331 = vpop.permute.xlu0 %6330
      %6332 = vrot.lane.b32.xlu0 %v5950, 32
      %v6333 = vpop.permute.xlu0 %6332
      %6334 = vrot.lane.b32.xlu0 %v5951, 32
      %v6335 = vpop.permute.xlu0 %6334
      %v6464 = vsel %vm3094, %v2374, %v6081
      %v6465 = vsel %vm3094, %v2375, %v6083
      %v6466 = vsel %vm3094, %v2376, %v6085
      %v6467 = vsel %vm3094, %v2377, %v6087
      %v6468 = vsel %vm3094, %v2378, %v6089
      %v6469 = vsel %vm3094, %v2379, %v6091
      %v6470 = vsel %vm3094, %v2380, %v6093
      %v6471 = vsel %vm3094, %v2381, %v6095
      %v6472 = vsel %vm3094, %v2382, %v6097
      %v6473 = vsel %vm3094, %v2383, %v6099
      %v6474 = vsel %vm3094, %v2384, %v6101
      %v6475 = vsel %vm3094, %v2385, %v6103
      %v6476 = vsel %vm3094, %v2386, %v6105
      %v6477 = vsel %vm3094, %v2387, %v6107
      %v6478 = vsel %vm3094, %v2388, %v6109
      %v6479 = vsel %vm3094, %v2389, %v6111
      %v6480 = vsel %vm3094, %v2390, %v6113
      %v6481 = vsel %vm3094, %v2391, %v6115
      %v6482 = vsel %vm3094, %v2392, %v6117
      %v6483 = vsel %vm3094, %v2393, %v6119
      %v6484 = vsel %vm3094, %v2394, %v6121
      %v6485 = vsel %vm3094, %v2395, %v6123
      %v6486 = vsel %vm3094, %v2396, %v6125
      %v6487 = vsel %vm3094, %v2397, %v6127
      %v6488 = vsel %vm3094, %v2398, %v6129
      %v6489 = vsel %vm3094, %v2399, %v6131
      %v6490 = vsel %vm3094, %v2400, %v6133
      %v6491 = vsel %vm3094, %v2401, %v6135
      %v6492 = vsel %vm3094, %v2402, %v6137
      %v6493 = vsel %vm3094, %v2403, %v6139
      %v6494 = vsel %vm3094, %v2404, %v6141
      %v6495 = vsel %vm3094, %v2405, %v6143
      %v6496 = vsel %vm3094, %v2406, %v6145
      %v6497 = vsel %vm3094, %v2407, %v6147
      %v6498 = vsel %vm3094, %v2408, %v6149
      %v6499 = vsel %vm3094, %v2409, %v6151
      %v6500 = vsel %vm3094, %v2410, %v6153
      %v6501 = vsel %vm3094, %v2411, %v6155
      %v6502 = vsel %vm3094, %v2412, %v6157
      %v6503 = vsel %vm3094, %v2413, %v6159
      %v6504 = vsel %vm3094, %v2414, %v6161
      %v6505 = vsel %vm3094, %v2415, %v6163
      %v6506 = vsel %vm3094, %v2416, %v6165
      %v6507 = vsel %vm3094, %v2417, %v6167
      %v6508 = vsel %vm3094, %v2418, %v6169
      %v6509 = vsel %vm3094, %v2419, %v6171
      %v6510 = vsel %vm3094, %v2420, %v6173
      %v6511 = vsel %vm3094, %v2421, %v6175
      %v6512 = vsel %vm3094, %v2422, %v6177
      %v6513 = vsel %vm3094, %v2423, %v6179
      %v6514 = vsel %vm3094, %v2424, %v6181
      %v6515 = vsel %vm3094, %v2425, %v6183
      %v6516 = vsel %vm3094, %v2426, %v6185
      %v6517 = vsel %vm3094, %v2427, %v6187
      %v6518 = vsel %vm3094, %v2428, %v6189
      %v6519 = vsel %vm3094, %v2429, %v6191
      %v6520 = vsel %vm3094, %v2430, %v6193
      %v6521 = vsel %vm3094, %v2431, %v6195
      %v6522 = vsel %vm3094, %v2432, %v6197
      %v6523 = vsel %vm3094, %v2433, %v6199
      %v6524 = vsel %vm3094, %v2434, %v6201
      %v6525 = vsel %vm3094, %v2435, %v6203
      %v6526 = vsel %vm3094, %v2436, %v6205
      %v6527 = vsel %vm3094, %v2437, %v6207
      %v6528 = vsel %vm3094, %v2438, %v6209
      %v6529 = vsel %vm3094, %v2439, %v6211
      %v6530 = vsel %vm3094, %v2440, %v6213
      %v6531 = vsel %vm3094, %v2441, %v6215
      %v6532 = vsel %vm3094, %v2442, %v6217
      %v6533 = vsel %vm3094, %v2443, %v6219
      %v6534 = vsel %vm3094, %v2444, %v6221
      %v6535 = vsel %vm3094, %v2445, %v6223
      %v6536 = vsel %vm3094, %v2446, %v6225
      %v6537 = vsel %vm3094, %v2447, %v6227
      %v6538 = vsel %vm3094, %v2448, %v6229
      %v6539 = vsel %vm3094, %v2449, %v6231
      %v6540 = vsel %vm3094, %v2450, %v6233
      %v6541 = vsel %vm3094, %v2451, %v6235
      %v6542 = vsel %vm3094, %v2452, %v6237
      %v6543 = vsel %vm3094, %v2453, %v6239
      %v6544 = vsel %vm3094, %v2454, %v6241
      %v6545 = vsel %vm3094, %v2455, %v6243
      %v6546 = vsel %vm3094, %v2456, %v6245
      %v6547 = vsel %vm3094, %v2457, %v6247
      %v6548 = vsel %vm3094, %v2458, %v6249
      %v6549 = vsel %vm3094, %v2459, %v6251
      %v6550 = vsel %vm3094, %v2460, %v6253
      %v6551 = vsel %vm3094, %v2461, %v6255
      %v6552 = vsel %vm3094, %v2462, %v6257
      %v6553 = vsel %vm3094, %v2463, %v6259
      %v6554 = vsel %vm3094, %v2464, %v6261
      %v6555 = vsel %vm3094, %v2465, %v6263
      %v6556 = vsel %vm3094, %v2466, %v6265
      %v6557 = vsel %vm3094, %v2467, %v6267
      %v6558 = vsel %vm3094, %v2468, %v6269
      %v6559 = vsel %vm3094, %v2469, %v6271
      %v6560 = vsel %vm3094, %v2470, %v6273
      %v6561 = vsel %vm3094, %v2471, %v6275
      %v6562 = vsel %vm3094, %v2472, %v6277
      %v6563 = vsel %vm3094, %v2473, %v6279
      %v6564 = vsel %vm3094, %v2474, %v6281
      %v6565 = vsel %vm3094, %v2475, %v6283
      %v6566 = vsel %vm3094, %v2476, %v6285
      %v6567 = vsel %vm3094, %v2477, %v6287
      %v6568 = vsel %vm3094, %v2478, %v6289
      %v6569 = vsel %vm3094, %v2479, %v6291
      %v6570 = vsel %vm3094, %v2480, %v6293
      %v6571 = vsel %vm3094, %v2481, %v6295
      %v6572 = vsel %vm3094, %v2482, %v6297
      %v6573 = vsel %vm3094, %v2483, %v6299
      %v6574 = vsel %vm3094, %v2484, %v6301
      %v6575 = vsel %vm3094, %v2485, %v6303
      %v6576 = vsel %vm3094, %v2486, %v6305
      %v6577 = vsel %vm3094, %v2487, %v6307
      %v6578 = vsel %vm3094, %v2488, %v6309
      %v6579 = vsel %vm3094, %v2489, %v6311
      %v6580 = vsel %vm3094, %v2490, %v6313
      %v6581 = vsel %vm3094, %v2491, %v6315
      %v6582 = vsel %vm3094, %v2492, %v6317
      %v6583 = vsel %vm3094, %v2493, %v6319
      %v6584 = vsel %vm3094, %v2494, %v6321
      %v6585 = vsel %vm3094, %v2495, %v6323
      %v6586 = vsel %vm3094, %v2496, %v6325
      %v6587 = vsel %vm3094, %v2497, %v6327
      %v6588 = vsel %vm3094, %v2498, %v6329
      %v6589 = vsel %vm3094, %v2499, %v6331
      %v6590 = vsel %vm3094, %v2500, %v6333
      %v6591 = vsel %vm3094, %v2501, %v6335
      %v6592 = vmul.f32 %v5696, %v6464
      %v6593 = vmul.f32 %v5697, %v6465
      %v6594 = vmul.f32 %v5698, %v6466
      %v6595 = vmul.f32 %v5699, %v6467
      %v6596 = vmul.f32 %v5700, %v6468
      %v6597 = vmul.f32 %v5701, %v6469
      %v6598 = vmul.f32 %v5702, %v6470
      %v6599 = vmul.f32 %v5703, %v6471
      %v6600 = vmul.f32 %v5704, %v6472
      %v6601 = vmul.f32 %v5705, %v6473
      %v6602 = vmul.f32 %v5706, %v6474
      %v6603 = vmul.f32 %v5707, %v6475
      %v6604 = vmul.f32 %v5708, %v6476
      %v6605 = vmul.f32 %v5709, %v6477
      %v6606 = vmul.f32 %v5710, %v6478
      %v6607 = vmul.f32 %v5711, %v6479
      %v6608 = vmul.f32 %v5712, %v6480
      %v6609 = vmul.f32 %v5713, %v6481
      %v6610 = vmul.f32 %v5714, %v6482
      %v6611 = vmul.f32 %v5715, %v6483
      %v6612 = vmul.f32 %v5716, %v6484
      %v6613 = vmul.f32 %v5717, %v6485
      %v6614 = vmul.f32 %v5718, %v6486
      %v6615 = vmul.f32 %v5719, %v6487
      %v6616 = vmul.f32 %v5720, %v6488
      %v6617 = vmul.f32 %v5721, %v6489
      %v6618 = vmul.f32 %v5722, %v6490
      %v6619 = vmul.f32 %v5723, %v6491
      %v6620 = vmul.f32 %v5724, %v6492
      %v6621 = vmul.f32 %v5725, %v6493
      %v6622 = vmul.f32 %v5726, %v6494
      %v6623 = vmul.f32 %v5727, %v6495
      %v6624 = vmul.f32 %v5728, %v6496
      %v6625 = vmul.f32 %v5729, %v6497
      %v6626 = vmul.f32 %v5730, %v6498
      %v6627 = vmul.f32 %v5731, %v6499
      %v6628 = vmul.f32 %v5732, %v6500
      %v6629 = vmul.f32 %v5733, %v6501
      %v6630 = vmul.f32 %v5734, %v6502
      %v6631 = vmul.f32 %v5735, %v6503
      %v6632 = vmul.f32 %v5736, %v6504
      %v6633 = vmul.f32 %v5737, %v6505
      %v6634 = vmul.f32 %v5738, %v6506
      %v6635 = vmul.f32 %v5739, %v6507
      %v6636 = vmul.f32 %v5740, %v6508
      %v6637 = vmul.f32 %v5741, %v6509
      %v6638 = vmul.f32 %v5742, %v6510
      %v6639 = vmul.f32 %v5743, %v6511
      %v6640 = vmul.f32 %v5744, %v6512
      %v6641 = vmul.f32 %v5745, %v6513
      %v6642 = vmul.f32 %v5746, %v6514
      %v6643 = vmul.f32 %v5747, %v6515
      %v6644 = vmul.f32 %v5748, %v6516
      %v6645 = vmul.f32 %v5749, %v6517
      %v6646 = vmul.f32 %v5750, %v6518
      %v6647 = vmul.f32 %v5751, %v6519
      %v6648 = vmul.f32 %v5752, %v6520
      %v6649 = vmul.f32 %v5753, %v6521
      %v6650 = vmul.f32 %v5754, %v6522
      %v6651 = vmul.f32 %v5755, %v6523
      %v6652 = vmul.f32 %v5756, %v6524
      %v6653 = vmul.f32 %v5757, %v6525
      %v6654 = vmul.f32 %v5758, %v6526
      %v6655 = vmul.f32 %v5759, %v6527
      %v6656 = vmul.f32 %v5760, %v6528
      %v6657 = vmul.f32 %v5761, %v6529
      %v6658 = vmul.f32 %v5762, %v6530
      %v6659 = vmul.f32 %v5763, %v6531
      %v6660 = vmul.f32 %v5764, %v6532
      %v6661 = vmul.f32 %v5765, %v6533
      %v6662 = vmul.f32 %v5766, %v6534
      %v6663 = vmul.f32 %v5767, %v6535
      %v6664 = vmul.f32 %v5768, %v6536
      %v6665 = vmul.f32 %v5769, %v6537
      %v6666 = vmul.f32 %v5770, %v6538
      %v6667 = vmul.f32 %v5771, %v6539
      %v6668 = vmul.f32 %v5772, %v6540
      %v6669 = vmul.f32 %v5773, %v6541
      %v6670 = vmul.f32 %v5774, %v6542
      %v6671 = vmul.f32 %v5775, %v6543
      %v6672 = vmul.f32 %v5776, %v6544
      %v6673 = vmul.f32 %v5777, %v6545
      %v6674 = vmul.f32 %v5778, %v6546
      %v6675 = vmul.f32 %v5779, %v6547
      %v6676 = vmul.f32 %v5780, %v6548
      %v6677 = vmul.f32 %v5781, %v6549
      %v6678 = vmul.f32 %v5782, %v6550
      %v6679 = vmul.f32 %v5783, %v6551
      %v6680 = vmul.f32 %v5784, %v6552
      %v6681 = vmul.f32 %v5785, %v6553
      %v6682 = vmul.f32 %v5786, %v6554
      %v6683 = vmul.f32 %v5787, %v6555
      %v6684 = vmul.f32 %v5788, %v6556
      %v6685 = vmul.f32 %v5789, %v6557
      %v6686 = vmul.f32 %v5790, %v6558
      %v6687 = vmul.f32 %v5791, %v6559
      %v6688 = vmul.f32 %v5792, %v6560
      %v6689 = vmul.f32 %v5793, %v6561
      %v6690 = vmul.f32 %v5794, %v6562
      %v6691 = vmul.f32 %v5795, %v6563
      %v6692 = vmul.f32 %v5796, %v6564
      %v6693 = vmul.f32 %v5797, %v6565
      %v6694 = vmul.f32 %v5798, %v6566
      %v6695 = vmul.f32 %v5799, %v6567
      %v6696 = vmul.f32 %v5800, %v6568
      %v6697 = vmul.f32 %v5801, %v6569
      %v6698 = vmul.f32 %v5802, %v6570
      %v6699 = vmul.f32 %v5803, %v6571
      %v6700 = vmul.f32 %v5804, %v6572
      %v6701 = vmul.f32 %v5805, %v6573
      %v6702 = vmul.f32 %v5806, %v6574
      %v6703 = vmul.f32 %v5807, %v6575
      %v6704 = vmul.f32 %v5808, %v6576
      %v6705 = vmul.f32 %v5809, %v6577
      %v6706 = vmul.f32 %v5810, %v6578
      %v6707 = vmul.f32 %v5811, %v6579
      %v6708 = vmul.f32 %v5812, %v6580
      %v6709 = vmul.f32 %v5813, %v6581
      %v6710 = vmul.f32 %v5814, %v6582
      %v6711 = vmul.f32 %v5815, %v6583
      %v6712 = vmul.f32 %v5816, %v6584
      %v6713 = vmul.f32 %v5817, %v6585
      %v6714 = vmul.f32 %v5818, %v6586
      %v6715 = vmul.f32 %v5819, %v6587
      %v6716 = vmul.f32 %v5820, %v6588
      %v6717 = vmul.f32 %v5821, %v6589
      %v6718 = vmul.f32 %v5822, %v6590
      %v6719 = vmul.f32 %v5823, %v6591
      %v6720 = vsel %vm4095, %v6592, 0.0
      %v6721 = vsel %vm4095, %v6593, 0.0
      %v6722 = vadd.f32 %v6720, %v6721
      %v6723 = vrot.slane %v6722, 4
      %v6724 = vadd.f32 %v6722, %v6723
      %v6725 = vrot.slane %v6724, 2
      %v6726 = vadd.f32 %v6724, %v6725
      %v6727 = vrot.slane %v6726, 1
      %v6728 = vadd.f32 %v6726, %v6727
      %v6729 = vsel %vm4095, %v6594, 0.0
      %v6730 = vsel %vm4095, %v6595, 0.0
      %v6731 = vadd.f32 %v6729, %v6730
      %v6732 = vrot.slane %v6731, 4
      %v6733 = vadd.f32 %v6731, %v6732
      %v6734 = vrot.slane %v6733, 2
      %v6735 = vadd.f32 %v6733, %v6734
      %v6736 = vrot.slane %v6735, 1
      %v6737 = vadd.f32 %v6735, %v6736
      %v6738 = vsel %vm4095, %v6596, 0.0
      %v6739 = vsel %vm4095, %v6597, 0.0
      %v6740 = vadd.f32 %v6738, %v6739
      %v6741 = vrot.slane %v6740, 4
      %v6742 = vadd.f32 %v6740, %v6741
      %v6743 = vrot.slane %v6742, 2
      %v6744 = vadd.f32 %v6742, %v6743
      %v6745 = vrot.slane %v6744, 1
      %v6746 = vadd.f32 %v6744, %v6745
      %v6747 = vsel %vm4095, %v6598, 0.0
      %v6748 = vsel %vm4095, %v6599, 0.0
      %v6749 = vadd.f32 %v6747, %v6748
      %v6750 = vrot.slane %v6749, 4
      %v6751 = vadd.f32 %v6749, %v6750
      %v6752 = vrot.slane %v6751, 2
      %v6753 = vadd.f32 %v6751, %v6752
      %v6754 = vrot.slane %v6753, 1
      %v6755 = vadd.f32 %v6753, %v6754
      %v6756 = vsel %vm4095, %v6600, 0.0
      %v6757 = vsel %vm4095, %v6601, 0.0
      %v6758 = vadd.f32 %v6756, %v6757
      %v6759 = vrot.slane %v6758, 4
      %v6760 = vadd.f32 %v6758, %v6759
      %v6761 = vrot.slane %v6760, 2
      %v6762 = vadd.f32 %v6760, %v6761
      %v6763 = vrot.slane %v6762, 1
      %v6764 = vadd.f32 %v6762, %v6763
      %v6765 = vsel %vm4095, %v6602, 0.0
      %v6766 = vsel %vm4095, %v6603, 0.0
      %v6767 = vadd.f32 %v6765, %v6766
      %v6768 = vrot.slane %v6767, 4
      %v6769 = vadd.f32 %v6767, %v6768
      %v6770 = vrot.slane %v6769, 2
      %v6771 = vadd.f32 %v6769, %v6770
      %v6772 = vrot.slane %v6771, 1
      %v6773 = vadd.f32 %v6771, %v6772
      %v6774 = vsel %vm4095, %v6604, 0.0
      %v6775 = vsel %vm4095, %v6605, 0.0
      %v6776 = vadd.f32 %v6774, %v6775
      %v6777 = vrot.slane %v6776, 4
      %v6778 = vadd.f32 %v6776, %v6777
      %v6779 = vrot.slane %v6778, 2
      %v6780 = vadd.f32 %v6778, %v6779
      %v6781 = vrot.slane %v6780, 1
      %v6782 = vadd.f32 %v6780, %v6781
      %v6783 = vsel %vm4095, %v6606, 0.0
      %v6784 = vsel %vm4095, %v6607, 0.0
      %v6785 = vadd.f32 %v6783, %v6784
      %v6786 = vrot.slane %v6785, 4
      %v6787 = vadd.f32 %v6785, %v6786
      %v6788 = vrot.slane %v6787, 2
      %v6789 = vadd.f32 %v6787, %v6788
      %v6790 = vrot.slane %v6789, 1
      %v6791 = vadd.f32 %v6789, %v6790
      %v6792 = vsel %vm4095, %v6608, 0.0
      %v6793 = vsel %vm4095, %v6609, 0.0
      %v6794 = vadd.f32 %v6792, %v6793
      %v6795 = vrot.slane %v6794, 4
      %v6796 = vadd.f32 %v6794, %v6795
      %v6797 = vrot.slane %v6796, 2
      %v6798 = vadd.f32 %v6796, %v6797
      %v6799 = vrot.slane %v6798, 1
      %v6800 = vadd.f32 %v6798, %v6799
      %v6801 = vsel %vm4095, %v6610, 0.0
      %v6802 = vsel %vm4095, %v6611, 0.0
      %v6803 = vadd.f32 %v6801, %v6802
      %v6804 = vrot.slane %v6803, 4
      %v6805 = vadd.f32 %v6803, %v6804
      %v6806 = vrot.slane %v6805, 2
      %v6807 = vadd.f32 %v6805, %v6806
      %v6808 = vrot.slane %v6807, 1
      %v6809 = vadd.f32 %v6807, %v6808
      %v6810 = vsel %vm4095, %v6612, 0.0
      %v6811 = vsel %vm4095, %v6613, 0.0
      %v6812 = vadd.f32 %v6810, %v6811
      %v6813 = vrot.slane %v6812, 4
      %v6814 = vadd.f32 %v6812, %v6813
      %v6815 = vrot.slane %v6814, 2
      %v6816 = vadd.f32 %v6814, %v6815
      %v6817 = vrot.slane %v6816, 1
      %v6818 = vadd.f32 %v6816, %v6817
      %v6819 = vsel %vm4095, %v6614, 0.0
      %v6820 = vsel %vm4095, %v6615, 0.0
      %v6821 = vadd.f32 %v6819, %v6820
      %v6822 = vrot.slane %v6821, 4
      %v6823 = vadd.f32 %v6821, %v6822
      %v6824 = vrot.slane %v6823, 2
      %v6825 = vadd.f32 %v6823, %v6824
      %v6826 = vrot.slane %v6825, 1
      %v6827 = vadd.f32 %v6825, %v6826
      %v6828 = vsel %vm4095, %v6616, 0.0
      %v6829 = vsel %vm4095, %v6617, 0.0
      %v6830 = vadd.f32 %v6828, %v6829
      %v6831 = vrot.slane %v6830, 4
      %v6832 = vadd.f32 %v6830, %v6831
      %v6833 = vrot.slane %v6832, 2
      %v6834 = vadd.f32 %v6832, %v6833
      %v6835 = vrot.slane %v6834, 1
      %v6836 = vadd.f32 %v6834, %v6835
      %v6837 = vsel %vm4095, %v6618, 0.0
      %v6838 = vsel %vm4095, %v6619, 0.0
      %v6839 = vadd.f32 %v6837, %v6838
      %v6840 = vrot.slane %v6839, 4
      %v6841 = vadd.f32 %v6839, %v6840
      %v6842 = vrot.slane %v6841, 2
      %v6843 = vadd.f32 %v6841, %v6842
      %v6844 = vrot.slane %v6843, 1
      %v6845 = vadd.f32 %v6843, %v6844
      %v6846 = vsel %vm4095, %v6620, 0.0
      %v6847 = vsel %vm4095, %v6621, 0.0
      %v6848 = vadd.f32 %v6846, %v6847
      %v6849 = vrot.slane %v6848, 4
      %v6850 = vadd.f32 %v6848, %v6849
      %v6851 = vrot.slane %v6850, 2
      %v6852 = vadd.f32 %v6850, %v6851
      %v6853 = vrot.slane %v6852, 1
      %v6854 = vadd.f32 %v6852, %v6853
      %v6855 = vsel %vm4095, %v6622, 0.0
      %v6856 = vsel %vm4095, %v6623, 0.0
      %v6857 = vadd.f32 %v6855, %v6856
      %v6858 = vrot.slane %v6857, 4
      %v6859 = vadd.f32 %v6857, %v6858
      %v6860 = vrot.slane %v6859, 2
      %v6861 = vadd.f32 %v6859, %v6860
      %v6862 = vrot.slane %v6861, 1
      %v6863 = vadd.f32 %v6861, %v6862
      %v6864 = vsel %vm4095, %v6624, 0.0
      %v6865 = vsel %vm4095, %v6625, 0.0
      %v6866 = vadd.f32 %v6864, %v6865
      %v6867 = vrot.slane %v6866, 4
      %v6868 = vadd.f32 %v6866, %v6867
      %v6869 = vrot.slane %v6868, 2
      %v6870 = vadd.f32 %v6868, %v6869
      %v6871 = vrot.slane %v6870, 1
      %v6872 = vadd.f32 %v6870, %v6871
      %v6873 = vsel %vm4095, %v6626, 0.0
      %v6874 = vsel %vm4095, %v6627, 0.0
      %v6875 = vadd.f32 %v6873, %v6874
      %v6876 = vrot.slane %v6875, 4
      %v6877 = vadd.f32 %v6875, %v6876
      %v6878 = vrot.slane %v6877, 2
      %v6879 = vadd.f32 %v6877, %v6878
      %v6880 = vrot.slane %v6879, 1
      %v6881 = vadd.f32 %v6879, %v6880
      %v6882 = vsel %vm4095, %v6628, 0.0
      %v6883 = vsel %vm4095, %v6629, 0.0
      %v6884 = vadd.f32 %v6882, %v6883
      %v6885 = vrot.slane %v6884, 4
      %v6886 = vadd.f32 %v6884, %v6885
      %v6887 = vrot.slane %v6886, 2
      %v6888 = vadd.f32 %v6886, %v6887
      %v6889 = vrot.slane %v6888, 1
      %v6890 = vadd.f32 %v6888, %v6889
      %v6891 = vsel %vm4095, %v6630, 0.0
      %v6892 = vsel %vm4095, %v6631, 0.0
      %v6893 = vadd.f32 %v6891, %v6892
      %v6894 = vrot.slane %v6893, 4
      %v6895 = vadd.f32 %v6893, %v6894
      %v6896 = vrot.slane %v6895, 2
      %v6897 = vadd.f32 %v6895, %v6896
      %v6898 = vrot.slane %v6897, 1
      %v6899 = vadd.f32 %v6897, %v6898
      %v6900 = vsel %vm4095, %v6632, 0.0
      %v6901 = vsel %vm4095, %v6633, 0.0
      %v6902 = vadd.f32 %v6900, %v6901
      %v6903 = vrot.slane %v6902, 4
      %v6904 = vadd.f32 %v6902, %v6903
      %v6905 = vrot.slane %v6904, 2
      %v6906 = vadd.f32 %v6904, %v6905
      %v6907 = vrot.slane %v6906, 1
      %v6908 = vadd.f32 %v6906, %v6907
      %v6909 = vsel %vm4095, %v6634, 0.0
      %v6910 = vsel %vm4095, %v6635, 0.0
      %v6911 = vadd.f32 %v6909, %v6910
      %v6912 = vrot.slane %v6911, 4
      %v6913 = vadd.f32 %v6911, %v6912
      %v6914 = vrot.slane %v6913, 2
      %v6915 = vadd.f32 %v6913, %v6914
      %v6916 = vrot.slane %v6915, 1
      %v6917 = vadd.f32 %v6915, %v6916
      %v6918 = vsel %vm4095, %v6636, 0.0
      %v6919 = vsel %vm4095, %v6637, 0.0
      %v6920 = vadd.f32 %v6918, %v6919
      %v6921 = vrot.slane %v6920, 4
      %v6922 = vadd.f32 %v6920, %v6921
      %v6923 = vrot.slane %v6922, 2
      %v6924 = vadd.f32 %v6922, %v6923
      %v6925 = vrot.slane %v6924, 1
      %v6926 = vadd.f32 %v6924, %v6925
      %v6927 = vsel %vm4095, %v6638, 0.0
      %v6928 = vsel %vm4095, %v6639, 0.0
      %v6929 = vadd.f32 %v6927, %v6928
      %v6930 = vrot.slane %v6929, 4
      %v6931 = vadd.f32 %v6929, %v6930
      %v6932 = vrot.slane %v6931, 2
      %v6933 = vadd.f32 %v6931, %v6932
      %v6934 = vrot.slane %v6933, 1
      %v6935 = vadd.f32 %v6933, %v6934
      %v6936 = vsel %vm4095, %v6640, 0.0
      %v6937 = vsel %vm4095, %v6641, 0.0
      %v6938 = vadd.f32 %v6936, %v6937
      %v6939 = vrot.slane %v6938, 4
      %v6940 = vadd.f32 %v6938, %v6939
      %v6941 = vrot.slane %v6940, 2
      %v6942 = vadd.f32 %v6940, %v6941
      %v6943 = vrot.slane %v6942, 1
      %v6944 = vadd.f32 %v6942, %v6943
      %v6945 = vsel %vm4095, %v6642, 0.0
      %v6946 = vsel %vm4095, %v6643, 0.0
      %v6947 = vadd.f32 %v6945, %v6946
      %v6948 = vrot.slane %v6947, 4
      %v6949 = vadd.f32 %v6947, %v6948
      %v6950 = vrot.slane %v6949, 2
      %v6951 = vadd.f32 %v6949, %v6950
      %v6952 = vrot.slane %v6951, 1
      %v6953 = vadd.f32 %v6951, %v6952
      %v6954 = vsel %vm4095, %v6644, 0.0
      %v6955 = vsel %vm4095, %v6645, 0.0
      %v6956 = vadd.f32 %v6954, %v6955
      %v6957 = vrot.slane %v6956, 4
      %v6958 = vadd.f32 %v6956, %v6957
      %v6959 = vrot.slane %v6958, 2
      %v6960 = vadd.f32 %v6958, %v6959
      %v6961 = vrot.slane %v6960, 1
      %v6962 = vadd.f32 %v6960, %v6961
      %v6963 = vsel %vm4095, %v6646, 0.0
      %v6964 = vsel %vm4095, %v6647, 0.0
      %v6965 = vadd.f32 %v6963, %v6964
      %v6966 = vrot.slane %v6965, 4
      %v6967 = vadd.f32 %v6965, %v6966
      %v6968 = vrot.slane %v6967, 2
      %v6969 = vadd.f32 %v6967, %v6968
      %v6970 = vrot.slane %v6969, 1
      %v6971 = vadd.f32 %v6969, %v6970
      %v6972 = vsel %vm4095, %v6648, 0.0
      %v6973 = vsel %vm4095, %v6649, 0.0
      %v6974 = vadd.f32 %v6972, %v6973
      %v6975 = vrot.slane %v6974, 4
      %v6976 = vadd.f32 %v6974, %v6975
      %v6977 = vrot.slane %v6976, 2
      %v6978 = vadd.f32 %v6976, %v6977
      %v6979 = vrot.slane %v6978, 1
      %v6980 = vadd.f32 %v6978, %v6979
      %v6981 = vsel %vm4095, %v6650, 0.0
      %v6982 = vsel %vm4095, %v6651, 0.0
      %v6983 = vadd.f32 %v6981, %v6982
      %v6984 = vrot.slane %v6983, 4
      %v6985 = vadd.f32 %v6983, %v6984
      %v6986 = vrot.slane %v6985, 2
      %v6987 = vadd.f32 %v6985, %v6986
      %v6988 = vrot.slane %v6987, 1
      %v6989 = vadd.f32 %v6987, %v6988
      %v6990 = vsel %vm4095, %v6652, 0.0
      %v6991 = vsel %vm4095, %v6653, 0.0
      %v6992 = vadd.f32 %v6990, %v6991
      %v6993 = vrot.slane %v6992, 4
      %v6994 = vadd.f32 %v6992, %v6993
      %v6995 = vrot.slane %v6994, 2
      %v6996 = vadd.f32 %v6994, %v6995
      %v6997 = vrot.slane %v6996, 1
      %v6998 = vadd.f32 %v6996, %v6997
      %v6999 = vsel %vm4095, %v6654, 0.0
      %v7000 = vsel %vm4095, %v6655, 0.0
      %v7001 = vadd.f32 %v6999, %v7000
      %v7002 = vrot.slane %v7001, 4
      %v7003 = vadd.f32 %v7001, %v7002
      %v7004 = vrot.slane %v7003, 2
      %v7005 = vadd.f32 %v7003, %v7004
      %v7006 = vrot.slane %v7005, 1
      %v7007 = vadd.f32 %v7005, %v7006
      %v7008 = vsel %vm4095, %v6656, 0.0
      %v7009 = vsel %vm4095, %v6657, 0.0
      %v7010 = vadd.f32 %v7008, %v7009
      %v7011 = vrot.slane %v7010, 4
      %v7012 = vadd.f32 %v7010, %v7011
      %v7013 = vrot.slane %v7012, 2
      %v7014 = vadd.f32 %v7012, %v7013
      %v7015 = vrot.slane %v7014, 1
      %v7016 = vadd.f32 %v7014, %v7015
      %v7017 = vsel %vm4095, %v6658, 0.0
      %v7018 = vsel %vm4095, %v6659, 0.0
      %v7019 = vadd.f32 %v7017, %v7018
      %v7020 = vrot.slane %v7019, 4
      %v7021 = vadd.f32 %v7019, %v7020
      %v7022 = vrot.slane %v7021, 2
      %v7023 = vadd.f32 %v7021, %v7022
      %v7024 = vrot.slane %v7023, 1
      %v7025 = vadd.f32 %v7023, %v7024
      %v7026 = vsel %vm4095, %v6660, 0.0
      %v7027 = vsel %vm4095, %v6661, 0.0
      %v7028 = vadd.f32 %v7026, %v7027
      %v7029 = vrot.slane %v7028, 4
      %v7030 = vadd.f32 %v7028, %v7029
      %v7031 = vrot.slane %v7030, 2
      %v7032 = vadd.f32 %v7030, %v7031
      %v7033 = vrot.slane %v7032, 1
      %v7034 = vadd.f32 %v7032, %v7033
      %v7035 = vsel %vm4095, %v6662, 0.0
      %v7036 = vsel %vm4095, %v6663, 0.0
      %v7037 = vadd.f32 %v7035, %v7036
      %v7038 = vrot.slane %v7037, 4
      %v7039 = vadd.f32 %v7037, %v7038
      %v7040 = vrot.slane %v7039, 2
      %v7041 = vadd.f32 %v7039, %v7040
      %v7042 = vrot.slane %v7041, 1
      %v7043 = vadd.f32 %v7041, %v7042
      %v7044 = vsel %vm4095, %v6664, 0.0
      %v7045 = vsel %vm4095, %v6665, 0.0
      %v7046 = vadd.f32 %v7044, %v7045
      %v7047 = vrot.slane %v7046, 4
      %v7048 = vadd.f32 %v7046, %v7047
      %v7049 = vrot.slane %v7048, 2
      %v7050 = vadd.f32 %v7048, %v7049
      %v7051 = vrot.slane %v7050, 1
      %v7052 = vadd.f32 %v7050, %v7051
      %v7053 = vsel %vm4095, %v6666, 0.0
      %v7054 = vsel %vm4095, %v6667, 0.0
      %v7055 = vadd.f32 %v7053, %v7054
      %v7056 = vrot.slane %v7055, 4
      %v7057 = vadd.f32 %v7055, %v7056
      %v7058 = vrot.slane %v7057, 2
      %v7059 = vadd.f32 %v7057, %v7058
      %v7060 = vrot.slane %v7059, 1
      %v7061 = vadd.f32 %v7059, %v7060
      %v7062 = vsel %vm4095, %v6668, 0.0
      %v7063 = vsel %vm4095, %v6669, 0.0
      %v7064 = vadd.f32 %v7062, %v7063
      %v7065 = vrot.slane %v7064, 4
      %v7066 = vadd.f32 %v7064, %v7065
      %v7067 = vrot.slane %v7066, 2
      %v7068 = vadd.f32 %v7066, %v7067
      %v7069 = vrot.slane %v7068, 1
      %v7070 = vadd.f32 %v7068, %v7069
      %v7071 = vsel %vm4095, %v6670, 0.0
      %v7072 = vsel %vm4095, %v6671, 0.0
      %v7073 = vadd.f32 %v7071, %v7072
      %v7074 = vrot.slane %v7073, 4
      %v7075 = vadd.f32 %v7073, %v7074
      %v7076 = vrot.slane %v7075, 2
      %v7077 = vadd.f32 %v7075, %v7076
      %v7078 = vrot.slane %v7077, 1
      %v7079 = vadd.f32 %v7077, %v7078
      %v7080 = vsel %vm4095, %v6672, 0.0
      %v7081 = vsel %vm4095, %v6673, 0.0
      %v7082 = vadd.f32 %v7080, %v7081
      %v7083 = vrot.slane %v7082, 4
      %v7084 = vadd.f32 %v7082, %v7083
      %v7085 = vrot.slane %v7084, 2
      %v7086 = vadd.f32 %v7084, %v7085
      %v7087 = vrot.slane %v7086, 1
      %v7088 = vadd.f32 %v7086, %v7087
      %v7089 = vsel %vm4095, %v6674, 0.0
      %v7090 = vsel %vm4095, %v6675, 0.0
      %v7091 = vadd.f32 %v7089, %v7090
      %v7092 = vrot.slane %v7091, 4
      %v7093 = vadd.f32 %v7091, %v7092
      %v7094 = vrot.slane %v7093, 2
      %v7095 = vadd.f32 %v7093, %v7094
      %v7096 = vrot.slane %v7095, 1
      %v7097 = vadd.f32 %v7095, %v7096
      %v7098 = vsel %vm4095, %v6676, 0.0
      %v7099 = vsel %vm4095, %v6677, 0.0
      %v7100 = vadd.f32 %v7098, %v7099
      %v7101 = vrot.slane %v7100, 4
      %v7102 = vadd.f32 %v7100, %v7101
      %v7103 = vrot.slane %v7102, 2
      %v7104 = vadd.f32 %v7102, %v7103
      %v7105 = vrot.slane %v7104, 1
      %v7106 = vadd.f32 %v7104, %v7105
      %v7107 = vsel %vm4095, %v6678, 0.0
      %v7108 = vsel %vm4095, %v6679, 0.0
      %v7109 = vadd.f32 %v7107, %v7108
      %v7110 = vrot.slane %v7109, 4
      %v7111 = vadd.f32 %v7109, %v7110
      %v7112 = vrot.slane %v7111, 2
      %v7113 = vadd.f32 %v7111, %v7112
      %v7114 = vrot.slane %v7113, 1
      %v7115 = vadd.f32 %v7113, %v7114
      %v7116 = vsel %vm4095, %v6680, 0.0
      %v7117 = vsel %vm4095, %v6681, 0.0
      %v7118 = vadd.f32 %v7116, %v7117
      %v7119 = vrot.slane %v7118, 4
      %v7120 = vadd.f32 %v7118, %v7119
      %v7121 = vrot.slane %v7120, 2
      %v7122 = vadd.f32 %v7120, %v7121
      %v7123 = vrot.slane %v7122, 1
      %v7124 = vadd.f32 %v7122, %v7123
      %v7125 = vsel %vm4095, %v6682, 0.0
      %v7126 = vsel %vm4095, %v6683, 0.0
      %v7127 = vadd.f32 %v7125, %v7126
      %v7128 = vrot.slane %v7127, 4
      %v7129 = vadd.f32 %v7127, %v7128
      %v7130 = vrot.slane %v7129, 2
      %v7131 = vadd.f32 %v7129, %v7130
      %v7132 = vrot.slane %v7131, 1
      %v7133 = vadd.f32 %v7131, %v7132
      %v7134 = vsel %vm4095, %v6684, 0.0
      %v7135 = vsel %vm4095, %v6685, 0.0
      %v7136 = vadd.f32 %v7134, %v7135
      %v7137 = vrot.slane %v7136, 4
      %v7138 = vadd.f32 %v7136, %v7137
      %v7139 = vrot.slane %v7138, 2
      %v7140 = vadd.f32 %v7138, %v7139
      %v7141 = vrot.slane %v7140, 1
      %v7142 = vadd.f32 %v7140, %v7141
      %v7143 = vsel %vm4095, %v6686, 0.0
      %v7144 = vsel %vm4095, %v6687, 0.0
      %v7145 = vadd.f32 %v7143, %v7144
      %v7146 = vrot.slane %v7145, 4
      %v7147 = vadd.f32 %v7145, %v7146
      %v7148 = vrot.slane %v7147, 2
      %v7149 = vadd.f32 %v7147, %v7148
      %v7150 = vrot.slane %v7149, 1
      %v7151 = vadd.f32 %v7149, %v7150
      %v7152 = vsel %vm4095, %v6688, 0.0
      %v7153 = vsel %vm4095, %v6689, 0.0
      %v7154 = vadd.f32 %v7152, %v7153
      %v7155 = vrot.slane %v7154, 4
      %v7156 = vadd.f32 %v7154, %v7155
      %v7157 = vrot.slane %v7156, 2
      %v7158 = vadd.f32 %v7156, %v7157
      %v7159 = vrot.slane %v7158, 1
      %v7160 = vadd.f32 %v7158, %v7159
      %v7161 = vsel %vm4095, %v6690, 0.0
      %v7162 = vsel %vm4095, %v6691, 0.0
      %v7163 = vadd.f32 %v7161, %v7162
      %v7164 = vrot.slane %v7163, 4
      %v7165 = vadd.f32 %v7163, %v7164
      %v7166 = vrot.slane %v7165, 2
      %v7167 = vadd.f32 %v7165, %v7166
      %v7168 = vrot.slane %v7167, 1
      %v7169 = vadd.f32 %v7167, %v7168
      %v7170 = vsel %vm4095, %v6692, 0.0
      %v7171 = vsel %vm4095, %v6693, 0.0
      %v7172 = vadd.f32 %v7170, %v7171
      %v7173 = vrot.slane %v7172, 4
      %v7174 = vadd.f32 %v7172, %v7173
      %v7175 = vrot.slane %v7174, 2
      %v7176 = vadd.f32 %v7174, %v7175
      %v7177 = vrot.slane %v7176, 1
      %v7178 = vadd.f32 %v7176, %v7177
      %v7179 = vsel %vm4095, %v6694, 0.0
      %v7180 = vsel %vm4095, %v6695, 0.0
      %v7181 = vadd.f32 %v7179, %v7180
      %v7182 = vrot.slane %v7181, 4
      %v7183 = vadd.f32 %v7181, %v7182
      %v7184 = vrot.slane %v7183, 2
      %v7185 = vadd.f32 %v7183, %v7184
      %v7186 = vrot.slane %v7185, 1
      %v7187 = vadd.f32 %v7185, %v7186
      %v7188 = vsel %vm4095, %v6696, 0.0
      %v7189 = vsel %vm4095, %v6697, 0.0
      %v7190 = vadd.f32 %v7188, %v7189
      %v7191 = vrot.slane %v7190, 4
      %v7192 = vadd.f32 %v7190, %v7191
      %v7193 = vrot.slane %v7192, 2
      %v7194 = vadd.f32 %v7192, %v7193
      %v7195 = vrot.slane %v7194, 1
      %v7196 = vadd.f32 %v7194, %v7195
      %v7197 = vsel %vm4095, %v6698, 0.0
      %v7198 = vsel %vm4095, %v6699, 0.0
      %v7199 = vadd.f32 %v7197, %v7198
      %v7200 = vrot.slane %v7199, 4
      %v7201 = vadd.f32 %v7199, %v7200
      %v7202 = vrot.slane %v7201, 2
      %v7203 = vadd.f32 %v7201, %v7202
      %v7204 = vrot.slane %v7203, 1
      %v7205 = vadd.f32 %v7203, %v7204
      %v7206 = vsel %vm4095, %v6700, 0.0
      %v7207 = vsel %vm4095, %v6701, 0.0
      %v7208 = vadd.f32 %v7206, %v7207
      %v7209 = vrot.slane %v7208, 4
      %v7210 = vadd.f32 %v7208, %v7209
      %v7211 = vrot.slane %v7210, 2
      %v7212 = vadd.f32 %v7210, %v7211
      %v7213 = vrot.slane %v7212, 1
      %v7214 = vadd.f32 %v7212, %v7213
      %v7215 = vsel %vm4095, %v6702, 0.0
      %v7216 = vsel %vm4095, %v6703, 0.0
      %v7217 = vadd.f32 %v7215, %v7216
      %v7218 = vrot.slane %v7217, 4
      %v7219 = vadd.f32 %v7217, %v7218
      %v7220 = vrot.slane %v7219, 2
      %v7221 = vadd.f32 %v7219, %v7220
      %v7222 = vrot.slane %v7221, 1
      %v7223 = vadd.f32 %v7221, %v7222
      %v7224 = vsel %vm4095, %v6704, 0.0
      %v7225 = vsel %vm4095, %v6705, 0.0
      %v7226 = vadd.f32 %v7224, %v7225
      %v7227 = vrot.slane %v7226, 4
      %v7228 = vadd.f32 %v7226, %v7227
      %v7229 = vrot.slane %v7228, 2
      %v7230 = vadd.f32 %v7228, %v7229
      %v7231 = vrot.slane %v7230, 1
      %v7232 = vadd.f32 %v7230, %v7231
      %v7233 = vsel %vm4095, %v6706, 0.0
      %v7234 = vsel %vm4095, %v6707, 0.0
      %v7235 = vadd.f32 %v7233, %v7234
      %v7236 = vrot.slane %v7235, 4
      %v7237 = vadd.f32 %v7235, %v7236
      %v7238 = vrot.slane %v7237, 2
      %v7239 = vadd.f32 %v7237, %v7238
      %v7240 = vrot.slane %v7239, 1
      %v7241 = vadd.f32 %v7239, %v7240
      %v7242 = vsel %vm4095, %v6708, 0.0
      %v7243 = vsel %vm4095, %v6709, 0.0
      %v7244 = vadd.f32 %v7242, %v7243
      %v7245 = vrot.slane %v7244, 4
      %v7246 = vadd.f32 %v7244, %v7245
      %v7247 = vrot.slane %v7246, 2
      %v7248 = vadd.f32 %v7246, %v7247
      %v7249 = vrot.slane %v7248, 1
      %v7250 = vadd.f32 %v7248, %v7249
      %v7251 = vsel %vm4095, %v6710, 0.0
      %v7252 = vsel %vm4095, %v6711, 0.0
      %v7253 = vadd.f32 %v7251, %v7252
      %v7254 = vrot.slane %v7253, 4
      %v7255 = vadd.f32 %v7253, %v7254
      %v7256 = vrot.slane %v7255, 2
      %v7257 = vadd.f32 %v7255, %v7256
      %v7258 = vrot.slane %v7257, 1
      %v7259 = vadd.f32 %v7257, %v7258
      %v7260 = vsel %vm4095, %v6712, 0.0
      %v7261 = vsel %vm4095, %v6713, 0.0
      %v7262 = vadd.f32 %v7260, %v7261
      %v7263 = vrot.slane %v7262, 4
      %v7264 = vadd.f32 %v7262, %v7263
      %v7265 = vrot.slane %v7264, 2
      %v7266 = vadd.f32 %v7264, %v7265
      %v7267 = vrot.slane %v7266, 1
      %v7268 = vadd.f32 %v7266, %v7267
      %v7269 = vsel %vm4095, %v6714, 0.0
      %v7270 = vsel %vm4095, %v6715, 0.0
      %v7271 = vadd.f32 %v7269, %v7270
      %v7272 = vrot.slane %v7271, 4
      %v7273 = vadd.f32 %v7271, %v7272
      %v7274 = vrot.slane %v7273, 2
      %v7275 = vadd.f32 %v7273, %v7274
      %v7276 = vrot.slane %v7275, 1
      %v7277 = vadd.f32 %v7275, %v7276
      %v7278 = vsel %vm4095, %v6716, 0.0
      %v7279 = vsel %vm4095, %v6717, 0.0
      %v7280 = vadd.f32 %v7278, %v7279
      %v7281 = vrot.slane %v7280, 4
      %v7282 = vadd.f32 %v7280, %v7281
      %v7283 = vrot.slane %v7282, 2
      %v7284 = vadd.f32 %v7282, %v7283
      %v7285 = vrot.slane %v7284, 1
      %v7286 = vadd.f32 %v7284, %v7285
      %v7287 = vsel %vm4095, %v6718, 0.0
      %v7288 = vsel %vm4095, %v6719, 0.0
      %v7289 = vadd.f32 %v7287, %v7288
      %v7290 = vrot.slane %v7289, 4
      %v7291 = vadd.f32 %v7289, %v7290
      %v7292 = vrot.slane %v7291, 2
      %v7293 = vadd.f32 %v7291, %v7292
      %v7294 = vrot.slane %v7293, 1
      %v7295 = vadd.f32 %v7293, %v7294
      %v7296 = vpack.c.bf16 %v6728, %v6728
      %v7297 = vpack.c.bf16 %v6737, %v6737
      %v7298 = vpack.c.bf16 %v6746, %v6746
      %v7299 = vpack.c.bf16 %v6755, %v6755
      %v7300 = vpack.c.bf16 %v6764, %v6764
      %v7301 = vpack.c.bf16 %v6773, %v6773
      %v7302 = vpack.c.bf16 %v6782, %v6782
      %v7303 = vpack.c.bf16 %v6791, %v6791
      %v7304 = vpack.c.bf16 %v6800, %v6800
      %v7305 = vpack.c.bf16 %v6809, %v6809
      %v7306 = vpack.c.bf16 %v6818, %v6818
      %v7307 = vpack.c.bf16 %v6827, %v6827
      %v7308 = vpack.c.bf16 %v6836, %v6836
      %v7309 = vpack.c.bf16 %v6845, %v6845
      %v7310 = vpack.c.bf16 %v6854, %v6854
      %v7311 = vpack.c.bf16 %v6863, %v6863
      %v7312 = vpack.c.bf16 %v6872, %v6872
      %v7313 = vpack.c.bf16 %v6881, %v6881
      %v7314 = vpack.c.bf16 %v6890, %v6890
      %v7315 = vpack.c.bf16 %v6899, %v6899
      %v7316 = vpack.c.bf16 %v6908, %v6908
      %v7317 = vpack.c.bf16 %v6917, %v6917
      %v7318 = vpack.c.bf16 %v6926, %v6926
      %v7319 = vpack.c.bf16 %v6935, %v6935
      %v7320 = vpack.c.bf16 %v6944, %v6944
      %v7321 = vpack.c.bf16 %v6953, %v6953
      %v7322 = vpack.c.bf16 %v6962, %v6962
      %v7323 = vpack.c.bf16 %v6971, %v6971
      %v7324 = vpack.c.bf16 %v6980, %v6980
      %v7325 = vpack.c.bf16 %v6989, %v6989
      %v7326 = vpack.c.bf16 %v6998, %v6998
      %v7327 = vpack.c.bf16 %v7007, %v7007
      %v7328 = vpack.c.bf16 %v7016, %v7016
      %v7329 = vpack.c.bf16 %v7025, %v7025
      %v7330 = vpack.c.bf16 %v7034, %v7034
      %v7331 = vpack.c.bf16 %v7043, %v7043
      %v7332 = vpack.c.bf16 %v7052, %v7052
      %v7333 = vpack.c.bf16 %v7061, %v7061
      %v7334 = vpack.c.bf16 %v7070, %v7070
      %v7335 = vpack.c.bf16 %v7079, %v7079
      %v7336 = vpack.c.bf16 %v7088, %v7088
      %v7337 = vpack.c.bf16 %v7097, %v7097
      %v7338 = vpack.c.bf16 %v7106, %v7106
      %v7339 = vpack.c.bf16 %v7115, %v7115
      %v7340 = vpack.c.bf16 %v7124, %v7124
      %v7341 = vpack.c.bf16 %v7133, %v7133
      %v7342 = vpack.c.bf16 %v7142, %v7142
      %v7343 = vpack.c.bf16 %v7151, %v7151
      %v7344 = vpack.c.bf16 %v7160, %v7160
      %v7345 = vpack.c.bf16 %v7169, %v7169
      %v7346 = vpack.c.bf16 %v7178, %v7178
      %v7347 = vpack.c.bf16 %v7187, %v7187
      %v7348 = vpack.c.bf16 %v7196, %v7196
      %v7349 = vpack.c.bf16 %v7205, %v7205
      %v7350 = vpack.c.bf16 %v7214, %v7214
      %v7351 = vpack.c.bf16 %v7223, %v7223
      %v7352 = vpack.c.bf16 %v7232, %v7232
      %v7353 = vpack.c.bf16 %v7241, %v7241
      %v7354 = vpack.c.bf16 %v7250, %v7250
      %v7355 = vpack.c.bf16 %v7259, %v7259
      %v7356 = vpack.c.bf16 %v7268, %v7268
      %v7357 = vpack.c.bf16 %v7277, %v7277
      %v7358 = vpack.c.bf16 %v7286, %v7286
      %v7359 = vpack.c.bf16 %v7295, %v7295
      %v7360 = vld [vmem:[%s5] sm:$0xf]
      %v7361 = vld [vmem:[%s5 + $0x4] sm:$0xf]
      %v7362 = vld [vmem:[%s5 + $0x8] sm:$0xf]
      %v7363 = vld [vmem:[%s5 + $0xc] sm:$0xf]
      %v7364 = vld [vmem:[%s5 + $0x10] sm:$0xf]
      %v7365 = vld [vmem:[%s5 + $0x14] sm:$0xf]
      %v7366 = vld [vmem:[%s5 + $0x18] sm:$0xf]
      %v7367 = vld [vmem:[%s5 + $0x1c] sm:$0xf]
      %v7368 = vld [vmem:[%s6] sm:$0x1]
      %v7370 = vlaneseq
      %v7371 = vshrl.u32 %v7370, 7
      %v7372 = vsub.s32 0, %v7371
      %v7373 = vrot.slane %v7368, %v7372
      %v7439 = vunpack.c.l.b16 %v7296
      %v7440 = vunpack.c.l.b16 %v7297
      %v7441 = vunpack.c.l.b16 %v7298
      %v7442 = vunpack.c.l.b16 %v7299
      %v7443 = vunpack.c.l.b16 %v7300
      %v7444 = vunpack.c.l.b16 %v7301
      %v7445 = vunpack.c.l.b16 %v7302
      %v7446 = vunpack.c.l.b16 %v7303
      %v7447 = vunpack.c.l.b16 %v7304
      %v7448 = vunpack.c.l.b16 %v7305
      %v7449 = vunpack.c.l.b16 %v7306
      %v7450 = vunpack.c.l.b16 %v7307
      %v7451 = vunpack.c.l.b16 %v7308
      %v7452 = vunpack.c.l.b16 %v7309
      %v7453 = vunpack.c.l.b16 %v7310
      %v7454 = vunpack.c.l.b16 %v7311
      %v7455 = vunpack.c.l.b16 %v7312
      %v7456 = vunpack.c.l.b16 %v7313
      %v7457 = vunpack.c.l.b16 %v7314
      %v7458 = vunpack.c.l.b16 %v7315
      %v7459 = vunpack.c.l.b16 %v7316
      %v7460 = vunpack.c.l.b16 %v7317
      %v7461 = vunpack.c.l.b16 %v7318
      %v7462 = vunpack.c.l.b16 %v7319
      %v7463 = vunpack.c.l.b16 %v7320
      %v7464 = vunpack.c.l.b16 %v7321
      %v7465 = vunpack.c.l.b16 %v7322
      %v7466 = vunpack.c.l.b16 %v7323
      %v7467 = vunpack.c.l.b16 %v7324
      %v7468 = vunpack.c.l.b16 %v7325
      %v7469 = vunpack.c.l.b16 %v7326
      %v7470 = vunpack.c.l.b16 %v7327
      %v7471 = vunpack.c.l.b16 %v7328
      %v7472 = vunpack.c.l.b16 %v7329
      %v7473 = vunpack.c.l.b16 %v7330
      %v7474 = vunpack.c.l.b16 %v7331
      %v7475 = vunpack.c.l.b16 %v7332
      %v7476 = vunpack.c.l.b16 %v7333
      %v7477 = vunpack.c.l.b16 %v7334
      %v7478 = vunpack.c.l.b16 %v7335
      %v7479 = vunpack.c.l.b16 %v7336
      %v7480 = vunpack.c.l.b16 %v7337
      %v7481 = vunpack.c.l.b16 %v7338
      %v7482 = vunpack.c.l.b16 %v7339
      %v7483 = vunpack.c.l.b16 %v7340
      %v7484 = vunpack.c.l.b16 %v7341
      %v7485 = vunpack.c.l.b16 %v7342
      %v7486 = vunpack.c.l.b16 %v7343
      %v7487 = vunpack.c.l.b16 %v7344
      %v7488 = vunpack.c.l.b16 %v7345
      %v7489 = vunpack.c.l.b16 %v7346
      %v7490 = vunpack.c.l.b16 %v7347
      %v7491 = vunpack.c.l.b16 %v7348
      %v7492 = vunpack.c.l.b16 %v7349
      %v7493 = vunpack.c.l.b16 %v7350
      %v7494 = vunpack.c.l.b16 %v7351
      %v7495 = vunpack.c.l.b16 %v7352
      %v7496 = vunpack.c.l.b16 %v7353
      %v7497 = vunpack.c.l.b16 %v7354
      %v7498 = vunpack.c.l.b16 %v7355
      %v7499 = vunpack.c.l.b16 %v7356
      %v7500 = vunpack.c.l.b16 %v7357
      %v7501 = vunpack.c.l.b16 %v7358
      %v7502 = vunpack.c.l.b16 %v7359
      %vm7503 = vcmask 1041409
      %v7504 = vsel %vm7503, %v7440, %v7439
      %vm7505 = vcmask 1042434
      %v7506 = vsel %vm7505, %v7441, %v7504
      %vm7507 = vcmask 1043459
      %v7508 = vsel %vm7507, %v7442, %v7506
      %vm7509 = vcmask 1044484
      %v7510 = vsel %vm7509, %v7443, %v7508
      %vm7511 = vcmask 1045509
      %v7512 = vsel %vm7511, %v7444, %v7510
      %vm7513 = vcmask 1046534
      %v7514 = vsel %vm7513, %v7445, %v7512
      %vm7515 = vcmask 1047559
      %v7516 = vsel %vm7515, %v7446, %v7514
      %v7517 = vsel %vm7503, %v7448, %v7447
      %v7518 = vsel %vm7505, %v7449, %v7517
      %v7519 = vsel %vm7507, %v7450, %v7518
      %v7520 = vsel %vm7509, %v7451, %v7519
      %v7521 = vsel %vm7511, %v7452, %v7520
      %v7522 = vsel %vm7513, %v7453, %v7521
      %v7523 = vsel %vm7515, %v7454, %v7522
      %v7524 = vsel %vm7503, %v7456, %v7455
      %v7525 = vsel %vm7505, %v7457, %v7524
      %v7526 = vsel %vm7507, %v7458, %v7525
      %v7527 = vsel %vm7509, %v7459, %v7526
      %v7528 = vsel %vm7511, %v7460, %v7527
      %v7529 = vsel %vm7513, %v7461, %v7528
      %v7530 = vsel %vm7515, %v7462, %v7529
      %v7531 = vsel %vm7503, %v7464, %v7463
      %v7532 = vsel %vm7505, %v7465, %v7531
      %v7533 = vsel %vm7507, %v7466, %v7532
      %v7534 = vsel %vm7509, %v7467, %v7533
      %v7535 = vsel %vm7511, %v7468, %v7534
      %v7536 = vsel %vm7513, %v7469, %v7535
      %v7537 = vsel %vm7515, %v7470, %v7536
      %v7538 = vsel %vm7503, %v7472, %v7471
      %v7539 = vsel %vm7505, %v7473, %v7538
      %v7540 = vsel %vm7507, %v7474, %v7539
      %v7541 = vsel %vm7509, %v7475, %v7540
      %v7542 = vsel %vm7511, %v7476, %v7541
      %v7543 = vsel %vm7513, %v7477, %v7542
      %v7544 = vsel %vm7515, %v7478, %v7543
      %v7545 = vsel %vm7503, %v7480, %v7479
      %v7546 = vsel %vm7505, %v7481, %v7545
      %v7547 = vsel %vm7507, %v7482, %v7546
      %v7548 = vsel %vm7509, %v7483, %v7547
      %v7549 = vsel %vm7511, %v7484, %v7548
      %v7550 = vsel %vm7513, %v7485, %v7549
      %v7551 = vsel %vm7515, %v7486, %v7550
      %v7552 = vsel %vm7503, %v7488, %v7487
      %v7553 = vsel %vm7505, %v7489, %v7552
      %v7554 = vsel %vm7507, %v7490, %v7553
      %v7555 = vsel %vm7509, %v7491, %v7554
      %v7556 = vsel %vm7511, %v7492, %v7555
      %v7557 = vsel %vm7513, %v7493, %v7556
      %v7558 = vsel %vm7515, %v7494, %v7557
      %v7559 = vsel %vm7503, %v7496, %v7495
      %v7560 = vsel %vm7505, %v7497, %v7559
      %v7561 = vsel %vm7507, %v7498, %v7560
      %v7562 = vsel %vm7509, %v7499, %v7561
      %v7563 = vsel %vm7511, %v7500, %v7562
      %v7564 = vsel %vm7513, %v7501, %v7563
      %v7565 = vsel %vm7515, %v7502, %v7564
      %v7566 = vpack.c.b16 %v7523, %v7516
      %v7567 = vpack.c.b16 %v7537, %v7530
      %v7568 = vpack.c.b16 %v7551, %v7544
      %v7569 = vpack.c.b16 %v7565, %v7558
      %v7578 = vunpack.c.l.b16 %v7360
      %v7579 = vunpack.c.l.b16 %v7361
      %v7580 = vunpack.c.l.b16 %v7362
      %v7581 = vunpack.c.l.b16 %v7363
      %v7582 = vunpack.c.l.b16 %v7364
      %v7583 = vunpack.c.l.b16 %v7365
      %v7584 = vunpack.c.l.b16 %v7366
      %v7585 = vunpack.c.l.b16 %v7367
      %v7586 = vpack.c.b16 %v7579, %v7578
      %v7587 = vpack.c.b16 %v7581, %v7580
      %v7588 = vpack.c.b16 %v7583, %v7582
      %v7589 = vpack.c.b16 %v7585, %v7584
      %v7595 = vsel %vm4095, %v7566, 0
      %v7598 = vsel %vm4095, %v7567, 0
      %v7601 = vsel %vm4095, %v7568, 0
      %v7604 = vsel %vm4095, %v7569, 0
      %7606 = vmatprep.subr.bf16.mxu0 0
      %7607 = vmatpush1.bf16.msra.mxu0 %v7586
      %7608 = vmatprep.subr.bf16.mxu0 0
      %7609 = vmatpush1.bf16.msra.mxu0 %v7587
      %7610 = vmatprep.subr.bf16.mxu0 0
      %7611 = vmatpush1.bf16.msra.mxu0 %v7588
      %7612 = vmatprep.subr.bf16.mxu0 0
      %7613 = vmatpush1.bf16.msra.mxu0 %v7589
      %7614 = vmatprep.subr.bf16.mxu0 0
      %7615 = vmatpush1.bf16.msra.mxu0 0
      %7616 = vmatprep.subr.bf16.mxu0 0
      %7617 = vmatpush1.bf16.msra.mxu0 0
      %7618 = vmatprep.subr.bf16.mxu0 0
      %7619 = vmatpush1.bf16.msra.mxu0 0
      %7620 = vmatprep.subr.bf16.mxu0 0
      %7621 = vmatpush1.bf16.msra.mxu0 0
      %7622 = vmatprep.subr.bf16.mxu0 0
      %7623 = vmatpush1.bf16.msra.mxu0 0
      %7624 = vmatprep.subr.bf16.mxu0 0
      %7625 = vmatpush1.bf16.msra.mxu0 0
      %7626 = vmatprep.subr.bf16.mxu0 0
      %7627 = vmatpush1.bf16.msra.mxu0 0
      %7628 = vmatprep.subr.bf16.mxu0 0
      %7629 = vmatpush1.bf16.msra.mxu0 0
      %7630 = vmatprep.subr.bf16.mxu0 0
      %7631 = vmatpush1.bf16.msra.mxu0 0
      %7632 = vmatprep.subr.bf16.mxu0 0
      %7633 = vmatpush1.bf16.msra.mxu0 0
      %7634 = vmatprep.subr.bf16.mxu0 0
      %7635 = vmatpush1.bf16.msra.mxu0 0
      %7636 = vmatprep.subr.bf16.mxu0 0
      %7637 = vmatpush1.bf16.msra.mxu0 0
      %7638 = vmatprep.mubr.bf16.mxu0 0
      %7639 = vmatmul.mubr.bf16.gmra.mrb[0].mxu0 %v7595
      %v7640 = vpop.f32.mrb[0].mxu0
      %v7641 = vadd.f32 %v7373, %v7640
      %v7642 = vpop.f32.mrb[0].mxu0
      %v7643 = vpop.f32.mrb[0].mxu0
      %v7644 = vadd.f32 %v7373, %v7643
      %v7645 = vpop.f32.mrb[0].mxu0
      %7646 = vmatprep.mubr.bf16.mxu0 0
      %7647 = vmatmul.mubr.bf16.gmra.mrb[0].mxu0 %v7598
      %v7648 = vpop.f32.mrb[0].mxu0
      %v7649 = vadd.f32 %v7373, %v7648
      %v7650 = vpop.f32.mrb[0].mxu0
      %v7651 = vpop.f32.mrb[0].mxu0
      %v7652 = vadd.f32 %v7373, %v7651
      %v7653 = vpop.f32.mrb[0].mxu0
      %7654 = vmatprep.mubr.bf16.mxu0 0
      %7655 = vmatmul.mubr.bf16.gmra.mrb[0].mxu0 %v7601
      %v7656 = vpop.f32.mrb[0].mxu0
      %v7657 = vadd.f32 %v7373, %v7656
      %v7658 = vpop.f32.mrb[0].mxu0
      %v7659 = vpop.f32.mrb[0].mxu0
      %v7660 = vadd.f32 %v7373, %v7659
      %v7661 = vpop.f32.mrb[0].mxu0
      %7662 = vmatprep.mubr.bf16.mxu0 0
      %7663 = vmatmul.mubr.bf16.gmra.mrb[0].mxu0 %v7604
      %v7664 = vpop.f32.mrb[0].mxu0
      %v7665 = vadd.f32 %v7373, %v7664
      %v7666 = vpop.f32.mrb[0].mxu0
      %v7667 = vpop.f32.mrb[0].mxu0
      %v7668 = vadd.f32 %v7373, %v7667
      %v7669 = vpop.f32.mrb[0].mxu0
      %7670 = vdwg.mxu0
      %v7671 = vmax.f32 %v7641, 0.0
      %v7672 = vmax.f32 %v7644, 0.0
      %v7673 = vmax.f32 %v7649, 0.0
      %v7674 = vmax.f32 %v7652, 0.0
      %v7675 = vmax.f32 %v7657, 0.0
      %v7676 = vmax.f32 %v7660, 0.0
      %v7677 = vmax.f32 %v7665, 0.0
      %v7678 = vmax.f32 %v7668, 0.0
      %7679 = vst.msk [vmem:[%s305] sm:$0xff] %vm4095, %v7671
      %7680 = vst.msk [vmem:[%s305 + $0x8] sm:$0xff] %vm4095, %v7672
      %7681 = vst.msk [vmem:[%s305 + $0x10] sm:$0xff] %vm4095, %v7673
      %7682 = vst.msk [vmem:[%s305 + $0x18] sm:$0xff] %vm4095, %v7674
      %7683 = vst.msk [vmem:[%s305 + $0x20] sm:$0xff] %vm4095, %v7675
      %7684 = vst.msk [vmem:[%s305 + $0x28] sm:$0xff] %vm4095, %v7676
      %7685 = vst.msk [vmem:[%s305 + $0x30] sm:$0xff] %vm4095, %v7677
      %7686 = vst.msk [vmem:[%s305 + $0x38] sm:$0xff] %vm4095, %v7678
      %s7687 = smul.u32 8, %s18
      %p7688 = scmp.lt.s32.totalorder %s7687, 31
      %s7689 = scalar_select %p7688, %s7687, 31
      %s7690 = smul.addr %s7689, 8
      %s7691 = scalar_lea.vmem %s7, %s7690
      // Predicated region
      $region49: #{tpu_custom_call.1} parent=47 // pred_check
        %p7692 = pneg %p193
      $region50: #{tpu_custom_call.1} parent=47 // pred_check_branch
        %7694 = sbr.rel (%p7692) target = $region52
      $region51: #{tpu_custom_call.1} parent=47 // pred_region
        %s7695 = smul.u32 8, %s18
      $region52: #{tpu_custom_call.1} parent=47 // pred_fallthru
        _
    $region48: #{tpu_custom_call.1} parent=5 // pred_fallthru
      _
    %p7696 = scmp.le.s32.totalorder 2, %s13
    // Predicated region
    $region53: #{tpu_custom_call.1} parent=5 // pred_check
      %p7697 = pneg %p7696
    $region54: #{tpu_custom_call.1} parent=5 // pred_check_branch
      %7699 = sbr.rel (%p7697) target = $region56
    $region55: #{tpu_custom_call.1} parent=5 // pred_region
      %s7700 = ssub.s32 %s13, 2
      // Predicated region
      $region57: #{tpu_custom_call.1} parent=55 // pred_check
        %p7701 = pneg %p199
      $region58: #{tpu_custom_call.1} parent=55 // pred_check_branch
        %7703 = sbr.rel (%p7701) target = $region60
      $region59: #{tpu_custom_call.1} parent=55 // pred_region
        %s7704 = smul.u32 8, %s19
        %p7705 = scmp.lt.s32.totalorder %s7704, 31
        %s7706 = scalar_select %p7705, %s7704, 31
        %s7707 = smul.addr %s7706, 8
        %s7708 = scalar_lea.vmem %s7, %s7707
      $region60: #{tpu_custom_call.1} parent=55 // pred_fallthru
        _
    $region56: #{tpu_custom_call.1} parent=5 // pred_fallthru
      _
  $region6: #{tpu_custom_call.1} parent=0 // loop_footer
    %s17 = sadd.s32 1, %s13
  $region7: #{tpu_custom_call.1} parent=0 // loop_footer_branch
    %12 = sbr.rel target = $region3
  $region8: #{tpu_custom_call.1} parent=0 // loop_exit
    _

</llo_original>
